<compile_context>
chip_gen: v7x
topology: tpu7x:2x2x1
jax: 0.10.0
libtpu: 0.0.40
codegen_flags: <defaults>
</compile_context>

<pallas_src>
import jax
import jax.numpy as jnp
from jax.experimental import pallas as pl
from jax.experimental.pallas import tpu as pltpu

HIDDEN = 128            # LSTM hidden size
Z_FEAT = 162            # LSTM input feature size
X_FEAT = 430            # flat feature size
DENSE = 512             # trunk width
HEAD_HIDDEN = 256       # pre* head hidden width
N_MLP_HEADS = 13        # pre1..pre13
N_HEADS = 15            # 13 MLP heads + presmall + prebig
N_OUT = 5               # classes per head
HH_COLS = N_MLP_HEADS * HEAD_HIDDEN        # 3328
SB_COLS = 2 * N_OUT                        # 10 (presmall | prebig)
CAT_COLS = HH_COLS + 2 * SB_COLS           # 3348 (+sb and -sb copies)
CHUNK_W = 896                              # head-weight column chunk (7 * 128)
NC_PAD = 3584                              # CAT_COLS zero-padded to 4 chunks
N_CHUNKS = NC_PAD // CHUNK_W               # 4
NPAD = 128                                 # lane-padded output width (75 -> 128)
NGROUP = 32                                # 5-lane groups covering the 128 output lanes
BIG_L = 1.0e7                              # self.L


# --------------------------------------------------------------------------
# Fused kernel: LSTM + trunk (chunk 0 only) + streamed packed heads
#               + legal masking + grouped softmax, lane-dense 128-wide outputs.
# --------------------------------------------------------------------------
def fused_kernel(z_ref, x_ref, legal_ref,
                 wih_ref, whh_ref, blstm_ref,
                 w1h_ref, w1x_ref, b1_ref,
                 w2_ref, b2_ref, w3_ref, b3_ref, w4_ref, b4_ref,
                 wcat_ref, bcat_ref, whead_ref, bhead_ref,
                 logits_ref, pred_ref,
                 a_ref):
    c = pl.program_id(1)
    last = pl.num_programs(1) - 1
    T = z_ref.shape[0]
    BT = z_ref.shape[1]
    f32 = jnp.float32

    # ---- LSTM + trunk: once per batch tile (chunk 0); result kept in VMEM scratch ----
    @pl.when(c == 0)
    def _lstm_and_trunk():
        wih = wih_ref[...].astype(f32)
        whh = whh_ref[...].astype(f32)
        # Hoisted input projection: one (T*BT,162)@(162,512) matmul, bias added once.
        z2 = jnp.concatenate([z_ref[t] for t in range(T)], axis=0)        # (T*BT, 162)
        gx = jnp.dot(z2, wih, preferred_element_type=f32) + blstm_ref[...]
        h = jnp.zeros((BT, HIDDEN), f32)
        cell = jnp.zeros((BT, HIDDEN), f32)
        for t in range(T):                                                # fully unrolled
            gates = (gx[t * BT:(t + 1) * BT, :]
                     + jnp.dot(h, whh, preferred_element_type=f32))
            # PyTorch gate order: input, forget, cell, output (i|f fused: contiguous 256 lanes)
            ifg = jax.nn.sigmoid(gates[:, :2 * HIDDEN])
            i_g = ifg[:, :HIDDEN]
            f_g = ifg[:, HIDDEN:]
            g_g = jnp.tanh(gates[:, 2 * HIDDEN:3 * HIDDEN])
            o_g = jax.nn.sigmoid(gates[:, 3 * HIDDEN:])
            cell = f_g * cell + i_g * g_g
            h = o_g * jnp.tanh(cell)

        # dense trunk (dense1 split over [h | x]: no concat needed)
        a = jnp.maximum(
            jnp.dot(h, w1h_ref[...].astype(f32), preferred_element_type=f32)
            + jnp.dot(x_ref[...], w1x_ref[...].astype(f32), preferred_element_type=f32)
            + b1_ref[...], 0.0)
        a = jnp.maximum(jnp.dot(a, w2_ref[...].astype(f32),
                                preferred_element_type=f32) + b2_ref[...], 0.0)
        a = jnp.maximum(jnp.dot(a, w3_ref[...].astype(f32),
                                preferred_element_type=f32) + b3_ref[...], 0.0)
        a = jnp.maximum(jnp.dot(a, w4_ref[...].astype(f32),
                                preferred_element_type=f32) + b4_ref[...], 0.0)
        a_ref[...] = a

    # ---- streamed head chunk: (BT,512)@(512,CW) -> relu -> (BT,CW)@(CW,128), accumulate ----
    y = (jnp.dot(a_ref[...], wcat_ref[...].astype(f32), preferred_element_type=f32)
         + bcat_ref[...])
    hh = jnp.maximum(y, 0.0)
    part = jnp.dot(hh, whead_ref[...].astype(f32), preferred_element_type=f32)   # (BT, 128)

    @pl.when(c == 0)
    def _init_acc():
        logits_ref[...] = part

    @pl.when(c > 0)
    def _accumulate():
        logits_ref[...] += part

    # ---- finalize: bias, legal mask, grouped per-head softmax, lane-dense stores ----
    @pl.when(c == last)
    def _finalize():
        legal = legal_ref[...]                                  # (BT, 128), pad lanes = 1
        raw = logits_ref[...] + bhead_ref[...]
        logits = raw - (1.0 - legal) * BIG_L
        logits_ref[...] = logits

        # Group-membership one-hots (2-D iota + comparisons; no integer division).
        lane = jax.lax.broadcasted_iota(jnp.int32, (NPAD, NGROUP), 0)
        grp = jax.lax.broadcasted_iota(jnp.int32, (NPAD, NGROUP), 1) * N_OUT
        G = jnp.where((lane >= grp) & (lane < grp + N_OUT), 1.0, 0.0).astype(f32)
        lane_t = jax.lax.broadcasted_iota(jnp.int32, (NGROUP, NPAD), 1)
        grp_t = jax.lax.broadcasted_iota(jnp.int32, (NGROUP, NPAD), 0) * N_OUT
        Gt = jnp.where((lane_t >= grp_t) & (lane_t < grp_t + N_OUT), 1.0, 0.0).astype(f32)

        # Fully-illegal heads get their -L offset added back so their exps don't underflow
        # (matches the reference's per-head-max softmax; no NaNs).
        cnt = jnp.dot(legal, G, preferred_element_type=f32)               # legal count / group
        dead = jnp.where(cnt < 0.5, 1.0, 0.0).astype(f32)
        adj = logits + jnp.dot(dead, Gt, preferred_element_type=f32) * BIG_L
        # Single row-wise max over the whole 128-lane slab (valid while the spread of the
        # un-masked logits stays well below the ~80 exp-underflow threshold).
        m = jnp.max(adj, axis=-1, keepdims=True)
        e = jnp.exp(adj - m)
        denom = jnp.dot(jnp.dot(e, G, preferred_element_type=f32), Gt,
                        preferred_element_type=f32)
        pred_ref[...] = e / denom


# --------------------------------------------------------------------------
# Wrapper
# --------------------------------------------------------------------------
@jax.jit
def farmer_predict(params, z, x, legal):
    B, T, _ = z.shape
    B8 = ((B + 7) // 8) * 8
    BT = min(B8, 128)                       # batch tile (rows per grid step)
    Bp = ((B8 + BT - 1) // BT) * BT
    n_bt = Bp // BT
    pad_b = Bp - B

    zf = z.astype(jnp.float32)
    xf = x.astype(jnp.float32)
    lf = legal.astype(jnp.float32).reshape(B, N_HEADS * N_OUT)
    if pad_b:
        zf = jnp.pad(zf, ((0, pad_b), (0, 0), (0, 0)))
        xf = jnp.pad(xf, ((0, pad_b), (0, 0)))
        lf = jnp.pad(lf, ((0, pad_b), (0, 0)), constant_values=1.0)
    # Pad legal to 128 lanes with ones so padded lanes stay finite (sliced off below).
    lf = jnp.pad(lf, ((0, 0), (0, NPAD - N_HEADS * N_OUT)), constant_values=1.0)
    # Time-major z: per-timestep slabs are contiguous, sublane-aligned rows of the tile.
    z_tm = jnp.transpose(zf, (1, 0, 2))                               # (T, Bp, Z)

    pin = lambda b, c: (0, 0)
    logits_p, pred_p = pl.pallas_call(
        fused_kernel,
        out_shape=(jax.ShapeDtypeStruct((Bp, NPAD), jnp.float32),
                   jax.ShapeDtypeStruct((Bp, NPAD), jnp.float32)),
        grid_spec=pltpu.PrefetchScalarGridSpec(
            num_scalar_prefetch=0,
            grid=(n_bt, N_CHUNKS),
            in_specs=[
                pl.BlockSpec((T, BT, Z_FEAT), lambda b, c: (0, b, 0)),
                pl.BlockSpec((BT, X_FEAT), lambda b, c: (b, 0)),
                pl.BlockSpec((BT, NPAD), lambda b, c: (b, 0)),
                pl.BlockSpec((Z_FEAT, 4 * HIDDEN), pin),
                pl.BlockSpec((HIDDEN, 4 * HIDDEN), pin),
                pl.BlockSpec((1, 4 * HIDDEN), pin),
                pl.BlockSpec((HIDDEN, DENSE), pin),
                pl.BlockSpec((X_FEAT, DENSE), pin),
                pl.BlockSpec((1, DENSE), pin),
                pl.BlockSpec((DENSE, DENSE), pin),
                pl.BlockSpec((1, DENSE), pin),
                pl.BlockSpec((DENSE, DENSE), pin),
                pl.BlockSpec((1, DENSE), pin),
                pl.BlockSpec((DENSE, DENSE), pin),
                pl.BlockSpec((1, DENSE), pin),
                pl.BlockSpec((DENSE, CHUNK_W), lambda b, c: (0, c)),
                pl.BlockSpec((1, CHUNK_W), lambda b, c: (0, c)),
                pl.BlockSpec((CHUNK_W, NPAD), lambda b, c: (c, 0)),
                pl.BlockSpec((1, NPAD), pin),
            ],
            out_specs=(pl.BlockSpec((BT, NPAD), lambda b, c: (b, 0)),
                       pl.BlockSpec((BT, NPAD), lambda b, c: (b, 0))),
            scratch_shapes=[pltpu.VMEM((BT, DENSE), jnp.float32)]),
        compiler_params=pltpu.CompilerParams(
            dimension_semantics=("parallel", "arbitrary"),
            vmem_limit_bytes=40 * 1024 * 1024),
    )(z_tm, xf, lf,
      params["wih"], params["whh"], params["b_lstm"],
      params["w1h"], params["w1x"], params["b1"],
      params["w2"], params["b2"], params["w3"], params["b3"],
      params["w4"], params["b4"],
      params["wcat"], params["bcat"], params["whead"], params["bhead"])

    logits = logits_p[:B, :N_HEADS * N_OUT].reshape(B, N_HEADS, N_OUT)
    pred = pred_p[:B, :N_HEADS * N_OUT].reshape(B, N_HEADS, N_OUT)
    return logits, pred


# --------------------------------------------------------------------------
# Deterministic synthetic parameters in the packed layout the kernel expects.
# Weights are stored bf16 (halved HBM streaming); biases stay f32.
# --------------------------------------------------------------------------
def init_params(key):
    ks = jax.random.split(key, 18)

    def u(k, shape, fan_in):
        s = 1.0 / float(fan_in) ** 0.5
        return jax.random.uniform(k, shape, jnp.float32, -s, s)

    wih = u(ks[0], (Z_FEAT, 4 * HIDDEN), HIDDEN)              # weight_ih_l0.T
    whh = u(ks[1], (HIDDEN, 4 * HIDDEN), HIDDEN)              # weight_hh_l0.T
    blstm = u(ks[2], (1, 4 * HIDDEN), HIDDEN)                 # b_ih + b_hh combined
    w1h = u(ks[3], (HIDDEN, DENSE), HIDDEN + X_FEAT)          # dense1 split over [h | x]
    w1x = u(ks[4], (X_FEAT, DENSE), HIDDEN + X_FEAT)
    b1 = u(ks[5], (1, DENSE), HIDDEN + X_FEAT)
    w2 = u(ks[6], (DENSE, DENSE), DENSE); b2 = u(ks[7], (1, DENSE), DENSE)
    w3 = u(ks[8], (DENSE, DENSE), DENSE); b3 = u(ks[9], (1, DENSE), DENSE)
    w4 = u(ks[10], (DENSE, DENSE), DENSE); b4 = u(ks[11], (1, DENSE), DENSE)
    wh1 = u(ks[12], (DENSE, HH_COLS), DENSE)                  # 13 head first layers, packed
    bh1 = u(ks[13], (1, HH_COLS), DENSE)
    wsb = u(ks[14], (DENSE, SB_COLS), DENSE)                  # presmall | prebig
    bsb = u(ks[15], (1, SB_COLS), DENSE)
    wh2 = u(ks[16], (N_MLP_HEADS, HEAD_HIDDEN, N_OUT), HEAD_HIDDEN)
    bh2 = u(ks[17], (1, N_MLP_HEADS * N_OUT), HEAD_HIDDEN)

    # First packed layer: [13 head hidden blocks | +wsb | -wsb | zero pad] (relu trick).
    wcat = jnp.zeros((DENSE, NC_PAD), jnp.float32)
    wcat = wcat.at[:, :HH_COLS].set(wh1)
    wcat = wcat.at[:, HH_COLS:HH_COLS + SB_COLS].set(wsb)
    wcat = wcat.at[:, HH_COLS + SB_COLS:HH_COLS + 2 * SB_COLS].set(-wsb)
    bcat = jnp.zeros((1, NC_PAD), jnp.float32)
    bcat = bcat.at[:, :HH_COLS].set(bh1)
    bcat = bcat.at[:, HH_COLS:HH_COLS + SB_COLS].set(bsb)
    bcat = bcat.at[:, HH_COLS + SB_COLS:HH_COLS + 2 * SB_COLS].set(-bsb)

    # Second packed layer: block-diagonal head weights + [I;-I] for presmall/prebig,
    # output lanes padded 75 -> 128.
    whead = jnp.zeros((NC_PAD, NPAD), jnp.float32)
    for i in range(N_MLP_HEADS):
        whead = whead.at[i * HEAD_HIDDEN:(i + 1) * HEAD_HIDDEN,
                         i * N_OUT:(i + 1) * N_OUT].set(wh2[i])
    eye = jnp.eye(SB_COLS, dtype=jnp.float32)
    whead = whead.at[HH_COLS:HH_COLS + SB_COLS,
                     N_MLP_HEADS * N_OUT:N_HEADS * N_OUT].set(eye)
    whead = whead.at[HH_COLS + SB_COLS:HH_COLS + 2 * SB_COLS,
                     N_MLP_HEADS * N_OUT:N_HEADS * N_OUT].set(-eye)
    bhead = jnp.zeros((1, NPAD), jnp.float32)
    bhead = bhead.at[:, :N_MLP_HEADS * N_OUT].set(bh2)

    bf = lambda a: a.astype(jnp.bfloat16)
    return {
        "wih": bf(wih), "whh": bf(whh), "b_lstm": blstm,
        "w1h": bf(w1h), "w1x": bf(w1x), "b1": b1,
        "w2": bf(w2), "b2": b2, "w3": bf(w3), "b3": b3, "w4": bf(w4), "b4": b4,
        "wcat": bf(wcat), "bcat": bcat, "whead": bf(whead), "bhead": bhead,
    }


# --------------------------------------------------------------------------
# Pure-JAX reference (per-head, un-packed math, mirrors the PyTorch module).
# Uses the same bf16-valued weights cast back to f32.
# --------------------------------------------------------------------------
def reference(params, z, x, legal):
    f = lambda w: w.astype(jnp.float32)
    B, T, _ = z.shape
    wih = f(params["wih"]); whh = f(params["whh"])
    h = jnp.zeros((B, HIDDEN), jnp.float32)
    c = jnp.zeros((B, HIDDEN), jnp.float32)
    for t in range(T):
        g = z[:, t, :] @ wih + h @ whh + params["b_lstm"]
        i = jax.nn.sigmoid(g[:, :HIDDEN])
        fg = jax.nn.sigmoid(g[:, HIDDEN:2 * HIDDEN])
        gg = jnp.tanh(g[:, 2 * HIDDEN:3 * HIDDEN])
        o = jax.nn.sigmoid(g[:, 3 * HIDDEN:])
        c = fg * c + i * gg
        h = o * jnp.tanh(c)
    a = jax.nn.relu(h @ f(params["w1h"]) + x @ f(params["w1x"]) + params["b1"])
    a = jax.nn.relu(a @ f(params["w2"]) + params["b2"])
    a = jax.nn.relu(a @ f(params["w3"]) + params["b3"])
    a = jax.nn.relu(a @ f(params["w4"]) + params["b4"])
    wcat = f(params["wcat"]); whead = f(params["whead"])
    outs = []
    for i in range(N_MLP_HEADS):
        hh = jax.nn.relu(a @ wcat[:, i * HEAD_HIDDEN:(i + 1) * HEAD_HIDDEN]
                         + params["bcat"][:, i * HEAD_HIDDEN:(i + 1) * HEAD_HIDDEN])
        outs.append(hh @ whead[i * HEAD_HIDDEN:(i + 1) * HEAD_HIDDEN,
                               i * N_OUT:(i + 1) * N_OUT]
                    + params["bhead"][:, i * N_OUT:(i + 1) * N_OUT])
    sb = a @ wcat[:, HH_COLS:HH_COLS + SB_COLS] + params["bcat"][:, HH_COLS:HH_COLS + SB_COLS]
    outs.append(sb[:, :N_OUT])      # presmall
    outs.append(sb[:, N_OUT:])      # prebig
    raw = jnp.concatenate(outs, axis=-1)
    lf = legal.astype(jnp.float32).reshape(B, N_HEADS * N_OUT)
    logits = (raw - (1.0 - lf) * BIG_L).reshape(B, N_HEADS, N_OUT)
    pred = jax.nn.softmax(logits, axis=-1)
    return logits, pred


if __name__ == "__main__":
    key = jax.random.PRNGKey(0)
    k_par, k_z, k_x, k_leg = jax.random.split(key, 4)

    B, T = 4, 8
    params = init_params(k_par)
    z = jax.random.normal(k_z, (B, T, Z_FEAT), jnp.float32)
    x = jax.random.normal(k_x, (B, X_FEAT), jnp.float32)
    legal = (jax.random.uniform(k_leg, (B, N_HEADS, N_OUT)) > 0.5).astype(jnp.float32)

    logits, pred = farmer_predict(params, z, x, legal)
    jax.block_until_ready((logits, pred))

    ref_logits, ref_pred = reference(params, z, x, legal)
    assert logits.shape == (B, N_HEADS, N_OUT) and pred.shape == (B, N_HEADS, N_OUT)
    assert jnp.allclose(logits, ref_logits, rtol=2e-3, atol=2e-3)
    assert jnp.allclose(pred, ref_pred, rtol=2e-3, atol=2e-3)

    print("KERNEL_OK")
</pallas_src>

<mosaic_0001>
module attributes {stable_mosaic.version = 11 : i64} {
  func.func @fused_kernel(%arg0: i32, %arg1: i32, %arg2: memref<8x8x162xf32, #tpu.memory_space<vmem>>, %arg3: memref<8x430xf32, #tpu.memory_space<vmem>>, %arg4: memref<8x128xf32, #tpu.memory_space<vmem>>, %arg5: memref<162x512xbf16, #tpu.memory_space<vmem>>, %arg6: memref<128x512xbf16, #tpu.memory_space<vmem>>, %arg7: memref<1x512xf32, #tpu.memory_space<vmem>>, %arg8: memref<128x512xbf16, #tpu.memory_space<vmem>>, %arg9: memref<430x512xbf16, #tpu.memory_space<vmem>>, %arg10: memref<1x512xf32, #tpu.memory_space<vmem>>, %arg11: memref<512x512xbf16, #tpu.memory_space<vmem>>, %arg12: memref<1x512xf32, #tpu.memory_space<vmem>>, %arg13: memref<512x512xbf16, #tpu.memory_space<vmem>>, %arg14: memref<1x512xf32, #tpu.memory_space<vmem>>, %arg15: memref<512x512xbf16, #tpu.memory_space<vmem>>, %arg16: memref<1x512xf32, #tpu.memory_space<vmem>>, %arg17: memref<512x896xbf16, #tpu.memory_space<vmem>>, %arg18: memref<1x896xf32, #tpu.memory_space<vmem>>, %arg19: memref<896x128xbf16, #tpu.memory_space<vmem>>, %arg20: memref<1x128xf32, #tpu.memory_space<vmem>>, %arg21: memref<8x128xf32, #tpu.memory_space<vmem>>, %arg22: memref<8x128xf32, #tpu.memory_space<vmem>>, %arg23: memref<8x512xf32, #tpu.memory_space<vmem>>) attributes {dimension_semantics = [#tpu.dimension_semantics<parallel>, #tpu.dimension_semantics<arbitrary>], iteration_bounds = array<i64: 1, 4>, scalar_prefetch = 0 : i64, scratch_operands = 1 : i64, tpu.core_type = #tpu.core_type<tc>, window_params = [{transform_indices = @transform_0, window_bounds = array<i64: 8, 8, 162>}, {transform_indices = @transform_1, window_bounds = array<i64: 8, 430>}, {transform_indices = @transform_2, window_bounds = array<i64: 8, 128>}, {pipeline_mode = #tpu.pipeline_mode<synchronous>, transform_indices = @transform_3, window_bounds = array<i64: 162, 512>}, {pipeline_mode = #tpu.pipeline_mode<synchronous>, transform_indices = @transform_4, window_bounds = array<i64: 128, 512>}, {pipeline_mode = #tpu.pipeline_mode<synchronous>, transform_indices = @transform_5, window_bounds = array<i64: 1, 512>}, {pipeline_mode = #tpu.pipeline_mode<synchronous>, transform_indices = @transform_6, window_bounds = array<i64: 128, 512>}, {pipeline_mode = #tpu.pipeline_mode<synchronous>, transform_indices = @transform_7, window_bounds = array<i64: 430, 512>}, {pipeline_mode = #tpu.pipeline_mode<synchronous>, transform_indices = @transform_8, window_bounds = array<i64: 1, 512>}, {pipeline_mode = #tpu.pipeline_mode<synchronous>, transform_indices = @transform_9, window_bounds = array<i64: 512, 512>}, {pipeline_mode = #tpu.pipeline_mode<synchronous>, transform_indices = @transform_10, window_bounds = array<i64: 1, 512>}, {pipeline_mode = #tpu.pipeline_mode<synchronous>, transform_indices = @transform_11, window_bounds = array<i64: 512, 512>}, {pipeline_mode = #tpu.pipeline_mode<synchronous>, transform_indices = @transform_12, window_bounds = array<i64: 1, 512>}, {pipeline_mode = #tpu.pipeline_mode<synchronous>, transform_indices = @transform_13, window_bounds = array<i64: 512, 512>}, {pipeline_mode = #tpu.pipeline_mode<synchronous>, transform_indices = @transform_14, window_bounds = array<i64: 1, 512>}, {transform_indices = @transform_15, window_bounds = array<i64: 512, 896>}, {transform_indices = @transform_16, window_bounds = array<i64: 1, 896>}, {transform_indices = @transform_17, window_bounds = array<i64: 896, 128>}, {pipeline_mode = #tpu.pipeline_mode<synchronous>, transform_indices = @transform_18, window_bounds = array<i64: 1, 128>}, {transform_indices = @transform_19, window_bounds = array<i64: 8, 128>}, {transform_indices = @transform_20, window_bounds = array<i64: 8, 128>}]} {
    %c0_i32 = arith.constant 0 : i32
    %0 = arith.cmpi eq, %arg1, %c0_i32 : i32
    %1 = arith.extui %0 : i1 to i32
    %c0_i32_0 = arith.constant 0 : i32
    %2 = arith.cmpi ne, %1, %c0_i32_0 : i32
    scf.if %2 {
      %c0_15 = arith.constant 0 : index
      %c0_16 = arith.constant 0 : index
      %24 = vector.load %arg5[%c0_15, %c0_16] : memref<162x512xbf16, #tpu.memory_space<vmem>>, vector<162x512xbf16>
      %25 = arith.extf %24 : vector<162x512xbf16> to vector<162x512xf32>
      %c0_17 = arith.constant 0 : index
      %c0_18 = arith.constant 0 : index
      %26 = vector.load %arg6[%c0_17, %c0_18] : memref<128x512xbf16, #tpu.memory_space<vmem>>, vector<128x512xbf16>
      %27 = arith.extf %26 : vector<128x512xbf16> to vector<128x512xf32>
      %c0_19 = arith.constant 0 : index
      %c0_20 = arith.constant 0 : index
      %c0_21 = arith.constant 0 : index
      %28 = vector.load %arg2[%c0_19, %c0_20, %c0_21] : memref<8x8x162xf32, #tpu.memory_space<vmem>>, vector<1x8x162xf32>
      %29 = vector.shape_cast %28 : vector<1x8x162xf32> to vector<8x162xf32>
      %c1 = arith.constant 1 : index
      %c0_22 = arith.constant 0 : index
      %c0_23 = arith.constant 0 : index
      %30 = vector.load %arg2[%c1, %c0_22, %c0_23] : memref<8x8x162xf32, #tpu.memory_space<vmem>>, vector<1x8x162xf32>
      %31 = vector.shape_cast %30 : vector<1x8x162xf32> to vector<8x162xf32>
      %c2 = arith.constant 2 : index
      %c0_24 = arith.constant 0 : index
      %c0_25 = arith.constant 0 : index
      %32 = vector.load %arg2[%c2, %c0_24, %c0_25] : memref<8x8x162xf32, #tpu.memory_space<vmem>>, vector<1x8x162xf32>
      %33 = vector.shape_cast %32 : vector<1x8x162xf32> to vector<8x162xf32>
      %c3 = arith.constant 3 : index
      %c0_26 = arith.constant 0 : index
      %c0_27 = arith.constant 0 : index
      %34 = vector.load %arg2[%c3, %c0_26, %c0_27] : memref<8x8x162xf32, #tpu.memory_space<vmem>>, vector<1x8x162xf32>
      %35 = vector.shape_cast %34 : vector<1x8x162xf32> to vector<8x162xf32>
      %c4 = arith.constant 4 : index
      %c0_28 = arith.constant 0 : index
      %c0_29 = arith.constant 0 : index
      %36 = vector.load %arg2[%c4, %c0_28, %c0_29] : memref<8x8x162xf32, #tpu.memory_space<vmem>>, vector<1x8x162xf32>
      %37 = vector.shape_cast %36 : vector<1x8x162xf32> to vector<8x162xf32>
      %c5 = arith.constant 5 : index
      %c0_30 = arith.constant 0 : index
      %c0_31 = arith.constant 0 : index
      %38 = vector.load %arg2[%c5, %c0_30, %c0_31] : memref<8x8x162xf32, #tpu.memory_space<vmem>>, vector<1x8x162xf32>
      %39 = vector.shape_cast %38 : vector<1x8x162xf32> to vector<8x162xf32>
      %c6 = arith.constant 6 : index
      %c0_32 = arith.constant 0 : index
      %c0_33 = arith.constant 0 : index
      %40 = vector.load %arg2[%c6, %c0_32, %c0_33] : memref<8x8x162xf32, #tpu.memory_space<vmem>>, vector<1x8x162xf32>
      %41 = vector.shape_cast %40 : vector<1x8x162xf32> to vector<8x162xf32>
      %c7 = arith.constant 7 : index
      %c0_34 = arith.constant 0 : index
      %c0_35 = arith.constant 0 : index
      %42 = vector.load %arg2[%c7, %c0_34, %c0_35] : memref<8x8x162xf32, #tpu.memory_space<vmem>>, vector<1x8x162xf32>
      %43 = vector.shape_cast %42 : vector<1x8x162xf32> to vector<8x162xf32>
      %44 = tpu.concatenate %29, %31, %33, %35, %37, %39, %41, %43 in 0 : vector<8x162xf32>, vector<8x162xf32>, vector<8x162xf32>, vector<8x162xf32>, vector<8x162xf32>, vector<8x162xf32>, vector<8x162xf32>, vector<8x162xf32> -> vector<64x162xf32>
      %cst_36 = arith.constant dense<0.000000e+00> : vector<64x512xf32>
      %45 = tpu.matmul %44, %25, %cst_36 {dimension_numbers = #tpu.dot_dimension_numbers<[1], [0], [0], [1], [0, 0, 1, 1], [], []>} : vector<64x162xf32>, vector<162x512xf32>, vector<64x512xf32> -> vector<64x512xf32>
      %c0_37 = arith.constant 0 : index
      %c0_38 = arith.constant 0 : index
      %46 = vector.load %arg7[%c0_37, %c0_38] : memref<1x512xf32, #tpu.memory_space<vmem>>, vector<1x512xf32>
      %47 = vector.broadcast %46 : vector<1x512xf32> to vector<64x512xf32>
      %48 = arith.addf %45, %47 : vector<64x512xf32>
      %cst_39 = arith.constant 0.000000e+00 : f32
      %49 = vector.broadcast %cst_39 : f32 to vector<8x128xf32>
      %cst_40 = arith.constant 0.000000e+00 : f32
      %50 = vector.broadcast %cst_40 : f32 to vector<8x128xf32>
      %51 = vector.extract_strided_slice %48 {offsets = [0, 0], sizes = [8, 512], strides = [1, 1]} : vector<64x512xf32> to vector<8x512xf32>
      %cst_41 = arith.constant dense<0.000000e+00> : vector<8x512xf32>
      %52 = tpu.matmul %49, %27, %cst_41 {dimension_numbers = #tpu.dot_dimension_numbers<[1], [0], [0], [1], [0, 0, 1, 1], [], []>} : vector<8x128xf32>, vector<128x512xf32>, vector<8x512xf32> -> vector<8x512xf32>
      %53 = arith.addf %51, %52 : vector<8x512xf32>
      %54 = vector.extract_strided_slice %53 {offsets = [0, 0], sizes = [8, 256], strides = [1, 1]} : vector<8x512xf32> to vector<8x256xf32>
      %55 = arith.negf %54 : vector<8x256xf32>
      %56 = math.exp %55 : vector<8x256xf32>
      %cst_42 = arith.constant 1.000000e+00 : f32
      %57 = vector.broadcast %cst_42 : f32 to vector<8x256xf32>
      %58 = arith.addf %57, %56 : vector<8x256xf32>
      %59 = arith.divf %57, %58 : vector<8x256xf32>
      %60 = vector.extract_strided_slice %59 {offsets = [0, 0], sizes = [8, 128], strides = [1, 1]} : vector<8x256xf32> to vector<8x128xf32>
      %61 = vector.extract_strided_slice %59 {offsets = [0, 128], sizes = [8, 128], strides = [1, 1]} : vector<8x256xf32> to vector<8x128xf32>
      %62 = vector.extract_strided_slice %53 {offsets = [0, 256], sizes = [8, 128], strides = [1, 1]} : vector<8x512xf32> to vector<8x128xf32>
      %63 = math.tanh %62 : vector<8x128xf32>
      %64 = vector.extract_strided_slice %53 {offsets = [0, 384], sizes = [8, 128], strides = [1, 1]} : vector<8x512xf32> to vector<8x128xf32>
      %65 = arith.negf %64 : vector<8x128xf32>
      %66 = math.exp %65 : vector<8x128xf32>
      %cst_43 = arith.constant 1.000000e+00 : f32
      %67 = vector.broadcast %cst_43 : f32 to vector<8x128xf32>
      %68 = arith.addf %67, %66 : vector<8x128xf32>
      %69 = arith.divf %67, %68 : vector<8x128xf32>
      %70 = arith.mulf %61, %50 : vector<8x128xf32>
      %71 = arith.mulf %60, %63 : vector<8x128xf32>
      %72 = arith.addf %70, %71 : vector<8x128xf32>
      %73 = math.tanh %72 : vector<8x128xf32>
      %74 = arith.mulf %69, %73 : vector<8x128xf32>
      %75 = vector.extract_strided_slice %48 {offsets = [8, 0], sizes = [8, 512], strides = [1, 1]} : vector<64x512xf32> to vector<8x512xf32>
      %cst_44 = arith.constant dense<0.000000e+00> : vector<8x512xf32>
      %76 = tpu.matmul %74, %27, %cst_44 {dimension_numbers = #tpu.dot_dimension_numbers<[1], [0], [0], [1], [0, 0, 1, 1], [], []>} : vector<8x128xf32>, vector<128x512xf32>, vector<8x512xf32> -> vector<8x512xf32>
      %77 = arith.addf %75, %76 : vector<8x512xf32>
      %78 = vector.extract_strided_slice %77 {offsets = [0, 0], sizes = [8, 256], strides = [1, 1]} : vector<8x512xf32> to vector<8x256xf32>
      %79 = arith.negf %78 : vector<8x256xf32>
      %80 = math.exp %79 : vector<8x256xf32>
      %cst_45 = arith.constant 1.000000e+00 : f32
      %81 = vector.broadcast %cst_45 : f32 to vector<8x256xf32>
      %82 = arith.addf %81, %80 : vector<8x256xf32>
      %83 = arith.divf %81, %82 : vector<8x256xf32>
      %84 = vector.extract_strided_slice %83 {offsets = [0, 0], sizes = [8, 128], strides = [1, 1]} : vector<8x256xf32> to vector<8x128xf32>
      %85 = vector.extract_strided_slice %83 {offsets = [0, 128], sizes = [8, 128], strides = [1, 1]} : vector<8x256xf32> to vector<8x128xf32>
      %86 = vector.extract_strided_slice %77 {offsets = [0, 256], sizes = [8, 128], strides = [1, 1]} : vector<8x512xf32> to vector<8x128xf32>
      %87 = math.tanh %86 : vector<8x128xf32>
      %88 = vector.extract_strided_slice %77 {offsets = [0, 384], sizes = [8, 128], strides = [1, 1]} : vector<8x512xf32> to vector<8x128xf32>
      %89 = arith.negf %88 : vector<8x128xf32>
      %90 = math.exp %89 : vector<8x128xf32>
      %cst_46 = arith.constant 1.000000e+00 : f32
      %91 = vector.broadcast %cst_46 : f32 to vector<8x128xf32>
      %92 = arith.addf %91, %90 : vector<8x128xf32>
      %93 = arith.divf %91, %92 : vector<8x128xf32>
      %94 = arith.mulf %85, %72 : vector<8x128xf32>
      %95 = arith.mulf %84, %87 : vector<8x128xf32>
      %96 = arith.addf %94, %95 : vector<8x128xf32>
      %97 = math.tanh %96 : vector<8x128xf32>
      %98 = arith.mulf %93, %97 : vector<8x128xf32>
      %99 = vector.extract_strided_slice %48 {offsets = [16, 0], sizes = [8, 512], strides = [1, 1]} : vector<64x512xf32> to vector<8x512xf32>
      %cst_47 = arith.constant dense<0.000000e+00> : vector<8x512xf32>
      %100 = tpu.matmul %98, %27, %cst_47 {dimension_numbers = #tpu.dot_dimension_numbers<[1], [0], [0], [1], [0, 0, 1, 1], [], []>} : vector<8x128xf32>, vector<128x512xf32>, vector<8x512xf32> -> vector<8x512xf32>
      %101 = arith.addf %99, %100 : vector<8x512xf32>
      %102 = vector.extract_strided_slice %101 {offsets = [0, 0], sizes = [8, 256], strides = [1, 1]} : vector<8x512xf32> to vector<8x256xf32>
      %103 = arith.negf %102 : vector<8x256xf32>
      %104 = math.exp %103 : vector<8x256xf32>
      %cst_48 = arith.constant 1.000000e+00 : f32
      %105 = vector.broadcast %cst_48 : f32 to vector<8x256xf32>
      %106 = arith.addf %105, %104 : vector<8x256xf32>
      %107 = arith.divf %105, %106 : vector<8x256xf32>
      %108 = vector.extract_strided_slice %107 {offsets = [0, 0], sizes = [8, 128], strides = [1, 1]} : vector<8x256xf32> to vector<8x128xf32>
      %109 = vector.extract_strided_slice %107 {offsets = [0, 128], sizes = [8, 128], strides = [1, 1]} : vector<8x256xf32> to vector<8x128xf32>
      %110 = vector.extract_strided_slice %101 {offsets = [0, 256], sizes = [8, 128], strides = [1, 1]} : vector<8x512xf32> to vector<8x128xf32>
      %111 = math.tanh %110 : vector<8x128xf32>
      %112 = vector.extract_strided_slice %101 {offsets = [0, 384], sizes = [8, 128], strides = [1, 1]} : vector<8x512xf32> to vector<8x128xf32>
      %113 = arith.negf %112 : vector<8x128xf32>
      %114 = math.exp %113 : vector<8x128xf32>
      %cst_49 = arith.constant 1.000000e+00 : f32
      %115 = vector.broadcast %cst_49 : f32 to vector<8x128xf32>
      %116 = arith.addf %115, %114 : vector<8x128xf32>
      %117 = arith.divf %115, %116 : vector<8x128xf32>
      %118 = arith.mulf %109, %96 : vector<8x128xf32>
      %119 = arith.mulf %108, %111 : vector<8x128xf32>
      %120 = arith.addf %118, %119 : vector<8x128xf32>
      %121 = math.tanh %120 : vector<8x128xf32>
      %122 = arith.mulf %117, %121 : vector<8x128xf32>
      %123 = vector.extract_strided_slice %48 {offsets = [24, 0], sizes = [8, 512], strides = [1, 1]} : vector<64x512xf32> to vector<8x512xf32>
      %cst_50 = arith.constant dense<0.000000e+00> : vector<8x512xf32>
      %124 = tpu.matmul %122, %27, %cst_50 {dimension_numbers = #tpu.dot_dimension_numbers<[1], [0], [0], [1], [0, 0, 1, 1], [], []>} : vector<8x128xf32>, vector<128x512xf32>, vector<8x512xf32> -> vector<8x512xf32>
      %125 = arith.addf %123, %124 : vector<8x512xf32>
      %126 = vector.extract_strided_slice %125 {offsets = [0, 0], sizes = [8, 256], strides = [1, 1]} : vector<8x512xf32> to vector<8x256xf32>
      %127 = arith.negf %126 : vector<8x256xf32>
      %128 = math.exp %127 : vector<8x256xf32>
      %cst_51 = arith.constant 1.000000e+00 : f32
      %129 = vector.broadcast %cst_51 : f32 to vector<8x256xf32>
      %130 = arith.addf %129, %128 : vector<8x256xf32>
      %131 = arith.divf %129, %130 : vector<8x256xf32>
      %132 = vector.extract_strided_slice %131 {offsets = [0, 0], sizes = [8, 128], strides = [1, 1]} : vector<8x256xf32> to vector<8x128xf32>
      %133 = vector.extract_strided_slice %131 {offsets = [0, 128], sizes = [8, 128], strides = [1, 1]} : vector<8x256xf32> to vector<8x128xf32>
      %134 = vector.extract_strided_slice %125 {offsets = [0, 256], sizes = [8, 128], strides = [1, 1]} : vector<8x512xf32> to vector<8x128xf32>
      %135 = math.tanh %134 : vector<8x128xf32>
      %136 = vector.extract_strided_slice %125 {offsets = [0, 384], sizes = [8, 128], strides = [1, 1]} : vector<8x512xf32> to vector<8x128xf32>
      %137 = arith.negf %136 : vector<8x128xf32>
      %138 = math.exp %137 : vector<8x128xf32>
      %cst_52 = arith.constant 1.000000e+00 : f32
      %139 = vector.broadcast %cst_52 : f32 to vector<8x128xf32>
      %140 = arith.addf %139, %138 : vector<8x128xf32>
      %141 = arith.divf %139, %140 : vector<8x128xf32>
      %142 = arith.mulf %133, %120 : vector<8x128xf32>
      %143 = arith.mulf %132, %135 : vector<8x128xf32>
      %144 = arith.addf %142, %143 : vector<8x128xf32>
      %145 = math.tanh %144 : vector<8x128xf32>
      %146 = arith.mulf %141, %145 : vector<8x128xf32>
      %147 = vector.extract_strided_slice %48 {offsets = [32, 0], sizes = [8, 512], strides = [1, 1]} : vector<64x512xf32> to vector<8x512xf32>
      %cst_53 = arith.constant dense<0.000000e+00> : vector<8x512xf32>
      %148 = tpu.matmul %146, %27, %cst_53 {dimension_numbers = #tpu.dot_dimension_numbers<[1], [0], [0], [1], [0, 0, 1, 1], [], []>} : vector<8x128xf32>, vector<128x512xf32>, vector<8x512xf32> -> vector<8x512xf32>
      %149 = arith.addf %147, %148 : vector<8x512xf32>
      %150 = vector.extract_strided_slice %149 {offsets = [0, 0], sizes = [8, 256], strides = [1, 1]} : vector<8x512xf32> to vector<8x256xf32>
      %151 = arith.negf %150 : vector<8x256xf32>
      %152 = math.exp %151 : vector<8x256xf32>
      %cst_54 = arith.constant 1.000000e+00 : f32
      %153 = vector.broadcast %cst_54 : f32 to vector<8x256xf32>
      %154 = arith.addf %153, %152 : vector<8x256xf32>
      %155 = arith.divf %153, %154 : vector<8x256xf32>
      %156 = vector.extract_strided_slice %155 {offsets = [0, 0], sizes = [8, 128], strides = [1, 1]} : vector<8x256xf32> to vector<8x128xf32>
      %157 = vector.extract_strided_slice %155 {offsets = [0, 128], sizes = [8, 128], strides = [1, 1]} : vector<8x256xf32> to vector<8x128xf32>
      %158 = vector.extract_strided_slice %149 {offsets = [0, 256], sizes = [8, 128], strides = [1, 1]} : vector<8x512xf32> to vector<8x128xf32>
      %159 = math.tanh %158 : vector<8x128xf32>
      %160 = vector.extract_strided_slice %149 {offsets = [0, 384], sizes = [8, 128], strides = [1, 1]} : vector<8x512xf32> to vector<8x128xf32>
      %161 = arith.negf %160 : vector<8x128xf32>
      %162 = math.exp %161 : vector<8x128xf32>
      %cst_55 = arith.constant 1.000000e+00 : f32
      %163 = vector.broadcast %cst_55 : f32 to vector<8x128xf32>
      %164 = arith.addf %163, %162 : vector<8x128xf32>
      %165 = arith.divf %163, %164 : vector<8x128xf32>
      %166 = arith.mulf %157, %144 : vector<8x128xf32>
      %167 = arith.mulf %156, %159 : vector<8x128xf32>
      %168 = arith.addf %166, %167 : vector<8x128xf32>
      %169 = math.tanh %168 : vector<8x128xf32>
      %170 = arith.mulf %165, %169 : vector<8x128xf32>
      %171 = vector.extract_strided_slice %48 {offsets = [40, 0], sizes = [8, 512], strides = [1, 1]} : vector<64x512xf32> to vector<8x512xf32>
      %cst_56 = arith.constant dense<0.000000e+00> : vector<8x512xf32>
      %172 = tpu.matmul %170, %27, %cst_56 {dimension_numbers = #tpu.dot_dimension_numbers<[1], [0], [0], [1], [0, 0, 1, 1], [], []>} : vector<8x128xf32>, vector<128x512xf32>, vector<8x512xf32> -> vector<8x512xf32>
      %173 = arith.addf %171, %172 : vector<8x512xf32>
      %174 = vector.extract_strided_slice %173 {offsets = [0, 0], sizes = [8, 256], strides = [1, 1]} : vector<8x512xf32> to vector<8x256xf32>
      %175 = arith.negf %174 : vector<8x256xf32>
      %176 = math.exp %175 : vector<8x256xf32>
      %cst_57 = arith.constant 1.000000e+00 : f32
      %177 = vector.broadcast %cst_57 : f32 to vector<8x256xf32>
      %178 = arith.addf %177, %176 : vector<8x256xf32>
      %179 = arith.divf %177, %178 : vector<8x256xf32>
      %180 = vector.extract_strided_slice %179 {offsets = [0, 0], sizes = [8, 128], strides = [1, 1]} : vector<8x256xf32> to vector<8x128xf32>
      %181 = vector.extract_strided_slice %179 {offsets = [0, 128], sizes = [8, 128], strides = [1, 1]} : vector<8x256xf32> to vector<8x128xf32>
      %182 = vector.extract_strided_slice %173 {offsets = [0, 256], sizes = [8, 128], strides = [1, 1]} : vector<8x512xf32> to vector<8x128xf32>
      %183 = math.tanh %182 : vector<8x128xf32>
      %184 = vector.extract_strided_slice %173 {offsets = [0, 384], sizes = [8, 128], strides = [1, 1]} : vector<8x512xf32> to vector<8x128xf32>
      %185 = arith.negf %184 : vector<8x128xf32>
      %186 = math.exp %185 : vector<8x128xf32>
      %cst_58 = arith.constant 1.000000e+00 : f32
      %187 = vector.broadcast %cst_58 : f32 to vector<8x128xf32>
      %188 = arith.addf %187, %186 : vector<8x128xf32>
      %189 = arith.divf %187, %188 : vector<8x128xf32>
      %190 = arith.mulf %181, %168 : vector<8x128xf32>
      %191 = arith.mulf %180, %183 : vector<8x128xf32>
      %192 = arith.addf %190, %191 : vector<8x128xf32>
      %193 = math.tanh %192 : vector<8x128xf32>
      %194 = arith.mulf %189, %193 : vector<8x128xf32>
      %195 = vector.extract_strided_slice %48 {offsets = [48, 0], sizes = [8, 512], strides = [1, 1]} : vector<64x512xf32> to vector<8x512xf32>
      %cst_59 = arith.constant dense<0.000000e+00> : vector<8x512xf32>
      %196 = tpu.matmul %194, %27, %cst_59 {dimension_numbers = #tpu.dot_dimension_numbers<[1], [0], [0], [1], [0, 0, 1, 1], [], []>} : vector<8x128xf32>, vector<128x512xf32>, vector<8x512xf32> -> vector<8x512xf32>
      %197 = arith.addf %195, %196 : vector<8x512xf32>
      %198 = vector.extract_strided_slice %197 {offsets = [0, 0], sizes = [8, 256], strides = [1, 1]} : vector<8x512xf32> to vector<8x256xf32>
      %199 = arith.negf %198 : vector<8x256xf32>
      %200 = math.exp %199 : vector<8x256xf32>
      %cst_60 = arith.constant 1.000000e+00 : f32
      %201 = vector.broadcast %cst_60 : f32 to vector<8x256xf32>
      %202 = arith.addf %201, %200 : vector<8x256xf32>
      %203 = arith.divf %201, %202 : vector<8x256xf32>
      %204 = vector.extract_strided_slice %203 {offsets = [0, 0], sizes = [8, 128], strides = [1, 1]} : vector<8x256xf32> to vector<8x128xf32>
      %205 = vector.extract_strided_slice %203 {offsets = [0, 128], sizes = [8, 128], strides = [1, 1]} : vector<8x256xf32> to vector<8x128xf32>
      %206 = vector.extract_strided_slice %197 {offsets = [0, 256], sizes = [8, 128], strides = [1, 1]} : vector<8x512xf32> to vector<8x128xf32>
      %207 = math.tanh %206 : vector<8x128xf32>
      %208 = vector.extract_strided_slice %197 {offsets = [0, 384], sizes = [8, 128], strides = [1, 1]} : vector<8x512xf32> to vector<8x128xf32>
      %209 = arith.negf %208 : vector<8x128xf32>
      %210 = math.exp %209 : vector<8x128xf32>
      %cst_61 = arith.constant 1.000000e+00 : f32
      %211 = vector.broadcast %cst_61 : f32 to vector<8x128xf32>
      %212 = arith.addf %211, %210 : vector<8x128xf32>
      %213 = arith.divf %211, %212 : vector<8x128xf32>
      %214 = arith.mulf %205, %192 : vector<8x128xf32>
      %215 = arith.mulf %204, %207 : vector<8x128xf32>
      %216 = arith.addf %214, %215 : vector<8x128xf32>
      %217 = math.tanh %216 : vector<8x128xf32>
      %218 = arith.mulf %213, %217 : vector<8x128xf32>
      %219 = vector.extract_strided_slice %48 {offsets = [56, 0], sizes = [8, 512], strides = [1, 1]} : vector<64x512xf32> to vector<8x512xf32>
      %cst_62 = arith.constant dense<0.000000e+00> : vector<8x512xf32>
      %220 = tpu.matmul %218, %27, %cst_62 {dimension_numbers = #tpu.dot_dimension_numbers<[1], [0], [0], [1], [0, 0, 1, 1], [], []>} : vector<8x128xf32>, vector<128x512xf32>, vector<8x512xf32> -> vector<8x512xf32>
      %221 = arith.addf %219, %220 : vector<8x512xf32>
      %222 = vector.extract_strided_slice %221 {offsets = [0, 0], sizes = [8, 256], strides = [1, 1]} : vector<8x512xf32> to vector<8x256xf32>
      %223 = arith.negf %222 : vector<8x256xf32>
      %224 = math.exp %223 : vector<8x256xf32>
      %cst_63 = arith.constant 1.000000e+00 : f32
      %225 = vector.broadcast %cst_63 : f32 to vector<8x256xf32>
      %226 = arith.addf %225, %224 : vector<8x256xf32>
      %227 = arith.divf %225, %226 : vector<8x256xf32>
      %228 = vector.extract_strided_slice %227 {offsets = [0, 0], sizes = [8, 128], strides = [1, 1]} : vector<8x256xf32> to vector<8x128xf32>
      %229 = vector.extract_strided_slice %227 {offsets = [0, 128], sizes = [8, 128], strides = [1, 1]} : vector<8x256xf32> to vector<8x128xf32>
      %230 = vector.extract_strided_slice %221 {offsets = [0, 256], sizes = [8, 128], strides = [1, 1]} : vector<8x512xf32> to vector<8x128xf32>
      %231 = math.tanh %230 : vector<8x128xf32>
      %232 = vector.extract_strided_slice %221 {offsets = [0, 384], sizes = [8, 128], strides = [1, 1]} : vector<8x512xf32> to vector<8x128xf32>
      %233 = arith.negf %232 : vector<8x128xf32>
      %234 = math.exp %233 : vector<8x128xf32>
      %cst_64 = arith.constant 1.000000e+00 : f32
      %235 = vector.broadcast %cst_64 : f32 to vector<8x128xf32>
      %236 = arith.addf %235, %234 : vector<8x128xf32>
      %237 = arith.divf %235, %236 : vector<8x128xf32>
      %238 = arith.mulf %229, %216 : vector<8x128xf32>
      %239 = arith.mulf %228, %231 : vector<8x128xf32>
      %240 = arith.addf %238, %239 : vector<8x128xf32>
      %241 = math.tanh %240 : vector<8x128xf32>
      %242 = arith.mulf %237, %241 : vector<8x128xf32>
      %c0_65 = arith.constant 0 : index
      %c0_66 = arith.constant 0 : index
      %243 = vector.load %arg8[%c0_65, %c0_66] : memref<128x512xbf16, #tpu.memory_space<vmem>>, vector<128x512xbf16>
      %244 = arith.extf %243 : vector<128x512xbf16> to vector<128x512xf32>
      %cst_67 = arith.constant dense<0.000000e+00> : vector<8x512xf32>
      %245 = tpu.matmul %242, %244, %cst_67 {dimension_numbers = #tpu.dot_dimension_numbers<[1], [0], [0], [1], [0, 0, 1, 1], [], []>} : vector<8x128xf32>, vector<128x512xf32>, vector<8x512xf32> -> vector<8x512xf32>
      %c0_68 = arith.constant 0 : index
      %c0_69 = arith.constant 0 : index
      %246 = vector.load %arg3[%c0_68, %c0_69] : memref<8x430xf32, #tpu.memory_space<vmem>>, vector<8x430xf32>
      %c0_70 = arith.constant 0 : index
      %c0_71 = arith.constant 0 : index
      %247 = vector.load %arg9[%c0_70, %c0_71] : memref<430x512xbf16, #tpu.memory_space<vmem>>, vector<430x512xbf16>
      %248 = arith.extf %247 : vector<430x512xbf16> to vector<430x512xf32>
      %cst_72 = arith.constant dense<0.000000e+00> : vector<8x512xf32>
      %249 = tpu.matmul %246, %248, %cst_72 {dimension_numbers = #tpu.dot_dimension_numbers<[1], [0], [0], [1], [0, 0, 1, 1], [], []>} : vector<8x430xf32>, vector<430x512xf32>, vector<8x512xf32> -> vector<8x512xf32>
      %250 = arith.addf %245, %249 : vector<8x512xf32>
      %c0_73 = arith.constant 0 : index
      %c0_74 = arith.constant 0 : index
      %251 = vector.load %arg10[%c0_73, %c0_74] : memref<1x512xf32, #tpu.memory_space<vmem>>, vector<1x512xf32>
      %252 = vector.broadcast %251 : vector<1x512xf32> to vector<8x512xf32>
      %253 = arith.addf %250, %252 : vector<8x512xf32>
      %cst_75 = arith.constant 0.000000e+00 : f32
      %254 = vector.broadcast %cst_75 : f32 to vector<8x512xf32>
      %255 = arith.maximumf %253, %254 : vector<8x512xf32>
      %c0_76 = arith.constant 0 : index
      %c0_77 = arith.constant 0 : index
      %256 = vector.load %arg11[%c0_76, %c0_77] : memref<512x512xbf16, #tpu.memory_space<vmem>>, vector<512x512xbf16>
      %257 = arith.extf %256 : vector<512x512xbf16> to vector<512x512xf32>
      %cst_78 = arith.constant dense<0.000000e+00> : vector<8x512xf32>
      %258 = tpu.matmul %255, %257, %cst_78 {dimension_numbers = #tpu.dot_dimension_numbers<[1], [0], [0], [1], [0, 0, 1, 1], [], []>} : vector<8x512xf32>, vector<512x512xf32>, vector<8x512xf32> -> vector<8x512xf32>
      %c0_79 = arith.constant 0 : index
      %c0_80 = arith.constant 0 : index
      %259 = vector.load %arg12[%c0_79, %c0_80] : memref<1x512xf32, #tpu.memory_space<vmem>>, vector<1x512xf32>
      %260 = vector.broadcast %259 : vector<1x512xf32> to vector<8x512xf32>
      %261 = arith.addf %258, %260 : vector<8x512xf32>
      %cst_81 = arith.constant 0.000000e+00 : f32
      %262 = vector.broadcast %cst_81 : f32 to vector<8x512xf32>
      %263 = arith.maximumf %261, %262 : vector<8x512xf32>
      %c0_82 = arith.constant 0 : index
      %c0_83 = arith.constant 0 : index
      %264 = vector.load %arg13[%c0_82, %c0_83] : memref<512x512xbf16, #tpu.memory_space<vmem>>, vector<512x512xbf16>
      %265 = arith.extf %264 : vector<512x512xbf16> to vector<512x512xf32>
      %cst_84 = arith.constant dense<0.000000e+00> : vector<8x512xf32>
      %266 = tpu.matmul %263, %265, %cst_84 {dimension_numbers = #tpu.dot_dimension_numbers<[1], [0], [0], [1], [0, 0, 1, 1], [], []>} : vector<8x512xf32>, vector<512x512xf32>, vector<8x512xf32> -> vector<8x512xf32>
      %c0_85 = arith.constant 0 : index
      %c0_86 = arith.constant 0 : index
      %267 = vector.load %arg14[%c0_85, %c0_86] : memref<1x512xf32, #tpu.memory_space<vmem>>, vector<1x512xf32>
      %268 = vector.broadcast %267 : vector<1x512xf32> to vector<8x512xf32>
      %269 = arith.addf %266, %268 : vector<8x512xf32>
      %cst_87 = arith.constant 0.000000e+00 : f32
      %270 = vector.broadcast %cst_87 : f32 to vector<8x512xf32>
      %271 = arith.maximumf %269, %270 : vector<8x512xf32>
      %c0_88 = arith.constant 0 : index
      %c0_89 = arith.constant 0 : index
      %272 = vector.load %arg15[%c0_88, %c0_89] : memref<512x512xbf16, #tpu.memory_space<vmem>>, vector<512x512xbf16>
      %273 = arith.extf %272 : vector<512x512xbf16> to vector<512x512xf32>
      %cst_90 = arith.constant dense<0.000000e+00> : vector<8x512xf32>
      %274 = tpu.matmul %271, %273, %cst_90 {dimension_numbers = #tpu.dot_dimension_numbers<[1], [0], [0], [1], [0, 0, 1, 1], [], []>} : vector<8x512xf32>, vector<512x512xf32>, vector<8x512xf32> -> vector<8x512xf32>
      %c0_91 = arith.constant 0 : index
      %c0_92 = arith.constant 0 : index
      %275 = vector.load %arg16[%c0_91, %c0_92] : memref<1x512xf32, #tpu.memory_space<vmem>>, vector<1x512xf32>
      %276 = vector.broadcast %275 : vector<1x512xf32> to vector<8x512xf32>
      %277 = arith.addf %274, %276 : vector<8x512xf32>
      %cst_93 = arith.constant 0.000000e+00 : f32
      %278 = vector.broadcast %cst_93 : f32 to vector<8x512xf32>
      %279 = arith.maximumf %277, %278 : vector<8x512xf32>
      %c0_94 = arith.constant 0 : index
      %c0_95 = arith.constant 0 : index
      %280 = vector.load %arg23[%c0_94, %c0_95] : memref<8x512xf32, #tpu.memory_space<vmem>>, vector<8x512xf32>
      tpu.vector_store %arg23[%c0_94, %c0_95], %279 {strides = array<i32>} : memref<8x512xf32, #tpu.memory_space<vmem>>, vector<8x512xf32>,
    } else {
    }
    %c0 = arith.constant 0 : index
    %c0_1 = arith.constant 0 : index
    %3 = vector.load %arg23[%c0, %c0_1] : memref<8x512xf32, #tpu.memory_space<vmem>>, vector<8x512xf32>
    %c0_2 = arith.constant 0 : index
    %c0_3 = arith.constant 0 : index
    %4 = vector.load %arg17[%c0_2, %c0_3] : memref<512x896xbf16, #tpu.memory_space<vmem>>, vector<512x896xbf16>
    %5 = arith.extf %4 : vector<512x896xbf16> to vector<512x896xf32>
    %cst = arith.constant dense<0.000000e+00> : vector<8x896xf32>
    %6 = tpu.matmul %3, %5, %cst {dimension_numbers = #tpu.dot_dimension_numbers<[1], [0], [0], [1], [0, 0, 1, 1], [], []>} : vector<8x512xf32>, vector<512x896xf32>, vector<8x896xf32> -> vector<8x896xf32>
    %c0_4 = arith.constant 0 : index
    %c0_5 = arith.constant 0 : index
    %7 = vector.load %arg18[%c0_4, %c0_5] : memref<1x896xf32, #tpu.memory_space<vmem>>, vector<1x896xf32>
    %8 = vector.broadcast %7 : vector<1x896xf32> to vector<8x896xf32>
    %9 = arith.addf %6, %8 : vector<8x896xf32>
    %cst_6 = arith.constant 0.000000e+00 : f32
    %10 = vector.broadcast %cst_6 : f32 to vector<8x896xf32>
    %11 = arith.maximumf %9, %10 : vector<8x896xf32>
    %c0_7 = arith.constant 0 : index
    %c0_8 = arith.constant 0 : index
    %12 = vector.load %arg19[%c0_7, %c0_8] : memref<896x128xbf16, #tpu.memory_space<vmem>>, vector<896x128xbf16>
    %13 = arith.extf %12 : vector<896x128xbf16> to vector<896x128xf32>
    %cst_9 = arith.constant dense<0.000000e+00> : vector<8x128xf32>
    %14 = tpu.matmul %11, %13, %cst_9 {dimension_numbers = #tpu.dot_dimension_numbers<[1], [0], [0], [1], [0, 0, 1, 1], [], []>} : vector<8x896xf32>, vector<896x128xf32>, vector<8x128xf32> -> vector<8x128xf32>
    %c0_i32_10 = arith.constant 0 : i32
    %15 = arith.cmpi eq, %arg1, %c0_i32_10 : i32
    %16 = arith.extui %15 : i1 to i32
    %c0_i32_11 = arith.constant 0 : i32
    %17 = arith.cmpi ne, %16, %c0_i32_11 : i32
    scf.if %17 {
      %c0_15 = arith.constant 0 : index
      %c0_16 = arith.constant 0 : index
      %24 = vector.load %arg21[%c0_15, %c0_16] : memref<8x128xf32, #tpu.memory_space<vmem>>, vector<8x128xf32>
      tpu.vector_store %arg21[%c0_15, %c0_16], %14 {strides = array<i32>} : memref<8x128xf32, #tpu.memory_space<vmem>>, vector<8x128xf32>,
    } else {
    }
    %c0_i32_12 = arith.constant 0 : i32
    %18 = arith.cmpi sgt, %arg1, %c0_i32_12 : i32
    %19 = arith.extui %18 : i1 to i32
    %c0_i32_13 = arith.constant 0 : i32
    %20 = arith.cmpi ne, %19, %c0_i32_13 : i32
    scf.if %20 {
      %c0_15 = arith.constant 0 : index
      %c0_16 = arith.constant 0 : index
      %24 = vector.load %arg21[%c0_15, %c0_16] : memref<8x128xf32, #tpu.memory_space<vmem>>, vector<8x128xf32>
      %25 = arith.addf %24, %14 : vector<8x128xf32>
      %c0_17 = arith.constant 0 : index
      %c0_18 = arith.constant 0 : index
      %26 = vector.load %arg21[%c0_17, %c0_18] : memref<8x128xf32, #tpu.memory_space<vmem>>, vector<8x128xf32>
      tpu.vector_store %arg21[%c0_17, %c0_18], %25 {strides = array<i32>} : memref<8x128xf32, #tpu.memory_space<vmem>>, vector<8x128xf32>,
    } else {
    }
    %c3_i32 = arith.constant 3 : i32
    %21 = arith.cmpi eq, %arg1, %c3_i32 : i32
    %22 = arith.extui %21 : i1 to i32
    %c0_i32_14 = arith.constant 0 : i32
    %23 = arith.cmpi ne, %22, %c0_i32_14 : i32
    scf.if %23 {
      %c0_15 = arith.constant 0 : index
      %c0_16 = arith.constant 0 : index
      %24 = vector.load %arg4[%c0_15, %c0_16] : memref<8x128xf32, #tpu.memory_space<vmem>>, vector<8x128xf32>
      %c0_17 = arith.constant 0 : index
      %c0_18 = arith.constant 0 : index
      %25 = vector.load %arg21[%c0_17, %c0_18] : memref<8x128xf32, #tpu.memory_space<vmem>>, vector<8x128xf32>
      %c0_19 = arith.constant 0 : index
      %c0_20 = arith.constant 0 : index
      %26 = vector.load %arg20[%c0_19, %c0_20] : memref<1x128xf32, #tpu.memory_space<vmem>>, vector<1x128xf32>
      %27 = vector.broadcast %26 : vector<1x128xf32> to vector<8x128xf32>
      %28 = arith.addf %25, %27 : vector<8x128xf32>
      %cst_21 = arith.constant 1.000000e+00 : f32
      %29 = vector.broadcast %cst_21 : f32 to vector<8x128xf32>
      %30 = arith.subf %29, %24 : vector<8x128xf32>
      %cst_22 = arith.constant 1.000000e+07 : f32
      %31 = vector.broadcast %cst_22 : f32 to vector<8x128xf32>
      %32 = arith.mulf %30, %31 : vector<8x128xf32>
      %33 = arith.subf %28, %32 : vector<8x128xf32>
      %c0_23 = arith.constant 0 : index
      %c0_24 = arith.constant 0 : index
      %34 = vector.load %arg21[%c0_23, %c0_24] : memref<8x128xf32, #tpu.memory_space<vmem>>, vector<8x128xf32>
      tpu.vector_store %arg21[%c0_23, %c0_24], %33 {strides = array<i32>} : memref<8x128xf32, #tpu.memory_space<vmem>>, vector<8x128xf32>,
      %35 = tpu.iota {dimensions = array<i32: 0>} : vector<128x32xi32>
      %36 = tpu.iota {dimensions = array<i32: 1>} : vector<128x32xi32>
      %c5_i32 = arith.constant 5 : i32
      %37 = vector.broadcast %c5_i32 : i32 to vector<128x32xi32>
      %38 = arith.muli %36, %37 : vector<128x32xi32>
      %39 = arith.cmpi sge, %35, %38 : vector<128x32xi32>
      %c5_i32_25 = arith.constant 5 : i32
      %40 = vector.broadcast %c5_i32_25 : i32 to vector<128x32xi32>
      %41 = arith.addi %38, %40 : vector<128x32xi32>
      %42 = arith.cmpi slt, %35, %41 : vector<128x32xi32>
      %43 = arith.andi %39, %42 : vector<128x32xi1>
      %cst_26 = arith.constant 1.000000e+00 : f32
      %cst_27 = arith.constant 0.000000e+00 : f32
      %44 = vector.broadcast %cst_26 : f32 to vector<128x32xf32>
      %45 = vector.broadcast %cst_27 : f32 to vector<128x32xf32>
      %46 = arith.select %43, %44, %45 : vector<128x32xi1>, vector<128x32xf32>
      %47 = tpu.iota {dimensions = array<i32: 1>} : vector<32x128xi32>
      %48 = tpu.iota {dimensions = array<i32: 0>} : vector<32x128xi32>
      %c5_i32_28 = arith.constant 5 : i32
      %49 = vector.broadcast %c5_i32_28 : i32 to vector<32x128xi32>
      %50 = arith.muli %48, %49 : vector<32x128xi32>
      %51 = arith.cmpi sge, %47, %50 : vector<32x128xi32>
      %c5_i32_29 = arith.constant 5 : i32
      %52 = vector.broadcast %c5_i32_29 : i32 to vector<32x128xi32>
      %53 = arith.addi %50, %52 : vector<32x128xi32>
      %54 = arith.cmpi slt, %47, %53 : vector<32x128xi32>
      %55 = arith.andi %51, %54 : vector<32x128xi1>
      %cst_30 = arith.constant 1.000000e+00 : f32
      %cst_31 = arith.constant 0.000000e+00 : f32
      %56 = vector.broadcast %cst_30 : f32 to vector<32x128xf32>
      %57 = vector.broadcast %cst_31 : f32 to vector<32x128xf32>
      %58 = arith.select %55, %56, %57 : vector<32x128xi1>, vector<32x128xf32>
      %cst_32 = arith.constant dense<0.000000e+00> : vector<8x32xf32>
      %59 = tpu.matmul %24, %46, %cst_32 {dimension_numbers = #tpu.dot_dimension_numbers<[1], [0], [0], [1], [0, 0, 1, 1], [], []>} : vector<8x128xf32>, vector<128x32xf32>, vector<8x32xf32> -> vector<8x32xf32>
      %cst_33 = arith.constant 5.000000e-01 : f32
      %60 = vector.broadcast %cst_33 : f32 to vector<8x32xf32>
      %61 = arith.cmpf olt, %59, %60 : vector<8x32xf32>
      %cst_34 = arith.constant 1.000000e+00 : f32
      %cst_35 = arith.constant 0.000000e+00 : f32
      %62 = vector.broadcast %cst_34 : f32 to vector<8x32xf32>
      %63 = vector.broadcast %cst_35 : f32 to vector<8x32xf32>
      %64 = arith.select %61, %62, %63 : vector<8x32xi1>, vector<8x32xf32>
      %cst_36 = arith.constant dense<0.000000e+00> : vector<8x128xf32>
      %65 = tpu.matmul %64, %58, %cst_36 {dimension_numbers = #tpu.dot_dimension_numbers<[1], [0], [0], [1], [0, 0, 1, 1], [], []>} : vector<8x32xf32>, vector<32x128xf32>, vector<8x128xf32> -> vector<8x128xf32>
      %cst_37 = arith.constant 1.000000e+07 : f32
      %66 = vector.broadcast %cst_37 : f32 to vector<8x128xf32>
      %67 = arith.mulf %65, %66 : vector<8x128xf32>
      %68 = arith.addf %33, %67 : vector<8x128xf32>
      %cst_38 = arith.constant dense<0xFF800000> : vector<8xf32>
      %69 = vector.multi_reduction <maximumf>, %68, %cst_38 [1] : vector<8x128xf32> to vector<8xf32>
      %70 = vector.shape_cast %69 : vector<8xf32> to vector<8x1xf32>
      %71 = vector.broadcast %70 : vector<8x1xf32> to vector<8x128xf32>
      %72 = arith.subf %68, %71 : vector<8x128xf32>
      %73 = math.exp %72 : vector<8x128xf32>
      %cst_39 = arith.constant dense<0.000000e+00> : vector<8x32xf32>
      %74 = tpu.matmul %73, %46, %cst_39 {dimension_numbers = #tpu.dot_dimension_numbers<[1], [0], [0], [1], [0, 0, 1, 1], [], []>} : vector<8x128xf32>, vector<128x32xf32>, vector<8x32xf32> -> vector<8x32xf32>
      %cst_40 = arith.constant dense<0.000000e+00> : vector<8x128xf32>
      %75 = tpu.matmul %74, %58, %cst_40 {dimension_numbers = #tpu.dot_dimension_numbers<[1], [0], [0], [1], [0, 0, 1, 1], [], []>} : vector<8x32xf32>, vector<32x128xf32>, vector<8x128xf32> -> vector<8x128xf32>
      %76 = arith.divf %73, %75 : vector<8x128xf32>
      %c0_41 = arith.constant 0 : index
      %c0_42 = arith.constant 0 : index
      %77 = vector.load %arg22[%c0_41, %c0_42] : memref<8x128xf32, #tpu.memory_space<vmem>>, vector<8x128xf32>
      tpu.vector_store %arg22[%c0_41, %c0_42], %76 {strides = array<i32>} : memref<8x128xf32, #tpu.memory_space<vmem>>, vector<8x128xf32>,
    } else {
    }
    return
  }
  func.func @transform_0(%arg0: i32, %arg1: i32) -> (i32, i32, i32) {
    %c0_i32 = arith.constant 0 : i32
    %c0_i32_0 = arith.constant 0 : i32
    %c0_i32_1 = arith.constant 0 : i32
    return %c0_i32, %arg0, %c0_i32_0 : i32, i32, i32
  }
  func.func @transform_1(%arg0: i32, %arg1: i32) -> (i32, i32) {
    %c0_i32 = arith.constant 0 : i32
    %c0_i32_0 = arith.constant 0 : i32
    return %arg0, %c0_i32 : i32, i32
  }
  func.func @transform_2(%arg0: i32, %arg1: i32) -> (i32, i32) {
    %c0_i32 = arith.constant 0 : i32
    %c0_i32_0 = arith.constant 0 : i32
    return %arg0, %c0_i32 : i32, i32
  }
  func.func @transform_3(%arg0: i32, %arg1: i32) -> (i32, i32) {
    %c0_i32 = arith.constant 0 : i32
    %c0_i32_0 = arith.constant 0 : i32
    %c0_i32_1 = arith.constant 0 : i32
    return %c0_i32, %c0_i32_0 : i32, i32
  }
  func.func @transform_4(%arg0: i32, %arg1: i32) -> (i32, i32) {
    %c0_i32 = arith.constant 0 : i32
    %c0_i32_0 = arith.constant 0 : i32
    %c0_i32_1 = arith.constant 0 : i32
    return %c0_i32, %c0_i32_0 : i32, i32
  }
  func.func @transform_5(%arg0: i32, %arg1: i32) -> (i32, i32) {
    %c0_i32 = arith.constant 0 : i32
    %c0_i32_0 = arith.constant 0 : i32
    %c0_i32_1 = arith.constant 0 : i32
    return %c0_i32, %c0_i32_0 : i32, i32
  }
  func.func @transform_6(%arg0: i32, %arg1: i32) -> (i32, i32) {
    %c0_i32 = arith.constant 0 : i32
    %c0_i32_0 = arith.constant 0 : i32
    %c0_i32_1 = arith.constant 0 : i32
    return %c0_i32, %c0_i32_0 : i32, i32
  }
  func.func @transform_7(%arg0: i32, %arg1: i32) -> (i32, i32) {
    %c0_i32 = arith.constant 0 : i32
    %c0_i32_0 = arith.constant 0 : i32
    %c0_i32_1 = arith.constant 0 : i32
    return %c0_i32, %c0_i32_0 : i32, i32
  }
  func.func @transform_8(%arg0: i32, %arg1: i32) -> (i32, i32) {
    %c0_i32 = arith.constant 0 : i32
    %c0_i32_0 = arith.constant 0 : i32
    %c0_i32_1 = arith.constant 0 : i32
    return %c0_i32, %c0_i32_0 : i32, i32
  }
  func.func @transform_9(%arg0: i32, %arg1: i32) -> (i32, i32) {
    %c0_i32 = arith.constant 0 : i32
    %c0_i32_0 = arith.constant 0 : i32
    %c0_i32_1 = arith.constant 0 : i32
    return %c0_i32, %c0_i32_0 : i32, i32
  }
  func.func @transform_10(%arg0: i32, %arg1: i32) -> (i32, i32) {
    %c0_i32 = arith.constant 0 : i32
    %c0_i32_0 = arith.constant 0 : i32
    %c0_i32_1 = arith.constant 0 : i32
    return %c0_i32, %c0_i32_0 : i32, i32
  }
  func.func @transform_11(%arg0: i32, %arg1: i32) -> (i32, i32) {
    %c0_i32 = arith.constant 0 : i32
    %c0_i32_0 = arith.constant 0 : i32
    %c0_i32_1 = arith.constant 0 : i32
    return %c0_i32, %c0_i32_0 : i32, i32
  }
  func.func @transform_12(%arg0: i32, %arg1: i32) -> (i32, i32) {
    %c0_i32 = arith.constant 0 : i32
    %c0_i32_0 = arith.constant 0 : i32
    %c0_i32_1 = arith.constant 0 : i32
    return %c0_i32, %c0_i32_0 : i32, i32
  }
  func.func @transform_13(%arg0: i32, %arg1: i32) -> (i32, i32) {
    %c0_i32 = arith.constant 0 : i32
    %c0_i32_0 = arith.constant 0 : i32
    %c0_i32_1 = arith.constant 0 : i32
    return %c0_i32, %c0_i32_0 : i32, i32
  }
  func.func @transform_14(%arg0: i32, %arg1: i32) -> (i32, i32) {
    %c0_i32 = arith.constant 0 : i32
    %c0_i32_0 = arith.constant 0 : i32
    %c0_i32_1 = arith.constant 0 : i32
    return %c0_i32, %c0_i32_0 : i32, i32
  }
  func.func @transform_15(%arg0: i32, %arg1: i32) -> (i32, i32) {
    %c0_i32 = arith.constant 0 : i32
    %c0_i32_0 = arith.constant 0 : i32
    return %c0_i32, %arg1 : i32, i32
  }
  func.func @transform_16(%arg0: i32, %arg1: i32) -> (i32, i32) {
    %c0_i32 = arith.constant 0 : i32
    %c0_i32_0 = arith.constant 0 : i32
    return %c0_i32, %arg1 : i32, i32
  }
  func.func @transform_17(%arg0: i32, %arg1: i32) -> (i32, i32) {
    %c0_i32 = arith.constant 0 : i32
    %c0_i32_0 = arith.constant 0 : i32
    return %arg1, %c0_i32 : i32, i32
  }
  func.func @transform_18(%arg0: i32, %arg1: i32) -> (i32, i32) {
    %c0_i32 = arith.constant 0 : i32
    %c0_i32_0 = arith.constant 0 : i32
    %c0_i32_1 = arith.constant 0 : i32
    return %c0_i32, %c0_i32_0 : i32, i32
  }
  func.func @transform_19(%arg0: i32, %arg1: i32) -> (i32, i32) {
    %c0_i32 = arith.constant 0 : i32
    %c0_i32_0 = arith.constant 0 : i32
    return %arg0, %c0_i32 : i32, i32
  }
  func.func @transform_20(%arg0: i32, %arg1: i32) -> (i32, i32) {
    %c0_i32 = arith.constant 0 : i32
    %c0_i32_0 = arith.constant 0 : i32
    return %arg0, %c0_i32 : i32, i32
  }
}

</mosaic_0001>

<llo_original>
// kernel: farmer_predict.1
$region0: #{farmer_predict.1}
  #allocation0 [shape = 'u32[]', space=smem, size = 0x4, offset = 0x4, fixed_abs, tag = 'smem constant byte address 0x4 - core index']
  #allocation1 [shape = 'u32[144,128]{1,0:T(1,128)}', space=vmem, size = 0x12000, scoped, tag = 'internal scratch']
  #allocation2 [shape = 'f32[8,512]{1,0:T(8,128)}', space=vmem, size = 0x4000, scoped, tag = 'scratch operand']
  %s0 = inlined_call_operand.vmem [shape: f32[8,8,162], index: 0, kind: input, shape index: {}]
  %s1 = inlined_call_operand.vmem [shape: f32[8,430], index: 1, kind: input, shape index: {}]
  %s2 = inlined_call_operand.vmem [shape: f32[8,128], index: 2, kind: input, shape index: {}]
  %s3 = inlined_call_operand.hbm [shape: bf16[162,512], index: 3, kind: input, shape index: {}]
  %s4 = inlined_call_operand.hbm [shape: bf16[128,512], index: 4, kind: input, shape index: {}]
  %s5 = inlined_call_operand.hbm [shape: f32[1,512], index: 5, kind: input, shape index: {}]
  %s6 = inlined_call_operand.hbm [shape: bf16[128,512], index: 6, kind: input, shape index: {}]
  %s7 = inlined_call_operand.hbm [shape: bf16[430,512], index: 7, kind: input, shape index: {}]
  %s8 = inlined_call_operand.hbm [shape: f32[1,512], index: 8, kind: input, shape index: {}]
  %s9 = inlined_call_operand.hbm [shape: bf16[512,512], index: 9, kind: input, shape index: {}]
  %s10 = inlined_call_operand.hbm [shape: f32[1,512], index: 10, kind: input, shape index: {}]
  %s11 = inlined_call_operand.hbm [shape: bf16[512,512], index: 11, kind: input, shape index: {}]
  %s12 = inlined_call_operand.hbm [shape: f32[1,512], index: 12, kind: input, shape index: {}]
  %s13 = inlined_call_operand.hbm [shape: bf16[512,512], index: 13, kind: input, shape index: {}]
  %s14 = inlined_call_operand.hbm [shape: f32[1,512], index: 14, kind: input, shape index: {}]
  %s15 = inlined_call_operand.hbm [shape: bf16[512,3584], index: 15, kind: input, shape index: {}]
  %s16 = inlined_call_operand.hbm [shape: f32[1,3584], index: 16, kind: input, shape index: {}]
  %s17 = inlined_call_operand.hbm [shape: bf16[3584,128], index: 17, kind: input, shape index: {}]
  %s18 = inlined_call_operand.hbm [shape: f32[1,128], index: 18, kind: input, shape index: {}]
  %s19 = inlined_call_operand.vmem [shape: f32[8,128], index: 19, kind: output, shape index: {0}]
  %s20 = inlined_call_operand.vmem [shape: f32[8,128], index: 20, kind: output, shape index: {1}]
  %21 = xla_tuple %s19, %s20
  %s22 = sld [smem:[#allocation0]]
  $region197: #{farmer_predict.1} parent=0
    _
  %s24 = ssub.s32 1, %s22
  %s25 = scalar_select 0, %s24, %s22
  $region1: #{farmer_predict.1} parent=0
    #allocation3 [shape = 'u8[172032]{0}', space=vmem, size = 0x2a000, scoped, tag = 'input window, operand 3, single buffered']
    #allocation4 [shape = 's32[2]{0}', space=sflag, size = 0x8, scoped, tag = 'scoped memory for farmer_predict.1']
    #allocation5 [shape = 'u8[131072]{0}', space=vmem, size = 0x20000, scoped, tag = 'input window, operand 4, single buffered']
    #allocation6 [shape = 's32[1]{0}', space=sflag, size = 0x4, scoped, tag = 'scoped memory for farmer_predict.1']
    #allocation7 [shape = 'u8[2048]{0}', space=vmem, size = 0x800, scoped, tag = 'input window, operand 5, single buffered']
    #allocation8 [shape = 'u8[131072]{0}', space=vmem, size = 0x20000, scoped, tag = 'input window, operand 6, single buffered']
    #allocation9 [shape = 's32[1]{0}', space=sflag, size = 0x4, scoped, tag = 'scoped memory for farmer_predict.1']
    #allocation10 [shape = 'u8[442368]{0}', space=vmem, size = 0x6c000, scoped, tag = 'input window, operand 7, single buffered']
    #allocation11 [shape = 'u8[2048]{0}', space=vmem, size = 0x800, scoped, tag = 'input window, operand 8, single buffered']
    #allocation12 [shape = 's32[1]{0}', space=sflag, size = 0x4, scoped, tag = 'scoped memory for farmer_predict.1']
    #allocation13 [shape = 'u8[524288]{0}', space=vmem, size = 0x80000, scoped, tag = 'input window, operand 9, single buffered']
    #allocation14 [shape = 'u8[2048]{0}', space=vmem, size = 0x800, scoped, tag = 'input window, operand 10, single buffered']
    #allocation15 [shape = 's32[1]{0}', space=sflag, size = 0x4, scoped, tag = 'scoped memory for farmer_predict.1']
    #allocation16 [shape = 'u8[524288]{0}', space=vmem, size = 0x80000, scoped, tag = 'input window, operand 11, single buffered']
    #allocation17 [shape = 'u8[2048]{0}', space=vmem, size = 0x800, scoped, tag = 'input window, operand 12, single buffered']
    #allocation18 [shape = 's32[1]{0}', space=sflag, size = 0x4, scoped, tag = 'scoped memory for farmer_predict.1']
    #allocation19 [shape = 'u8[524288]{0}', space=vmem, size = 0x80000, scoped, tag = 'input window, operand 13, single buffered']
    #allocation20 [shape = 'u8[2048]{0}', space=vmem, size = 0x800, scoped, tag = 'input window, operand 14, single buffered']
    #allocation21 [shape = 's32[1]{0}', space=sflag, size = 0x4, scoped, tag = 'scoped memory for farmer_predict.1']
    #allocation22 [shape = 'u8[1835008]{0}', space=vmem, size = 0x1c0000, scoped, tag = 'input window, operand 15']
    #allocation23 [shape = 'u8[7168]{0}', space=vmem, size = 0x1c00, scoped, tag = 'input window, operand 16']
    #allocation24 [shape = 'u8[458752]{0}', space=vmem, size = 0x70000, scoped, tag = 'input window, operand 17']
    #allocation25 [shape = 'u8[512]{0}', space=vmem, size = 0x400, scoped, tag = 'input window, operand 18, single buffered']
    %26 = vsyncpa [#allocation4], 0
    %27 = vsyncpa [#allocation6], 0
    %28 = vsyncpa [#allocation9], 0
    %29 = vsyncpa [#allocation12], 0
    %30 = vsyncpa [#allocation15], 0
    %31 = vsyncpa [#allocation18], 0
    %32 = vsyncpa [#allocation21], 0
    loop: start=0, step=1, limit=6
    $region2: #{farmer_predict.1} parent=1 // loop_pre_header
      _
    $region3: #{farmer_predict.1} parent=1 // loop_header
      %s34 = sphi 0, %s38
      %p35 = scmp.ge.s32.totalorder %s34, 6
      %s41 = sphi 0, %s53
      %s42 = sphi 0, %s49
      %s43 = sphi 0, %s41
      %s44 = sphi 0, %s42
      %s45 = sphi 0, %s43
      %s46 = sphi 0, %s44
      %s56 = sphi 0, %s58
      %s59 = sphi 0, %s56
      %s60 = sphi 0, %s59
      %s76 = sphi 0, %s60
      %s82 = sphi 0, %s84
      %s85 = sphi 0, %s82
      %s86 = sphi 0, %s85
      %s102 = sphi 0, %s86
      %s108 = sphi 0, %s110
      %s111 = sphi 0, %s108
      %s112 = sphi 0, %s111
      %s128 = sphi 0, %s112
      %s132 = sphi 0, %s132
      %s134 = sphi 0, %s132
      %s135 = sphi 0, %s134
      %s149 = sphi 0, %s135
      %s153 = sphi 0, %s153
      %s155 = sphi 0, %s153
      %s156 = sphi 0, %s155
      %s170 = sphi 0, %s156
      %s174 = sphi 0, %s174
      %s176 = sphi 0, %s174
      %s177 = sphi 0, %s176
      %s191 = sphi 0, %s177
      %s195 = sphi 0, %s195
      %s197 = sphi 0, %s195
      %s198 = sphi 0, %s197
      %s212 = sphi 0, %s198
      %s216 = sphi 0, %s216
      %s218 = sphi 0, %s216
      %s219 = sphi 0, %s218
      %s233 = sphi 0, %s219
      %s237 = sphi 0, %s237
      %s239 = sphi 0, %s237
      %s240 = sphi 0, %s239
      %s254 = sphi 0, %s240
      %s258 = sphi 0, %s258
      %s260 = sphi 0, %s258
      %s261 = sphi 0, %s260
      %s275 = sphi 0, %s261
      %s279 = sphi 0, %s279
      %s281 = sphi 0, %s279
      %s282 = sphi 0, %s281
      %s296 = sphi 0, %s282
      %s300 = sphi 0, %s300
      %s302 = sphi 0, %s300
      %s303 = sphi 0, %s302
      %s317 = sphi 0, %s303
      %s321 = sphi 0, %s321
      %s323 = sphi 0, %s321
      %s324 = sphi 0, %s323
      %s338 = sphi 0, %s324
      %s342 = sphi 0, %s342
      %s344 = sphi 0, %s342
      %s345 = sphi 0, %s344
      %s359 = sphi 0, %s345
      %s363 = sphi 0, %s363
      %s365 = sphi 0, %s363
      %s366 = sphi 0, %s365
      %s380 = sphi 0, %s366
      %s386 = sphi 0, %s388
      %s389 = sphi 0, %s386
      %s390 = sphi 0, %s389
      %s406 = sphi 0, %s390
      %s412 = sphi 0, %s414
      %s415 = sphi 0, %s412
      %s416 = sphi 0, %s415
      %s432 = sphi 0, %s416
      %s438 = sphi 0, %s440
      %s441 = sphi 0, %s438
      %s442 = sphi 0, %s441
      %s458 = sphi 0, %s442
      %s462 = sphi 0, %s462
      %s464 = sphi 0, %s462
      %s465 = sphi 0, %s464
      %s479 = sphi 0, %s465
      %s485 = sphi 0, %s487
      %s488 = sphi 0, %s485
      %s489 = sphi 0, %s488
      %s505 = sphi 0, %s489
      %s511 = sphi 0, %s513
      %s514 = sphi 0, %s511
      %s515 = sphi 0, %s514
      %s531 = sphi 0, %s515
    $region4: #{farmer_predict.1} parent=1 // loop_header_branch
      %37 = sbr.rel (%p35) target = $region8
    $region5: #{farmer_predict.1} parent=1 // loop_body
      %s39 = ssub.s32 %s34, 1
      %s40 = ssub.s32 %s34, 2
      %s47 = sadd.s32 1, %s42
      %p48 = scmp.ge.s32.totalorder %s47, 4
      %s49 = scalar_select %p48, 0, %s47
      %s50 = sadd.s32 1, %s41
      %s51 = scalar_select %p48, %s50, %s41
      %p52 = scmp.ge.s32.totalorder %s51, 1
      %s53 = scalar_select %p52, 0, %s51
      %s54 = ssub.s32 %s41, %s53
      %p55 = scmp.eq.s32.totalorder %s54, 0
      %s57 = sadd.s32 %s56, 1
      %s58 = scalar_select %p55, %s56, %s57
      %p61 = pneg %p55
      %p62 = scmp.eq.s32.totalorder %s34, 3
      %p63 = por %p61, %p62
      %p64 = scmp.ne.s32.totalorder %s56, %s59
      %p65 = scmp.eq.s32.totalorder %s34, 0
      %p66 = por %p64, %p65
      %p67 = scmp.ne.s32.totalorder %s56, %s59
      %p68 = scmp.eq.s32.totalorder %s39, 3
      %p69 = por %p67, %p68
      %p70 = scmp.ne.s32.totalorder %s59, %s60
      %p71 = scmp.eq.s32.totalorder %s39, 0
      %p72 = por %p70, %p71
      %p73 = scmp.ne.s32.totalorder %s59, %s60
      %p74 = scmp.eq.s32.totalorder %s40, 3
      %p75 = por %p73, %p74
      %p77 = scmp.ne.s32.totalorder %s60, %s76
      %p78 = scmp.eq.s32.totalorder %s40, 0
      %p79 = por %p77, %p78
      %s80 = ssub.s32 %s41, %s53
      %p81 = scmp.eq.s32.totalorder %s80, 0
      %s83 = sadd.s32 %s82, 1
      %s84 = scalar_select %p81, %s82, %s83
      %p87 = pneg %p81
      %p88 = scmp.eq.s32.totalorder %s34, 3
      %p89 = por %p87, %p88
      %p90 = scmp.ne.s32.totalorder %s82, %s85
      %p91 = scmp.eq.s32.totalorder %s34, 0
      %p92 = por %p90, %p91
      %p93 = scmp.ne.s32.totalorder %s82, %s85
      %p94 = scmp.eq.s32.totalorder %s39, 3
      %p95 = por %p93, %p94
      %p96 = scmp.ne.s32.totalorder %s85, %s86
      %p97 = scmp.eq.s32.totalorder %s39, 0
      %p98 = por %p96, %p97
      %p99 = scmp.ne.s32.totalorder %s85, %s86
      %p100 = scmp.eq.s32.totalorder %s40, 3
      %p101 = por %p99, %p100
      %p103 = scmp.ne.s32.totalorder %s86, %s102
      %p104 = scmp.eq.s32.totalorder %s40, 0
      %p105 = por %p103, %p104
      %s106 = ssub.s32 %s41, %s53
      %p107 = scmp.eq.s32.totalorder %s106, 0
      %s109 = sadd.s32 %s108, 1
      %s110 = scalar_select %p107, %s108, %s109
      %p113 = pneg %p107
      %p114 = scmp.eq.s32.totalorder %s34, 3
      %p115 = por %p113, %p114
      %p116 = scmp.ne.s32.totalorder %s108, %s111
      %p117 = scmp.eq.s32.totalorder %s34, 0
      %p118 = por %p116, %p117
      %p119 = scmp.ne.s32.totalorder %s108, %s111
      %p120 = scmp.eq.s32.totalorder %s39, 3
      %p121 = por %p119, %p120
      %p122 = scmp.ne.s32.totalorder %s111, %s112
      %p123 = scmp.eq.s32.totalorder %s39, 0
      %p124 = por %p122, %p123
      %p125 = scmp.ne.s32.totalorder %s111, %s112
      %p126 = scmp.eq.s32.totalorder %s40, 3
      %p127 = por %p125, %p126
      %p129 = scmp.ne.s32.totalorder %s112, %s128
      %p130 = scmp.eq.s32.totalorder %s40, 0
      %p131 = por %p129, %p130
      %s133 = sadd.s32 %s132, 1
      %p136 = scmp.eq.s32.totalorder %s34, 3
      %p137 = scmp.ne.s32.totalorder %s132, %s134
      %p138 = scmp.eq.s32.totalorder %s34, 0
      %p139 = por %p137, %p138
      %p140 = scmp.ne.s32.totalorder %s132, %s134
      %p141 = scmp.eq.s32.totalorder %s39, 3
      %p142 = por %p140, %p141
      %p143 = scmp.ne.s32.totalorder %s134, %s135
      %p144 = scmp.eq.s32.totalorder %s39, 0
      %p145 = por %p143, %p144
      %p146 = scmp.ne.s32.totalorder %s134, %s135
      %p147 = scmp.eq.s32.totalorder %s40, 3
      %p148 = por %p146, %p147
      %p150 = scmp.ne.s32.totalorder %s135, %s149
      %p151 = scmp.eq.s32.totalorder %s40, 0
      %p152 = por %p150, %p151
      %s154 = sadd.s32 %s153, 1
      %p157 = scmp.eq.s32.totalorder %s34, 3
      %p158 = scmp.ne.s32.totalorder %s153, %s155
      %p159 = scmp.eq.s32.totalorder %s34, 0
      %p160 = por %p158, %p159
      %p161 = scmp.ne.s32.totalorder %s153, %s155
      %p162 = scmp.eq.s32.totalorder %s39, 3
      %p163 = por %p161, %p162
      %p164 = scmp.ne.s32.totalorder %s155, %s156
      %p165 = scmp.eq.s32.totalorder %s39, 0
      %p166 = por %p164, %p165
      %p167 = scmp.ne.s32.totalorder %s155, %s156
      %p168 = scmp.eq.s32.totalorder %s40, 3
      %p169 = por %p167, %p168
      %p171 = scmp.ne.s32.totalorder %s156, %s170
      %p172 = scmp.eq.s32.totalorder %s40, 0
      %p173 = por %p171, %p172
      %s175 = sadd.s32 %s174, 1
      %p178 = scmp.eq.s32.totalorder %s34, 3
      %p179 = scmp.ne.s32.totalorder %s174, %s176
      %p180 = scmp.eq.s32.totalorder %s34, 0
      %p181 = por %p179, %p180
      %p182 = scmp.ne.s32.totalorder %s174, %s176
      %p183 = scmp.eq.s32.totalorder %s39, 3
      %p184 = por %p182, %p183
      %p185 = scmp.ne.s32.totalorder %s176, %s177
      %p186 = scmp.eq.s32.totalorder %s39, 0
      %p187 = por %p185, %p186
      %p188 = scmp.ne.s32.totalorder %s176, %s177
      %p189 = scmp.eq.s32.totalorder %s40, 3
      %p190 = por %p188, %p189
      %p192 = scmp.ne.s32.totalorder %s177, %s191
      %p193 = scmp.eq.s32.totalorder %s40, 0
      %p194 = por %p192, %p193
      %s196 = sadd.s32 %s195, 1
      %p199 = scmp.eq.s32.totalorder %s34, 3
      %p200 = scmp.ne.s32.totalorder %s195, %s197
      %p201 = scmp.eq.s32.totalorder %s34, 0
      %p202 = por %p200, %p201
      %p203 = scmp.ne.s32.totalorder %s195, %s197
      %p204 = scmp.eq.s32.totalorder %s39, 3
      %p205 = por %p203, %p204
      %p206 = scmp.ne.s32.totalorder %s197, %s198
      %p207 = scmp.eq.s32.totalorder %s39, 0
      %p208 = por %p206, %p207
      %p209 = scmp.ne.s32.totalorder %s197, %s198
      %p210 = scmp.eq.s32.totalorder %s40, 3
      %p211 = por %p209, %p210
      %p213 = scmp.ne.s32.totalorder %s198, %s212
      %p214 = scmp.eq.s32.totalorder %s40, 0
      %p215 = por %p213, %p214
      %s217 = sadd.s32 %s216, 1
      %p220 = scmp.eq.s32.totalorder %s34, 3
      %p221 = scmp.ne.s32.totalorder %s216, %s218
      %p222 = scmp.eq.s32.totalorder %s34, 0
      %p223 = por %p221, %p222
      %p224 = scmp.ne.s32.totalorder %s216, %s218
      %p225 = scmp.eq.s32.totalorder %s39, 3
      %p226 = por %p224, %p225
      %p227 = scmp.ne.s32.totalorder %s218, %s219
      %p228 = scmp.eq.s32.totalorder %s39, 0
      %p229 = por %p227, %p228
      %p230 = scmp.ne.s32.totalorder %s218, %s219
      %p231 = scmp.eq.s32.totalorder %s40, 3
      %p232 = por %p230, %p231
      %p234 = scmp.ne.s32.totalorder %s219, %s233
      %p235 = scmp.eq.s32.totalorder %s40, 0
      %p236 = por %p234, %p235
      %s238 = sadd.s32 %s237, 1
      %p241 = scmp.eq.s32.totalorder %s34, 3
      %p242 = scmp.ne.s32.totalorder %s237, %s239
      %p243 = scmp.eq.s32.totalorder %s34, 0
      %p244 = por %p242, %p243
      %p245 = scmp.ne.s32.totalorder %s237, %s239
      %p246 = scmp.eq.s32.totalorder %s39, 3
      %p247 = por %p245, %p246
      %p248 = scmp.ne.s32.totalorder %s239, %s240
      %p249 = scmp.eq.s32.totalorder %s39, 0
      %p250 = por %p248, %p249
      %p251 = scmp.ne.s32.totalorder %s239, %s240
      %p252 = scmp.eq.s32.totalorder %s40, 3
      %p253 = por %p251, %p252
      %p255 = scmp.ne.s32.totalorder %s240, %s254
      %p256 = scmp.eq.s32.totalorder %s40, 0
      %p257 = por %p255, %p256
      %s259 = sadd.s32 %s258, 1
      %p262 = scmp.eq.s32.totalorder %s34, 3
      %p263 = scmp.ne.s32.totalorder %s258, %s260
      %p264 = scmp.eq.s32.totalorder %s34, 0
      %p265 = por %p263, %p264
      %p266 = scmp.ne.s32.totalorder %s258, %s260
      %p267 = scmp.eq.s32.totalorder %s39, 3
      %p268 = por %p266, %p267
      %p269 = scmp.ne.s32.totalorder %s260, %s261
      %p270 = scmp.eq.s32.totalorder %s39, 0
      %p271 = por %p269, %p270
      %p272 = scmp.ne.s32.totalorder %s260, %s261
      %p273 = scmp.eq.s32.totalorder %s40, 3
      %p274 = por %p272, %p273
      %p276 = scmp.ne.s32.totalorder %s261, %s275
      %p277 = scmp.eq.s32.totalorder %s40, 0
      %p278 = por %p276, %p277
      %s280 = sadd.s32 %s279, 1
      %p283 = scmp.eq.s32.totalorder %s34, 3
      %p284 = scmp.ne.s32.totalorder %s279, %s281
      %p285 = scmp.eq.s32.totalorder %s34, 0
      %p286 = por %p284, %p285
      %p287 = scmp.ne.s32.totalorder %s279, %s281
      %p288 = scmp.eq.s32.totalorder %s39, 3
      %p289 = por %p287, %p288
      %p290 = scmp.ne.s32.totalorder %s281, %s282
      %p291 = scmp.eq.s32.totalorder %s39, 0
      %p292 = por %p290, %p291
      %p293 = scmp.ne.s32.totalorder %s281, %s282
      %p294 = scmp.eq.s32.totalorder %s40, 3
      %p295 = por %p293, %p294
      %p297 = scmp.ne.s32.totalorder %s282, %s296
      %p298 = scmp.eq.s32.totalorder %s40, 0
      %p299 = por %p297, %p298
      %s301 = sadd.s32 %s300, 1
      %p304 = scmp.eq.s32.totalorder %s34, 3
      %p305 = scmp.ne.s32.totalorder %s300, %s302
      %p306 = scmp.eq.s32.totalorder %s34, 0
      %p307 = por %p305, %p306
      %p308 = scmp.ne.s32.totalorder %s300, %s302
      %p309 = scmp.eq.s32.totalorder %s39, 3
      %p310 = por %p308, %p309
      %p311 = scmp.ne.s32.totalorder %s302, %s303
      %p312 = scmp.eq.s32.totalorder %s39, 0
      %p313 = por %p311, %p312
      %p314 = scmp.ne.s32.totalorder %s302, %s303
      %p315 = scmp.eq.s32.totalorder %s40, 3
      %p316 = por %p314, %p315
      %p318 = scmp.ne.s32.totalorder %s303, %s317
      %p319 = scmp.eq.s32.totalorder %s40, 0
      %p320 = por %p318, %p319
      %s322 = sadd.s32 %s321, 1
      %p325 = scmp.eq.s32.totalorder %s34, 3
      %p326 = scmp.ne.s32.totalorder %s321, %s323
      %p327 = scmp.eq.s32.totalorder %s34, 0
      %p328 = por %p326, %p327
      %p329 = scmp.ne.s32.totalorder %s321, %s323
      %p330 = scmp.eq.s32.totalorder %s39, 3
      %p331 = por %p329, %p330
      %p332 = scmp.ne.s32.totalorder %s323, %s324
      %p333 = scmp.eq.s32.totalorder %s39, 0
      %p334 = por %p332, %p333
      %p335 = scmp.ne.s32.totalorder %s323, %s324
      %p336 = scmp.eq.s32.totalorder %s40, 3
      %p337 = por %p335, %p336
      %p339 = scmp.ne.s32.totalorder %s324, %s338
      %p340 = scmp.eq.s32.totalorder %s40, 0
      %p341 = por %p339, %p340
      %s343 = sadd.s32 %s342, 1
      %p346 = scmp.eq.s32.totalorder %s34, 3
      %p347 = scmp.ne.s32.totalorder %s342, %s344
      %p348 = scmp.eq.s32.totalorder %s34, 0
      %p349 = por %p347, %p348
      %p350 = scmp.ne.s32.totalorder %s342, %s344
      %p351 = scmp.eq.s32.totalorder %s39, 3
      %p352 = por %p350, %p351
      %p353 = scmp.ne.s32.totalorder %s344, %s345
      %p354 = scmp.eq.s32.totalorder %s39, 0
      %p355 = por %p353, %p354
      %p356 = scmp.ne.s32.totalorder %s344, %s345
      %p357 = scmp.eq.s32.totalorder %s40, 3
      %p358 = por %p356, %p357
      %p360 = scmp.ne.s32.totalorder %s345, %s359
      %p361 = scmp.eq.s32.totalorder %s40, 0
      %p362 = por %p360, %p361
      %s364 = sadd.s32 %s363, 1
      %p367 = scmp.eq.s32.totalorder %s34, 3
      %p368 = scmp.ne.s32.totalorder %s363, %s365
      %p369 = scmp.eq.s32.totalorder %s34, 0
      %p370 = por %p368, %p369
      %p371 = scmp.ne.s32.totalorder %s363, %s365
      %p372 = scmp.eq.s32.totalorder %s39, 3
      %p373 = por %p371, %p372
      %p374 = scmp.ne.s32.totalorder %s365, %s366
      %p375 = scmp.eq.s32.totalorder %s39, 0
      %p376 = por %p374, %p375
      %p377 = scmp.ne.s32.totalorder %s365, %s366
      %p378 = scmp.eq.s32.totalorder %s40, 3
      %p379 = por %p377, %p378
      %p381 = scmp.ne.s32.totalorder %s366, %s380
      %p382 = scmp.eq.s32.totalorder %s40, 0
      %p383 = por %p381, %p382
      %s384 = ssub.s32 %s42, %s49
      %p385 = scmp.eq.s32.totalorder %s384, 0
      %s387 = sadd.s32 %s386, 1
      %s388 = scalar_select %p385, %s386, %s387
      %p391 = pneg %p385
      %p392 = scmp.eq.s32.totalorder %s34, 3
      %p393 = por %p391, %p392
      %p394 = scmp.ne.s32.totalorder %s386, %s389
      %p395 = scmp.eq.s32.totalorder %s34, 0
      %p396 = por %p394, %p395
      %p397 = scmp.ne.s32.totalorder %s386, %s389
      %p398 = scmp.eq.s32.totalorder %s39, 3
      %p399 = por %p397, %p398
      %p400 = scmp.ne.s32.totalorder %s389, %s390
      %p401 = scmp.eq.s32.totalorder %s39, 0
      %p402 = por %p400, %p401
      %p403 = scmp.ne.s32.totalorder %s389, %s390
      %p404 = scmp.eq.s32.totalorder %s40, 3
      %p405 = por %p403, %p404
      %p407 = scmp.ne.s32.totalorder %s390, %s406
      %p408 = scmp.eq.s32.totalorder %s40, 0
      %p409 = por %p407, %p408
      %s410 = ssub.s32 %s42, %s49
      %p411 = scmp.eq.s32.totalorder %s410, 0
      %s413 = sadd.s32 %s412, 1
      %s414 = scalar_select %p411, %s412, %s413
      %p417 = pneg %p411
      %p418 = scmp.eq.s32.totalorder %s34, 3
      %p419 = por %p417, %p418
      %p420 = scmp.ne.s32.totalorder %s412, %s415
      %p421 = scmp.eq.s32.totalorder %s34, 0
      %p422 = por %p420, %p421
      %p423 = scmp.ne.s32.totalorder %s412, %s415
      %p424 = scmp.eq.s32.totalorder %s39, 3
      %p425 = por %p423, %p424
      %p426 = scmp.ne.s32.totalorder %s415, %s416
      %p427 = scmp.eq.s32.totalorder %s39, 0
      %p428 = por %p426, %p427
      %p429 = scmp.ne.s32.totalorder %s415, %s416
      %p430 = scmp.eq.s32.totalorder %s40, 3
      %p431 = por %p429, %p430
      %p433 = scmp.ne.s32.totalorder %s416, %s432
      %p434 = scmp.eq.s32.totalorder %s40, 0
      %p435 = por %p433, %p434
      %s436 = ssub.s32 %s42, %s49
      %p437 = scmp.eq.s32.totalorder %s436, 0
      %s439 = sadd.s32 %s438, 1
      %s440 = scalar_select %p437, %s438, %s439
      %p443 = pneg %p437
      %p444 = scmp.eq.s32.totalorder %s34, 3
      %p445 = por %p443, %p444
      %p446 = scmp.ne.s32.totalorder %s438, %s441
      %p447 = scmp.eq.s32.totalorder %s34, 0
      %p448 = por %p446, %p447
      %p449 = scmp.ne.s32.totalorder %s438, %s441
      %p450 = scmp.eq.s32.totalorder %s39, 3
      %p451 = por %p449, %p450
      %p452 = scmp.ne.s32.totalorder %s441, %s442
      %p453 = scmp.eq.s32.totalorder %s39, 0
      %p454 = por %p452, %p453
      %p455 = scmp.ne.s32.totalorder %s441, %s442
      %p456 = scmp.eq.s32.totalorder %s40, 3
      %p457 = por %p455, %p456
      %p459 = scmp.ne.s32.totalorder %s442, %s458
      %p460 = scmp.eq.s32.totalorder %s40, 0
      %p461 = por %p459, %p460
      %s463 = sadd.s32 %s462, 1
      %p466 = scmp.eq.s32.totalorder %s34, 3
      %p467 = scmp.ne.s32.totalorder %s462, %s464
      %p468 = scmp.eq.s32.totalorder %s34, 0
      %p469 = por %p467, %p468
      %p470 = scmp.ne.s32.totalorder %s462, %s464
      %p471 = scmp.eq.s32.totalorder %s39, 3
      %p472 = por %p470, %p471
      %p473 = scmp.ne.s32.totalorder %s464, %s465
      %p474 = scmp.eq.s32.totalorder %s39, 0
      %p475 = por %p473, %p474
      %p476 = scmp.ne.s32.totalorder %s464, %s465
      %p477 = scmp.eq.s32.totalorder %s40, 3
      %p478 = por %p476, %p477
      %p480 = scmp.ne.s32.totalorder %s465, %s479
      %p481 = scmp.eq.s32.totalorder %s40, 0
      %p482 = por %p480, %p481
      %s483 = ssub.s32 %s41, %s53
      %p484 = scmp.eq.s32.totalorder %s483, 0
      %s486 = sadd.s32 %s485, 1
      %s487 = scalar_select %p484, %s485, %s486
      %p490 = pneg %p484
      %p491 = scmp.eq.s32.totalorder %s34, 3
      %p492 = por %p490, %p491
      %p493 = scmp.ne.s32.totalorder %s485, %s488
      %p494 = scmp.eq.s32.totalorder %s34, 0
      %p495 = por %p493, %p494
      %p496 = scmp.ne.s32.totalorder %s485, %s488
      %p497 = scmp.eq.s32.totalorder %s39, 3
      %p498 = por %p496, %p497
      %p499 = scmp.ne.s32.totalorder %s488, %s489
      %p500 = scmp.eq.s32.totalorder %s39, 0
      %p501 = por %p499, %p500
      %p502 = scmp.ne.s32.totalorder %s488, %s489
      %p503 = scmp.eq.s32.totalorder %s40, 3
      %p504 = por %p502, %p503
      %p506 = scmp.ne.s32.totalorder %s489, %s505
      %p507 = scmp.eq.s32.totalorder %s40, 0
      %p508 = por %p506, %p507
      %s509 = ssub.s32 %s41, %s53
      %p510 = scmp.eq.s32.totalorder %s509, 0
      %s512 = sadd.s32 %s511, 1
      %s513 = scalar_select %p510, %s511, %s512
      %p516 = pneg %p510
      %p517 = scmp.eq.s32.totalorder %s34, 3
      %p518 = por %p516, %p517
      %p519 = scmp.ne.s32.totalorder %s511, %s514
      %p520 = scmp.eq.s32.totalorder %s34, 0
      %p521 = por %p519, %p520
      %p522 = scmp.ne.s32.totalorder %s511, %s514
      %p523 = scmp.eq.s32.totalorder %s39, 3
      %p524 = por %p522, %p523
      %p525 = scmp.ne.s32.totalorder %s514, %s515
      %p526 = scmp.eq.s32.totalorder %s39, 0
      %p527 = por %p525, %p526
      %p528 = scmp.ne.s32.totalorder %s514, %s515
      %p529 = scmp.eq.s32.totalorder %s40, 3
      %p530 = por %p528, %p529
      %p532 = scmp.ne.s32.totalorder %s515, %s531
      %p533 = scmp.eq.s32.totalorder %s40, 0
      %p534 = por %p532, %p533
      %p535 = scmp.le.s32.totalorder 1, %s34
      %p536 = scmp.lt.s32.totalorder %s34, 5
      %p537 = pnand %p535, %p536
      %p538 = pneg %p537
      // Predicated region
      $region9: #{farmer_predict.1} parent=5 // pred_check
        _
      $region10: #{farmer_predict.1} parent=5 // pred_check_branch
        %540 = sbr.rel (%p537) target = $region12
      $region11: #{farmer_predict.1} parent=5 // pred_region
        %s541 = ssub.s32 %s34, 1
        // Predicated region
        $region13: #{farmer_predict.1} parent=11 // pred_check
          %p542 = pneg %p72
        $region14: #{farmer_predict.1} parent=11 // pred_check_branch
          %544 = sbr.rel (%p542) target = $region16
        $region15: #{farmer_predict.1} parent=11 // pred_region
          %p545 = scmp.lt.s32.totalorder %s43, 0
          %s546 = scalar_select %p545, %s43, 0
          %s547 = smul.addr %s546, 2
          %s548 = smul.addr %s547, 8
          %s549 = scalar_lea.vmem %s0, %s548
        $region16: #{farmer_predict.1} parent=11 // pred_fallthru
          _
        // Predicated region
        $region17: #{farmer_predict.1} parent=11 // pred_check
          %p550 = pneg %p98
        $region18: #{farmer_predict.1} parent=11 // pred_check_branch
          %552 = sbr.rel (%p550) target = $region20
        $region19: #{farmer_predict.1} parent=11 // pred_region
          %p553 = scmp.lt.s32.totalorder %s43, 0
          %s554 = scalar_select %p553, %s43, 0
          %s555 = smul.addr %s554, 4
          %s556 = smul.addr %s555, 8
          %s557 = scalar_lea.vmem %s1, %s556
        $region20: #{farmer_predict.1} parent=11 // pred_fallthru
          _
        // Predicated region
        $region21: #{farmer_predict.1} parent=11 // pred_check
          %p558 = pneg %p124
        $region22: #{farmer_predict.1} parent=11 // pred_check_branch
          %560 = sbr.rel (%p558) target = $region24
        $region23: #{farmer_predict.1} parent=11 // pred_region
          %p561 = scmp.lt.s32.totalorder %s43, 0
          %s562 = scalar_select %p561, %s43, 0
          %s563 = smul.addr %s562, 8
          %s564 = scalar_lea.vmem %s2, %s563
        $region24: #{farmer_predict.1} parent=11 // pred_fallthru
          _
        // Predicated region
        $region25: #{farmer_predict.1} parent=11 // pred_check
          %p565 = pneg %p145
        $region26: #{farmer_predict.1} parent=11 // pred_check_branch
          %567 = sbr.rel (%p565) target = $region28
        $region27: #{farmer_predict.1} parent=11 // pred_region
          %s569 = ssub.s32 5376, 5376
          %570 = vsyncadd [#allocation4], %s569
          %s571 = sshll.u32 [#allocation3], 4
          %s572 = int_to_ptr.vmem [resolvable:$true] %s571
          %577 = dma.hbm_to_vmem [thread:$0]  %s3, 5376, %s572, [#allocation4], 256, 256, 16
        $region28: #{farmer_predict.1} parent=11 // pred_fallthru
          _
        // Predicated region
        $region29: #{farmer_predict.1} parent=11 // pred_check
          %p578 = pneg %p166
        $region30: #{farmer_predict.1} parent=11 // pred_check_branch
          %580 = sbr.rel (%p578) target = $region32
        $region31: #{farmer_predict.1} parent=11 // pred_region
          %s582 = ssub.s32 4096, 4096
          %583 = vsyncadd [#allocation6], %s582
          %s584 = sshll.u32 [#allocation5], 4
          %s585 = int_to_ptr.vmem [resolvable:$true] %s584
          %590 = dma.hbm_to_vmem [thread:$0]  %s4, 4096, %s585, [#allocation6], 256, 256, 16
        $region32: #{farmer_predict.1} parent=11 // pred_fallthru
          _
        // Predicated region
        $region33: #{farmer_predict.1} parent=11 // pred_check
          %p591 = pneg %p187
        $region34: #{farmer_predict.1} parent=11 // pred_check_branch
          %593 = sbr.rel (%p591) target = $region36
        $region35: #{farmer_predict.1} parent=11 // pred_region
          %s595 = ssub.s32 64, 64
          %596 = vsyncadd [#allocation6], %s595
          %s598 = sshll.u32 [#allocation7], 4
          %s599 = int_to_ptr.vmem [resolvable:$true] %s598
          %601 = dma.hbm_to_vmem [thread:$0]  %s5, 64, %s599, [#allocation6]
        $region36: #{farmer_predict.1} parent=11 // pred_fallthru
          _
        // Predicated region
        $region37: #{farmer_predict.1} parent=11 // pred_check
          %p602 = pneg %p208
        $region38: #{farmer_predict.1} parent=11 // pred_check_branch
          %604 = sbr.rel (%p602) target = $region40
        $region39: #{farmer_predict.1} parent=11 // pred_region
          %s606 = ssub.s32 4096, 4096
          %607 = vsyncadd [#allocation9], %s606
          %s608 = sshll.u32 [#allocation8], 4
          %s609 = int_to_ptr.vmem [resolvable:$true] %s608
          %614 = dma.hbm_to_vmem [thread:$0]  %s6, 4096, %s609, [#allocation9], 256, 256, 16
        $region40: #{farmer_predict.1} parent=11 // pred_fallthru
          _
        // Predicated region
        $region41: #{farmer_predict.1} parent=11 // pred_check
          %p615 = pneg %p229
        $region42: #{farmer_predict.1} parent=11 // pred_check_branch
          %617 = sbr.rel (%p615) target = $region44
        $region43: #{farmer_predict.1} parent=11 // pred_region
          %s619 = ssub.s32 13824, 13824
          %620 = vsyncadd [#allocation9], %s619
          %s621 = sshll.u32 [#allocation10], 4
          %s622 = int_to_ptr.vmem [resolvable:$true] %s621
          %627 = dma.hbm_to_vmem [thread:$0]  %s7, 13824, %s622, [#allocation9], 256, 256, 16
        $region44: #{farmer_predict.1} parent=11 // pred_fallthru
          _
        // Predicated region
        $region45: #{farmer_predict.1} parent=11 // pred_check
          %p628 = pneg %p250
        $region46: #{farmer_predict.1} parent=11 // pred_check_branch
          %630 = sbr.rel (%p628) target = $region48
        $region47: #{farmer_predict.1} parent=11 // pred_region
          %s632 = ssub.s32 64, 64
          %633 = vsyncadd [#allocation12], %s632
          %s635 = sshll.u32 [#allocation11], 4
          %s636 = int_to_ptr.vmem [resolvable:$true] %s635
          %638 = dma.hbm_to_vmem [thread:$0]  %s8, 64, %s636, [#allocation12]
        $region48: #{farmer_predict.1} parent=11 // pred_fallthru
          _
        // Predicated region
        $region49: #{farmer_predict.1} parent=11 // pred_check
          %p639 = pneg %p271
        $region50: #{farmer_predict.1} parent=11 // pred_check_branch
          %641 = sbr.rel (%p639) target = $region52
        $region51: #{farmer_predict.1} parent=11 // pred_region
          %s643 = ssub.s32 16384, 16384
          %644 = vsyncadd [#allocation12], %s643
          %s645 = sshll.u32 [#allocation13], 4
          %s646 = int_to_ptr.vmem [resolvable:$true] %s645
          %651 = dma.hbm_to_vmem [thread:$0]  %s9, 16384, %s646, [#allocation12], 256, 256, 16
        $region52: #{farmer_predict.1} parent=11 // pred_fallthru
          _
        // Predicated region
        $region53: #{farmer_predict.1} parent=11 // pred_check
          %p652 = pneg %p292
        $region54: #{farmer_predict.1} parent=11 // pred_check_branch
          %654 = sbr.rel (%p652) target = $region56
        $region55: #{farmer_predict.1} parent=11 // pred_region
          %s656 = ssub.s32 64, 64
          %657 = vsyncadd [#allocation15], %s656
          %s659 = sshll.u32 [#allocation14], 4
          %s660 = int_to_ptr.vmem [resolvable:$true] %s659
          %662 = dma.hbm_to_vmem [thread:$0]  %s10, 64, %s660, [#allocation15]
        $region56: #{farmer_predict.1} parent=11 // pred_fallthru
          _
        // Predicated region
        $region57: #{farmer_predict.1} parent=11 // pred_check
          %p663 = pneg %p313
        $region58: #{farmer_predict.1} parent=11 // pred_check_branch
          %665 = sbr.rel (%p663) target = $region60
        $region59: #{farmer_predict.1} parent=11 // pred_region
          %s667 = ssub.s32 16384, 16384
          %668 = vsyncadd [#allocation15], %s667
          %s669 = sshll.u32 [#allocation16], 4
          %s670 = int_to_ptr.vmem [resolvable:$true] %s669
          %675 = dma.hbm_to_vmem [thread:$0]  %s11, 16384, %s670, [#allocation15], 256, 256, 16
        $region60: #{farmer_predict.1} parent=11 // pred_fallthru
          _
        // Predicated region
        $region61: #{farmer_predict.1} parent=11 // pred_check
          %p676 = pneg %p334
        $region62: #{farmer_predict.1} parent=11 // pred_check_branch
          %678 = sbr.rel (%p676) target = $region64
        $region63: #{farmer_predict.1} parent=11 // pred_region
          %s680 = ssub.s32 64, 64
          %681 = vsyncadd [#allocation18], %s680
          %s683 = sshll.u32 [#allocation17], 4
          %s684 = int_to_ptr.vmem [resolvable:$true] %s683
          %686 = dma.hbm_to_vmem [thread:$0]  %s12, 64, %s684, [#allocation18]
        $region64: #{farmer_predict.1} parent=11 // pred_fallthru
          _
        // Predicated region
        $region65: #{farmer_predict.1} parent=11 // pred_check
          %p687 = pneg %p355
        $region66: #{farmer_predict.1} parent=11 // pred_check_branch
          %689 = sbr.rel (%p687) target = $region68
        $region67: #{farmer_predict.1} parent=11 // pred_region
          %s691 = ssub.s32 16384, 16384
          %692 = vsyncadd [#allocation18], %s691
          %s693 = sshll.u32 [#allocation19], 4
          %s694 = int_to_ptr.vmem [resolvable:$true] %s693
          %699 = dma.hbm_to_vmem [thread:$0]  %s13, 16384, %s694, [#allocation18], 256, 256, 16
        $region68: #{farmer_predict.1} parent=11 // pred_fallthru
          _
        // Predicated region
        $region69: #{farmer_predict.1} parent=11 // pred_check
          %p700 = pneg %p376
        $region70: #{farmer_predict.1} parent=11 // pred_check_branch
          %702 = sbr.rel (%p700) target = $region72
        $region71: #{farmer_predict.1} parent=11 // pred_region
          %s704 = ssub.s32 64, 64
          %705 = vsyncadd [#allocation21], %s704
          %s707 = sshll.u32 [#allocation20], 4
          %s708 = int_to_ptr.vmem [resolvable:$true] %s707
          %710 = dma.hbm_to_vmem [thread:$0]  %s14, 64, %s708, [#allocation21]
        $region72: #{farmer_predict.1} parent=11 // pred_fallthru
          _
        // Predicated region
        $region73: #{farmer_predict.1} parent=11 // pred_check
          %p711 = pneg %p475
        $region74: #{farmer_predict.1} parent=11 // pred_check_branch
          %713 = sbr.rel (%p711) target = $region76
        $region75: #{farmer_predict.1} parent=11 // pred_region
          %s715 = ssub.s32 16, 16
          %716 = vsyncadd [#allocation6], %s715
          %s718 = sshll.u32 [#allocation25], 4
          %s719 = int_to_ptr.vmem [resolvable:$true] %s718
          %721 = dma.hbm_to_vmem [thread:$0]  %s18, 16, %s719, [#allocation6]
        $region76: #{farmer_predict.1} parent=11 // pred_fallthru
          _
      $region12: #{farmer_predict.1} parent=5 // pred_fallthru
        _
      %p722 = scmp.lt.s32.totalorder %s34, 4
      // Predicated region
      $region77: #{farmer_predict.1} parent=5 // pred_check
        %p723 = pneg %p722
      $region78: #{farmer_predict.1} parent=5 // pred_check_branch
        %725 = sbr.rel (%p723) target = $region80
      $region79: #{farmer_predict.1} parent=5 // pred_region
        // Predicated region
        $region81: #{farmer_predict.1} parent=79 // pred_check
          %p726 = pneg %p396
        $region82: #{farmer_predict.1} parent=79 // pred_check_branch
          %728 = sbr.rel (%p726) target = $region84
        $region83: #{farmer_predict.1} parent=79 // pred_region
          %s729 = sand.u32 %s34, 1
          %s730 = scalar_lea.sflag [#allocation4], %s729
          %s731 = sand.u32 %s386, 1
          %s732 = smul.addr %s731, 1792
          %s733 = scalar_lea.vmem [#allocation22], %s732
          %s734 = smul.u32 7, %s42
          %s736 = ssub.s32 28672, 28672
          %737 = vsyncadd %s730, %s736
          %s738 = smul.addr %s734, 64
          %s739 = scalar_lea.hbm %s15, %s738
          %s740 = sshll.u32 %s733, 4
          %s741 = int_to_ptr.vmem [resolvable:$true] %s740
          %746 = dma.hbm_to_vmem [thread:$0]  %s739, 28672, %s741, %s730, 1792, 448, 28
        $region84: #{farmer_predict.1} parent=79 // pred_fallthru
          _
        // Predicated region
        $region85: #{farmer_predict.1} parent=79 // pred_check
          %p747 = pneg %p422
        $region86: #{farmer_predict.1} parent=79 // pred_check_branch
          %749 = sbr.rel (%p747) target = $region88
        $region87: #{farmer_predict.1} parent=79 // pred_region
          %s750 = sand.u32 %s34, 1
          %s751 = scalar_lea.sflag [#allocation4], %s750
          %s752 = sand.u32 %s412, 1
          %s753 = smul.addr %s752, 7
          %s754 = scalar_lea.vmem [#allocation23], %s753
          %s755 = smul.u32 7, %s42
          %s757 = ssub.s32 112, 112
          %758 = vsyncadd %s751, %s757
          %s759 = smul.addr %s755, 16
          %s760 = scalar_lea.hbm %s16, %s759
          %s762 = sshll.u32 %s754, 4
          %s763 = int_to_ptr.vmem [resolvable:$true] %s762
          %765 = dma.hbm_to_vmem [thread:$0]  %s760, 112, %s763, %s751
        $region88: #{farmer_predict.1} parent=79 // pred_fallthru
          _
        // Predicated region
        $region89: #{farmer_predict.1} parent=79 // pred_check
          %p766 = pneg %p448
        $region90: #{farmer_predict.1} parent=79 // pred_check_branch
          %768 = sbr.rel (%p766) target = $region92
        $region91: #{farmer_predict.1} parent=79 // pred_region
          %s769 = sand.u32 %s34, 1
          %s770 = scalar_lea.sflag [#allocation4], %s769
          %s771 = sand.u32 %s438, 1
          %s772 = smul.addr %s771, 448
          %s773 = scalar_lea.vmem [#allocation24], %s772
          %s774 = smul.u32 112, %s42
          %s776 = ssub.s32 7168, 7168
          %777 = vsyncadd %s770, %s776
          %s778 = smul.addr %s774, 64
          %s779 = scalar_lea.hbm %s17, %s778
          %s780 = sshll.u32 %s773, 4
          %s781 = int_to_ptr.vmem [resolvable:$true] %s780
          %786 = dma.hbm_to_vmem [thread:$0]  %s779, 7168, %s781, %s770, 64, 64, 4
        $region92: #{farmer_predict.1} parent=79 // pred_fallthru
          _
      $region80: #{farmer_predict.1} parent=5 // pred_fallthru
        _
      %p787 = scmp.le.s32.totalorder 1, %s34
      %p788 = scmp.lt.s32.totalorder %s34, 5
      %p789 = pnand %p787, %p788
      %p790 = pneg %p789
      // Predicated region
      $region93: #{farmer_predict.1} parent=5 // pred_check
        _
      $region94: #{farmer_predict.1} parent=5 // pred_check_branch
        %792 = sbr.rel (%p789) target = $region96
      $region95: #{farmer_predict.1} parent=5 // pred_region
        %s793 = ssub.s32 %s34, 1
        // Predicated region
        $region97: #{farmer_predict.1} parent=95 // pred_check
          %p794 = pneg %p145
        $region98: #{farmer_predict.1} parent=95 // pred_check_branch
          %796 = sbr.rel (%p794) target = $region100
        $region99: #{farmer_predict.1} parent=95 // pred_region
          %797 = dma.done [#allocation4], 5376
        $region100: #{farmer_predict.1} parent=95 // pred_fallthru
          _
        // Predicated region
        $region101: #{farmer_predict.1} parent=95 // pred_check
          %p798 = pneg %p166
        $region102: #{farmer_predict.1} parent=95 // pred_check_branch
          %800 = sbr.rel (%p798) target = $region104
        $region103: #{farmer_predict.1} parent=95 // pred_region
          %801 = dma.done [#allocation6], 4096
        $region104: #{farmer_predict.1} parent=95 // pred_fallthru
          _
        // Predicated region
        $region105: #{farmer_predict.1} parent=95 // pred_check
          %p802 = pneg %p187
        $region106: #{farmer_predict.1} parent=95 // pred_check_branch
          %804 = sbr.rel (%p802) target = $region108
        $region107: #{farmer_predict.1} parent=95 // pred_region
          %805 = dma.done [#allocation6], 64
        $region108: #{farmer_predict.1} parent=95 // pred_fallthru
          _
        // Predicated region
        $region109: #{farmer_predict.1} parent=95 // pred_check
          %p806 = pneg %p208
        $region110: #{farmer_predict.1} parent=95 // pred_check_branch
          %808 = sbr.rel (%p806) target = $region112
        $region111: #{farmer_predict.1} parent=95 // pred_region
          %809 = dma.done [#allocation9], 4096
        $region112: #{farmer_predict.1} parent=95 // pred_fallthru
          _
        // Predicated region
        $region113: #{farmer_predict.1} parent=95 // pred_check
          %p810 = pneg %p229
        $region114: #{farmer_predict.1} parent=95 // pred_check_branch
          %812 = sbr.rel (%p810) target = $region116
        $region115: #{farmer_predict.1} parent=95 // pred_region
          %813 = dma.done [#allocation9], 13824
        $region116: #{farmer_predict.1} parent=95 // pred_fallthru
          _
        // Predicated region
        $region117: #{farmer_predict.1} parent=95 // pred_check
          %p814 = pneg %p250
        $region118: #{farmer_predict.1} parent=95 // pred_check_branch
          %816 = sbr.rel (%p814) target = $region120
        $region119: #{farmer_predict.1} parent=95 // pred_region
          %817 = dma.done [#allocation12], 64
        $region120: #{farmer_predict.1} parent=95 // pred_fallthru
          _
        // Predicated region
        $region121: #{farmer_predict.1} parent=95 // pred_check
          %p818 = pneg %p271
        $region122: #{farmer_predict.1} parent=95 // pred_check_branch
          %820 = sbr.rel (%p818) target = $region124
        $region123: #{farmer_predict.1} parent=95 // pred_region
          %821 = dma.done [#allocation12], 16384
        $region124: #{farmer_predict.1} parent=95 // pred_fallthru
          _
        // Predicated region
        $region125: #{farmer_predict.1} parent=95 // pred_check
          %p822 = pneg %p292
        $region126: #{farmer_predict.1} parent=95 // pred_check_branch
          %824 = sbr.rel (%p822) target = $region128
        $region127: #{farmer_predict.1} parent=95 // pred_region
          %825 = dma.done [#allocation15], 64
        $region128: #{farmer_predict.1} parent=95 // pred_fallthru
          _
        // Predicated region
        $region129: #{farmer_predict.1} parent=95 // pred_check
          %p826 = pneg %p313
        $region130: #{farmer_predict.1} parent=95 // pred_check_branch
          %828 = sbr.rel (%p826) target = $region132
        $region131: #{farmer_predict.1} parent=95 // pred_region
          %829 = dma.done [#allocation15], 16384
        $region132: #{farmer_predict.1} parent=95 // pred_fallthru
          _
        // Predicated region
        $region133: #{farmer_predict.1} parent=95 // pred_check
          %p830 = pneg %p334
        $region134: #{farmer_predict.1} parent=95 // pred_check_branch
          %832 = sbr.rel (%p830) target = $region136
        $region135: #{farmer_predict.1} parent=95 // pred_region
          %833 = dma.done [#allocation18], 64
        $region136: #{farmer_predict.1} parent=95 // pred_fallthru
          _
        // Predicated region
        $region137: #{farmer_predict.1} parent=95 // pred_check
          %p834 = pneg %p355
        $region138: #{farmer_predict.1} parent=95 // pred_check_branch
          %836 = sbr.rel (%p834) target = $region140
        $region139: #{farmer_predict.1} parent=95 // pred_region
          %837 = dma.done [#allocation18], 16384
        $region140: #{farmer_predict.1} parent=95 // pred_fallthru
          _
        // Predicated region
        $region141: #{farmer_predict.1} parent=95 // pred_check
          %p838 = pneg %p376
        $region142: #{farmer_predict.1} parent=95 // pred_check_branch
          %840 = sbr.rel (%p838) target = $region144
        $region143: #{farmer_predict.1} parent=95 // pred_region
          %841 = dma.done [#allocation21], 64
        $region144: #{farmer_predict.1} parent=95 // pred_fallthru
          _
        %s842 = sand.u32 %s39, 1
        %s843 = scalar_lea.sflag [#allocation4], %s842
        %s844 = sand.u32 %s389, 1
        %s845 = smul.addr %s844, 1792
        %s846 = scalar_lea.vmem [#allocation22], %s845
        // Predicated region
        $region145: #{farmer_predict.1} parent=95 // pred_check
          %p847 = pneg %p402
        $region146: #{farmer_predict.1} parent=95 // pred_check_branch
          %849 = sbr.rel (%p847) target = $region148
        $region147: #{farmer_predict.1} parent=95 // pred_region
          %850 = dma.done %s843, 28672
        $region148: #{farmer_predict.1} parent=95 // pred_fallthru
          _
        %s851 = sand.u32 %s39, 1
        %s852 = scalar_lea.sflag [#allocation4], %s851
        %s853 = sand.u32 %s415, 1
        %s854 = smul.addr %s853, 7
        %s855 = scalar_lea.vmem [#allocation23], %s854
        // Predicated region
        $region149: #{farmer_predict.1} parent=95 // pred_check
          %p856 = pneg %p428
        $region150: #{farmer_predict.1} parent=95 // pred_check_branch
          %858 = sbr.rel (%p856) target = $region152
        $region151: #{farmer_predict.1} parent=95 // pred_region
          %859 = dma.done %s852, 112
        $region152: #{farmer_predict.1} parent=95 // pred_fallthru
          _
        %s860 = sand.u32 %s39, 1
        %s861 = scalar_lea.sflag [#allocation4], %s860
        %s862 = sand.u32 %s441, 1
        %s863 = smul.addr %s862, 448
        %s864 = scalar_lea.vmem [#allocation24], %s863
        // Predicated region
        $region153: #{farmer_predict.1} parent=95 // pred_check
          %p865 = pneg %p454
        $region154: #{farmer_predict.1} parent=95 // pred_check_branch
          %867 = sbr.rel (%p865) target = $region156
        $region155: #{farmer_predict.1} parent=95 // pred_region
          %868 = dma.done %s861, 7168
        $region156: #{farmer_predict.1} parent=95 // pred_fallthru
          _
        // Predicated region
        $region157: #{farmer_predict.1} parent=95 // pred_check
          %p869 = pneg %p475
        $region158: #{farmer_predict.1} parent=95 // pred_check_branch
          %871 = sbr.rel (%p869) target = $region160
        $region159: #{farmer_predict.1} parent=95 // pred_region
          %872 = dma.done [#allocation6], 16
        $region160: #{farmer_predict.1} parent=95 // pred_fallthru
          _
        %p873 = scmp.lt.s32.totalorder %s43, 0
        %s874 = scalar_select %p873, %s43, 0
        %s875 = smul.addr %s874, 2
        %s876 = smul.addr %s875, 8
        %s877 = scalar_lea.vmem %s0, %s876
        %p878 = pneg %p72
        %p879 = pneg %p69
        %p880 = scmp.lt.s32.totalorder %s43, 0
        %s881 = scalar_select %p880, %s43, 0
        %s882 = smul.addr %s881, 4
        %s883 = smul.addr %s882, 8
        %s884 = scalar_lea.vmem %s1, %s883
        %p885 = pneg %p98
        %p886 = pneg %p95
        %p887 = scmp.lt.s32.totalorder %s43, 0
        %s888 = scalar_select %p887, %s43, 0
        %s889 = smul.addr %s888, 8
        %s890 = scalar_lea.vmem %s2, %s889
        %p891 = pneg %p124
        %p892 = pneg %p121
        %p893 = pneg %p145
        %p894 = pneg %p142
        %p895 = pneg %p166
        %p896 = pneg %p163
        %p897 = pneg %p187
        %p898 = pneg %p184
        %p899 = pneg %p208
        %p900 = pneg %p205
        %p901 = pneg %p229
        %p902 = pneg %p226
        %p903 = pneg %p250
        %p904 = pneg %p247
        %p905 = pneg %p271
        %p906 = pneg %p268
        %p907 = pneg %p292
        %p908 = pneg %p289
        %p909 = pneg %p313
        %p910 = pneg %p310
        %p911 = pneg %p334
        %p912 = pneg %p331
        %p913 = pneg %p355
        %p914 = pneg %p352
        %p915 = pneg %p376
        %p916 = pneg %p373
        %s917 = sand.u32 %s39, 1
        %s918 = scalar_lea.sflag [#allocation4], %s917
        %s919 = sand.u32 %s389, 1
        %s920 = smul.addr %s919, 1792
        %s921 = scalar_lea.vmem [#allocation22], %s920
        %p922 = pneg %p402
        %p923 = pneg %p399
        %s924 = sand.u32 %s39, 1
        %s925 = scalar_lea.sflag [#allocation4], %s924
        %s926 = sand.u32 %s415, 1
        %s927 = smul.addr %s926, 7
        %s928 = scalar_lea.vmem [#allocation23], %s927
        %p929 = pneg %p428
        %p930 = pneg %p425
        %s931 = sand.u32 %s39, 1
        %s932 = scalar_lea.sflag [#allocation4], %s931
        %s933 = sand.u32 %s441, 1
        %s934 = smul.addr %s933, 448
        %s935 = scalar_lea.vmem [#allocation24], %s934
        %p936 = pneg %p454
        %p937 = pneg %p451
        %p938 = pneg %p475
        %p939 = pneg %p472
        %p940 = pneg %p501
        %p941 = pneg %p498
        %p942 = scmp.lt.s32.totalorder %s43, 0
        %s943 = scalar_select %p942, %s43, 0
        %s944 = smul.addr %s943, 8
        %s945 = scalar_lea.vmem %s19, %s944
        %p946 = pneg %p527
        %p947 = pneg %p524
        %p948 = scmp.lt.s32.totalorder %s43, 0
        %s949 = scalar_select %p948, %s43, 0
        %s950 = smul.addr %s949, 8
        %s951 = scalar_lea.vmem %s20, %s950
        %p952 = scmp.lt.s32.totalorder %s43, 0
        %s953 = scalar_select %p952, %s43, 0
        %s954 = smul.addr %s953, 2
        %s955 = smul.addr %s954, 8
        %s956 = scalar_lea.vmem %s0, %s955
        %p957 = scmp.lt.s32.totalorder %s43, 0
        %s958 = scalar_select %p957, %s43, 0
        %s959 = smul.addr %s958, 4
        %s960 = smul.addr %s959, 8
        %s961 = scalar_lea.vmem %s1, %s960
        %p962 = scmp.lt.s32.totalorder %s43, 0
        %s963 = scalar_select %p962, %s43, 0
        %s964 = smul.addr %s963, 8
        %s965 = scalar_lea.vmem %s2, %s964
        %s966 = smul.u32 7, %s44
        %s967 = smul.u32 7, %s44
        %s968 = smul.u32 112, %s44
        %p969 = scmp.lt.s32.totalorder %s43, 0
        %s970 = scalar_select %p969, %s43, 0
        %s971 = smul.addr %s970, 8
        %s972 = scalar_lea.vmem %s19, %s971
        %p973 = scmp.lt.s32.totalorder %s43, 0
        %s974 = scalar_select %p973, %s43, 0
        %s975 = smul.addr %s974, 8
        %s976 = scalar_lea.vmem %s20, %s975
        %p977 = scmp.eq.s32.totalorder %s44, 0
        // Predicated region
        $region161: #{farmer_predict.1} parent=95 // pred_check
          %p978 = pneg %p977
        $region162: #{farmer_predict.1} parent=95 // pred_check_branch
          %980 = sbr.rel (%p978) target = $region164
        $region163: #{farmer_predict.1} parent=95 // pred_region
          %v981 = vld [vmem:[#allocation3] sm:$0xff]
          %v982 = vld [vmem:[#allocation3 + $0x8] sm:$0xff]
          %v983 = vld [vmem:[#allocation3 + $0x10] sm:$0xff]
          %v984 = vld [vmem:[#allocation3 + $0x18] sm:$0xff]
          %v985 = vld [vmem:[#allocation3 + $0x20] sm:$0xff]
          %v986 = vld [vmem:[#allocation3 + $0x28] sm:$0xff]
          %v987 = vld [vmem:[#allocation3 + $0x30] sm:$0xff]
          %v988 = vld [vmem:[#allocation3 + $0x38] sm:$0xff]
          %v989 = vld [vmem:[#allocation3 + $0x40] sm:$0xff]
          %v990 = vld [vmem:[#allocation3 + $0x48] sm:$0xff]
          %v991 = vld [vmem:[#allocation3 + $0x50] sm:$0xff]
          %v992 = vld [vmem:[#allocation3 + $0x58] sm:$0xff]
          %v993 = vld [vmem:[#allocation3 + $0x60] sm:$0xff]
          %v994 = vld [vmem:[#allocation3 + $0x68] sm:$0xff]
          %v995 = vld [vmem:[#allocation3 + $0x70] sm:$0xff]
          %v996 = vld [vmem:[#allocation3 + $0x78] sm:$0xff]
          %v997 = vld [vmem:[#allocation3 + $0x80] sm:$0xff]
          %v998 = vld [vmem:[#allocation3 + $0x88] sm:$0xff]
          %v999 = vld [vmem:[#allocation3 + $0x90] sm:$0xff]
          %v1000 = vld [vmem:[#allocation3 + $0x98] sm:$0xff]
          %v1001 = vld [vmem:[#allocation3 + $0xa0] sm:$0xff]
          %v1002 = vld [vmem:[#allocation3 + $0xa8] sm:$0xff]
          %v1003 = vld [vmem:[#allocation3 + $0xb0] sm:$0xff]
          %v1004 = vld [vmem:[#allocation3 + $0xb8] sm:$0xff]
          %v1005 = vld [vmem:[#allocation3 + $0xc0] sm:$0xff]
          %v1006 = vld [vmem:[#allocation3 + $0xc8] sm:$0xff]
          %v1007 = vld [vmem:[#allocation3 + $0xd0] sm:$0xff]
          %v1008 = vld [vmem:[#allocation3 + $0xd8] sm:$0xff]
          %v1009 = vld [vmem:[#allocation3 + $0xe0] sm:$0xff]
          %v1010 = vld [vmem:[#allocation3 + $0xe8] sm:$0xff]
          %v1011 = vld [vmem:[#allocation3 + $0xf0] sm:$0xff]
          %v1012 = vld [vmem:[#allocation3 + $0xf8] sm:$0xff]
          %v1013 = vld [vmem:[#allocation3 + $0x100] sm:$0xff]
          %v1014 = vld [vmem:[#allocation3 + $0x108] sm:$0xff]
          %v1015 = vld [vmem:[#allocation3 + $0x110] sm:$0xff]
          %v1016 = vld [vmem:[#allocation3 + $0x118] sm:$0xff]
          %v1017 = vld [vmem:[#allocation3 + $0x120] sm:$0xff]
          %v1018 = vld [vmem:[#allocation3 + $0x128] sm:$0xff]
          %v1019 = vld [vmem:[#allocation3 + $0x130] sm:$0xff]
          %v1020 = vld [vmem:[#allocation3 + $0x138] sm:$0xff]
          %v1021 = vld [vmem:[#allocation3 + $0x140] sm:$0x11]
          %v1022 = vld [vmem:[#allocation3 + $0x148] sm:$0x11]
          %v1023 = vunpack.c.l.bf16 %v981
          %v1024 = vunpack.c.h.bf16 %v981
          %v1025 = vunpack.c.l.bf16 %v982
          %v1026 = vunpack.c.h.bf16 %v982
          %v1027 = vunpack.c.l.bf16 %v983
          %v1028 = vunpack.c.h.bf16 %v983
          %v1029 = vunpack.c.l.bf16 %v984
          %v1030 = vunpack.c.h.bf16 %v984
          %v1031 = vunpack.c.l.bf16 %v985
          %v1032 = vunpack.c.h.bf16 %v985
          %v1033 = vunpack.c.l.bf16 %v986
          %v1034 = vunpack.c.h.bf16 %v986
          %v1035 = vunpack.c.l.bf16 %v987
          %v1036 = vunpack.c.h.bf16 %v987
          %v1037 = vunpack.c.l.bf16 %v988
          %v1038 = vunpack.c.h.bf16 %v988
          %v1039 = vunpack.c.l.bf16 %v989
          %v1040 = vunpack.c.h.bf16 %v989
          %v1041 = vunpack.c.l.bf16 %v990
          %v1042 = vunpack.c.h.bf16 %v990
          %v1043 = vunpack.c.l.bf16 %v991
          %v1044 = vunpack.c.h.bf16 %v991
          %v1045 = vunpack.c.l.bf16 %v992
          %v1046 = vunpack.c.h.bf16 %v992
          %v1047 = vunpack.c.l.bf16 %v993
          %v1048 = vunpack.c.h.bf16 %v993
          %v1049 = vunpack.c.l.bf16 %v994
          %v1050 = vunpack.c.h.bf16 %v994
          %v1051 = vunpack.c.l.bf16 %v995
          %v1052 = vunpack.c.h.bf16 %v995
          %v1053 = vunpack.c.l.bf16 %v996
          %v1054 = vunpack.c.h.bf16 %v996
          %v1055 = vunpack.c.l.bf16 %v997
          %v1056 = vunpack.c.h.bf16 %v997
          %v1057 = vunpack.c.l.bf16 %v998
          %v1058 = vunpack.c.h.bf16 %v998
          %v1059 = vunpack.c.l.bf16 %v999
          %v1060 = vunpack.c.h.bf16 %v999
          %v1061 = vunpack.c.l.bf16 %v1000
          %v1062 = vunpack.c.h.bf16 %v1000
          %v1063 = vunpack.c.l.bf16 %v1001
          %v1064 = vunpack.c.h.bf16 %v1001
          %v1065 = vunpack.c.l.bf16 %v1002
          %v1066 = vunpack.c.h.bf16 %v1002
          %v1067 = vunpack.c.l.bf16 %v1003
          %v1068 = vunpack.c.h.bf16 %v1003
          %v1069 = vunpack.c.l.bf16 %v1004
          %v1070 = vunpack.c.h.bf16 %v1004
          %v1071 = vunpack.c.l.bf16 %v1005
          %v1072 = vunpack.c.h.bf16 %v1005
          %v1073 = vunpack.c.l.bf16 %v1006
          %v1074 = vunpack.c.h.bf16 %v1006
          %v1075 = vunpack.c.l.bf16 %v1007
          %v1076 = vunpack.c.h.bf16 %v1007
          %v1077 = vunpack.c.l.bf16 %v1008
          %v1078 = vunpack.c.h.bf16 %v1008
          %v1079 = vunpack.c.l.bf16 %v1009
          %v1080 = vunpack.c.h.bf16 %v1009
          %v1081 = vunpack.c.l.bf16 %v1010
          %v1082 = vunpack.c.h.bf16 %v1010
          %v1083 = vunpack.c.l.bf16 %v1011
          %v1084 = vunpack.c.h.bf16 %v1011
          %v1085 = vunpack.c.l.bf16 %v1012
          %v1086 = vunpack.c.h.bf16 %v1012
          %v1087 = vunpack.c.l.bf16 %v1013
          %v1088 = vunpack.c.h.bf16 %v1013
          %v1089 = vunpack.c.l.bf16 %v1014
          %v1090 = vunpack.c.h.bf16 %v1014
          %v1091 = vunpack.c.l.bf16 %v1015
          %v1092 = vunpack.c.h.bf16 %v1015
          %v1093 = vunpack.c.l.bf16 %v1016
          %v1094 = vunpack.c.h.bf16 %v1016
          %v1095 = vunpack.c.l.bf16 %v1017
          %v1096 = vunpack.c.h.bf16 %v1017
          %v1097 = vunpack.c.l.bf16 %v1018
          %v1098 = vunpack.c.h.bf16 %v1018
          %v1099 = vunpack.c.l.bf16 %v1019
          %v1100 = vunpack.c.h.bf16 %v1019
          %v1101 = vunpack.c.l.bf16 %v1020
          %v1102 = vunpack.c.h.bf16 %v1020
          %v1103 = vunpack.c.l.bf16 %v1021
          %v1104 = vunpack.c.h.bf16 %v1021
          %v1105 = vunpack.c.l.bf16 %v1022
          %v1106 = vunpack.c.h.bf16 %v1022
          %v1107 = vld [vmem:[#allocation5] sm:$0xff]
          %v1108 = vld [vmem:[#allocation5 + $0x8] sm:$0xff]
          %v1109 = vld [vmem:[#allocation5 + $0x10] sm:$0xff]
          %v1110 = vld [vmem:[#allocation5 + $0x18] sm:$0xff]
          %v1111 = vld [vmem:[#allocation5 + $0x20] sm:$0xff]
          %v1112 = vld [vmem:[#allocation5 + $0x28] sm:$0xff]
          %v1113 = vld [vmem:[#allocation5 + $0x30] sm:$0xff]
          %v1114 = vld [vmem:[#allocation5 + $0x38] sm:$0xff]
          %v1115 = vld [vmem:[#allocation5 + $0x40] sm:$0xff]
          %v1116 = vld [vmem:[#allocation5 + $0x48] sm:$0xff]
          %v1117 = vld [vmem:[#allocation5 + $0x50] sm:$0xff]
          %v1118 = vld [vmem:[#allocation5 + $0x58] sm:$0xff]
          %v1119 = vld [vmem:[#allocation5 + $0x60] sm:$0xff]
          %v1120 = vld [vmem:[#allocation5 + $0x68] sm:$0xff]
          %v1121 = vld [vmem:[#allocation5 + $0x70] sm:$0xff]
          %v1122 = vld [vmem:[#allocation5 + $0x78] sm:$0xff]
          %v1123 = vld [vmem:[#allocation5 + $0x80] sm:$0xff]
          %v1124 = vld [vmem:[#allocation5 + $0x88] sm:$0xff]
          %v1125 = vld [vmem:[#allocation5 + $0x90] sm:$0xff]
          %v1126 = vld [vmem:[#allocation5 + $0x98] sm:$0xff]
          %v1127 = vld [vmem:[#allocation5 + $0xa0] sm:$0xff]
          %v1128 = vld [vmem:[#allocation5 + $0xa8] sm:$0xff]
          %v1129 = vld [vmem:[#allocation5 + $0xb0] sm:$0xff]
          %v1130 = vld [vmem:[#allocation5 + $0xb8] sm:$0xff]
          %v1131 = vld [vmem:[#allocation5 + $0xc0] sm:$0xff]
          %v1132 = vld [vmem:[#allocation5 + $0xc8] sm:$0xff]
          %v1133 = vld [vmem:[#allocation5 + $0xd0] sm:$0xff]
          %v1134 = vld [vmem:[#allocation5 + $0xd8] sm:$0xff]
          %v1135 = vld [vmem:[#allocation5 + $0xe0] sm:$0xff]
          %v1136 = vld [vmem:[#allocation5 + $0xe8] sm:$0xff]
          %v1137 = vld [vmem:[#allocation5 + $0xf0] sm:$0xff]
          %v1138 = vld [vmem:[#allocation5 + $0xf8] sm:$0xff]
          %v1139 = vunpack.c.l.bf16 %v1107
          %v1140 = vunpack.c.h.bf16 %v1107
          %v1141 = vunpack.c.l.bf16 %v1108
          %v1142 = vunpack.c.h.bf16 %v1108
          %v1143 = vunpack.c.l.bf16 %v1109
          %v1144 = vunpack.c.h.bf16 %v1109
          %v1145 = vunpack.c.l.bf16 %v1110
          %v1146 = vunpack.c.h.bf16 %v1110
          %v1147 = vunpack.c.l.bf16 %v1111
          %v1148 = vunpack.c.h.bf16 %v1111
          %v1149 = vunpack.c.l.bf16 %v1112
          %v1150 = vunpack.c.h.bf16 %v1112
          %v1151 = vunpack.c.l.bf16 %v1113
          %v1152 = vunpack.c.h.bf16 %v1113
          %v1153 = vunpack.c.l.bf16 %v1114
          %v1154 = vunpack.c.h.bf16 %v1114
          %v1155 = vunpack.c.l.bf16 %v1115
          %v1156 = vunpack.c.h.bf16 %v1115
          %v1157 = vunpack.c.l.bf16 %v1116
          %v1158 = vunpack.c.h.bf16 %v1116
          %v1159 = vunpack.c.l.bf16 %v1117
          %v1160 = vunpack.c.h.bf16 %v1117
          %v1161 = vunpack.c.l.bf16 %v1118
          %v1162 = vunpack.c.h.bf16 %v1118
          %v1163 = vunpack.c.l.bf16 %v1119
          %v1164 = vunpack.c.h.bf16 %v1119
          %v1165 = vunpack.c.l.bf16 %v1120
          %v1166 = vunpack.c.h.bf16 %v1120
          %v1167 = vunpack.c.l.bf16 %v1121
          %v1168 = vunpack.c.h.bf16 %v1121
          %v1169 = vunpack.c.l.bf16 %v1122
          %v1170 = vunpack.c.h.bf16 %v1122
          %v1171 = vunpack.c.l.bf16 %v1123
          %v1172 = vunpack.c.h.bf16 %v1123
          %v1173 = vunpack.c.l.bf16 %v1124
          %v1174 = vunpack.c.h.bf16 %v1124
          %v1175 = vunpack.c.l.bf16 %v1125
          %v1176 = vunpack.c.h.bf16 %v1125
          %v1177 = vunpack.c.l.bf16 %v1126
          %v1178 = vunpack.c.h.bf16 %v1126
          %v1179 = vunpack.c.l.bf16 %v1127
          %v1180 = vunpack.c.h.bf16 %v1127
          %v1181 = vunpack.c.l.bf16 %v1128
          %v1182 = vunpack.c.h.bf16 %v1128
          %v1183 = vunpack.c.l.bf16 %v1129
          %v1184 = vunpack.c.h.bf16 %v1129
          %v1185 = vunpack.c.l.bf16 %v1130
          %v1186 = vunpack.c.h.bf16 %v1130
          %v1187 = vunpack.c.l.bf16 %v1131
          %v1188 = vunpack.c.h.bf16 %v1131
          %v1189 = vunpack.c.l.bf16 %v1132
          %v1190 = vunpack.c.h.bf16 %v1132
          %v1191 = vunpack.c.l.bf16 %v1133
          %v1192 = vunpack.c.h.bf16 %v1133
          %v1193 = vunpack.c.l.bf16 %v1134
          %v1194 = vunpack.c.h.bf16 %v1134
          %v1195 = vunpack.c.l.bf16 %v1135
          %v1196 = vunpack.c.h.bf16 %v1135
          %v1197 = vunpack.c.l.bf16 %v1136
          %v1198 = vunpack.c.h.bf16 %v1136
          %v1199 = vunpack.c.l.bf16 %v1137
          %v1200 = vunpack.c.h.bf16 %v1137
          %v1201 = vunpack.c.l.bf16 %v1138
          %v1202 = vunpack.c.h.bf16 %v1138
          %v1203 = vld [vmem:[%s956] sm:$0xff]
          %v1204 = vld [vmem:[%s956 + $0x8] sm:$0xff]
          %s1205 = scalar_lea.vmem %s956, 16
          %v1206 = vld [vmem:[%s1205] sm:$0xff]
          %v1207 = vld [vmem:[%s1205 + $0x8] sm:$0xff]
          %s1208 = scalar_lea.vmem %s956, 32
          %v1209 = vld [vmem:[%s1208] sm:$0xff]
          %v1210 = vld [vmem:[%s1208 + $0x8] sm:$0xff]
          %s1211 = scalar_lea.vmem %s956, 48
          %v1212 = vld [vmem:[%s1211] sm:$0xff]
          %v1213 = vld [vmem:[%s1211 + $0x8] sm:$0xff]
          %s1214 = scalar_lea.vmem %s956, 64
          %v1215 = vld [vmem:[%s1214] sm:$0xff]
          %v1216 = vld [vmem:[%s1214 + $0x8] sm:$0xff]
          %s1217 = scalar_lea.vmem %s956, 80
          %v1218 = vld [vmem:[%s1217] sm:$0xff]
          %v1219 = vld [vmem:[%s1217 + $0x8] sm:$0xff]
          %s1220 = scalar_lea.vmem %s956, 96
          %v1221 = vld [vmem:[%s1220] sm:$0xff]
          %v1222 = vld [vmem:[%s1220 + $0x8] sm:$0xff]
          %s1223 = scalar_lea.vmem %s956, 112
          %v1224 = vld [vmem:[%s1223] sm:$0xff]
          %v1225 = vld [vmem:[%s1223 + $0x8] sm:$0xff]
          %v1226 = vld [vmem:[#allocation7] sm:$0xf]
          %v1228 = vlaneseq
          %v1229 = vshrl.u32 %v1228, 7
          %v1230 = vsub.s32 0, %v1229
          %v1231 = vrot.slane %v1226, %v1230
          %v1232 = vlaneseq
          %v1233 = vshrl.u32 %v1232, 7
          %v1234 = vsub.s32 1, %v1233
          %v1235 = vrot.slane %v1226, %v1234
          %v1236 = vlaneseq
          %v1237 = vshrl.u32 %v1236, 7
          %v1238 = vsub.s32 2, %v1237
          %v1239 = vrot.slane %v1226, %v1238
          %v1240 = vlaneseq
          %v1241 = vshrl.u32 %v1240, 7
          %v1242 = vsub.s32 3, %v1241
          %v1243 = vrot.slane %v1226, %v1242
          %vm1248 = vcmask 277504
          %v1250 = vsel %vm1248, %v1204, 0
          %v1253 = vsel %vm1248, %v1207, 0
          %v1256 = vsel %vm1248, %v1210, 0
          %v1259 = vsel %vm1248, %v1213, 0
          %v1262 = vsel %vm1248, %v1216, 0
          %v1265 = vsel %vm1248, %v1219, 0
          %v1268 = vsel %vm1248, %v1222, 0
          %v1271 = vsel %vm1248, %v1225, 0
          %vm1273 = vcmask 1041408
          %v1275 = vsel %vm1273, %v1103, 0
          %v1278 = vsel %vm1273, %v1104, 0
          %v1281 = vsel %vm1273, %v1105, 0
          %v1284 = vsel %vm1273, %v1106, 0
          %1286 = vmatprep.subr.mxu0 %v1024
          %1287 = vmatpush1.msra.mxu0 %v1023
          %1288 = vmatprep.subr.mxu0 %v1028
          %1289 = vmatpush1.msra.mxu0 %v1027
          %1290 = vmatprep.subr.mxu0 %v1032
          %1291 = vmatpush1.msra.mxu0 %v1031
          %1292 = vmatprep.subr.mxu0 %v1036
          %1293 = vmatpush1.msra.mxu0 %v1035
          %1294 = vmatprep.subr.mxu0 %v1040
          %1295 = vmatpush1.msra.mxu0 %v1039
          %1296 = vmatprep.subr.mxu0 %v1044
          %1297 = vmatpush1.msra.mxu0 %v1043
          %1298 = vmatprep.subr.mxu0 %v1048
          %1299 = vmatpush1.msra.mxu0 %v1047
          %1300 = vmatprep.subr.mxu0 %v1052
          %1301 = vmatpush1.msra.mxu0 %v1051
          %1302 = vmatprep.subr.mxu0 %v1056
          %1303 = vmatpush1.msra.mxu0 %v1055
          %1304 = vmatprep.subr.mxu0 %v1060
          %1305 = vmatpush1.msra.mxu0 %v1059
          %1306 = vmatprep.subr.mxu0 %v1064
          %1307 = vmatpush1.msra.mxu0 %v1063
          %1308 = vmatprep.subr.mxu0 %v1068
          %1309 = vmatpush1.msra.mxu0 %v1067
          %1310 = vmatprep.subr.mxu0 %v1072
          %1311 = vmatpush1.msra.mxu0 %v1071
          %1312 = vmatprep.subr.mxu0 %v1076
          %1313 = vmatpush1.msra.mxu0 %v1075
          %1314 = vmatprep.subr.mxu0 %v1080
          %1315 = vmatpush1.msra.mxu0 %v1079
          %1316 = vmatprep.subr.mxu0 %v1084
          %1317 = vmatpush1.msra.mxu0 %v1083
          %1318 = vmatprep.subr.mxu0 %v1088
          %1319 = vmatpush1.msra.mxu0 %v1087
          %1320 = vmatprep.subr.mxu0 %v1092
          %1321 = vmatpush1.msra.mxu0 %v1091
          %1322 = vmatprep.subr.mxu0 %v1096
          %1323 = vmatpush1.msra.mxu0 %v1095
          %1324 = vmatprep.subr.mxu0 %v1100
          %1325 = vmatpush1.msra.mxu0 %v1099
          %1326 = vmatprep.subr.mxu0 %v1278
          %1327 = vmatpush1.msra.mxu0 %v1275
          %1328 = vmatprep.subr.mxu0 0.0
          %1329 = vmatpush1.msra.mxu0 0.0
          %1330 = vmatprep.subr.mxu0 0.0
          %1331 = vmatpush1.msra.mxu0 0.0
          %1332 = vmatprep.subr.mxu0 0.0
          %1333 = vmatpush1.msra.mxu0 0.0
          %1334 = vmatprep.subr.mxu0 0.0
          %1335 = vmatpush1.msra.mxu0 0.0
          %1336 = vmatprep.subr.mxu0 0.0
          %1337 = vmatpush1.msra.mxu0 0.0
          %1338 = vmatprep.subr.mxu0 0.0
          %1339 = vmatpush1.msra.mxu0 0.0
          %1340 = vmatprep.subr.mxu0 0.0
          %1341 = vmatpush1.msra.mxu0 0.0
          %1342 = vmatprep.subr.mxu0 0.0
          %1343 = vmatpush1.msra.mxu0 0.0
          %1344 = vmatprep.subr.mxu0 0.0
          %1345 = vmatpush1.msra.mxu0 0.0
          %1346 = vmatprep.subr.mxu0 0.0
          %1347 = vmatpush1.msra.mxu0 0.0
          %1348 = vmatprep.subr.mxu0 0.0
          %1349 = vmatpush1.msra.mxu0 0.0
          %1350 = vmatprep.mubr.f32.mxu0 %v1250
          %1351 = vmatmul.mubr.f32.gmra.mrb[0].mxu0 %v1203
          %v1352 = vpop.f32.mrb[0].mxu0
          %v1353 = vadd.f32 %v1231, %v1352
          %v1354 = vpop.f32.mrb[0].mxu0
          %v1355 = vadd.f32 %v1235, %v1354
          %1356 = vmatprep.mubr.f32.mxu0 %v1253
          %1357 = vmatmul.mubr.f32.gmra.mrb[0].mxu0 %v1206
          %v1358 = vpop.f32.mrb[0].mxu0
          %v1359 = vadd.f32 %v1231, %v1358
          %v1360 = vpop.f32.mrb[0].mxu0
          %v1361 = vadd.f32 %v1235, %v1360
          %1362 = vmatprep.mubr.f32.mxu0 %v1256
          %1363 = vmatmul.mubr.f32.gmra.mrb[0].mxu0 %v1209
          %v1364 = vpop.f32.mrb[0].mxu0
          %v1365 = vadd.f32 %v1231, %v1364
          %v1366 = vpop.f32.mrb[0].mxu0
          %v1367 = vadd.f32 %v1235, %v1366
          %1368 = vmatprep.mubr.f32.mxu0 %v1259
          %1369 = vmatmul.mubr.f32.gmra.mrb[0].mxu0 %v1212
          %v1370 = vpop.f32.mrb[0].mxu0
          %v1371 = vadd.f32 %v1231, %v1370
          %v1372 = vpop.f32.mrb[0].mxu0
          %v1373 = vadd.f32 %v1235, %v1372
          %1374 = vmatprep.mubr.f32.mxu0 %v1262
          %1375 = vmatmul.mubr.f32.gmra.mrb[0].mxu0 %v1215
          %v1376 = vpop.f32.mrb[0].mxu0
          %v1377 = vadd.f32 %v1231, %v1376
          %v1378 = vpop.f32.mrb[0].mxu0
          %v1379 = vadd.f32 %v1235, %v1378
          %1380 = vmatprep.mubr.f32.mxu0 %v1265
          %1381 = vmatmul.mubr.f32.gmra.mrb[0].mxu0 %v1218
          %v1382 = vpop.f32.mrb[0].mxu0
          %v1383 = vadd.f32 %v1231, %v1382
          %v1384 = vpop.f32.mrb[0].mxu0
          %v1385 = vadd.f32 %v1235, %v1384
          %1386 = vmatprep.mubr.f32.mxu0 %v1268
          %1387 = vmatmul.mubr.f32.gmra.mrb[0].mxu0 %v1221
          %v1388 = vpop.f32.mrb[0].mxu0
          %v1389 = vadd.f32 %v1231, %v1388
          %v1390 = vpop.f32.mrb[0].mxu0
          %v1391 = vadd.f32 %v1235, %v1390
          %1392 = vmatprep.mubr.f32.mxu0 %v1271
          %1393 = vmatmul.mubr.f32.gmra.mrb[0].mxu0 %v1224
          %v1394 = vpop.f32.mrb[0].mxu0
          %v1395 = vadd.f32 %v1231, %v1394
          %v1396 = vpop.f32.mrb[0].mxu0
          %v1397 = vadd.f32 %v1235, %v1396
          %1398 = vdwg.mxu0
          %1399 = vmatprep.subr.mxu0 %v1026
          %1400 = vmatpush1.msra.mxu0 %v1025
          %1401 = vmatprep.subr.mxu0 %v1030
          %1402 = vmatpush1.msra.mxu0 %v1029
          %1403 = vmatprep.subr.mxu0 %v1034
          %1404 = vmatpush1.msra.mxu0 %v1033
          %1405 = vmatprep.subr.mxu0 %v1038
          %1406 = vmatpush1.msra.mxu0 %v1037
          %1407 = vmatprep.subr.mxu0 %v1042
          %1408 = vmatpush1.msra.mxu0 %v1041
          %1409 = vmatprep.subr.mxu0 %v1046
          %1410 = vmatpush1.msra.mxu0 %v1045
          %1411 = vmatprep.subr.mxu0 %v1050
          %1412 = vmatpush1.msra.mxu0 %v1049
          %1413 = vmatprep.subr.mxu0 %v1054
          %1414 = vmatpush1.msra.mxu0 %v1053
          %1415 = vmatprep.subr.mxu0 %v1058
          %1416 = vmatpush1.msra.mxu0 %v1057
          %1417 = vmatprep.subr.mxu0 %v1062
          %1418 = vmatpush1.msra.mxu0 %v1061
          %1419 = vmatprep.subr.mxu0 %v1066
          %1420 = vmatpush1.msra.mxu0 %v1065
          %1421 = vmatprep.subr.mxu0 %v1070
          %1422 = vmatpush1.msra.mxu0 %v1069
          %1423 = vmatprep.subr.mxu0 %v1074
          %1424 = vmatpush1.msra.mxu0 %v1073
          %1425 = vmatprep.subr.mxu0 %v1078
          %1426 = vmatpush1.msra.mxu0 %v1077
          %1427 = vmatprep.subr.mxu0 %v1082
          %1428 = vmatpush1.msra.mxu0 %v1081
          %1429 = vmatprep.subr.mxu0 %v1086
          %1430 = vmatpush1.msra.mxu0 %v1085
          %1431 = vmatprep.subr.mxu0 %v1090
          %1432 = vmatpush1.msra.mxu0 %v1089
          %1433 = vmatprep.subr.mxu0 %v1094
          %1434 = vmatpush1.msra.mxu0 %v1093
          %1435 = vmatprep.subr.mxu0 %v1098
          %1436 = vmatpush1.msra.mxu0 %v1097
          %1437 = vmatprep.subr.mxu0 %v1102
          %1438 = vmatpush1.msra.mxu0 %v1101
          %1439 = vmatprep.subr.mxu0 %v1284
          %1440 = vmatpush1.msra.mxu0 %v1281
          %1441 = vmatprep.subr.mxu0 0.0
          %1442 = vmatpush1.msra.mxu0 0.0
          %1443 = vmatprep.subr.mxu0 0.0
          %1444 = vmatpush1.msra.mxu0 0.0
          %1445 = vmatprep.subr.mxu0 0.0
          %1446 = vmatpush1.msra.mxu0 0.0
          %1447 = vmatprep.subr.mxu0 0.0
          %1448 = vmatpush1.msra.mxu0 0.0
          %1449 = vmatprep.subr.mxu0 0.0
          %1450 = vmatpush1.msra.mxu0 0.0
          %1451 = vmatprep.subr.mxu0 0.0
          %1452 = vmatpush1.msra.mxu0 0.0
          %1453 = vmatprep.subr.mxu0 0.0
          %1454 = vmatpush1.msra.mxu0 0.0
          %1455 = vmatprep.subr.mxu0 0.0
          %1456 = vmatpush1.msra.mxu0 0.0
          %1457 = vmatprep.subr.mxu0 0.0
          %1458 = vmatpush1.msra.mxu0 0.0
          %1459 = vmatprep.subr.mxu0 0.0
          %1460 = vmatpush1.msra.mxu0 0.0
          %1461 = vmatprep.subr.mxu0 0.0
          %1462 = vmatpush1.msra.mxu0 0.0
          %1463 = vmatprep.mubr.f32.mxu0 %v1250
          %1464 = vmatmul.mubr.f32.gmra.mrb[0].mxu0 %v1203
          %v1465 = vpop.f32.mrb[0].mxu0
          %v1466 = vadd.f32 %v1239, %v1465
          %v1467 = vpop.f32.mrb[0].mxu0
          %v1468 = vadd.f32 %v1243, %v1467
          %1469 = vmatprep.mubr.f32.mxu0 %v1253
          %1470 = vmatmul.mubr.f32.gmra.mrb[0].mxu0 %v1206
          %v1471 = vpop.f32.mrb[0].mxu0
          %v1472 = vadd.f32 %v1239, %v1471
          %v1473 = vpop.f32.mrb[0].mxu0
          %v1474 = vadd.f32 %v1243, %v1473
          %1475 = vmatprep.mubr.f32.mxu0 %v1256
          %1476 = vmatmul.mubr.f32.gmra.mrb[0].mxu0 %v1209
          %v1477 = vpop.f32.mrb[0].mxu0
          %v1478 = vadd.f32 %v1239, %v1477
          %v1479 = vpop.f32.mrb[0].mxu0
          %v1480 = vadd.f32 %v1243, %v1479
          %1481 = vmatprep.mubr.f32.mxu0 %v1259
          %1482 = vmatmul.mubr.f32.gmra.mrb[0].mxu0 %v1212
          %v1483 = vpop.f32.mrb[0].mxu0
          %v1484 = vadd.f32 %v1239, %v1483
          %v1485 = vpop.f32.mrb[0].mxu0
          %v1486 = vadd.f32 %v1243, %v1485
          %1487 = vmatprep.mubr.f32.mxu0 %v1262
          %1488 = vmatmul.mubr.f32.gmra.mrb[0].mxu0 %v1215
          %v1489 = vpop.f32.mrb[0].mxu0
          %v1490 = vadd.f32 %v1239, %v1489
          %v1491 = vpop.f32.mrb[0].mxu0
          %v1492 = vadd.f32 %v1243, %v1491
          %1493 = vmatprep.mubr.f32.mxu0 %v1265
          %1494 = vmatmul.mubr.f32.gmra.mrb[0].mxu0 %v1218
          %v1495 = vpop.f32.mrb[0].mxu0
          %v1496 = vadd.f32 %v1239, %v1495
          %v1497 = vpop.f32.mrb[0].mxu0
          %v1498 = vadd.f32 %v1243, %v1497
          %1499 = vmatprep.mubr.f32.mxu0 %v1268
          %1500 = vmatmul.mubr.f32.gmra.mrb[0].mxu0 %v1221
          %v1501 = vpop.f32.mrb[0].mxu0
          %v1502 = vadd.f32 %v1239, %v1501
          %v1503 = vpop.f32.mrb[0].mxu0
          %v1504 = vadd.f32 %v1243, %v1503
          %1505 = vmatprep.mubr.f32.mxu0 %v1271
          %1506 = vmatmul.mubr.f32.gmra.mrb[0].mxu0 %v1224
          %v1507 = vpop.f32.mrb[0].mxu0
          %v1508 = vadd.f32 %v1239, %v1507
          %v1509 = vpop.f32.mrb[0].mxu0
          %v1510 = vadd.f32 %v1243, %v1509
          %1511 = vdwg.mxu0
          %1512 = vmatprep.subr.mxu0 %v1140
          %1513 = vmatpush1.msra.mxu0 %v1139
          %1514 = vmatprep.subr.mxu0 %v1144
          %1515 = vmatpush1.msra.mxu0 %v1143
          %1516 = vmatprep.subr.mxu0 %v1148
          %1517 = vmatpush1.msra.mxu0 %v1147
          %1518 = vmatprep.subr.mxu0 %v1152
          %1519 = vmatpush1.msra.mxu0 %v1151
          %1520 = vmatprep.subr.mxu0 %v1156
          %1521 = vmatpush1.msra.mxu0 %v1155
          %1522 = vmatprep.subr.mxu0 %v1160
          %1523 = vmatpush1.msra.mxu0 %v1159
          %1524 = vmatprep.subr.mxu0 %v1164
          %1525 = vmatpush1.msra.mxu0 %v1163
          %1526 = vmatprep.subr.mxu0 %v1168
          %1527 = vmatpush1.msra.mxu0 %v1167
          %1528 = vmatprep.subr.mxu0 %v1172
          %1529 = vmatpush1.msra.mxu0 %v1171
          %1530 = vmatprep.subr.mxu0 %v1176
          %1531 = vmatpush1.msra.mxu0 %v1175
          %1532 = vmatprep.subr.mxu0 %v1180
          %1533 = vmatpush1.msra.mxu0 %v1179
          %1534 = vmatprep.subr.mxu0 %v1184
          %1535 = vmatpush1.msra.mxu0 %v1183
          %1536 = vmatprep.subr.mxu0 %v1188
          %1537 = vmatpush1.msra.mxu0 %v1187
          %1538 = vmatprep.subr.mxu0 %v1192
          %1539 = vmatpush1.msra.mxu0 %v1191
          %1540 = vmatprep.subr.mxu0 %v1196
          %1541 = vmatpush1.msra.mxu0 %v1195
          %1542 = vmatprep.subr.mxu0 %v1200
          %1543 = vmatpush1.msra.mxu0 %v1199
          %1544 = vmatprep.subr.mxu0 0.0
          %1545 = vmatpush1.msra.mxu0 0.0
          %1546 = vmatprep.subr.mxu0 0.0
          %1547 = vmatpush1.msra.mxu0 0.0
          %1548 = vmatprep.subr.mxu0 0.0
          %1549 = vmatpush1.msra.mxu0 0.0
          %1550 = vmatprep.subr.mxu0 0.0
          %1551 = vmatpush1.msra.mxu0 0.0
          %1552 = vmatprep.subr.mxu0 0.0
          %1553 = vmatpush1.msra.mxu0 0.0
          %1554 = vmatprep.subr.mxu0 0.0
          %1555 = vmatpush1.msra.mxu0 0.0
          %1556 = vmatprep.subr.mxu0 0.0
          %1557 = vmatpush1.msra.mxu0 0.0
          %1558 = vmatprep.subr.mxu0 0.0
          %1559 = vmatpush1.msra.mxu0 0.0
          %1560 = vmatprep.subr.mxu0 0.0
          %1561 = vmatpush1.msra.mxu0 0.0
          %1562 = vmatprep.subr.mxu0 0.0
          %1563 = vmatpush1.msra.mxu0 0.0
          %1564 = vmatprep.subr.mxu0 0.0
          %1565 = vmatpush1.msra.mxu0 0.0
          %1566 = vmatprep.subr.mxu0 0.0
          %1567 = vmatpush1.msra.mxu0 0.0
          %1568 = vmatprep.subr.mxu0 0.0
          %1569 = vmatpush1.msra.mxu0 0.0
          %1570 = vmatprep.subr.mxu0 0.0
          %1571 = vmatpush1.msra.mxu0 0.0
          %1572 = vmatprep.subr.mxu0 0.0
          %1573 = vmatpush1.msra.mxu0 0.0
          %1574 = vmatprep.subr.mxu0 0.0
          %1575 = vmatpush1.msra.mxu0 0.0
          %1576 = vmatprep.mubr.f32.mxu0 0.0
          %1577 = vmatmul.mubr.f32.gmra.mrb[0].mxu0 0.0
          %v1578 = vpop.f32.mrb[0].mxu0
          %v1579 = vadd.f32 0.0, %v1578
          %v1580 = vpop.f32.mrb[0].mxu0
          %v1581 = vadd.f32 0.0, %v1580
          %1582 = vdwg.mxu0
          %1583 = vmatprep.subr.mxu0 %v1142
          %1584 = vmatpush1.msra.mxu0 %v1141
          %1585 = vmatprep.subr.mxu0 %v1146
          %1586 = vmatpush1.msra.mxu0 %v1145
          %1587 = vmatprep.subr.mxu0 %v1150
          %1588 = vmatpush1.msra.mxu0 %v1149
          %1589 = vmatprep.subr.mxu0 %v1154
          %1590 = vmatpush1.msra.mxu0 %v1153
          %1591 = vmatprep.subr.mxu0 %v1158
          %1592 = vmatpush1.msra.mxu0 %v1157
          %1593 = vmatprep.subr.mxu0 %v1162
          %1594 = vmatpush1.msra.mxu0 %v1161
          %1595 = vmatprep.subr.mxu0 %v1166
          %1596 = vmatpush1.msra.mxu0 %v1165
          %1597 = vmatprep.subr.mxu0 %v1170
          %1598 = vmatpush1.msra.mxu0 %v1169
          %1599 = vmatprep.subr.mxu0 %v1174
          %1600 = vmatpush1.msra.mxu0 %v1173
          %1601 = vmatprep.subr.mxu0 %v1178
          %1602 = vmatpush1.msra.mxu0 %v1177
          %1603 = vmatprep.subr.mxu0 %v1182
          %1604 = vmatpush1.msra.mxu0 %v1181
          %1605 = vmatprep.subr.mxu0 %v1186
          %1606 = vmatpush1.msra.mxu0 %v1185
          %1607 = vmatprep.subr.mxu0 %v1190
          %1608 = vmatpush1.msra.mxu0 %v1189
          %1609 = vmatprep.subr.mxu0 %v1194
          %1610 = vmatpush1.msra.mxu0 %v1193
          %1611 = vmatprep.subr.mxu0 %v1198
          %1612 = vmatpush1.msra.mxu0 %v1197
          %1613 = vmatprep.subr.mxu0 %v1202
          %1614 = vmatpush1.msra.mxu0 %v1201
          %1615 = vmatprep.subr.mxu0 0.0
          %1616 = vmatpush1.msra.mxu0 0.0
          %1617 = vmatprep.subr.mxu0 0.0
          %1618 = vmatpush1.msra.mxu0 0.0
          %1619 = vmatprep.subr.mxu0 0.0
          %1620 = vmatpush1.msra.mxu0 0.0
          %1621 = vmatprep.subr.mxu0 0.0
          %1622 = vmatpush1.msra.mxu0 0.0
          %1623 = vmatprep.subr.mxu0 0.0
          %1624 = vmatpush1.msra.mxu0 0.0
          %1625 = vmatprep.subr.mxu0 0.0
          %1626 = vmatpush1.msra.mxu0 0.0
          %1627 = vmatprep.subr.mxu0 0.0
          %1628 = vmatpush1.msra.mxu0 0.0
          %1629 = vmatprep.subr.mxu0 0.0
          %1630 = vmatpush1.msra.mxu0 0.0
          %1631 = vmatprep.subr.mxu0 0.0
          %1632 = vmatpush1.msra.mxu0 0.0
          %1633 = vmatprep.subr.mxu0 0.0
          %1634 = vmatpush1.msra.mxu0 0.0
          %1635 = vmatprep.subr.mxu0 0.0
          %1636 = vmatpush1.msra.mxu0 0.0
          %1637 = vmatprep.subr.mxu0 0.0
          %1638 = vmatpush1.msra.mxu0 0.0
          %1639 = vmatprep.subr.mxu0 0.0
          %1640 = vmatpush1.msra.mxu0 0.0
          %1641 = vmatprep.subr.mxu0 0.0
          %1642 = vmatpush1.msra.mxu0 0.0
          %1643 = vmatprep.subr.mxu0 0.0
          %1644 = vmatpush1.msra.mxu0 0.0
          %1645 = vmatprep.subr.mxu0 0.0
          %1646 = vmatpush1.msra.mxu0 0.0
          %1647 = vmatprep.mubr.f32.mxu0 0.0
          %1648 = vmatmul.mubr.f32.gmra.mrb[0].mxu0 0.0
          %v1649 = vpop.f32.mrb[0].mxu0
          %v1650 = vadd.f32 0.0, %v1649
          %v1651 = vpop.f32.mrb[0].mxu0
          %v1652 = vadd.f32 0.0, %v1651
          %1653 = vdwg.mxu0
          %v1654 = vadd.f32 %v1353, %v1579
          %v1655 = vadd.f32 %v1355, %v1581
          %v1656 = vadd.f32 %v1466, %v1650
          %v1657 = vadd.f32 %v1468, %v1652
          %v1658 = vxor.u32 %v1654, 2147483648
          %v1659 = vxor.u32 %v1655, 2147483648
          %v1660 = vmul.f32 %v1658, 1.442695
          %v1661 = vpow.pop %v1660
          %v1662 = vmul.f32 %v1659, 1.442695
          %v1663 = vpow.pop %v1662
          %v1664 = vadd.f32 %v1661, 1.0
          %v1665 = vadd.f32 %v1663, 1.0
          %v1666 = vrcp.pop %v1664
          %v1667 = vmul.f32 1.0, %v1666
          %v1668 = vrcp.pop %v1665
          %v1669 = vmul.f32 1.0, %v1668
          %v1670 = vtanh.pop %v1656
          %v1671 = vxor.u32 %v1657, 2147483648
          %v1672 = vmul.f32 %v1671, 1.442695
          %v1673 = vpow.pop %v1672
          %v1674 = vadd.f32 %v1673, 1.0
          %v1675 = vrcp.pop %v1674
          %v1676 = vmul.f32 1.0, %v1675
          %v1677 = vmul.f32 %v1669, 0.0
          %v1678 = vmul.f32 %v1667, %v1670
          %v1679 = vadd.f32 %v1677, %v1678
          %v1680 = vtanh.pop %v1679
          %v1681 = vmul.f32 %v1676, %v1680
          %1682 = vmatprep.subr.mxu0 %v1140
          %1683 = vmatpush1.msra.mxu0 %v1139
          %1684 = vmatprep.subr.mxu0 %v1144
          %1685 = vmatpush1.msra.mxu0 %v1143
          %1686 = vmatprep.subr.mxu0 %v1148
          %1687 = vmatpush1.msra.mxu0 %v1147
          %1688 = vmatprep.subr.mxu0 %v1152
          %1689 = vmatpush1.msra.mxu0 %v1151
          %1690 = vmatprep.subr.mxu0 %v1156
          %1691 = vmatpush1.msra.mxu0 %v1155
          %1692 = vmatprep.subr.mxu0 %v1160
          %1693 = vmatpush1.msra.mxu0 %v1159
          %1694 = vmatprep.subr.mxu0 %v1164
          %1695 = vmatpush1.msra.mxu0 %v1163
          %1696 = vmatprep.subr.mxu0 %v1168
          %1697 = vmatpush1.msra.mxu0 %v1167
          %1698 = vmatprep.subr.mxu0 %v1172
          %1699 = vmatpush1.msra.mxu0 %v1171
          %1700 = vmatprep.subr.mxu0 %v1176
          %1701 = vmatpush1.msra.mxu0 %v1175
          %1702 = vmatprep.subr.mxu0 %v1180
          %1703 = vmatpush1.msra.mxu0 %v1179
          %1704 = vmatprep.subr.mxu0 %v1184
          %1705 = vmatpush1.msra.mxu0 %v1183
          %1706 = vmatprep.subr.mxu0 %v1188
          %1707 = vmatpush1.msra.mxu0 %v1187
          %1708 = vmatprep.subr.mxu0 %v1192
          %1709 = vmatpush1.msra.mxu0 %v1191
          %1710 = vmatprep.subr.mxu0 %v1196
          %1711 = vmatpush1.msra.mxu0 %v1195
          %1712 = vmatprep.subr.mxu0 %v1200
          %1713 = vmatpush1.msra.mxu0 %v1199
          %1714 = vmatprep.subr.mxu0 0.0
          %1715 = vmatpush1.msra.mxu0 0.0
          %1716 = vmatprep.subr.mxu0 0.0
          %1717 = vmatpush1.msra.mxu0 0.0
          %1718 = vmatprep.subr.mxu0 0.0
          %1719 = vmatpush1.msra.mxu0 0.0
          %1720 = vmatprep.subr.mxu0 0.0
          %1721 = vmatpush1.msra.mxu0 0.0
          %1722 = vmatprep.subr.mxu0 0.0
          %1723 = vmatpush1.msra.mxu0 0.0
          %1724 = vmatprep.subr.mxu0 0.0
          %1725 = vmatpush1.msra.mxu0 0.0
          %1726 = vmatprep.subr.mxu0 0.0
          %1727 = vmatpush1.msra.mxu0 0.0
          %1728 = vmatprep.subr.mxu0 0.0
          %1729 = vmatpush1.msra.mxu0 0.0
          %1730 = vmatprep.subr.mxu0 0.0
          %1731 = vmatpush1.msra.mxu0 0.0
          %1732 = vmatprep.subr.mxu0 0.0
          %1733 = vmatpush1.msra.mxu0 0.0
          %1734 = vmatprep.subr.mxu0 0.0
          %1735 = vmatpush1.msra.mxu0 0.0
          %1736 = vmatprep.subr.mxu0 0.0
          %1737 = vmatpush1.msra.mxu0 0.0
          %1738 = vmatprep.subr.mxu0 0.0
          %1739 = vmatpush1.msra.mxu0 0.0
          %1740 = vmatprep.subr.mxu0 0.0
          %1741 = vmatpush1.msra.mxu0 0.0
          %1742 = vmatprep.subr.mxu0 0.0
          %1743 = vmatpush1.msra.mxu0 0.0
          %1744 = vmatprep.subr.mxu0 0.0
          %1745 = vmatpush1.msra.mxu0 0.0
          %1746 = vmatprep.mubr.f32.mxu0 0.0
          %1747 = vmatmul.mubr.f32.gmra.mrb[0].mxu0 %v1681
          %v1748 = vpop.f32.mrb[0].mxu0
          %v1749 = vadd.f32 0.0, %v1748
          %v1750 = vpop.f32.mrb[0].mxu0
          %v1751 = vadd.f32 0.0, %v1750
          %1752 = vdwg.mxu0
          %1753 = vmatprep.subr.mxu0 %v1142
          %1754 = vmatpush1.msra.mxu0 %v1141
          %1755 = vmatprep.subr.mxu0 %v1146
          %1756 = vmatpush1.msra.mxu0 %v1145
          %1757 = vmatprep.subr.mxu0 %v1150
          %1758 = vmatpush1.msra.mxu0 %v1149
          %1759 = vmatprep.subr.mxu0 %v1154
          %1760 = vmatpush1.msra.mxu0 %v1153
          %1761 = vmatprep.subr.mxu0 %v1158
          %1762 = vmatpush1.msra.mxu0 %v1157
          %1763 = vmatprep.subr.mxu0 %v1162
          %1764 = vmatpush1.msra.mxu0 %v1161
          %1765 = vmatprep.subr.mxu0 %v1166
          %1766 = vmatpush1.msra.mxu0 %v1165
          %1767 = vmatprep.subr.mxu0 %v1170
          %1768 = vmatpush1.msra.mxu0 %v1169
          %1769 = vmatprep.subr.mxu0 %v1174
          %1770 = vmatpush1.msra.mxu0 %v1173
          %1771 = vmatprep.subr.mxu0 %v1178
          %1772 = vmatpush1.msra.mxu0 %v1177
          %1773 = vmatprep.subr.mxu0 %v1182
          %1774 = vmatpush1.msra.mxu0 %v1181
          %1775 = vmatprep.subr.mxu0 %v1186
          %1776 = vmatpush1.msra.mxu0 %v1185
          %1777 = vmatprep.subr.mxu0 %v1190
          %1778 = vmatpush1.msra.mxu0 %v1189
          %1779 = vmatprep.subr.mxu0 %v1194
          %1780 = vmatpush1.msra.mxu0 %v1193
          %1781 = vmatprep.subr.mxu0 %v1198
          %1782 = vmatpush1.msra.mxu0 %v1197
          %1783 = vmatprep.subr.mxu0 %v1202
          %1784 = vmatpush1.msra.mxu0 %v1201
          %1785 = vmatprep.subr.mxu0 0.0
          %1786 = vmatpush1.msra.mxu0 0.0
          %1787 = vmatprep.subr.mxu0 0.0
          %1788 = vmatpush1.msra.mxu0 0.0
          %1789 = vmatprep.subr.mxu0 0.0
          %1790 = vmatpush1.msra.mxu0 0.0
          %1791 = vmatprep.subr.mxu0 0.0
          %1792 = vmatpush1.msra.mxu0 0.0
          %1793 = vmatprep.subr.mxu0 0.0
          %1794 = vmatpush1.msra.mxu0 0.0
          %1795 = vmatprep.subr.mxu0 0.0
          %1796 = vmatpush1.msra.mxu0 0.0
          %1797 = vmatprep.subr.mxu0 0.0
          %1798 = vmatpush1.msra.mxu0 0.0
          %1799 = vmatprep.subr.mxu0 0.0
          %1800 = vmatpush1.msra.mxu0 0.0
          %1801 = vmatprep.subr.mxu0 0.0
          %1802 = vmatpush1.msra.mxu0 0.0
          %1803 = vmatprep.subr.mxu0 0.0
          %1804 = vmatpush1.msra.mxu0 0.0
          %1805 = vmatprep.subr.mxu0 0.0
          %1806 = vmatpush1.msra.mxu0 0.0
          %1807 = vmatprep.subr.mxu0 0.0
          %1808 = vmatpush1.msra.mxu0 0.0
          %1809 = vmatprep.subr.mxu0 0.0
          %1810 = vmatpush1.msra.mxu0 0.0
          %1811 = vmatprep.subr.mxu0 0.0
          %1812 = vmatpush1.msra.mxu0 0.0
          %1813 = vmatprep.subr.mxu0 0.0
          %1814 = vmatpush1.msra.mxu0 0.0
          %1815 = vmatprep.subr.mxu0 0.0
          %1816 = vmatpush1.msra.mxu0 0.0
          %1817 = vmatprep.mubr.f32.mxu0 0.0
          %1818 = vmatmul.mubr.f32.gmra.mrb[0].mxu0 %v1681
          %v1819 = vpop.f32.mrb[0].mxu0
          %v1820 = vadd.f32 0.0, %v1819
          %v1821 = vpop.f32.mrb[0].mxu0
          %v1822 = vadd.f32 0.0, %v1821
          %1823 = vdwg.mxu0
          %v1824 = vadd.f32 %v1359, %v1749
          %v1825 = vadd.f32 %v1361, %v1751
          %v1826 = vadd.f32 %v1472, %v1820
          %v1827 = vadd.f32 %v1474, %v1822
          %v1828 = vxor.u32 %v1824, 2147483648
          %v1829 = vxor.u32 %v1825, 2147483648
          %v1830 = vmul.f32 %v1828, 1.442695
          %v1831 = vpow.pop %v1830
          %v1832 = vmul.f32 %v1829, 1.442695
          %v1833 = vpow.pop %v1832
          %v1834 = vadd.f32 %v1831, 1.0
          %v1835 = vadd.f32 %v1833, 1.0
          %v1836 = vrcp.pop %v1834
          %v1837 = vmul.f32 1.0, %v1836
          %v1838 = vrcp.pop %v1835
          %v1839 = vmul.f32 1.0, %v1838
          %v1840 = vtanh.pop %v1826
          %v1841 = vxor.u32 %v1827, 2147483648
          %v1842 = vmul.f32 %v1841, 1.442695
          %v1843 = vpow.pop %v1842
          %v1844 = vadd.f32 %v1843, 1.0
          %v1845 = vrcp.pop %v1844
          %v1846 = vmul.f32 1.0, %v1845
          %v1847 = vmul.f32 %v1839, %v1679
          %v1848 = vmul.f32 %v1837, %v1840
          %v1849 = vadd.f32 %v1847, %v1848
          %v1850 = vtanh.pop %v1849
          %v1851 = vmul.f32 %v1846, %v1850
          %1852 = vmatprep.subr.mxu0 %v1140
          %1853 = vmatpush1.msra.mxu0 %v1139
          %1854 = vmatprep.subr.mxu0 %v1144
          %1855 = vmatpush1.msra.mxu0 %v1143
          %1856 = vmatprep.subr.mxu0 %v1148
          %1857 = vmatpush1.msra.mxu0 %v1147
          %1858 = vmatprep.subr.mxu0 %v1152
          %1859 = vmatpush1.msra.mxu0 %v1151
          %1860 = vmatprep.subr.mxu0 %v1156
          %1861 = vmatpush1.msra.mxu0 %v1155
          %1862 = vmatprep.subr.mxu0 %v1160
          %1863 = vmatpush1.msra.mxu0 %v1159
          %1864 = vmatprep.subr.mxu0 %v1164
          %1865 = vmatpush1.msra.mxu0 %v1163
          %1866 = vmatprep.subr.mxu0 %v1168
          %1867 = vmatpush1.msra.mxu0 %v1167
          %1868 = vmatprep.subr.mxu0 %v1172
          %1869 = vmatpush1.msra.mxu0 %v1171
          %1870 = vmatprep.subr.mxu0 %v1176
          %1871 = vmatpush1.msra.mxu0 %v1175
          %1872 = vmatprep.subr.mxu0 %v1180
          %1873 = vmatpush1.msra.mxu0 %v1179
          %1874 = vmatprep.subr.mxu0 %v1184
          %1875 = vmatpush1.msra.mxu0 %v1183
          %1876 = vmatprep.subr.mxu0 %v1188
          %1877 = vmatpush1.msra.mxu0 %v1187
          %1878 = vmatprep.subr.mxu0 %v1192
          %1879 = vmatpush1.msra.mxu0 %v1191
          %1880 = vmatprep.subr.mxu0 %v1196
          %1881 = vmatpush1.msra.mxu0 %v1195
          %1882 = vmatprep.subr.mxu0 %v1200
          %1883 = vmatpush1.msra.mxu0 %v1199
          %1884 = vmatprep.subr.mxu0 0.0
          %1885 = vmatpush1.msra.mxu0 0.0
          %1886 = vmatprep.subr.mxu0 0.0
          %1887 = vmatpush1.msra.mxu0 0.0
          %1888 = vmatprep.subr.mxu0 0.0
          %1889 = vmatpush1.msra.mxu0 0.0
          %1890 = vmatprep.subr.mxu0 0.0
          %1891 = vmatpush1.msra.mxu0 0.0
          %1892 = vmatprep.subr.mxu0 0.0
          %1893 = vmatpush1.msra.mxu0 0.0
          %1894 = vmatprep.subr.mxu0 0.0
          %1895 = vmatpush1.msra.mxu0 0.0
          %1896 = vmatprep.subr.mxu0 0.0
          %1897 = vmatpush1.msra.mxu0 0.0
          %1898 = vmatprep.subr.mxu0 0.0
          %1899 = vmatpush1.msra.mxu0 0.0
          %1900 = vmatprep.subr.mxu0 0.0
          %1901 = vmatpush1.msra.mxu0 0.0
          %1902 = vmatprep.subr.mxu0 0.0
          %1903 = vmatpush1.msra.mxu0 0.0
          %1904 = vmatprep.subr.mxu0 0.0
          %1905 = vmatpush1.msra.mxu0 0.0
          %1906 = vmatprep.subr.mxu0 0.0
          %1907 = vmatpush1.msra.mxu0 0.0
          %1908 = vmatprep.subr.mxu0 0.0
          %1909 = vmatpush1.msra.mxu0 0.0
          %1910 = vmatprep.subr.mxu0 0.0
          %1911 = vmatpush1.msra.mxu0 0.0
          %1912 = vmatprep.subr.mxu0 0.0
          %1913 = vmatpush1.msra.mxu0 0.0
          %1914 = vmatprep.subr.mxu0 0.0
          %1915 = vmatpush1.msra.mxu0 0.0
          %1916 = vmatprep.mubr.f32.mxu0 0.0
          %1917 = vmatmul.mubr.f32.gmra.mrb[0].mxu0 %v1851
          %v1918 = vpop.f32.mrb[0].mxu0
          %v1919 = vadd.f32 0.0, %v1918
          %v1920 = vpop.f32.mrb[0].mxu0
          %v1921 = vadd.f32 0.0, %v1920
          %1922 = vdwg.mxu0
          %1923 = vmatprep.subr.mxu0 %v1142
          %1924 = vmatpush1.msra.mxu0 %v1141
          %1925 = vmatprep.subr.mxu0 %v1146
          %1926 = vmatpush1.msra.mxu0 %v1145
          %1927 = vmatprep.subr.mxu0 %v1150
          %1928 = vmatpush1.msra.mxu0 %v1149
          %1929 = vmatprep.subr.mxu0 %v1154
          %1930 = vmatpush1.msra.mxu0 %v1153
          %1931 = vmatprep.subr.mxu0 %v1158
          %1932 = vmatpush1.msra.mxu0 %v1157
          %1933 = vmatprep.subr.mxu0 %v1162
          %1934 = vmatpush1.msra.mxu0 %v1161
          %1935 = vmatprep.subr.mxu0 %v1166
          %1936 = vmatpush1.msra.mxu0 %v1165
          %1937 = vmatprep.subr.mxu0 %v1170
          %1938 = vmatpush1.msra.mxu0 %v1169
          %1939 = vmatprep.subr.mxu0 %v1174
          %1940 = vmatpush1.msra.mxu0 %v1173
          %1941 = vmatprep.subr.mxu0 %v1178
          %1942 = vmatpush1.msra.mxu0 %v1177
          %1943 = vmatprep.subr.mxu0 %v1182
          %1944 = vmatpush1.msra.mxu0 %v1181
          %1945 = vmatprep.subr.mxu0 %v1186
          %1946 = vmatpush1.msra.mxu0 %v1185
          %1947 = vmatprep.subr.mxu0 %v1190
          %1948 = vmatpush1.msra.mxu0 %v1189
          %1949 = vmatprep.subr.mxu0 %v1194
          %1950 = vmatpush1.msra.mxu0 %v1193
          %1951 = vmatprep.subr.mxu0 %v1198
          %1952 = vmatpush1.msra.mxu0 %v1197
          %1953 = vmatprep.subr.mxu0 %v1202
          %1954 = vmatpush1.msra.mxu0 %v1201
          %1955 = vmatprep.subr.mxu0 0.0
          %1956 = vmatpush1.msra.mxu0 0.0
          %1957 = vmatprep.subr.mxu0 0.0
          %1958 = vmatpush1.msra.mxu0 0.0
          %1959 = vmatprep.subr.mxu0 0.0
          %1960 = vmatpush1.msra.mxu0 0.0
          %1961 = vmatprep.subr.mxu0 0.0
          %1962 = vmatpush1.msra.mxu0 0.0
          %1963 = vmatprep.subr.mxu0 0.0
          %1964 = vmatpush1.msra.mxu0 0.0
          %1965 = vmatprep.subr.mxu0 0.0
          %1966 = vmatpush1.msra.mxu0 0.0
          %1967 = vmatprep.subr.mxu0 0.0
          %1968 = vmatpush1.msra.mxu0 0.0
          %1969 = vmatprep.subr.mxu0 0.0
          %1970 = vmatpush1.msra.mxu0 0.0
          %1971 = vmatprep.subr.mxu0 0.0
          %1972 = vmatpush1.msra.mxu0 0.0
          %1973 = vmatprep.subr.mxu0 0.0
          %1974 = vmatpush1.msra.mxu0 0.0
          %1975 = vmatprep.subr.mxu0 0.0
          %1976 = vmatpush1.msra.mxu0 0.0
          %1977 = vmatprep.subr.mxu0 0.0
          %1978 = vmatpush1.msra.mxu0 0.0
          %1979 = vmatprep.subr.mxu0 0.0
          %1980 = vmatpush1.msra.mxu0 0.0
          %1981 = vmatprep.subr.mxu0 0.0
          %1982 = vmatpush1.msra.mxu0 0.0
          %1983 = vmatprep.subr.mxu0 0.0
          %1984 = vmatpush1.msra.mxu0 0.0
          %1985 = vmatprep.subr.mxu0 0.0
          %1986 = vmatpush1.msra.mxu0 0.0
          %1987 = vmatprep.mubr.f32.mxu0 0.0
          %1988 = vmatmul.mubr.f32.gmra.mrb[0].mxu0 %v1851
          %v1989 = vpop.f32.mrb[0].mxu0
          %v1990 = vadd.f32 0.0, %v1989
          %v1991 = vpop.f32.mrb[0].mxu0
          %v1992 = vadd.f32 0.0, %v1991
          %1993 = vdwg.mxu0
          %v1994 = vadd.f32 %v1365, %v1919
          %v1995 = vadd.f32 %v1367, %v1921
          %v1996 = vadd.f32 %v1478, %v1990
          %v1997 = vadd.f32 %v1480, %v1992
          %v1998 = vxor.u32 %v1994, 2147483648
          %v1999 = vxor.u32 %v1995, 2147483648
          %v2000 = vmul.f32 %v1998, 1.442695
          %v2001 = vpow.pop %v2000
          %v2002 = vmul.f32 %v1999, 1.442695
          %v2003 = vpow.pop %v2002
          %v2004 = vadd.f32 %v2001, 1.0
          %v2005 = vadd.f32 %v2003, 1.0
          %v2006 = vrcp.pop %v2004
          %v2007 = vmul.f32 1.0, %v2006
          %v2008 = vrcp.pop %v2005
          %v2009 = vmul.f32 1.0, %v2008
          %v2010 = vtanh.pop %v1996
          %v2011 = vxor.u32 %v1997, 2147483648
          %v2012 = vmul.f32 %v2011, 1.442695
          %v2013 = vpow.pop %v2012
          %v2014 = vadd.f32 %v2013, 1.0
          %v2015 = vrcp.pop %v2014
          %v2016 = vmul.f32 1.0, %v2015
          %v2017 = vmul.f32 %v2009, %v1849
          %v2018 = vmul.f32 %v2007, %v2010
          %v2019 = vadd.f32 %v2017, %v2018
          %v2020 = vtanh.pop %v2019
          %v2021 = vmul.f32 %v2016, %v2020
          %2022 = vmatprep.subr.mxu0 %v1140
          %2023 = vmatpush1.msra.mxu0 %v1139
          %2024 = vmatprep.subr.mxu0 %v1144
          %2025 = vmatpush1.msra.mxu0 %v1143
          %2026 = vmatprep.subr.mxu0 %v1148
          %2027 = vmatpush1.msra.mxu0 %v1147
          %2028 = vmatprep.subr.mxu0 %v1152
          %2029 = vmatpush1.msra.mxu0 %v1151
          %2030 = vmatprep.subr.mxu0 %v1156
          %2031 = vmatpush1.msra.mxu0 %v1155
          %2032 = vmatprep.subr.mxu0 %v1160
          %2033 = vmatpush1.msra.mxu0 %v1159
          %2034 = vmatprep.subr.mxu0 %v1164
          %2035 = vmatpush1.msra.mxu0 %v1163
          %2036 = vmatprep.subr.mxu0 %v1168
          %2037 = vmatpush1.msra.mxu0 %v1167
          %2038 = vmatprep.subr.mxu0 %v1172
          %2039 = vmatpush1.msra.mxu0 %v1171
          %2040 = vmatprep.subr.mxu0 %v1176
          %2041 = vmatpush1.msra.mxu0 %v1175
          %2042 = vmatprep.subr.mxu0 %v1180
          %2043 = vmatpush1.msra.mxu0 %v1179
          %2044 = vmatprep.subr.mxu0 %v1184
          %2045 = vmatpush1.msra.mxu0 %v1183
          %2046 = vmatprep.subr.mxu0 %v1188
          %2047 = vmatpush1.msra.mxu0 %v1187
          %2048 = vmatprep.subr.mxu0 %v1192
          %2049 = vmatpush1.msra.mxu0 %v1191
          %2050 = vmatprep.subr.mxu0 %v1196
          %2051 = vmatpush1.msra.mxu0 %v1195
          %2052 = vmatprep.subr.mxu0 %v1200
          %2053 = vmatpush1.msra.mxu0 %v1199
          %2054 = vmatprep.subr.mxu0 0.0
          %2055 = vmatpush1.msra.mxu0 0.0
          %2056 = vmatprep.subr.mxu0 0.0
          %2057 = vmatpush1.msra.mxu0 0.0
          %2058 = vmatprep.subr.mxu0 0.0
          %2059 = vmatpush1.msra.mxu0 0.0
          %2060 = vmatprep.subr.mxu0 0.0
          %2061 = vmatpush1.msra.mxu0 0.0
          %2062 = vmatprep.subr.mxu0 0.0
          %2063 = vmatpush1.msra.mxu0 0.0
          %2064 = vmatprep.subr.mxu0 0.0
          %2065 = vmatpush1.msra.mxu0 0.0
          %2066 = vmatprep.subr.mxu0 0.0
          %2067 = vmatpush1.msra.mxu0 0.0
          %2068 = vmatprep.subr.mxu0 0.0
          %2069 = vmatpush1.msra.mxu0 0.0
          %2070 = vmatprep.subr.mxu0 0.0
          %2071 = vmatpush1.msra.mxu0 0.0
          %2072 = vmatprep.subr.mxu0 0.0
          %2073 = vmatpush1.msra.mxu0 0.0
          %2074 = vmatprep.subr.mxu0 0.0
          %2075 = vmatpush1.msra.mxu0 0.0
          %2076 = vmatprep.subr.mxu0 0.0
          %2077 = vmatpush1.msra.mxu0 0.0
          %2078 = vmatprep.subr.mxu0 0.0
          %2079 = vmatpush1.msra.mxu0 0.0
          %2080 = vmatprep.subr.mxu0 0.0
          %2081 = vmatpush1.msra.mxu0 0.0
          %2082 = vmatprep.subr.mxu0 0.0
          %2083 = vmatpush1.msra.mxu0 0.0
          %2084 = vmatprep.subr.mxu0 0.0
          %2085 = vmatpush1.msra.mxu0 0.0
          %2086 = vmatprep.mubr.f32.mxu0 0.0
          %2087 = vmatmul.mubr.f32.gmra.mrb[0].mxu0 %v2021
          %v2088 = vpop.f32.mrb[0].mxu0
          %v2089 = vadd.f32 0.0, %v2088
          %v2090 = vpop.f32.mrb[0].mxu0
          %v2091 = vadd.f32 0.0, %v2090
          %2092 = vdwg.mxu0
          %2093 = vmatprep.subr.mxu0 %v1142
          %2094 = vmatpush1.msra.mxu0 %v1141
          %2095 = vmatprep.subr.mxu0 %v1146
          %2096 = vmatpush1.msra.mxu0 %v1145
          %2097 = vmatprep.subr.mxu0 %v1150
          %2098 = vmatpush1.msra.mxu0 %v1149
          %2099 = vmatprep.subr.mxu0 %v1154
          %2100 = vmatpush1.msra.mxu0 %v1153
          %2101 = vmatprep.subr.mxu0 %v1158
          %2102 = vmatpush1.msra.mxu0 %v1157
          %2103 = vmatprep.subr.mxu0 %v1162
          %2104 = vmatpush1.msra.mxu0 %v1161
          %2105 = vmatprep.subr.mxu0 %v1166
          %2106 = vmatpush1.msra.mxu0 %v1165
          %2107 = vmatprep.subr.mxu0 %v1170
          %2108 = vmatpush1.msra.mxu0 %v1169
          %2109 = vmatprep.subr.mxu0 %v1174
          %2110 = vmatpush1.msra.mxu0 %v1173
          %2111 = vmatprep.subr.mxu0 %v1178
          %2112 = vmatpush1.msra.mxu0 %v1177
          %2113 = vmatprep.subr.mxu0 %v1182
          %2114 = vmatpush1.msra.mxu0 %v1181
          %2115 = vmatprep.subr.mxu0 %v1186
          %2116 = vmatpush1.msra.mxu0 %v1185
          %2117 = vmatprep.subr.mxu0 %v1190
          %2118 = vmatpush1.msra.mxu0 %v1189
          %2119 = vmatprep.subr.mxu0 %v1194
          %2120 = vmatpush1.msra.mxu0 %v1193
          %2121 = vmatprep.subr.mxu0 %v1198
          %2122 = vmatpush1.msra.mxu0 %v1197
          %2123 = vmatprep.subr.mxu0 %v1202
          %2124 = vmatpush1.msra.mxu0 %v1201
          %2125 = vmatprep.subr.mxu0 0.0
          %2126 = vmatpush1.msra.mxu0 0.0
          %2127 = vmatprep.subr.mxu0 0.0
          %2128 = vmatpush1.msra.mxu0 0.0
          %2129 = vmatprep.subr.mxu0 0.0
          %2130 = vmatpush1.msra.mxu0 0.0
          %2131 = vmatprep.subr.mxu0 0.0
          %2132 = vmatpush1.msra.mxu0 0.0
          %2133 = vmatprep.subr.mxu0 0.0
          %2134 = vmatpush1.msra.mxu0 0.0
          %2135 = vmatprep.subr.mxu0 0.0
          %2136 = vmatpush1.msra.mxu0 0.0
          %2137 = vmatprep.subr.mxu0 0.0
          %2138 = vmatpush1.msra.mxu0 0.0
          %2139 = vmatprep.subr.mxu0 0.0
          %2140 = vmatpush1.msra.mxu0 0.0
          %2141 = vmatprep.subr.mxu0 0.0
          %2142 = vmatpush1.msra.mxu0 0.0
          %2143 = vmatprep.subr.mxu0 0.0
          %2144 = vmatpush1.msra.mxu0 0.0
          %2145 = vmatprep.subr.mxu0 0.0
          %2146 = vmatpush1.msra.mxu0 0.0
          %2147 = vmatprep.subr.mxu0 0.0
          %2148 = vmatpush1.msra.mxu0 0.0
          %2149 = vmatprep.subr.mxu0 0.0
          %2150 = vmatpush1.msra.mxu0 0.0
          %2151 = vmatprep.subr.mxu0 0.0
          %2152 = vmatpush1.msra.mxu0 0.0
          %2153 = vmatprep.subr.mxu0 0.0
          %2154 = vmatpush1.msra.mxu0 0.0
          %2155 = vmatprep.subr.mxu0 0.0
          %2156 = vmatpush1.msra.mxu0 0.0
          %2157 = vmatprep.mubr.f32.mxu0 0.0
          %2158 = vmatmul.mubr.f32.gmra.mrb[0].mxu0 %v2021
          %v2159 = vpop.f32.mrb[0].mxu0
          %v2160 = vadd.f32 0.0, %v2159
          %v2161 = vpop.f32.mrb[0].mxu0
          %v2162 = vadd.f32 0.0, %v2161
          %2163 = vdwg.mxu0
          %v2164 = vadd.f32 %v1371, %v2089
          %v2165 = vadd.f32 %v1373, %v2091
          %v2166 = vadd.f32 %v1484, %v2160
          %v2167 = vadd.f32 %v1486, %v2162
          %v2168 = vxor.u32 %v2164, 2147483648
          %v2169 = vxor.u32 %v2165, 2147483648
          %v2170 = vmul.f32 %v2168, 1.442695
          %v2171 = vpow.pop %v2170
          %v2172 = vmul.f32 %v2169, 1.442695
          %v2173 = vpow.pop %v2172
          %v2174 = vadd.f32 %v2171, 1.0
          %v2175 = vadd.f32 %v2173, 1.0
          %v2176 = vrcp.pop %v2174
          %v2177 = vmul.f32 1.0, %v2176
          %v2178 = vrcp.pop %v2175
          %v2179 = vmul.f32 1.0, %v2178
          %v2180 = vtanh.pop %v2166
          %v2181 = vxor.u32 %v2167, 2147483648
          %v2182 = vmul.f32 %v2181, 1.442695
          %v2183 = vpow.pop %v2182
          %v2184 = vadd.f32 %v2183, 1.0
          %v2185 = vrcp.pop %v2184
          %v2186 = vmul.f32 1.0, %v2185
          %v2187 = vmul.f32 %v2179, %v2019
          %v2188 = vmul.f32 %v2177, %v2180
          %v2189 = vadd.f32 %v2187, %v2188
          %v2190 = vtanh.pop %v2189
          %v2191 = vmul.f32 %v2186, %v2190
          %2192 = vmatprep.subr.mxu0 %v1140
          %2193 = vmatpush1.msra.mxu0 %v1139
          %2194 = vmatprep.subr.mxu0 %v1144
          %2195 = vmatpush1.msra.mxu0 %v1143
          %2196 = vmatprep.subr.mxu0 %v1148
          %2197 = vmatpush1.msra.mxu0 %v1147
          %2198 = vmatprep.subr.mxu0 %v1152
          %2199 = vmatpush1.msra.mxu0 %v1151
          %2200 = vmatprep.subr.mxu0 %v1156
          %2201 = vmatpush1.msra.mxu0 %v1155
          %2202 = vmatprep.subr.mxu0 %v1160
          %2203 = vmatpush1.msra.mxu0 %v1159
          %2204 = vmatprep.subr.mxu0 %v1164
          %2205 = vmatpush1.msra.mxu0 %v1163
          %2206 = vmatprep.subr.mxu0 %v1168
          %2207 = vmatpush1.msra.mxu0 %v1167
          %2208 = vmatprep.subr.mxu0 %v1172
          %2209 = vmatpush1.msra.mxu0 %v1171
          %2210 = vmatprep.subr.mxu0 %v1176
          %2211 = vmatpush1.msra.mxu0 %v1175
          %2212 = vmatprep.subr.mxu0 %v1180
          %2213 = vmatpush1.msra.mxu0 %v1179
          %2214 = vmatprep.subr.mxu0 %v1184
          %2215 = vmatpush1.msra.mxu0 %v1183
          %2216 = vmatprep.subr.mxu0 %v1188
          %2217 = vmatpush1.msra.mxu0 %v1187
          %2218 = vmatprep.subr.mxu0 %v1192
          %2219 = vmatpush1.msra.mxu0 %v1191
          %2220 = vmatprep.subr.mxu0 %v1196
          %2221 = vmatpush1.msra.mxu0 %v1195
          %2222 = vmatprep.subr.mxu0 %v1200
          %2223 = vmatpush1.msra.mxu0 %v1199
          %2224 = vmatprep.subr.mxu0 0.0
          %2225 = vmatpush1.msra.mxu0 0.0
          %2226 = vmatprep.subr.mxu0 0.0
          %2227 = vmatpush1.msra.mxu0 0.0
          %2228 = vmatprep.subr.mxu0 0.0
          %2229 = vmatpush1.msra.mxu0 0.0
          %2230 = vmatprep.subr.mxu0 0.0
          %2231 = vmatpush1.msra.mxu0 0.0
          %2232 = vmatprep.subr.mxu0 0.0
          %2233 = vmatpush1.msra.mxu0 0.0
          %2234 = vmatprep.subr.mxu0 0.0
          %2235 = vmatpush1.msra.mxu0 0.0
          %2236 = vmatprep.subr.mxu0 0.0
          %2237 = vmatpush1.msra.mxu0 0.0
          %2238 = vmatprep.subr.mxu0 0.0
          %2239 = vmatpush1.msra.mxu0 0.0
          %2240 = vmatprep.subr.mxu0 0.0
          %2241 = vmatpush1.msra.mxu0 0.0
          %2242 = vmatprep.subr.mxu0 0.0
          %2243 = vmatpush1.msra.mxu0 0.0
          %2244 = vmatprep.subr.mxu0 0.0
          %2245 = vmatpush1.msra.mxu0 0.0
          %2246 = vmatprep.subr.mxu0 0.0
          %2247 = vmatpush1.msra.mxu0 0.0
          %2248 = vmatprep.subr.mxu0 0.0
          %2249 = vmatpush1.msra.mxu0 0.0
          %2250 = vmatprep.subr.mxu0 0.0
          %2251 = vmatpush1.msra.mxu0 0.0
          %2252 = vmatprep.subr.mxu0 0.0
          %2253 = vmatpush1.msra.mxu0 0.0
          %2254 = vmatprep.subr.mxu0 0.0
          %2255 = vmatpush1.msra.mxu0 0.0
          %2256 = vmatprep.mubr.f32.mxu0 0.0
          %2257 = vmatmul.mubr.f32.gmra.mrb[0].mxu0 %v2191
          %v2258 = vpop.f32.mrb[0].mxu0
          %v2259 = vadd.f32 0.0, %v2258
          %v2260 = vpop.f32.mrb[0].mxu0
          %v2261 = vadd.f32 0.0, %v2260
          %2262 = vdwg.mxu0
          %2263 = vmatprep.subr.mxu0 %v1142
          %2264 = vmatpush1.msra.mxu0 %v1141
          %2265 = vmatprep.subr.mxu0 %v1146
          %2266 = vmatpush1.msra.mxu0 %v1145
          %2267 = vmatprep.subr.mxu0 %v1150
          %2268 = vmatpush1.msra.mxu0 %v1149
          %2269 = vmatprep.subr.mxu0 %v1154
          %2270 = vmatpush1.msra.mxu0 %v1153
          %2271 = vmatprep.subr.mxu0 %v1158
          %2272 = vmatpush1.msra.mxu0 %v1157
          %2273 = vmatprep.subr.mxu0 %v1162
          %2274 = vmatpush1.msra.mxu0 %v1161
          %2275 = vmatprep.subr.mxu0 %v1166
          %2276 = vmatpush1.msra.mxu0 %v1165
          %2277 = vmatprep.subr.mxu0 %v1170
          %2278 = vmatpush1.msra.mxu0 %v1169
          %2279 = vmatprep.subr.mxu0 %v1174
          %2280 = vmatpush1.msra.mxu0 %v1173
          %2281 = vmatprep.subr.mxu0 %v1178
          %2282 = vmatpush1.msra.mxu0 %v1177
          %2283 = vmatprep.subr.mxu0 %v1182
          %2284 = vmatpush1.msra.mxu0 %v1181
          %2285 = vmatprep.subr.mxu0 %v1186
          %2286 = vmatpush1.msra.mxu0 %v1185
          %2287 = vmatprep.subr.mxu0 %v1190
          %2288 = vmatpush1.msra.mxu0 %v1189
          %2289 = vmatprep.subr.mxu0 %v1194
          %2290 = vmatpush1.msra.mxu0 %v1193
          %2291 = vmatprep.subr.mxu0 %v1198
          %2292 = vmatpush1.msra.mxu0 %v1197
          %2293 = vmatprep.subr.mxu0 %v1202
          %2294 = vmatpush1.msra.mxu0 %v1201
          %2295 = vmatprep.subr.mxu0 0.0
          %2296 = vmatpush1.msra.mxu0 0.0
          %2297 = vmatprep.subr.mxu0 0.0
          %2298 = vmatpush1.msra.mxu0 0.0
          %2299 = vmatprep.subr.mxu0 0.0
          %2300 = vmatpush1.msra.mxu0 0.0
          %2301 = vmatprep.subr.mxu0 0.0
          %2302 = vmatpush1.msra.mxu0 0.0
          %2303 = vmatprep.subr.mxu0 0.0
          %2304 = vmatpush1.msra.mxu0 0.0
          %2305 = vmatprep.subr.mxu0 0.0
          %2306 = vmatpush1.msra.mxu0 0.0
          %2307 = vmatprep.subr.mxu0 0.0
          %2308 = vmatpush1.msra.mxu0 0.0
          %2309 = vmatprep.subr.mxu0 0.0
          %2310 = vmatpush1.msra.mxu0 0.0
          %2311 = vmatprep.subr.mxu0 0.0
          %2312 = vmatpush1.msra.mxu0 0.0
          %2313 = vmatprep.subr.mxu0 0.0
          %2314 = vmatpush1.msra.mxu0 0.0
          %2315 = vmatprep.subr.mxu0 0.0
          %2316 = vmatpush1.msra.mxu0 0.0
          %2317 = vmatprep.subr.mxu0 0.0
          %2318 = vmatpush1.msra.mxu0 0.0
          %2319 = vmatprep.subr.mxu0 0.0
          %2320 = vmatpush1.msra.mxu0 0.0
          %2321 = vmatprep.subr.mxu0 0.0
          %2322 = vmatpush1.msra.mxu0 0.0
          %2323 = vmatprep.subr.mxu0 0.0
          %2324 = vmatpush1.msra.mxu0 0.0
          %2325 = vmatprep.subr.mxu0 0.0
          %2326 = vmatpush1.msra.mxu0 0.0
          %2327 = vmatprep.mubr.f32.mxu0 0.0
          %2328 = vmatmul.mubr.f32.gmra.mrb[0].mxu0 %v2191
          %v2329 = vpop.f32.mrb[0].mxu0
          %v2330 = vadd.f32 0.0, %v2329
          %v2331 = vpop.f32.mrb[0].mxu0
          %v2332 = vadd.f32 0.0, %v2331
          %2333 = vdwg.mxu0
          %v2334 = vadd.f32 %v1377, %v2259
          %v2335 = vadd.f32 %v1379, %v2261
          %v2336 = vadd.f32 %v1490, %v2330
          %v2337 = vadd.f32 %v1492, %v2332
          %v2338 = vxor.u32 %v2334, 2147483648
          %v2339 = vxor.u32 %v2335, 2147483648
          %v2340 = vmul.f32 %v2338, 1.442695
          %v2341 = vpow.pop %v2340
          %v2342 = vmul.f32 %v2339, 1.442695
          %v2343 = vpow.pop %v2342
          %v2344 = vadd.f32 %v2341, 1.0
          %v2345 = vadd.f32 %v2343, 1.0
          %v2346 = vrcp.pop %v2344
          %v2347 = vmul.f32 1.0, %v2346
          %v2348 = vrcp.pop %v2345
          %v2349 = vmul.f32 1.0, %v2348
          %v2350 = vtanh.pop %v2336
          %v2351 = vxor.u32 %v2337, 2147483648
          %v2352 = vmul.f32 %v2351, 1.442695
          %v2353 = vpow.pop %v2352
          %v2354 = vadd.f32 %v2353, 1.0
          %v2355 = vrcp.pop %v2354
          %v2356 = vmul.f32 1.0, %v2355
          %v2357 = vmul.f32 %v2349, %v2189
          %v2358 = vmul.f32 %v2347, %v2350
          %v2359 = vadd.f32 %v2357, %v2358
          %v2360 = vtanh.pop %v2359
          %v2361 = vmul.f32 %v2356, %v2360
          %2362 = vmatprep.subr.mxu0 %v1140
          %2363 = vmatpush1.msra.mxu0 %v1139
          %2364 = vmatprep.subr.mxu0 %v1144
          %2365 = vmatpush1.msra.mxu0 %v1143
          %2366 = vmatprep.subr.mxu0 %v1148
          %2367 = vmatpush1.msra.mxu0 %v1147
          %2368 = vmatprep.subr.mxu0 %v1152
          %2369 = vmatpush1.msra.mxu0 %v1151
          %2370 = vmatprep.subr.mxu0 %v1156
          %2371 = vmatpush1.msra.mxu0 %v1155
          %2372 = vmatprep.subr.mxu0 %v1160
          %2373 = vmatpush1.msra.mxu0 %v1159
          %2374 = vmatprep.subr.mxu0 %v1164
          %2375 = vmatpush1.msra.mxu0 %v1163
          %2376 = vmatprep.subr.mxu0 %v1168
          %2377 = vmatpush1.msra.mxu0 %v1167
          %2378 = vmatprep.subr.mxu0 %v1172
          %2379 = vmatpush1.msra.mxu0 %v1171
          %2380 = vmatprep.subr.mxu0 %v1176
          %2381 = vmatpush1.msra.mxu0 %v1175
          %2382 = vmatprep.subr.mxu0 %v1180
          %2383 = vmatpush1.msra.mxu0 %v1179
          %2384 = vmatprep.subr.mxu0 %v1184
          %2385 = vmatpush1.msra.mxu0 %v1183
          %2386 = vmatprep.subr.mxu0 %v1188
          %2387 = vmatpush1.msra.mxu0 %v1187
          %2388 = vmatprep.subr.mxu0 %v1192
          %2389 = vmatpush1.msra.mxu0 %v1191
          %2390 = vmatprep.subr.mxu0 %v1196
          %2391 = vmatpush1.msra.mxu0 %v1195
          %2392 = vmatprep.subr.mxu0 %v1200
          %2393 = vmatpush1.msra.mxu0 %v1199
          %2394 = vmatprep.subr.mxu0 0.0
          %2395 = vmatpush1.msra.mxu0 0.0
          %2396 = vmatprep.subr.mxu0 0.0
          %2397 = vmatpush1.msra.mxu0 0.0
          %2398 = vmatprep.subr.mxu0 0.0
          %2399 = vmatpush1.msra.mxu0 0.0
          %2400 = vmatprep.subr.mxu0 0.0
          %2401 = vmatpush1.msra.mxu0 0.0
          %2402 = vmatprep.subr.mxu0 0.0
          %2403 = vmatpush1.msra.mxu0 0.0
          %2404 = vmatprep.subr.mxu0 0.0
          %2405 = vmatpush1.msra.mxu0 0.0
          %2406 = vmatprep.subr.mxu0 0.0
          %2407 = vmatpush1.msra.mxu0 0.0
          %2408 = vmatprep.subr.mxu0 0.0
          %2409 = vmatpush1.msra.mxu0 0.0
          %2410 = vmatprep.subr.mxu0 0.0
          %2411 = vmatpush1.msra.mxu0 0.0
          %2412 = vmatprep.subr.mxu0 0.0
          %2413 = vmatpush1.msra.mxu0 0.0
          %2414 = vmatprep.subr.mxu0 0.0
          %2415 = vmatpush1.msra.mxu0 0.0
          %2416 = vmatprep.subr.mxu0 0.0
          %2417 = vmatpush1.msra.mxu0 0.0
          %2418 = vmatprep.subr.mxu0 0.0
          %2419 = vmatpush1.msra.mxu0 0.0
          %2420 = vmatprep.subr.mxu0 0.0
          %2421 = vmatpush1.msra.mxu0 0.0
          %2422 = vmatprep.subr.mxu0 0.0
          %2423 = vmatpush1.msra.mxu0 0.0
          %2424 = vmatprep.subr.mxu0 0.0
          %2425 = vmatpush1.msra.mxu0 0.0
          %2426 = vmatprep.mubr.f32.mxu0 0.0
          %2427 = vmatmul.mubr.f32.gmra.mrb[0].mxu0 %v2361
          %v2428 = vpop.f32.mrb[0].mxu0
          %v2429 = vadd.f32 0.0, %v2428
          %v2430 = vpop.f32.mrb[0].mxu0
          %v2431 = vadd.f32 0.0, %v2430
          %2432 = vdwg.mxu0
          %2433 = vmatprep.subr.mxu0 %v1142
          %2434 = vmatpush1.msra.mxu0 %v1141
          %2435 = vmatprep.subr.mxu0 %v1146
          %2436 = vmatpush1.msra.mxu0 %v1145
          %2437 = vmatprep.subr.mxu0 %v1150
          %2438 = vmatpush1.msra.mxu0 %v1149
          %2439 = vmatprep.subr.mxu0 %v1154
          %2440 = vmatpush1.msra.mxu0 %v1153
          %2441 = vmatprep.subr.mxu0 %v1158
          %2442 = vmatpush1.msra.mxu0 %v1157
          %2443 = vmatprep.subr.mxu0 %v1162
          %2444 = vmatpush1.msra.mxu0 %v1161
          %2445 = vmatprep.subr.mxu0 %v1166
          %2446 = vmatpush1.msra.mxu0 %v1165
          %2447 = vmatprep.subr.mxu0 %v1170
          %2448 = vmatpush1.msra.mxu0 %v1169
          %2449 = vmatprep.subr.mxu0 %v1174
          %2450 = vmatpush1.msra.mxu0 %v1173
          %2451 = vmatprep.subr.mxu0 %v1178
          %2452 = vmatpush1.msra.mxu0 %v1177
          %2453 = vmatprep.subr.mxu0 %v1182
          %2454 = vmatpush1.msra.mxu0 %v1181
          %2455 = vmatprep.subr.mxu0 %v1186
          %2456 = vmatpush1.msra.mxu0 %v1185
          %2457 = vmatprep.subr.mxu0 %v1190
          %2458 = vmatpush1.msra.mxu0 %v1189
          %2459 = vmatprep.subr.mxu0 %v1194
          %2460 = vmatpush1.msra.mxu0 %v1193
          %2461 = vmatprep.subr.mxu0 %v1198
          %2462 = vmatpush1.msra.mxu0 %v1197
          %2463 = vmatprep.subr.mxu0 %v1202
          %2464 = vmatpush1.msra.mxu0 %v1201
          %2465 = vmatprep.subr.mxu0 0.0
          %2466 = vmatpush1.msra.mxu0 0.0
          %2467 = vmatprep.subr.mxu0 0.0
          %2468 = vmatpush1.msra.mxu0 0.0
          %2469 = vmatprep.subr.mxu0 0.0
          %2470 = vmatpush1.msra.mxu0 0.0
          %2471 = vmatprep.subr.mxu0 0.0
          %2472 = vmatpush1.msra.mxu0 0.0
          %2473 = vmatprep.subr.mxu0 0.0
          %2474 = vmatpush1.msra.mxu0 0.0
          %2475 = vmatprep.subr.mxu0 0.0
          %2476 = vmatpush1.msra.mxu0 0.0
          %2477 = vmatprep.subr.mxu0 0.0
          %2478 = vmatpush1.msra.mxu0 0.0
          %2479 = vmatprep.subr.mxu0 0.0
          %2480 = vmatpush1.msra.mxu0 0.0
          %2481 = vmatprep.subr.mxu0 0.0
          %2482 = vmatpush1.msra.mxu0 0.0
          %2483 = vmatprep.subr.mxu0 0.0
          %2484 = vmatpush1.msra.mxu0 0.0
          %2485 = vmatprep.subr.mxu0 0.0
          %2486 = vmatpush1.msra.mxu0 0.0
          %2487 = vmatprep.subr.mxu0 0.0
          %2488 = vmatpush1.msra.mxu0 0.0
          %2489 = vmatprep.subr.mxu0 0.0
          %2490 = vmatpush1.msra.mxu0 0.0
          %2491 = vmatprep.subr.mxu0 0.0
          %2492 = vmatpush1.msra.mxu0 0.0
          %2493 = vmatprep.subr.mxu0 0.0
          %2494 = vmatpush1.msra.mxu0 0.0
          %2495 = vmatprep.subr.mxu0 0.0
          %2496 = vmatpush1.msra.mxu0 0.0
          %2497 = vmatprep.mubr.f32.mxu0 0.0
          %2498 = vmatmul.mubr.f32.gmra.mrb[0].mxu0 %v2361
          %v2499 = vpop.f32.mrb[0].mxu0
          %v2500 = vadd.f32 0.0, %v2499
          %v2501 = vpop.f32.mrb[0].mxu0
          %v2502 = vadd.f32 0.0, %v2501
          %2503 = vdwg.mxu0
          %v2504 = vadd.f32 %v1383, %v2429
          %v2505 = vadd.f32 %v1385, %v2431
          %v2506 = vadd.f32 %v1496, %v2500
          %v2507 = vadd.f32 %v1498, %v2502
          %v2508 = vxor.u32 %v2504, 2147483648
          %v2509 = vxor.u32 %v2505, 2147483648
          %v2510 = vmul.f32 %v2508, 1.442695
          %v2511 = vpow.pop %v2510
          %v2512 = vmul.f32 %v2509, 1.442695
          %v2513 = vpow.pop %v2512
          %v2514 = vadd.f32 %v2511, 1.0
          %v2515 = vadd.f32 %v2513, 1.0
          %v2516 = vrcp.pop %v2514
          %v2517 = vmul.f32 1.0, %v2516
          %v2518 = vrcp.pop %v2515
          %v2519 = vmul.f32 1.0, %v2518
          %v2520 = vtanh.pop %v2506
          %v2521 = vxor.u32 %v2507, 2147483648
          %v2522 = vmul.f32 %v2521, 1.442695
          %v2523 = vpow.pop %v2522
          %v2524 = vadd.f32 %v2523, 1.0
          %v2525 = vrcp.pop %v2524
          %v2526 = vmul.f32 1.0, %v2525
          %v2527 = vmul.f32 %v2519, %v2359
          %v2528 = vmul.f32 %v2517, %v2520
          %v2529 = vadd.f32 %v2527, %v2528
          %v2530 = vtanh.pop %v2529
          %v2531 = vmul.f32 %v2526, %v2530
          %2532 = vmatprep.subr.mxu0 %v1140
          %2533 = vmatpush1.msra.mxu0 %v1139
          %2534 = vmatprep.subr.mxu0 %v1144
          %2535 = vmatpush1.msra.mxu0 %v1143
          %2536 = vmatprep.subr.mxu0 %v1148
          %2537 = vmatpush1.msra.mxu0 %v1147
          %2538 = vmatprep.subr.mxu0 %v1152
          %2539 = vmatpush1.msra.mxu0 %v1151
          %2540 = vmatprep.subr.mxu0 %v1156
          %2541 = vmatpush1.msra.mxu0 %v1155
          %2542 = vmatprep.subr.mxu0 %v1160
          %2543 = vmatpush1.msra.mxu0 %v1159
          %2544 = vmatprep.subr.mxu0 %v1164
          %2545 = vmatpush1.msra.mxu0 %v1163
          %2546 = vmatprep.subr.mxu0 %v1168
          %2547 = vmatpush1.msra.mxu0 %v1167
          %2548 = vmatprep.subr.mxu0 %v1172
          %2549 = vmatpush1.msra.mxu0 %v1171
          %2550 = vmatprep.subr.mxu0 %v1176
          %2551 = vmatpush1.msra.mxu0 %v1175
          %2552 = vmatprep.subr.mxu0 %v1180
          %2553 = vmatpush1.msra.mxu0 %v1179
          %2554 = vmatprep.subr.mxu0 %v1184
          %2555 = vmatpush1.msra.mxu0 %v1183
          %2556 = vmatprep.subr.mxu0 %v1188
          %2557 = vmatpush1.msra.mxu0 %v1187
          %2558 = vmatprep.subr.mxu0 %v1192
          %2559 = vmatpush1.msra.mxu0 %v1191
          %2560 = vmatprep.subr.mxu0 %v1196
          %2561 = vmatpush1.msra.mxu0 %v1195
          %2562 = vmatprep.subr.mxu0 %v1200
          %2563 = vmatpush1.msra.mxu0 %v1199
          %2564 = vmatprep.subr.mxu0 0.0
          %2565 = vmatpush1.msra.mxu0 0.0
          %2566 = vmatprep.subr.mxu0 0.0
          %2567 = vmatpush1.msra.mxu0 0.0
          %2568 = vmatprep.subr.mxu0 0.0
          %2569 = vmatpush1.msra.mxu0 0.0
          %2570 = vmatprep.subr.mxu0 0.0
          %2571 = vmatpush1.msra.mxu0 0.0
          %2572 = vmatprep.subr.mxu0 0.0
          %2573 = vmatpush1.msra.mxu0 0.0
          %2574 = vmatprep.subr.mxu0 0.0
          %2575 = vmatpush1.msra.mxu0 0.0
          %2576 = vmatprep.subr.mxu0 0.0
          %2577 = vmatpush1.msra.mxu0 0.0
          %2578 = vmatprep.subr.mxu0 0.0
          %2579 = vmatpush1.msra.mxu0 0.0
          %2580 = vmatprep.subr.mxu0 0.0
          %2581 = vmatpush1.msra.mxu0 0.0
          %2582 = vmatprep.subr.mxu0 0.0
          %2583 = vmatpush1.msra.mxu0 0.0
          %2584 = vmatprep.subr.mxu0 0.0
          %2585 = vmatpush1.msra.mxu0 0.0
          %2586 = vmatprep.subr.mxu0 0.0
          %2587 = vmatpush1.msra.mxu0 0.0
          %2588 = vmatprep.subr.mxu0 0.0
          %2589 = vmatpush1.msra.mxu0 0.0
          %2590 = vmatprep.subr.mxu0 0.0
          %2591 = vmatpush1.msra.mxu0 0.0
          %2592 = vmatprep.subr.mxu0 0.0
          %2593 = vmatpush1.msra.mxu0 0.0
          %2594 = vmatprep.subr.mxu0 0.0
          %2595 = vmatpush1.msra.mxu0 0.0
          %2596 = vmatprep.mubr.f32.mxu0 0.0
          %2597 = vmatmul.mubr.f32.gmra.mrb[0].mxu0 %v2531
          %v2598 = vpop.f32.mrb[0].mxu0
          %v2599 = vadd.f32 0.0, %v2598
          %v2600 = vpop.f32.mrb[0].mxu0
          %v2601 = vadd.f32 0.0, %v2600
          %2602 = vdwg.mxu0
          %2603 = vmatprep.subr.mxu0 %v1142
          %2604 = vmatpush1.msra.mxu0 %v1141
          %2605 = vmatprep.subr.mxu0 %v1146
          %2606 = vmatpush1.msra.mxu0 %v1145
          %2607 = vmatprep.subr.mxu0 %v1150
          %2608 = vmatpush1.msra.mxu0 %v1149
          %2609 = vmatprep.subr.mxu0 %v1154
          %2610 = vmatpush1.msra.mxu0 %v1153
          %2611 = vmatprep.subr.mxu0 %v1158
          %2612 = vmatpush1.msra.mxu0 %v1157
          %2613 = vmatprep.subr.mxu0 %v1162
          %2614 = vmatpush1.msra.mxu0 %v1161
          %2615 = vmatprep.subr.mxu0 %v1166
          %2616 = vmatpush1.msra.mxu0 %v1165
          %2617 = vmatprep.subr.mxu0 %v1170
          %2618 = vmatpush1.msra.mxu0 %v1169
          %2619 = vmatprep.subr.mxu0 %v1174
          %2620 = vmatpush1.msra.mxu0 %v1173
          %2621 = vmatprep.subr.mxu0 %v1178
          %2622 = vmatpush1.msra.mxu0 %v1177
          %2623 = vmatprep.subr.mxu0 %v1182
          %2624 = vmatpush1.msra.mxu0 %v1181
          %2625 = vmatprep.subr.mxu0 %v1186
          %2626 = vmatpush1.msra.mxu0 %v1185
          %2627 = vmatprep.subr.mxu0 %v1190
          %2628 = vmatpush1.msra.mxu0 %v1189
          %2629 = vmatprep.subr.mxu0 %v1194
          %2630 = vmatpush1.msra.mxu0 %v1193
          %2631 = vmatprep.subr.mxu0 %v1198
          %2632 = vmatpush1.msra.mxu0 %v1197
          %2633 = vmatprep.subr.mxu0 %v1202
          %2634 = vmatpush1.msra.mxu0 %v1201
          %2635 = vmatprep.subr.mxu0 0.0
          %2636 = vmatpush1.msra.mxu0 0.0
          %2637 = vmatprep.subr.mxu0 0.0
          %2638 = vmatpush1.msra.mxu0 0.0
          %2639 = vmatprep.subr.mxu0 0.0
          %2640 = vmatpush1.msra.mxu0 0.0
          %2641 = vmatprep.subr.mxu0 0.0
          %2642 = vmatpush1.msra.mxu0 0.0
          %2643 = vmatprep.subr.mxu0 0.0
          %2644 = vmatpush1.msra.mxu0 0.0
          %2645 = vmatprep.subr.mxu0 0.0
          %2646 = vmatpush1.msra.mxu0 0.0
          %2647 = vmatprep.subr.mxu0 0.0
          %2648 = vmatpush1.msra.mxu0 0.0
          %2649 = vmatprep.subr.mxu0 0.0
          %2650 = vmatpush1.msra.mxu0 0.0
          %2651 = vmatprep.subr.mxu0 0.0
          %2652 = vmatpush1.msra.mxu0 0.0
          %2653 = vmatprep.subr.mxu0 0.0
          %2654 = vmatpush1.msra.mxu0 0.0
          %2655 = vmatprep.subr.mxu0 0.0
          %2656 = vmatpush1.msra.mxu0 0.0
          %2657 = vmatprep.subr.mxu0 0.0
          %2658 = vmatpush1.msra.mxu0 0.0
          %2659 = vmatprep.subr.mxu0 0.0
          %2660 = vmatpush1.msra.mxu0 0.0
          %2661 = vmatprep.subr.mxu0 0.0
          %2662 = vmatpush1.msra.mxu0 0.0
          %2663 = vmatprep.subr.mxu0 0.0
          %2664 = vmatpush1.msra.mxu0 0.0
          %2665 = vmatprep.subr.mxu0 0.0
          %2666 = vmatpush1.msra.mxu0 0.0
          %2667 = vmatprep.mubr.f32.mxu0 0.0
          %2668 = vmatmul.mubr.f32.gmra.mrb[0].mxu0 %v2531
          %v2669 = vpop.f32.mrb[0].mxu0
          %v2670 = vadd.f32 0.0, %v2669
          %v2671 = vpop.f32.mrb[0].mxu0
          %v2672 = vadd.f32 0.0, %v2671
          %2673 = vdwg.mxu0
          %v2674 = vadd.f32 %v1389, %v2599
          %v2675 = vadd.f32 %v1391, %v2601
          %v2676 = vadd.f32 %v1502, %v2670
          %v2677 = vadd.f32 %v1504, %v2672
          %v2678 = vxor.u32 %v2674, 2147483648
          %v2679 = vxor.u32 %v2675, 2147483648
          %v2680 = vmul.f32 %v2678, 1.442695
          %v2681 = vpow.pop %v2680
          %v2682 = vmul.f32 %v2679, 1.442695
          %v2683 = vpow.pop %v2682
          %v2684 = vadd.f32 %v2681, 1.0
          %v2685 = vadd.f32 %v2683, 1.0
          %v2686 = vrcp.pop %v2684
          %v2687 = vmul.f32 1.0, %v2686
          %v2688 = vrcp.pop %v2685
          %v2689 = vmul.f32 1.0, %v2688
          %v2690 = vtanh.pop %v2676
          %v2691 = vxor.u32 %v2677, 2147483648
          %v2692 = vmul.f32 %v2691, 1.442695
          %v2693 = vpow.pop %v2692
          %v2694 = vadd.f32 %v2693, 1.0
          %v2695 = vrcp.pop %v2694
          %v2696 = vmul.f32 1.0, %v2695
          %v2697 = vmul.f32 %v2689, %v2529
          %v2698 = vmul.f32 %v2687, %v2690
          %v2699 = vadd.f32 %v2697, %v2698
          %v2700 = vtanh.pop %v2699
          %v2701 = vmul.f32 %v2696, %v2700
          %2702 = vmatprep.subr.mxu0 %v1140
          %2703 = vmatpush1.msra.mxu0 %v1139
          %2704 = vmatprep.subr.mxu0 %v1144
          %2705 = vmatpush1.msra.mxu0 %v1143
          %2706 = vmatprep.subr.mxu0 %v1148
          %2707 = vmatpush1.msra.mxu0 %v1147
          %2708 = vmatprep.subr.mxu0 %v1152
          %2709 = vmatpush1.msra.mxu0 %v1151
          %2710 = vmatprep.subr.mxu0 %v1156
          %2711 = vmatpush1.msra.mxu0 %v1155
          %2712 = vmatprep.subr.mxu0 %v1160
          %2713 = vmatpush1.msra.mxu0 %v1159
          %2714 = vmatprep.subr.mxu0 %v1164
          %2715 = vmatpush1.msra.mxu0 %v1163
          %2716 = vmatprep.subr.mxu0 %v1168
          %2717 = vmatpush1.msra.mxu0 %v1167
          %2718 = vmatprep.subr.mxu0 %v1172
          %2719 = vmatpush1.msra.mxu0 %v1171
          %2720 = vmatprep.subr.mxu0 %v1176
          %2721 = vmatpush1.msra.mxu0 %v1175
          %2722 = vmatprep.subr.mxu0 %v1180
          %2723 = vmatpush1.msra.mxu0 %v1179
          %2724 = vmatprep.subr.mxu0 %v1184
          %2725 = vmatpush1.msra.mxu0 %v1183
          %2726 = vmatprep.subr.mxu0 %v1188
          %2727 = vmatpush1.msra.mxu0 %v1187
          %2728 = vmatprep.subr.mxu0 %v1192
          %2729 = vmatpush1.msra.mxu0 %v1191
          %2730 = vmatprep.subr.mxu0 %v1196
          %2731 = vmatpush1.msra.mxu0 %v1195
          %2732 = vmatprep.subr.mxu0 %v1200
          %2733 = vmatpush1.msra.mxu0 %v1199
          %2734 = vmatprep.subr.mxu0 0.0
          %2735 = vmatpush1.msra.mxu0 0.0
          %2736 = vmatprep.subr.mxu0 0.0
          %2737 = vmatpush1.msra.mxu0 0.0
          %2738 = vmatprep.subr.mxu0 0.0
          %2739 = vmatpush1.msra.mxu0 0.0
          %2740 = vmatprep.subr.mxu0 0.0
          %2741 = vmatpush1.msra.mxu0 0.0
          %2742 = vmatprep.subr.mxu0 0.0
          %2743 = vmatpush1.msra.mxu0 0.0
          %2744 = vmatprep.subr.mxu0 0.0
          %2745 = vmatpush1.msra.mxu0 0.0
          %2746 = vmatprep.subr.mxu0 0.0
          %2747 = vmatpush1.msra.mxu0 0.0
          %2748 = vmatprep.subr.mxu0 0.0
          %2749 = vmatpush1.msra.mxu0 0.0
          %2750 = vmatprep.subr.mxu0 0.0
          %2751 = vmatpush1.msra.mxu0 0.0
          %2752 = vmatprep.subr.mxu0 0.0
          %2753 = vmatpush1.msra.mxu0 0.0
          %2754 = vmatprep.subr.mxu0 0.0
          %2755 = vmatpush1.msra.mxu0 0.0
          %2756 = vmatprep.subr.mxu0 0.0
          %2757 = vmatpush1.msra.mxu0 0.0
          %2758 = vmatprep.subr.mxu0 0.0
          %2759 = vmatpush1.msra.mxu0 0.0
          %2760 = vmatprep.subr.mxu0 0.0
          %2761 = vmatpush1.msra.mxu0 0.0
          %2762 = vmatprep.subr.mxu0 0.0
          %2763 = vmatpush1.msra.mxu0 0.0
          %2764 = vmatprep.subr.mxu0 0.0
          %2765 = vmatpush1.msra.mxu0 0.0
          %2766 = vmatprep.mubr.f32.mxu0 0.0
          %2767 = vmatmul.mubr.f32.gmra.mrb[0].mxu0 %v2701
          %v2768 = vpop.f32.mrb[0].mxu0
          %v2769 = vadd.f32 0.0, %v2768
          %v2770 = vpop.f32.mrb[0].mxu0
          %v2771 = vadd.f32 0.0, %v2770
          %2772 = vdwg.mxu0
          %2773 = vmatprep.subr.mxu0 %v1142
          %2774 = vmatpush1.msra.mxu0 %v1141
          %2775 = vmatprep.subr.mxu0 %v1146
          %2776 = vmatpush1.msra.mxu0 %v1145
          %2777 = vmatprep.subr.mxu0 %v1150
          %2778 = vmatpush1.msra.mxu0 %v1149
          %2779 = vmatprep.subr.mxu0 %v1154
          %2780 = vmatpush1.msra.mxu0 %v1153
          %2781 = vmatprep.subr.mxu0 %v1158
          %2782 = vmatpush1.msra.mxu0 %v1157
          %2783 = vmatprep.subr.mxu0 %v1162
          %2784 = vmatpush1.msra.mxu0 %v1161
          %2785 = vmatprep.subr.mxu0 %v1166
          %2786 = vmatpush1.msra.mxu0 %v1165
          %2787 = vmatprep.subr.mxu0 %v1170
          %2788 = vmatpush1.msra.mxu0 %v1169
          %2789 = vmatprep.subr.mxu0 %v1174
          %2790 = vmatpush1.msra.mxu0 %v1173
          %2791 = vmatprep.subr.mxu0 %v1178
          %2792 = vmatpush1.msra.mxu0 %v1177
          %2793 = vmatprep.subr.mxu0 %v1182
          %2794 = vmatpush1.msra.mxu0 %v1181
          %2795 = vmatprep.subr.mxu0 %v1186
          %2796 = vmatpush1.msra.mxu0 %v1185
          %2797 = vmatprep.subr.mxu0 %v1190
          %2798 = vmatpush1.msra.mxu0 %v1189
          %2799 = vmatprep.subr.mxu0 %v1194
          %2800 = vmatpush1.msra.mxu0 %v1193
          %2801 = vmatprep.subr.mxu0 %v1198
          %2802 = vmatpush1.msra.mxu0 %v1197
          %2803 = vmatprep.subr.mxu0 %v1202
          %2804 = vmatpush1.msra.mxu0 %v1201
          %2805 = vmatprep.subr.mxu0 0.0
          %2806 = vmatpush1.msra.mxu0 0.0
          %2807 = vmatprep.subr.mxu0 0.0
          %2808 = vmatpush1.msra.mxu0 0.0
          %2809 = vmatprep.subr.mxu0 0.0
          %2810 = vmatpush1.msra.mxu0 0.0
          %2811 = vmatprep.subr.mxu0 0.0
          %2812 = vmatpush1.msra.mxu0 0.0
          %2813 = vmatprep.subr.mxu0 0.0
          %2814 = vmatpush1.msra.mxu0 0.0
          %2815 = vmatprep.subr.mxu0 0.0
          %2816 = vmatpush1.msra.mxu0 0.0
          %2817 = vmatprep.subr.mxu0 0.0
          %2818 = vmatpush1.msra.mxu0 0.0
          %2819 = vmatprep.subr.mxu0 0.0
          %2820 = vmatpush1.msra.mxu0 0.0
          %2821 = vmatprep.subr.mxu0 0.0
          %2822 = vmatpush1.msra.mxu0 0.0
          %2823 = vmatprep.subr.mxu0 0.0
          %2824 = vmatpush1.msra.mxu0 0.0
          %2825 = vmatprep.subr.mxu0 0.0
          %2826 = vmatpush1.msra.mxu0 0.0
          %2827 = vmatprep.subr.mxu0 0.0
          %2828 = vmatpush1.msra.mxu0 0.0
          %2829 = vmatprep.subr.mxu0 0.0
          %2830 = vmatpush1.msra.mxu0 0.0
          %2831 = vmatprep.subr.mxu0 0.0
          %2832 = vmatpush1.msra.mxu0 0.0
          %2833 = vmatprep.subr.mxu0 0.0
          %2834 = vmatpush1.msra.mxu0 0.0
          %2835 = vmatprep.subr.mxu0 0.0
          %2836 = vmatpush1.msra.mxu0 0.0
          %2837 = vmatprep.mubr.f32.mxu0 0.0
          %2838 = vmatmul.mubr.f32.gmra.mrb[0].mxu0 %v2701
          %v2839 = vpop.f32.mrb[0].mxu0
          %v2840 = vadd.f32 0.0, %v2839
          %v2841 = vpop.f32.mrb[0].mxu0
          %v2842 = vadd.f32 0.0, %v2841
          %2843 = vdwg.mxu0
          %v2844 = vadd.f32 %v1395, %v2769
          %v2845 = vadd.f32 %v1397, %v2771
          %v2846 = vadd.f32 %v1508, %v2840
          %v2847 = vadd.f32 %v1510, %v2842
          %v2848 = vxor.u32 %v2844, 2147483648
          %v2849 = vxor.u32 %v2845, 2147483648
          %v2850 = vmul.f32 %v2848, 1.442695
          %v2851 = vpow.pop %v2850
          %v2852 = vmul.f32 %v2849, 1.442695
          %v2853 = vpow.pop %v2852
          %v2854 = vadd.f32 %v2851, 1.0
          %v2855 = vadd.f32 %v2853, 1.0
          %v2856 = vrcp.pop %v2854
          %v2857 = vmul.f32 1.0, %v2856
          %v2858 = vrcp.pop %v2855
          %v2859 = vmul.f32 1.0, %v2858
          %v2860 = vtanh.pop %v2846
          %v2861 = vxor.u32 %v2847, 2147483648
          %v2862 = vmul.f32 %v2861, 1.442695
          %v2863 = vpow.pop %v2862
          %v2864 = vadd.f32 %v2863, 1.0
          %v2865 = vrcp.pop %v2864
          %v2866 = vmul.f32 1.0, %v2865
          %v2867 = vmul.f32 %v2859, %v2699
          %v2868 = vmul.f32 %v2857, %v2860
          %v2869 = vadd.f32 %v2867, %v2868
          %v2870 = vtanh.pop %v2869
          %v2871 = vmul.f32 %v2866, %v2870
          %v2872 = vld [vmem:[#allocation8] sm:$0xff]
          %v2873 = vld [vmem:[#allocation8 + $0x8] sm:$0xff]
          %v2874 = vld [vmem:[#allocation8 + $0x10] sm:$0xff]
          %v2875 = vld [vmem:[#allocation8 + $0x18] sm:$0xff]
          %v2876 = vld [vmem:[#allocation8 + $0x20] sm:$0xff]
          %v2877 = vld [vmem:[#allocation8 + $0x28] sm:$0xff]
          %v2878 = vld [vmem:[#allocation8 + $0x30] sm:$0xff]
          %v2879 = vld [vmem:[#allocation8 + $0x38] sm:$0xff]
          %v2880 = vld [vmem:[#allocation8 + $0x40] sm:$0xff]
          %v2881 = vld [vmem:[#allocation8 + $0x48] sm:$0xff]
          %v2882 = vld [vmem:[#allocation8 + $0x50] sm:$0xff]
          %v2883 = vld [vmem:[#allocation8 + $0x58] sm:$0xff]
          %v2884 = vld [vmem:[#allocation8 + $0x60] sm:$0xff]
          %v2885 = vld [vmem:[#allocation8 + $0x68] sm:$0xff]
          %v2886 = vld [vmem:[#allocation8 + $0x70] sm:$0xff]
          %v2887 = vld [vmem:[#allocation8 + $0x78] sm:$0xff]
          %v2888 = vld [vmem:[#allocation8 + $0x80] sm:$0xff]
          %v2889 = vld [vmem:[#allocation8 + $0x88] sm:$0xff]
          %v2890 = vld [vmem:[#allocation8 + $0x90] sm:$0xff]
          %v2891 = vld [vmem:[#allocation8 + $0x98] sm:$0xff]
          %v2892 = vld [vmem:[#allocation8 + $0xa0] sm:$0xff]
          %v2893 = vld [vmem:[#allocation8 + $0xa8] sm:$0xff]
          %v2894 = vld [vmem:[#allocation8 + $0xb0] sm:$0xff]
          %v2895 = vld [vmem:[#allocation8 + $0xb8] sm:$0xff]
          %v2896 = vld [vmem:[#allocation8 + $0xc0] sm:$0xff]
          %v2897 = vld [vmem:[#allocation8 + $0xc8] sm:$0xff]
          %v2898 = vld [vmem:[#allocation8 + $0xd0] sm:$0xff]
          %v2899 = vld [vmem:[#allocation8 + $0xd8] sm:$0xff]
          %v2900 = vld [vmem:[#allocation8 + $0xe0] sm:$0xff]
          %v2901 = vld [vmem:[#allocation8 + $0xe8] sm:$0xff]
          %v2902 = vld [vmem:[#allocation8 + $0xf0] sm:$0xff]
          %v2903 = vld [vmem:[#allocation8 + $0xf8] sm:$0xff]
          %v2904 = vunpack.c.l.bf16 %v2872
          %v2905 = vunpack.c.h.bf16 %v2872
          %v2906 = vunpack.c.l.bf16 %v2873
          %v2907 = vunpack.c.h.bf16 %v2873
          %v2908 = vunpack.c.l.bf16 %v2874
          %v2909 = vunpack.c.h.bf16 %v2874
          %v2910 = vunpack.c.l.bf16 %v2875
          %v2911 = vunpack.c.h.bf16 %v2875
          %v2912 = vunpack.c.l.bf16 %v2876
          %v2913 = vunpack.c.h.bf16 %v2876
          %v2914 = vunpack.c.l.bf16 %v2877
          %v2915 = vunpack.c.h.bf16 %v2877
          %v2916 = vunpack.c.l.bf16 %v2878
          %v2917 = vunpack.c.h.bf16 %v2878
          %v2918 = vunpack.c.l.bf16 %v2879
          %v2919 = vunpack.c.h.bf16 %v2879
          %v2920 = vunpack.c.l.bf16 %v2880
          %v2921 = vunpack.c.h.bf16 %v2880
          %v2922 = vunpack.c.l.bf16 %v2881
          %v2923 = vunpack.c.h.bf16 %v2881
          %v2924 = vunpack.c.l.bf16 %v2882
          %v2925 = vunpack.c.h.bf16 %v2882
          %v2926 = vunpack.c.l.bf16 %v2883
          %v2927 = vunpack.c.h.bf16 %v2883
          %v2928 = vunpack.c.l.bf16 %v2884
          %v2929 = vunpack.c.h.bf16 %v2884
          %v2930 = vunpack.c.l.bf16 %v2885
          %v2931 = vunpack.c.h.bf16 %v2885
          %v2932 = vunpack.c.l.bf16 %v2886
          %v2933 = vunpack.c.h.bf16 %v2886
          %v2934 = vunpack.c.l.bf16 %v2887
          %v2935 = vunpack.c.h.bf16 %v2887
          %v2936 = vunpack.c.l.bf16 %v2888
          %v2937 = vunpack.c.h.bf16 %v2888
          %v2938 = vunpack.c.l.bf16 %v2889
          %v2939 = vunpack.c.h.bf16 %v2889
          %v2940 = vunpack.c.l.bf16 %v2890
          %v2941 = vunpack.c.h.bf16 %v2890
          %v2942 = vunpack.c.l.bf16 %v2891
          %v2943 = vunpack.c.h.bf16 %v2891
          %v2944 = vunpack.c.l.bf16 %v2892
          %v2945 = vunpack.c.h.bf16 %v2892
          %v2946 = vunpack.c.l.bf16 %v2893
          %v2947 = vunpack.c.h.bf16 %v2893
          %v2948 = vunpack.c.l.bf16 %v2894
          %v2949 = vunpack.c.h.bf16 %v2894
          %v2950 = vunpack.c.l.bf16 %v2895
          %v2951 = vunpack.c.h.bf16 %v2895
          %v2952 = vunpack.c.l.bf16 %v2896
          %v2953 = vunpack.c.h.bf16 %v2896
          %v2954 = vunpack.c.l.bf16 %v2897
          %v2955 = vunpack.c.h.bf16 %v2897
          %v2956 = vunpack.c.l.bf16 %v2898
          %v2957 = vunpack.c.h.bf16 %v2898
          %v2958 = vunpack.c.l.bf16 %v2899
          %v2959 = vunpack.c.h.bf16 %v2899
          %v2960 = vunpack.c.l.bf16 %v2900
          %v2961 = vunpack.c.h.bf16 %v2900
          %v2962 = vunpack.c.l.bf16 %v2901
          %v2963 = vunpack.c.h.bf16 %v2901
          %v2964 = vunpack.c.l.bf16 %v2902
          %v2965 = vunpack.c.h.bf16 %v2902
          %v2966 = vunpack.c.l.bf16 %v2903
          %v2967 = vunpack.c.h.bf16 %v2903
          %v2968 = vld [vmem:[%s961] sm:$0xff]
          %v2969 = vld [vmem:[%s961 + $0x8] sm:$0xff]
          %v2970 = vld [vmem:[%s961 + $0x10] sm:$0xff]
          %v2971 = vld [vmem:[%s961 + $0x18] sm:$0xff]
          %v2972 = vld [vmem:[#allocation10] sm:$0xff]
          %v2973 = vld [vmem:[#allocation10 + $0x8] sm:$0xff]
          %v2974 = vld [vmem:[#allocation10 + $0x10] sm:$0xff]
          %v2975 = vld [vmem:[#allocation10 + $0x18] sm:$0xff]
          %v2976 = vld [vmem:[#allocation10 + $0x20] sm:$0xff]
          %v2977 = vld [vmem:[#allocation10 + $0x28] sm:$0xff]
          %v2978 = vld [vmem:[#allocation10 + $0x30] sm:$0xff]
          %v2979 = vld [vmem:[#allocation10 + $0x38] sm:$0xff]
          %v2980 = vld [vmem:[#allocation10 + $0x40] sm:$0xff]
          %v2981 = vld [vmem:[#allocation10 + $0x48] sm:$0xff]
          %v2982 = vld [vmem:[#allocation10 + $0x50] sm:$0xff]
          %v2983 = vld [vmem:[#allocation10 + $0x58] sm:$0xff]
          %v2984 = vld [vmem:[#allocation10 + $0x60] sm:$0xff]
          %v2985 = vld [vmem:[#allocation10 + $0x68] sm:$0xff]
          %v2986 = vld [vmem:[#allocation10 + $0x70] sm:$0xff]
          %v2987 = vld [vmem:[#allocation10 + $0x78] sm:$0xff]
          %v2988 = vld [vmem:[#allocation10 + $0x80] sm:$0xff]
          %v2989 = vld [vmem:[#allocation10 + $0x88] sm:$0xff]
          %v2990 = vld [vmem:[#allocation10 + $0x90] sm:$0xff]
          %v2991 = vld [vmem:[#allocation10 + $0x98] sm:$0xff]
          %v2992 = vld [vmem:[#allocation10 + $0xa0] sm:$0xff]
          %v2993 = vld [vmem:[#allocation10 + $0xa8] sm:$0xff]
          %v2994 = vld [vmem:[#allocation10 + $0xb0] sm:$0xff]
          %v2995 = vld [vmem:[#allocation10 + $0xb8] sm:$0xff]
          %v2996 = vld [vmem:[#allocation10 + $0xc0] sm:$0xff]
          %v2997 = vld [vmem:[#allocation10 + $0xc8] sm:$0xff]
          %v2998 = vld [vmem:[#allocation10 + $0xd0] sm:$0xff]
          %v2999 = vld [vmem:[#allocation10 + $0xd8] sm:$0xff]
          %v3000 = vld [vmem:[#allocation10 + $0xe0] sm:$0xff]
          %v3001 = vld [vmem:[#allocation10 + $0xe8] sm:$0xff]
          %v3002 = vld [vmem:[#allocation10 + $0xf0] sm:$0xff]
          %v3003 = vld [vmem:[#allocation10 + $0xf8] sm:$0xff]
          %v3004 = vld [vmem:[#allocation10 + $0x100] sm:$0xff]
          %v3005 = vld [vmem:[#allocation10 + $0x108] sm:$0xff]
          %v3006 = vld [vmem:[#allocation10 + $0x110] sm:$0xff]
          %v3007 = vld [vmem:[#allocation10 + $0x118] sm:$0xff]
          %v3008 = vld [vmem:[#allocation10 + $0x120] sm:$0xff]
          %v3009 = vld [vmem:[#allocation10 + $0x128] sm:$0xff]
          %v3010 = vld [vmem:[#allocation10 + $0x130] sm:$0xff]
          %v3011 = vld [vmem:[#allocation10 + $0x138] sm:$0xff]
          %v3012 = vld [vmem:[#allocation10 + $0x140] sm:$0xff]
          %v3013 = vld [vmem:[#allocation10 + $0x148] sm:$0xff]
          %v3014 = vld [vmem:[#allocation10 + $0x150] sm:$0xff]
          %v3015 = vld [vmem:[#allocation10 + $0x158] sm:$0xff]
          %v3016 = vld [vmem:[#allocation10 + $0x160] sm:$0xff]
          %v3017 = vld [vmem:[#allocation10 + $0x168] sm:$0xff]
          %v3018 = vld [vmem:[#allocation10 + $0x170] sm:$0xff]
          %v3019 = vld [vmem:[#allocation10 + $0x178] sm:$0xff]
          %v3020 = vld [vmem:[#allocation10 + $0x180] sm:$0xff]
          %v3021 = vld [vmem:[#allocation10 + $0x188] sm:$0xff]
          %v3022 = vld [vmem:[#allocation10 + $0x190] sm:$0xff]
          %v3023 = vld [vmem:[#allocation10 + $0x198] sm:$0xff]
          %v3024 = vld [vmem:[#allocation10 + $0x1a0] sm:$0xff]
          %v3025 = vld [vmem:[#allocation10 + $0x1a8] sm:$0xff]
          %v3026 = vld [vmem:[#allocation10 + $0x1b0] sm:$0xff]
          %v3027 = vld [vmem:[#allocation10 + $0x1b8] sm:$0xff]
          %v3028 = vld [vmem:[#allocation10 + $0x1c0] sm:$0xff]
          %v3029 = vld [vmem:[#allocation10 + $0x1c8] sm:$0xff]
          %v3030 = vld [vmem:[#allocation10 + $0x1d0] sm:$0xff]
          %v3031 = vld [vmem:[#allocation10 + $0x1d8] sm:$0xff]
          %v3032 = vld [vmem:[#allocation10 + $0x1e0] sm:$0xff]
          %v3033 = vld [vmem:[#allocation10 + $0x1e8] sm:$0xff]
          %v3034 = vld [vmem:[#allocation10 + $0x1f0] sm:$0xff]
          %v3035 = vld [vmem:[#allocation10 + $0x1f8] sm:$0xff]
          %v3036 = vld [vmem:[#allocation10 + $0x200] sm:$0xff]
          %v3037 = vld [vmem:[#allocation10 + $0x208] sm:$0xff]
          %v3038 = vld [vmem:[#allocation10 + $0x210] sm:$0xff]
          %v3039 = vld [vmem:[#allocation10 + $0x218] sm:$0xff]
          %v3040 = vld [vmem:[#allocation10 + $0x220] sm:$0xff]
          %v3041 = vld [vmem:[#allocation10 + $0x228] sm:$0xff]
          %v3042 = vld [vmem:[#allocation10 + $0x230] sm:$0xff]
          %v3043 = vld [vmem:[#allocation10 + $0x238] sm:$0xff]
          %v3044 = vld [vmem:[#allocation10 + $0x240] sm:$0xff]
          %v3045 = vld [vmem:[#allocation10 + $0x248] sm:$0xff]
          %v3046 = vld [vmem:[#allocation10 + $0x250] sm:$0xff]
          %v3047 = vld [vmem:[#allocation10 + $0x258] sm:$0xff]
          %v3048 = vld [vmem:[#allocation10 + $0x260] sm:$0xff]
          %v3049 = vld [vmem:[#allocation10 + $0x268] sm:$0xff]
          %v3050 = vld [vmem:[#allocation10 + $0x270] sm:$0xff]
          %v3051 = vld [vmem:[#allocation10 + $0x278] sm:$0xff]
          %v3052 = vld [vmem:[#allocation10 + $0x280] sm:$0xff]
          %v3053 = vld [vmem:[#allocation10 + $0x288] sm:$0xff]
          %v3054 = vld [vmem:[#allocation10 + $0x290] sm:$0xff]
          %v3055 = vld [vmem:[#allocation10 + $0x298] sm:$0xff]
          %v3056 = vld [vmem:[#allocation10 + $0x2a0] sm:$0xff]
          %v3057 = vld [vmem:[#allocation10 + $0x2a8] sm:$0xff]
          %v3058 = vld [vmem:[#allocation10 + $0x2b0] sm:$0xff]
          %v3059 = vld [vmem:[#allocation10 + $0x2b8] sm:$0xff]
          %v3060 = vld [vmem:[#allocation10 + $0x2c0] sm:$0xff]
          %v3061 = vld [vmem:[#allocation10 + $0x2c8] sm:$0xff]
          %v3062 = vld [vmem:[#allocation10 + $0x2d0] sm:$0xff]
          %v3063 = vld [vmem:[#allocation10 + $0x2d8] sm:$0xff]
          %v3064 = vld [vmem:[#allocation10 + $0x2e0] sm:$0xff]
          %v3065 = vld [vmem:[#allocation10 + $0x2e8] sm:$0xff]
          %v3066 = vld [vmem:[#allocation10 + $0x2f0] sm:$0xff]
          %v3067 = vld [vmem:[#allocation10 + $0x2f8] sm:$0xff]
          %v3068 = vld [vmem:[#allocation10 + $0x300] sm:$0xff]
          %v3069 = vld [vmem:[#allocation10 + $0x308] sm:$0xff]
          %v3070 = vld [vmem:[#allocation10 + $0x310] sm:$0xff]
          %v3071 = vld [vmem:[#allocation10 + $0x318] sm:$0xff]
          %v3072 = vld [vmem:[#allocation10 + $0x320] sm:$0xff]
          %v3073 = vld [vmem:[#allocation10 + $0x328] sm:$0xff]
          %v3074 = vld [vmem:[#allocation10 + $0x330] sm:$0xff]
          %v3075 = vld [vmem:[#allocation10 + $0x338] sm:$0xff]
          %v3076 = vld [vmem:[#allocation10 + $0x340] sm:$0xff]
          %v3077 = vld [vmem:[#allocation10 + $0x348] sm:$0xff]
          %v3078 = vld [vmem:[#allocation10 + $0x350] sm:$0x77]
          %v3079 = vld [vmem:[#allocation10 + $0x358] sm:$0x77]
          %v3080 = vunpack.c.l.bf16 %v2972
          %v3081 = vunpack.c.h.bf16 %v2972
          %v3082 = vunpack.c.l.bf16 %v2973
          %v3083 = vunpack.c.h.bf16 %v2973
          %v3084 = vunpack.c.l.bf16 %v2974
          %v3085 = vunpack.c.h.bf16 %v2974
          %v3086 = vunpack.c.l.bf16 %v2975
          %v3087 = vunpack.c.h.bf16 %v2975
          %v3088 = vunpack.c.l.bf16 %v2976
          %v3089 = vunpack.c.h.bf16 %v2976
          %v3090 = vunpack.c.l.bf16 %v2977
          %v3091 = vunpack.c.h.bf16 %v2977
          %v3092 = vunpack.c.l.bf16 %v2978
          %v3093 = vunpack.c.h.bf16 %v2978
          %v3094 = vunpack.c.l.bf16 %v2979
          %v3095 = vunpack.c.h.bf16 %v2979
          %v3096 = vunpack.c.l.bf16 %v2980
          %v3097 = vunpack.c.h.bf16 %v2980
          %v3098 = vunpack.c.l.bf16 %v2981
          %v3099 = vunpack.c.h.bf16 %v2981
          %v3100 = vunpack.c.l.bf16 %v2982
          %v3101 = vunpack.c.h.bf16 %v2982
          %v3102 = vunpack.c.l.bf16 %v2983
          %v3103 = vunpack.c.h.bf16 %v2983
          %v3104 = vunpack.c.l.bf16 %v2984
          %v3105 = vunpack.c.h.bf16 %v2984
          %v3106 = vunpack.c.l.bf16 %v2985
          %v3107 = vunpack.c.h.bf16 %v2985
          %v3108 = vunpack.c.l.bf16 %v2986
          %v3109 = vunpack.c.h.bf16 %v2986
          %v3110 = vunpack.c.l.bf16 %v2987
          %v3111 = vunpack.c.h.bf16 %v2987
          %v3112 = vunpack.c.l.bf16 %v2988
          %v3113 = vunpack.c.h.bf16 %v2988
          %v3114 = vunpack.c.l.bf16 %v2989
          %v3115 = vunpack.c.h.bf16 %v2989
          %v3116 = vunpack.c.l.bf16 %v2990
          %v3117 = vunpack.c.h.bf16 %v2990
          %v3118 = vunpack.c.l.bf16 %v2991
          %v3119 = vunpack.c.h.bf16 %v2991
          %v3120 = vunpack.c.l.bf16 %v2992
          %v3121 = vunpack.c.h.bf16 %v2992
          %v3122 = vunpack.c.l.bf16 %v2993
          %v3123 = vunpack.c.h.bf16 %v2993
          %v3124 = vunpack.c.l.bf16 %v2994
          %v3125 = vunpack.c.h.bf16 %v2994
          %v3126 = vunpack.c.l.bf16 %v2995
          %v3127 = vunpack.c.h.bf16 %v2995
          %v3128 = vunpack.c.l.bf16 %v2996
          %v3129 = vunpack.c.h.bf16 %v2996
          %v3130 = vunpack.c.l.bf16 %v2997
          %v3131 = vunpack.c.h.bf16 %v2997
          %v3132 = vunpack.c.l.bf16 %v2998
          %v3133 = vunpack.c.h.bf16 %v2998
          %v3134 = vunpack.c.l.bf16 %v2999
          %v3135 = vunpack.c.h.bf16 %v2999
          %v3136 = vunpack.c.l.bf16 %v3000
          %v3137 = vunpack.c.h.bf16 %v3000
          %v3138 = vunpack.c.l.bf16 %v3001
          %v3139 = vunpack.c.h.bf16 %v3001
          %v3140 = vunpack.c.l.bf16 %v3002
          %v3141 = vunpack.c.h.bf16 %v3002
          %v3142 = vunpack.c.l.bf16 %v3003
          %v3143 = vunpack.c.h.bf16 %v3003
          %v3144 = vunpack.c.l.bf16 %v3004
          %v3145 = vunpack.c.h.bf16 %v3004
          %v3146 = vunpack.c.l.bf16 %v3005
          %v3147 = vunpack.c.h.bf16 %v3005
          %v3148 = vunpack.c.l.bf16 %v3006
          %v3149 = vunpack.c.h.bf16 %v3006
          %v3150 = vunpack.c.l.bf16 %v3007
          %v3151 = vunpack.c.h.bf16 %v3007
          %v3152 = vunpack.c.l.bf16 %v3008
          %v3153 = vunpack.c.h.bf16 %v3008
          %v3154 = vunpack.c.l.bf16 %v3009
          %v3155 = vunpack.c.h.bf16 %v3009
          %v3156 = vunpack.c.l.bf16 %v3010
          %v3157 = vunpack.c.h.bf16 %v3010
          %v3158 = vunpack.c.l.bf16 %v3011
          %v3159 = vunpack.c.h.bf16 %v3011
          %v3160 = vunpack.c.l.bf16 %v3012
          %v3161 = vunpack.c.h.bf16 %v3012
          %v3162 = vunpack.c.l.bf16 %v3013
          %v3163 = vunpack.c.h.bf16 %v3013
          %v3164 = vunpack.c.l.bf16 %v3014
          %v3165 = vunpack.c.h.bf16 %v3014
          %v3166 = vunpack.c.l.bf16 %v3015
          %v3167 = vunpack.c.h.bf16 %v3015
          %v3168 = vunpack.c.l.bf16 %v3016
          %v3169 = vunpack.c.h.bf16 %v3016
          %v3170 = vunpack.c.l.bf16 %v3017
          %v3171 = vunpack.c.h.bf16 %v3017
          %v3172 = vunpack.c.l.bf16 %v3018
          %v3173 = vunpack.c.h.bf16 %v3018
          %v3174 = vunpack.c.l.bf16 %v3019
          %v3175 = vunpack.c.h.bf16 %v3019
          %v3176 = vunpack.c.l.bf16 %v3020
          %v3177 = vunpack.c.h.bf16 %v3020
          %v3178 = vunpack.c.l.bf16 %v3021
          %v3179 = vunpack.c.h.bf16 %v3021
          %v3180 = vunpack.c.l.bf16 %v3022
          %v3181 = vunpack.c.h.bf16 %v3022
          %v3182 = vunpack.c.l.bf16 %v3023
          %v3183 = vunpack.c.h.bf16 %v3023
          %v3184 = vunpack.c.l.bf16 %v3024
          %v3185 = vunpack.c.h.bf16 %v3024
          %v3186 = vunpack.c.l.bf16 %v3025
          %v3187 = vunpack.c.h.bf16 %v3025
          %v3188 = vunpack.c.l.bf16 %v3026
          %v3189 = vunpack.c.h.bf16 %v3026
          %v3190 = vunpack.c.l.bf16 %v3027
          %v3191 = vunpack.c.h.bf16 %v3027
          %v3192 = vunpack.c.l.bf16 %v3028
          %v3193 = vunpack.c.h.bf16 %v3028
          %v3194 = vunpack.c.l.bf16 %v3029
          %v3195 = vunpack.c.h.bf16 %v3029
          %v3196 = vunpack.c.l.bf16 %v3030
          %v3197 = vunpack.c.h.bf16 %v3030
          %v3198 = vunpack.c.l.bf16 %v3031
          %v3199 = vunpack.c.h.bf16 %v3031
          %v3200 = vunpack.c.l.bf16 %v3032
          %v3201 = vunpack.c.h.bf16 %v3032
          %v3202 = vunpack.c.l.bf16 %v3033
          %v3203 = vunpack.c.h.bf16 %v3033
          %v3204 = vunpack.c.l.bf16 %v3034
          %v3205 = vunpack.c.h.bf16 %v3034
          %v3206 = vunpack.c.l.bf16 %v3035
          %v3207 = vunpack.c.h.bf16 %v3035
          %v3208 = vunpack.c.l.bf16 %v3036
          %v3209 = vunpack.c.h.bf16 %v3036
          %v3210 = vunpack.c.l.bf16 %v3037
          %v3211 = vunpack.c.h.bf16 %v3037
          %v3212 = vunpack.c.l.bf16 %v3038
          %v3213 = vunpack.c.h.bf16 %v3038
          %v3214 = vunpack.c.l.bf16 %v3039
          %v3215 = vunpack.c.h.bf16 %v3039
          %v3216 = vunpack.c.l.bf16 %v3040
          %v3217 = vunpack.c.h.bf16 %v3040
          %v3218 = vunpack.c.l.bf16 %v3041
          %v3219 = vunpack.c.h.bf16 %v3041
          %v3220 = vunpack.c.l.bf16 %v3042
          %v3221 = vunpack.c.h.bf16 %v3042
          %v3222 = vunpack.c.l.bf16 %v3043
          %v3223 = vunpack.c.h.bf16 %v3043
          %v3224 = vunpack.c.l.bf16 %v3044
          %v3225 = vunpack.c.h.bf16 %v3044
          %v3226 = vunpack.c.l.bf16 %v3045
          %v3227 = vunpack.c.h.bf16 %v3045
          %v3228 = vunpack.c.l.bf16 %v3046
          %v3229 = vunpack.c.h.bf16 %v3046
          %v3230 = vunpack.c.l.bf16 %v3047
          %v3231 = vunpack.c.h.bf16 %v3047
          %v3232 = vunpack.c.l.bf16 %v3048
          %v3233 = vunpack.c.h.bf16 %v3048
          %v3234 = vunpack.c.l.bf16 %v3049
          %v3235 = vunpack.c.h.bf16 %v3049
          %v3236 = vunpack.c.l.bf16 %v3050
          %v3237 = vunpack.c.h.bf16 %v3050
          %v3238 = vunpack.c.l.bf16 %v3051
          %v3239 = vunpack.c.h.bf16 %v3051
          %v3240 = vunpack.c.l.bf16 %v3052
          %v3241 = vunpack.c.h.bf16 %v3052
          %v3242 = vunpack.c.l.bf16 %v3053
          %v3243 = vunpack.c.h.bf16 %v3053
          %v3244 = vunpack.c.l.bf16 %v3054
          %v3245 = vunpack.c.h.bf16 %v3054
          %v3246 = vunpack.c.l.bf16 %v3055
          %v3247 = vunpack.c.h.bf16 %v3055
          %v3248 = vunpack.c.l.bf16 %v3056
          %v3249 = vunpack.c.h.bf16 %v3056
          %v3250 = vunpack.c.l.bf16 %v3057
          %v3251 = vunpack.c.h.bf16 %v3057
          %v3252 = vunpack.c.l.bf16 %v3058
          %v3253 = vunpack.c.h.bf16 %v3058
          %v3254 = vunpack.c.l.bf16 %v3059
          %v3255 = vunpack.c.h.bf16 %v3059
          %v3256 = vunpack.c.l.bf16 %v3060
          %v3257 = vunpack.c.h.bf16 %v3060
          %v3258 = vunpack.c.l.bf16 %v3061
          %v3259 = vunpack.c.h.bf16 %v3061
          %v3260 = vunpack.c.l.bf16 %v3062
          %v3261 = vunpack.c.h.bf16 %v3062
          %v3262 = vunpack.c.l.bf16 %v3063
          %v3263 = vunpack.c.h.bf16 %v3063
          %v3264 = vunpack.c.l.bf16 %v3064
          %v3265 = vunpack.c.h.bf16 %v3064
          %v3266 = vunpack.c.l.bf16 %v3065
          %v3267 = vunpack.c.h.bf16 %v3065
          %v3268 = vunpack.c.l.bf16 %v3066
          %v3269 = vunpack.c.h.bf16 %v3066
          %v3270 = vunpack.c.l.bf16 %v3067
          %v3271 = vunpack.c.h.bf16 %v3067
          %v3272 = vunpack.c.l.bf16 %v3068
          %v3273 = vunpack.c.h.bf16 %v3068
          %v3274 = vunpack.c.l.bf16 %v3069
          %v3275 = vunpack.c.h.bf16 %v3069
          %v3276 = vunpack.c.l.bf16 %v3070
          %v3277 = vunpack.c.h.bf16 %v3070
          %v3278 = vunpack.c.l.bf16 %v3071
          %v3279 = vunpack.c.h.bf16 %v3071
          %v3280 = vunpack.c.l.bf16 %v3072
          %v3281 = vunpack.c.h.bf16 %v3072
          %v3282 = vunpack.c.l.bf16 %v3073
          %v3283 = vunpack.c.h.bf16 %v3073
          %v3284 = vunpack.c.l.bf16 %v3074
          %v3285 = vunpack.c.h.bf16 %v3074
          %v3286 = vunpack.c.l.bf16 %v3075
          %v3287 = vunpack.c.h.bf16 %v3075
          %v3288 = vunpack.c.l.bf16 %v3076
          %v3289 = vunpack.c.h.bf16 %v3076
          %v3290 = vunpack.c.l.bf16 %v3077
          %v3291 = vunpack.c.h.bf16 %v3077
          %v3292 = vunpack.c.l.bf16 %v3078
          %v3293 = vunpack.c.h.bf16 %v3078
          %v3294 = vunpack.c.l.bf16 %v3079
          %v3295 = vunpack.c.h.bf16 %v3079
          %vm3296 = vcmask 375808
          %v3298 = vsel %vm3296, %v2971, 0
          %vm3300 = vcmask 1045504
          %v3302 = vsel %vm3300, %v3292, 0
          %v3305 = vsel %vm3300, %v3293, 0
          %v3308 = vsel %vm3300, %v3294, 0
          %v3311 = vsel %vm3300, %v3295, 0
          %3313 = vmatprep.subr.mxu0 %v3081
          %3314 = vmatpush1.msra.mxu0 %v3080
          %3315 = vmatprep.subr.mxu0 %v3085
          %3316 = vmatpush1.msra.mxu0 %v3084
          %3317 = vmatprep.subr.mxu0 %v3089
          %3318 = vmatpush1.msra.mxu0 %v3088
          %3319 = vmatprep.subr.mxu0 %v3093
          %3320 = vmatpush1.msra.mxu0 %v3092
          %3321 = vmatprep.subr.mxu0 %v3097
          %3322 = vmatpush1.msra.mxu0 %v3096
          %3323 = vmatprep.subr.mxu0 %v3101
          %3324 = vmatpush1.msra.mxu0 %v3100
          %3325 = vmatprep.subr.mxu0 %v3105
          %3326 = vmatpush1.msra.mxu0 %v3104
          %3327 = vmatprep.subr.mxu0 %v3109
          %3328 = vmatpush1.msra.mxu0 %v3108
          %3329 = vmatprep.subr.mxu0 %v3113
          %3330 = vmatpush1.msra.mxu0 %v3112
          %3331 = vmatprep.subr.mxu0 %v3117
          %3332 = vmatpush1.msra.mxu0 %v3116
          %3333 = vmatprep.subr.mxu0 %v3121
          %3334 = vmatpush1.msra.mxu0 %v3120
          %3335 = vmatprep.subr.mxu0 %v3125
          %3336 = vmatpush1.msra.mxu0 %v3124
          %3337 = vmatprep.subr.mxu0 %v3129
          %3338 = vmatpush1.msra.mxu0 %v3128
          %3339 = vmatprep.subr.mxu0 %v3133
          %3340 = vmatpush1.msra.mxu0 %v3132
          %3341 = vmatprep.subr.mxu0 %v3137
          %3342 = vmatpush1.msra.mxu0 %v3136
          %3343 = vmatprep.subr.mxu0 %v3141
          %3344 = vmatpush1.msra.mxu0 %v3140
          %3345 = vmatprep.subr.mxu0 %v3145
          %3346 = vmatpush1.msra.mxu0 %v3144
          %3347 = vmatprep.subr.mxu0 %v3149
          %3348 = vmatpush1.msra.mxu0 %v3148
          %3349 = vmatprep.subr.mxu0 %v3153
          %3350 = vmatpush1.msra.mxu0 %v3152
          %3351 = vmatprep.subr.mxu0 %v3157
          %3352 = vmatpush1.msra.mxu0 %v3156
          %3353 = vmatprep.subr.mxu0 %v3161
          %3354 = vmatpush1.msra.mxu0 %v3160
          %3355 = vmatprep.subr.mxu0 %v3165
          %3356 = vmatpush1.msra.mxu0 %v3164
          %3357 = vmatprep.subr.mxu0 %v3169
          %3358 = vmatpush1.msra.mxu0 %v3168
          %3359 = vmatprep.subr.mxu0 %v3173
          %3360 = vmatpush1.msra.mxu0 %v3172
          %3361 = vmatprep.subr.mxu0 %v3177
          %3362 = vmatpush1.msra.mxu0 %v3176
          %3363 = vmatprep.subr.mxu0 %v3181
          %3364 = vmatpush1.msra.mxu0 %v3180
          %3365 = vmatprep.subr.mxu0 %v3185
          %3366 = vmatpush1.msra.mxu0 %v3184
          %3367 = vmatprep.subr.mxu0 %v3189
          %3368 = vmatpush1.msra.mxu0 %v3188
          %3369 = vmatprep.subr.mxu0 %v3193
          %3370 = vmatpush1.msra.mxu0 %v3192
          %3371 = vmatprep.subr.mxu0 %v3197
          %3372 = vmatpush1.msra.mxu0 %v3196
          %3373 = vmatprep.subr.mxu0 %v3201
          %3374 = vmatpush1.msra.mxu0 %v3200
          %3375 = vmatprep.subr.mxu0 %v3205
          %3376 = vmatpush1.msra.mxu0 %v3204
          %3377 = vmatprep.mubr.f32.mxu0 %v2969
          %3378 = vmatmul.mubr.f32.gmra.mrb[0].mxu0 %v2968
          %v3379 = vpop.f32.mrb[0].mxu0
          %v3380 = vadd.f32 0.0, %v3379
          %v3381 = vpop.f32.mrb[0].mxu0
          %v3382 = vadd.f32 0.0, %v3381
          %3383 = vdwg.mxu0
          %3384 = vmatprep.subr.mxu0 %v3209
          %3385 = vmatpush1.msra.mxu0 %v3208
          %3386 = vmatprep.subr.mxu0 %v3213
          %3387 = vmatpush1.msra.mxu0 %v3212
          %3388 = vmatprep.subr.mxu0 %v3217
          %3389 = vmatpush1.msra.mxu0 %v3216
          %3390 = vmatprep.subr.mxu0 %v3221
          %3391 = vmatpush1.msra.mxu0 %v3220
          %3392 = vmatprep.subr.mxu0 %v3225
          %3393 = vmatpush1.msra.mxu0 %v3224
          %3394 = vmatprep.subr.mxu0 %v3229
          %3395 = vmatpush1.msra.mxu0 %v3228
          %3396 = vmatprep.subr.mxu0 %v3233
          %3397 = vmatpush1.msra.mxu0 %v3232
          %3398 = vmatprep.subr.mxu0 %v3237
          %3399 = vmatpush1.msra.mxu0 %v3236
          %3400 = vmatprep.subr.mxu0 %v3241
          %3401 = vmatpush1.msra.mxu0 %v3240
          %3402 = vmatprep.subr.mxu0 %v3245
          %3403 = vmatpush1.msra.mxu0 %v3244
          %3404 = vmatprep.subr.mxu0 %v3249
          %3405 = vmatpush1.msra.mxu0 %v3248
          %3406 = vmatprep.subr.mxu0 %v3253
          %3407 = vmatpush1.msra.mxu0 %v3252
          %3408 = vmatprep.subr.mxu0 %v3257
          %3409 = vmatpush1.msra.mxu0 %v3256
          %3410 = vmatprep.subr.mxu0 %v3261
          %3411 = vmatpush1.msra.mxu0 %v3260
          %3412 = vmatprep.subr.mxu0 %v3265
          %3413 = vmatpush1.msra.mxu0 %v3264
          %3414 = vmatprep.subr.mxu0 %v3269
          %3415 = vmatpush1.msra.mxu0 %v3268
          %3416 = vmatprep.subr.mxu0 %v3273
          %3417 = vmatpush1.msra.mxu0 %v3272
          %3418 = vmatprep.subr.mxu0 %v3277
          %3419 = vmatpush1.msra.mxu0 %v3276
          %3420 = vmatprep.subr.mxu0 %v3281
          %3421 = vmatpush1.msra.mxu0 %v3280
          %3422 = vmatprep.subr.mxu0 %v3285
          %3423 = vmatpush1.msra.mxu0 %v3284
          %3424 = vmatprep.subr.mxu0 %v3289
          %3425 = vmatpush1.msra.mxu0 %v3288
          %3426 = vmatprep.subr.mxu0 %v3305
          %3427 = vmatpush1.msra.mxu0 %v3302
          %3428 = vmatprep.subr.mxu0 0.0
          %3429 = vmatpush1.msra.mxu0 0.0
          %3430 = vmatprep.subr.mxu0 0.0
          %3431 = vmatpush1.msra.mxu0 0.0
          %3432 = vmatprep.subr.mxu0 0.0
          %3433 = vmatpush1.msra.mxu0 0.0
          %3434 = vmatprep.subr.mxu0 0.0
          %3435 = vmatpush1.msra.mxu0 0.0
          %3436 = vmatprep.subr.mxu0 0.0
          %3437 = vmatpush1.msra.mxu0 0.0
          %3438 = vmatprep.subr.mxu0 0.0
          %3439 = vmatpush1.msra.mxu0 0.0
          %3440 = vmatprep.subr.mxu0 0.0
          %3441 = vmatpush1.msra.mxu0 0.0
          %3442 = vmatprep.subr.mxu0 0.0
          %3443 = vmatpush1.msra.mxu0 0.0
          %3444 = vmatprep.subr.mxu0 0.0
          %3445 = vmatpush1.msra.mxu0 0.0
          %3446 = vmatprep.subr.mxu0 0.0
          %3447 = vmatpush1.msra.mxu0 0.0
          %3448 = vmatprep.mubr.f32.mxu0 %v3298
          %3449 = vmatmul.mubr.f32.gmra.mrb[0].mxu0 %v2970
          %v3450 = vpop.f32.mrb[0].mxu0
          %v3451 = vadd.f32 %v3380, %v3450
          %v3452 = vpop.f32.mrb[0].mxu0
          %v3453 = vadd.f32 %v3382, %v3452
          %3454 = vdwg.mxu0
          %3455 = vmatprep.subr.mxu0 %v3083
          %3456 = vmatpush1.msra.mxu0 %v3082
          %3457 = vmatprep.subr.mxu0 %v3087
          %3458 = vmatpush1.msra.mxu0 %v3086
          %3459 = vmatprep.subr.mxu0 %v3091
          %3460 = vmatpush1.msra.mxu0 %v3090
          %3461 = vmatprep.subr.mxu0 %v3095
          %3462 = vmatpush1.msra.mxu0 %v3094
          %3463 = vmatprep.subr.mxu0 %v3099
          %3464 = vmatpush1.msra.mxu0 %v3098
          %3465 = vmatprep.subr.mxu0 %v3103
          %3466 = vmatpush1.msra.mxu0 %v3102
          %3467 = vmatprep.subr.mxu0 %v3107
          %3468 = vmatpush1.msra.mxu0 %v3106
          %3469 = vmatprep.subr.mxu0 %v3111
          %3470 = vmatpush1.msra.mxu0 %v3110
          %3471 = vmatprep.subr.mxu0 %v3115
          %3472 = vmatpush1.msra.mxu0 %v3114
          %3473 = vmatprep.subr.mxu0 %v3119
          %3474 = vmatpush1.msra.mxu0 %v3118
          %3475 = vmatprep.subr.mxu0 %v3123
          %3476 = vmatpush1.msra.mxu0 %v3122
          %3477 = vmatprep.subr.mxu0 %v3127
          %3478 = vmatpush1.msra.mxu0 %v3126
          %3479 = vmatprep.subr.mxu0 %v3131
          %3480 = vmatpush1.msra.mxu0 %v3130
          %3481 = vmatprep.subr.mxu0 %v3135
          %3482 = vmatpush1.msra.mxu0 %v3134
          %3483 = vmatprep.subr.mxu0 %v3139
          %3484 = vmatpush1.msra.mxu0 %v3138
          %3485 = vmatprep.subr.mxu0 %v3143
          %3486 = vmatpush1.msra.mxu0 %v3142
          %3487 = vmatprep.subr.mxu0 %v3147
          %3488 = vmatpush1.msra.mxu0 %v3146
          %3489 = vmatprep.subr.mxu0 %v3151
          %3490 = vmatpush1.msra.mxu0 %v3150
          %3491 = vmatprep.subr.mxu0 %v3155
          %3492 = vmatpush1.msra.mxu0 %v3154
          %3493 = vmatprep.subr.mxu0 %v3159
          %3494 = vmatpush1.msra.mxu0 %v3158
          %3495 = vmatprep.subr.mxu0 %v3163
          %3496 = vmatpush1.msra.mxu0 %v3162
          %3497 = vmatprep.subr.mxu0 %v3167
          %3498 = vmatpush1.msra.mxu0 %v3166
          %3499 = vmatprep.subr.mxu0 %v3171
          %3500 = vmatpush1.msra.mxu0 %v3170
          %3501 = vmatprep.subr.mxu0 %v3175
          %3502 = vmatpush1.msra.mxu0 %v3174
          %3503 = vmatprep.subr.mxu0 %v3179
          %3504 = vmatpush1.msra.mxu0 %v3178
          %3505 = vmatprep.subr.mxu0 %v3183
          %3506 = vmatpush1.msra.mxu0 %v3182
          %3507 = vmatprep.subr.mxu0 %v3187
          %3508 = vmatpush1.msra.mxu0 %v3186
          %3509 = vmatprep.subr.mxu0 %v3191
          %3510 = vmatpush1.msra.mxu0 %v3190
          %3511 = vmatprep.subr.mxu0 %v3195
          %3512 = vmatpush1.msra.mxu0 %v3194
          %3513 = vmatprep.subr.mxu0 %v3199
          %3514 = vmatpush1.msra.mxu0 %v3198
          %3515 = vmatprep.subr.mxu0 %v3203
          %3516 = vmatpush1.msra.mxu0 %v3202
          %3517 = vmatprep.subr.mxu0 %v3207
          %3518 = vmatpush1.msra.mxu0 %v3206
          %3519 = vmatprep.mubr.f32.mxu0 %v2969
          %3520 = vmatmul.mubr.f32.gmra.mrb[0].mxu0 %v2968
          %v3521 = vpop.f32.mrb[0].mxu0
          %v3522 = vadd.f32 0.0, %v3521
          %v3523 = vpop.f32.mrb[0].mxu0
          %v3524 = vadd.f32 0.0, %v3523
          %3525 = vdwg.mxu0
          %3526 = vmatprep.subr.mxu0 %v3211
          %3527 = vmatpush1.msra.mxu0 %v3210
          %3528 = vmatprep.subr.mxu0 %v3215
          %3529 = vmatpush1.msra.mxu0 %v3214
          %3530 = vmatprep.subr.mxu0 %v3219
          %3531 = vmatpush1.msra.mxu0 %v3218
          %3532 = vmatprep.subr.mxu0 %v3223
          %3533 = vmatpush1.msra.mxu0 %v3222
          %3534 = vmatprep.subr.mxu0 %v3227
          %3535 = vmatpush1.msra.mxu0 %v3226
          %3536 = vmatprep.subr.mxu0 %v3231
          %3537 = vmatpush1.msra.mxu0 %v3230
          %3538 = vmatprep.subr.mxu0 %v3235
          %3539 = vmatpush1.msra.mxu0 %v3234
          %3540 = vmatprep.subr.mxu0 %v3239
          %3541 = vmatpush1.msra.mxu0 %v3238
          %3542 = vmatprep.subr.mxu0 %v3243
          %3543 = vmatpush1.msra.mxu0 %v3242
          %3544 = vmatprep.subr.mxu0 %v3247
          %3545 = vmatpush1.msra.mxu0 %v3246
          %3546 = vmatprep.subr.mxu0 %v3251
          %3547 = vmatpush1.msra.mxu0 %v3250
          %3548 = vmatprep.subr.mxu0 %v3255
          %3549 = vmatpush1.msra.mxu0 %v3254
          %3550 = vmatprep.subr.mxu0 %v3259
          %3551 = vmatpush1.msra.mxu0 %v3258
          %3552 = vmatprep.subr.mxu0 %v3263
          %3553 = vmatpush1.msra.mxu0 %v3262
          %3554 = vmatprep.subr.mxu0 %v3267
          %3555 = vmatpush1.msra.mxu0 %v3266
          %3556 = vmatprep.subr.mxu0 %v3271
          %3557 = vmatpush1.msra.mxu0 %v3270
          %3558 = vmatprep.subr.mxu0 %v3275
          %3559 = vmatpush1.msra.mxu0 %v3274
          %3560 = vmatprep.subr.mxu0 %v3279
          %3561 = vmatpush1.msra.mxu0 %v3278
          %3562 = vmatprep.subr.mxu0 %v3283
          %3563 = vmatpush1.msra.mxu0 %v3282
          %3564 = vmatprep.subr.mxu0 %v3287
          %3565 = vmatpush1.msra.mxu0 %v3286
          %3566 = vmatprep.subr.mxu0 %v3291
          %3567 = vmatpush1.msra.mxu0 %v3290
          %3568 = vmatprep.subr.mxu0 %v3311
          %3569 = vmatpush1.msra.mxu0 %v3308
          %3570 = vmatprep.subr.mxu0 0.0
          %3571 = vmatpush1.msra.mxu0 0.0
          %3572 = vmatprep.subr.mxu0 0.0
          %3573 = vmatpush1.msra.mxu0 0.0
          %3574 = vmatprep.subr.mxu0 0.0
          %3575 = vmatpush1.msra.mxu0 0.0
          %3576 = vmatprep.subr.mxu0 0.0
          %3577 = vmatpush1.msra.mxu0 0.0
          %3578 = vmatprep.subr.mxu0 0.0
          %3579 = vmatpush1.msra.mxu0 0.0
          %3580 = vmatprep.subr.mxu0 0.0
          %3581 = vmatpush1.msra.mxu0 0.0
          %3582 = vmatprep.subr.mxu0 0.0
          %3583 = vmatpush1.msra.mxu0 0.0
          %3584 = vmatprep.subr.mxu0 0.0
          %3585 = vmatpush1.msra.mxu0 0.0
          %3586 = vmatprep.subr.mxu0 0.0
          %3587 = vmatpush1.msra.mxu0 0.0
          %3588 = vmatprep.subr.mxu0 0.0
          %3589 = vmatpush1.msra.mxu0 0.0
          %3590 = vmatprep.mubr.f32.mxu0 %v3298
          %3591 = vmatmul.mubr.f32.gmra.mrb[0].mxu0 %v2970
          %v3592 = vpop.f32.mrb[0].mxu0
          %v3593 = vadd.f32 %v3522, %v3592
          %v3594 = vpop.f32.mrb[0].mxu0
          %v3595 = vadd.f32 %v3524, %v3594
          %3596 = vdwg.mxu0
          %3597 = vmatprep.subr.mxu0 %v2905
          %3598 = vmatpush1.msra.mxu0 %v2904
          %3599 = vmatprep.subr.mxu0 %v2909
          %3600 = vmatpush1.msra.mxu0 %v2908
          %3601 = vmatprep.subr.mxu0 %v2913
          %3602 = vmatpush1.msra.mxu0 %v2912
          %3603 = vmatprep.subr.mxu0 %v2917
          %3604 = vmatpush1.msra.mxu0 %v2916
          %3605 = vmatprep.subr.mxu0 %v2921
          %3606 = vmatpush1.msra.mxu0 %v2920
          %3607 = vmatprep.subr.mxu0 %v2925
          %3608 = vmatpush1.msra.mxu0 %v2924
          %3609 = vmatprep.subr.mxu0 %v2929
          %3610 = vmatpush1.msra.mxu0 %v2928
          %3611 = vmatprep.subr.mxu0 %v2933
          %3612 = vmatpush1.msra.mxu0 %v2932
          %3613 = vmatprep.subr.mxu0 %v2937
          %3614 = vmatpush1.msra.mxu0 %v2936
          %3615 = vmatprep.subr.mxu0 %v2941
          %3616 = vmatpush1.msra.mxu0 %v2940
          %3617 = vmatprep.subr.mxu0 %v2945
          %3618 = vmatpush1.msra.mxu0 %v2944
          %3619 = vmatprep.subr.mxu0 %v2949
          %3620 = vmatpush1.msra.mxu0 %v2948
          %3621 = vmatprep.subr.mxu0 %v2953
          %3622 = vmatpush1.msra.mxu0 %v2952
          %3623 = vmatprep.subr.mxu0 %v2957
          %3624 = vmatpush1.msra.mxu0 %v2956
          %3625 = vmatprep.subr.mxu0 %v2961
          %3626 = vmatpush1.msra.mxu0 %v2960
          %3627 = vmatprep.subr.mxu0 %v2965
          %3628 = vmatpush1.msra.mxu0 %v2964
          %3629 = vmatprep.subr.mxu0 0.0
          %3630 = vmatpush1.msra.mxu0 0.0
          %3631 = vmatprep.subr.mxu0 0.0
          %3632 = vmatpush1.msra.mxu0 0.0
          %3633 = vmatprep.subr.mxu0 0.0
          %3634 = vmatpush1.msra.mxu0 0.0
          %3635 = vmatprep.subr.mxu0 0.0
          %3636 = vmatpush1.msra.mxu0 0.0
          %3637 = vmatprep.subr.mxu0 0.0
          %3638 = vmatpush1.msra.mxu0 0.0
          %3639 = vmatprep.subr.mxu0 0.0
          %3640 = vmatpush1.msra.mxu0 0.0
          %3641 = vmatprep.subr.mxu0 0.0
          %3642 = vmatpush1.msra.mxu0 0.0
          %3643 = vmatprep.subr.mxu0 0.0
          %3644 = vmatpush1.msra.mxu0 0.0
          %3645 = vmatprep.subr.mxu0 0.0
          %3646 = vmatpush1.msra.mxu0 0.0
          %3647 = vmatprep.subr.mxu0 0.0
          %3648 = vmatpush1.msra.mxu0 0.0
          %3649 = vmatprep.subr.mxu0 0.0
          %3650 = vmatpush1.msra.mxu0 0.0
          %3651 = vmatprep.subr.mxu0 0.0
          %3652 = vmatpush1.msra.mxu0 0.0
          %3653 = vmatprep.subr.mxu0 0.0
          %3654 = vmatpush1.msra.mxu0 0.0
          %3655 = vmatprep.subr.mxu0 0.0
          %3656 = vmatpush1.msra.mxu0 0.0
          %3657 = vmatprep.subr.mxu0 0.0
          %3658 = vmatpush1.msra.mxu0 0.0
          %3659 = vmatprep.subr.mxu0 0.0
          %3660 = vmatpush1.msra.mxu0 0.0
          %3661 = vmatprep.mubr.f32.mxu0 0.0
          %3662 = vmatmul.mubr.f32.gmra.mrb[0].mxu0 %v2871
          %v3663 = vpop.f32.mrb[0].mxu0
          %v3664 = vadd.f32 %v3451, %v3663
          %v3665 = vpop.f32.mrb[0].mxu0
          %v3666 = vadd.f32 %v3453, %v3665
          %3667 = vdwg.mxu0
          %3668 = vmatprep.subr.mxu0 %v2907
          %3669 = vmatpush1.msra.mxu0 %v2906
          %3670 = vmatprep.subr.mxu0 %v2911
          %3671 = vmatpush1.msra.mxu0 %v2910
          %3672 = vmatprep.subr.mxu0 %v2915
          %3673 = vmatpush1.msra.mxu0 %v2914
          %3674 = vmatprep.subr.mxu0 %v2919
          %3675 = vmatpush1.msra.mxu0 %v2918
          %3676 = vmatprep.subr.mxu0 %v2923
          %3677 = vmatpush1.msra.mxu0 %v2922
          %3678 = vmatprep.subr.mxu0 %v2927
          %3679 = vmatpush1.msra.mxu0 %v2926
          %3680 = vmatprep.subr.mxu0 %v2931
          %3681 = vmatpush1.msra.mxu0 %v2930
          %3682 = vmatprep.subr.mxu0 %v2935
          %3683 = vmatpush1.msra.mxu0 %v2934
          %3684 = vmatprep.subr.mxu0 %v2939
          %3685 = vmatpush1.msra.mxu0 %v2938
          %3686 = vmatprep.subr.mxu0 %v2943
          %3687 = vmatpush1.msra.mxu0 %v2942
          %3688 = vmatprep.subr.mxu0 %v2947
          %3689 = vmatpush1.msra.mxu0 %v2946
          %3690 = vmatprep.subr.mxu0 %v2951
          %3691 = vmatpush1.msra.mxu0 %v2950
          %3692 = vmatprep.subr.mxu0 %v2955
          %3693 = vmatpush1.msra.mxu0 %v2954
          %3694 = vmatprep.subr.mxu0 %v2959
          %3695 = vmatpush1.msra.mxu0 %v2958
          %3696 = vmatprep.subr.mxu0 %v2963
          %3697 = vmatpush1.msra.mxu0 %v2962
          %3698 = vmatprep.subr.mxu0 %v2967
          %3699 = vmatpush1.msra.mxu0 %v2966
          %3700 = vmatprep.subr.mxu0 0.0
          %3701 = vmatpush1.msra.mxu0 0.0
          %3702 = vmatprep.subr.mxu0 0.0
          %3703 = vmatpush1.msra.mxu0 0.0
          %3704 = vmatprep.subr.mxu0 0.0
          %3705 = vmatpush1.msra.mxu0 0.0
          %3706 = vmatprep.subr.mxu0 0.0
          %3707 = vmatpush1.msra.mxu0 0.0
          %3708 = vmatprep.subr.mxu0 0.0
          %3709 = vmatpush1.msra.mxu0 0.0
          %3710 = vmatprep.subr.mxu0 0.0
          %3711 = vmatpush1.msra.mxu0 0.0
          %3712 = vmatprep.subr.mxu0 0.0
          %3713 = vmatpush1.msra.mxu0 0.0
          %3714 = vmatprep.subr.mxu0 0.0
          %3715 = vmatpush1.msra.mxu0 0.0
          %3716 = vmatprep.subr.mxu0 0.0
          %3717 = vmatpush1.msra.mxu0 0.0
          %3718 = vmatprep.subr.mxu0 0.0
          %3719 = vmatpush1.msra.mxu0 0.0
          %3720 = vmatprep.subr.mxu0 0.0
          %3721 = vmatpush1.msra.mxu0 0.0
          %3722 = vmatprep.subr.mxu0 0.0
          %3723 = vmatpush1.msra.mxu0 0.0
          %3724 = vmatprep.subr.mxu0 0.0
          %3725 = vmatpush1.msra.mxu0 0.0
          %3726 = vmatprep.subr.mxu0 0.0
          %3727 = vmatpush1.msra.mxu0 0.0
          %3728 = vmatprep.subr.mxu0 0.0
          %3729 = vmatpush1.msra.mxu0 0.0
          %3730 = vmatprep.subr.mxu0 0.0
          %3731 = vmatpush1.msra.mxu0 0.0
          %3732 = vmatprep.mubr.f32.mxu0 0.0
          %3733 = vmatmul.mubr.f32.gmra.mrb[0].mxu0 %v2871
          %v3734 = vpop.f32.mrb[0].mxu0
          %v3735 = vadd.f32 %v3593, %v3734
          %v3736 = vpop.f32.mrb[0].mxu0
          %v3737 = vadd.f32 %v3595, %v3736
          %3738 = vdwg.mxu0
          %v3739 = vld [vmem:[#allocation11] sm:$0xf]
          %v3741 = vlaneseq
          %v3742 = vshrl.u32 %v3741, 7
          %v3743 = vsub.s32 0, %v3742
          %v3744 = vrot.slane %v3739, %v3743
          %v3745 = vlaneseq
          %v3746 = vshrl.u32 %v3745, 7
          %v3747 = vsub.s32 1, %v3746
          %v3748 = vrot.slane %v3739, %v3747
          %v3749 = vlaneseq
          %v3750 = vshrl.u32 %v3749, 7
          %v3751 = vsub.s32 2, %v3750
          %v3752 = vrot.slane %v3739, %v3751
          %v3753 = vlaneseq
          %v3754 = vshrl.u32 %v3753, 7
          %v3755 = vsub.s32 3, %v3754
          %v3756 = vrot.slane %v3739, %v3755
          %v3761 = vadd.f32 %v3664, %v3744
          %v3762 = vadd.f32 %v3666, %v3748
          %v3763 = vadd.f32 %v3735, %v3752
          %v3764 = vadd.f32 %v3737, %v3756
          %v3765 = vmax.f32 %v3761, 0.0
          %v3766 = vmax.f32 %v3762, 0.0
          %v3767 = vmax.f32 %v3763, 0.0
          %v3768 = vmax.f32 %v3764, 0.0
          %v3769 = vld [vmem:[#allocation13] sm:$0xff]
          %v3770 = vld [vmem:[#allocation13 + $0x8] sm:$0xff]
          %v3771 = vld [vmem:[#allocation13 + $0x10] sm:$0xff]
          %v3772 = vld [vmem:[#allocation13 + $0x18] sm:$0xff]
          %v3773 = vld [vmem:[#allocation13 + $0x20] sm:$0xff]
          %v3774 = vld [vmem:[#allocation13 + $0x28] sm:$0xff]
          %v3775 = vld [vmem:[#allocation13 + $0x30] sm:$0xff]
          %v3776 = vld [vmem:[#allocation13 + $0x38] sm:$0xff]
          %v3777 = vld [vmem:[#allocation13 + $0x40] sm:$0xff]
          %v3778 = vld [vmem:[#allocation13 + $0x48] sm:$0xff]
          %v3779 = vld [vmem:[#allocation13 + $0x50] sm:$0xff]
          %v3780 = vld [vmem:[#allocation13 + $0x58] sm:$0xff]
          %v3781 = vld [vmem:[#allocation13 + $0x60] sm:$0xff]
          %v3782 = vld [vmem:[#allocation13 + $0x68] sm:$0xff]
          %v3783 = vld [vmem:[#allocation13 + $0x70] sm:$0xff]
          %v3784 = vld [vmem:[#allocation13 + $0x78] sm:$0xff]
          %v3785 = vld [vmem:[#allocation13 + $0x80] sm:$0xff]
          %v3786 = vld [vmem:[#allocation13 + $0x88] sm:$0xff]
          %v3787 = vld [vmem:[#allocation13 + $0x90] sm:$0xff]
          %v3788 = vld [vmem:[#allocation13 + $0x98] sm:$0xff]
          %v3789 = vld [vmem:[#allocation13 + $0xa0] sm:$0xff]
          %v3790 = vld [vmem:[#allocation13 + $0xa8] sm:$0xff]
          %v3791 = vld [vmem:[#allocation13 + $0xb0] sm:$0xff]
          %v3792 = vld [vmem:[#allocation13 + $0xb8] sm:$0xff]
          %v3793 = vld [vmem:[#allocation13 + $0xc0] sm:$0xff]
          %v3794 = vld [vmem:[#allocation13 + $0xc8] sm:$0xff]
          %v3795 = vld [vmem:[#allocation13 + $0xd0] sm:$0xff]
          %v3796 = vld [vmem:[#allocation13 + $0xd8] sm:$0xff]
          %v3797 = vld [vmem:[#allocation13 + $0xe0] sm:$0xff]
          %v3798 = vld [vmem:[#allocation13 + $0xe8] sm:$0xff]
          %v3799 = vld [vmem:[#allocation13 + $0xf0] sm:$0xff]
          %v3800 = vld [vmem:[#allocation13 + $0xf8] sm:$0xff]
          %v3801 = vld [vmem:[#allocation13 + $0x100] sm:$0xff]
          %v3802 = vld [vmem:[#allocation13 + $0x108] sm:$0xff]
          %v3803 = vld [vmem:[#allocation13 + $0x110] sm:$0xff]
          %v3804 = vld [vmem:[#allocation13 + $0x118] sm:$0xff]
          %v3805 = vld [vmem:[#allocation13 + $0x120] sm:$0xff]
          %v3806 = vld [vmem:[#allocation13 + $0x128] sm:$0xff]
          %v3807 = vld [vmem:[#allocation13 + $0x130] sm:$0xff]
          %v3808 = vld [vmem:[#allocation13 + $0x138] sm:$0xff]
          %v3809 = vld [vmem:[#allocation13 + $0x140] sm:$0xff]
          %v3810 = vld [vmem:[#allocation13 + $0x148] sm:$0xff]
          %v3811 = vld [vmem:[#allocation13 + $0x150] sm:$0xff]
          %v3812 = vld [vmem:[#allocation13 + $0x158] sm:$0xff]
          %v3813 = vld [vmem:[#allocation13 + $0x160] sm:$0xff]
          %v3814 = vld [vmem:[#allocation13 + $0x168] sm:$0xff]
          %v3815 = vld [vmem:[#allocation13 + $0x170] sm:$0xff]
          %v3816 = vld [vmem:[#allocation13 + $0x178] sm:$0xff]
          %v3817 = vld [vmem:[#allocation13 + $0x180] sm:$0xff]
          %v3818 = vld [vmem:[#allocation13 + $0x188] sm:$0xff]
          %v3819 = vld [vmem:[#allocation13 + $0x190] sm:$0xff]
          %v3820 = vld [vmem:[#allocation13 + $0x198] sm:$0xff]
          %v3821 = vld [vmem:[#allocation13 + $0x1a0] sm:$0xff]
          %v3822 = vld [vmem:[#allocation13 + $0x1a8] sm:$0xff]
          %v3823 = vld [vmem:[#allocation13 + $0x1b0] sm:$0xff]
          %v3824 = vld [vmem:[#allocation13 + $0x1b8] sm:$0xff]
          %v3825 = vld [vmem:[#allocation13 + $0x1c0] sm:$0xff]
          %v3826 = vld [vmem:[#allocation13 + $0x1c8] sm:$0xff]
          %v3827 = vld [vmem:[#allocation13 + $0x1d0] sm:$0xff]
          %v3828 = vld [vmem:[#allocation13 + $0x1d8] sm:$0xff]
          %v3829 = vld [vmem:[#allocation13 + $0x1e0] sm:$0xff]
          %v3830 = vld [vmem:[#allocation13 + $0x1e8] sm:$0xff]
          %v3831 = vld [vmem:[#allocation13 + $0x1f0] sm:$0xff]
          %v3832 = vld [vmem:[#allocation13 + $0x1f8] sm:$0xff]
          %v3833 = vld [vmem:[#allocation13 + $0x200] sm:$0xff]
          %v3834 = vld [vmem:[#allocation13 + $0x208] sm:$0xff]
          %v3835 = vld [vmem:[#allocation13 + $0x210] sm:$0xff]
          %v3836 = vld [vmem:[#allocation13 + $0x218] sm:$0xff]
          %v3837 = vld [vmem:[#allocation13 + $0x220] sm:$0xff]
          %v3838 = vld [vmem:[#allocation13 + $0x228] sm:$0xff]
          %v3839 = vld [vmem:[#allocation13 + $0x230] sm:$0xff]
          %v3840 = vld [vmem:[#allocation13 + $0x238] sm:$0xff]
          %v3841 = vld [vmem:[#allocation13 + $0x240] sm:$0xff]
          %v3842 = vld [vmem:[#allocation13 + $0x248] sm:$0xff]
          %v3843 = vld [vmem:[#allocation13 + $0x250] sm:$0xff]
          %v3844 = vld [vmem:[#allocation13 + $0x258] sm:$0xff]
          %v3845 = vld [vmem:[#allocation13 + $0x260] sm:$0xff]
          %v3846 = vld [vmem:[#allocation13 + $0x268] sm:$0xff]
          %v3847 = vld [vmem:[#allocation13 + $0x270] sm:$0xff]
          %v3848 = vld [vmem:[#allocation13 + $0x278] sm:$0xff]
          %v3849 = vld [vmem:[#allocation13 + $0x280] sm:$0xff]
          %v3850 = vld [vmem:[#allocation13 + $0x288] sm:$0xff]
          %v3851 = vld [vmem:[#allocation13 + $0x290] sm:$0xff]
          %v3852 = vld [vmem:[#allocation13 + $0x298] sm:$0xff]
          %v3853 = vld [vmem:[#allocation13 + $0x2a0] sm:$0xff]
          %v3854 = vld [vmem:[#allocation13 + $0x2a8] sm:$0xff]
          %v3855 = vld [vmem:[#allocation13 + $0x2b0] sm:$0xff]
          %v3856 = vld [vmem:[#allocation13 + $0x2b8] sm:$0xff]
          %v3857 = vld [vmem:[#allocation13 + $0x2c0] sm:$0xff]
          %v3858 = vld [vmem:[#allocation13 + $0x2c8] sm:$0xff]
          %v3859 = vld [vmem:[#allocation13 + $0x2d0] sm:$0xff]
          %v3860 = vld [vmem:[#allocation13 + $0x2d8] sm:$0xff]
          %v3861 = vld [vmem:[#allocation13 + $0x2e0] sm:$0xff]
          %v3862 = vld [vmem:[#allocation13 + $0x2e8] sm:$0xff]
          %v3863 = vld [vmem:[#allocation13 + $0x2f0] sm:$0xff]
          %v3864 = vld [vmem:[#allocation13 + $0x2f8] sm:$0xff]
          %v3865 = vld [vmem:[#allocation13 + $0x300] sm:$0xff]
          %v3866 = vld [vmem:[#allocation13 + $0x308] sm:$0xff]
          %v3867 = vld [vmem:[#allocation13 + $0x310] sm:$0xff]
          %v3868 = vld [vmem:[#allocation13 + $0x318] sm:$0xff]
          %v3869 = vld [vmem:[#allocation13 + $0x320] sm:$0xff]
          %v3870 = vld [vmem:[#allocation13 + $0x328] sm:$0xff]
          %v3871 = vld [vmem:[#allocation13 + $0x330] sm:$0xff]
          %v3872 = vld [vmem:[#allocation13 + $0x338] sm:$0xff]
          %v3873 = vld [vmem:[#allocation13 + $0x340] sm:$0xff]
          %v3874 = vld [vmem:[#allocation13 + $0x348] sm:$0xff]
          %v3875 = vld [vmem:[#allocation13 + $0x350] sm:$0xff]
          %v3876 = vld [vmem:[#allocation13 + $0x358] sm:$0xff]
          %v3877 = vld [vmem:[#allocation13 + $0x360] sm:$0xff]
          %v3878 = vld [vmem:[#allocation13 + $0x368] sm:$0xff]
          %v3879 = vld [vmem:[#allocation13 + $0x370] sm:$0xff]
          %v3880 = vld [vmem:[#allocation13 + $0x378] sm:$0xff]
          %v3881 = vld [vmem:[#allocation13 + $0x380] sm:$0xff]
          %v3882 = vld [vmem:[#allocation13 + $0x388] sm:$0xff]
          %v3883 = vld [vmem:[#allocation13 + $0x390] sm:$0xff]
          %v3884 = vld [vmem:[#allocation13 + $0x398] sm:$0xff]
          %v3885 = vld [vmem:[#allocation13 + $0x3a0] sm:$0xff]
          %v3886 = vld [vmem:[#allocation13 + $0x3a8] sm:$0xff]
          %v3887 = vld [vmem:[#allocation13 + $0x3b0] sm:$0xff]
          %v3888 = vld [vmem:[#allocation13 + $0x3b8] sm:$0xff]
          %v3889 = vld [vmem:[#allocation13 + $0x3c0] sm:$0xff]
          %v3890 = vld [vmem:[#allocation13 + $0x3c8] sm:$0xff]
          %v3891 = vld [vmem:[#allocation13 + $0x3d0] sm:$0xff]
          %v3892 = vld [vmem:[#allocation13 + $0x3d8] sm:$0xff]
          %v3893 = vld [vmem:[#allocation13 + $0x3e0] sm:$0xff]
          %v3894 = vld [vmem:[#allocation13 + $0x3e8] sm:$0xff]
          %v3895 = vld [vmem:[#allocation13 + $0x3f0] sm:$0xff]
          %v3896 = vld [vmem:[#allocation13 + $0x3f8] sm:$0xff]
          %v3897 = vunpack.c.l.bf16 %v3769
          %v3898 = vunpack.c.h.bf16 %v3769
          %v3899 = vunpack.c.l.bf16 %v3770
          %v3900 = vunpack.c.h.bf16 %v3770
          %v3901 = vunpack.c.l.bf16 %v3771
          %v3902 = vunpack.c.h.bf16 %v3771
          %v3903 = vunpack.c.l.bf16 %v3772
          %v3904 = vunpack.c.h.bf16 %v3772
          %v3905 = vunpack.c.l.bf16 %v3773
          %v3906 = vunpack.c.h.bf16 %v3773
          %v3907 = vunpack.c.l.bf16 %v3774
          %v3908 = vunpack.c.h.bf16 %v3774
          %v3909 = vunpack.c.l.bf16 %v3775
          %v3910 = vunpack.c.h.bf16 %v3775
          %v3911 = vunpack.c.l.bf16 %v3776
          %v3912 = vunpack.c.h.bf16 %v3776
          %v3913 = vunpack.c.l.bf16 %v3777
          %v3914 = vunpack.c.h.bf16 %v3777
          %v3915 = vunpack.c.l.bf16 %v3778
          %v3916 = vunpack.c.h.bf16 %v3778
          %v3917 = vunpack.c.l.bf16 %v3779
          %v3918 = vunpack.c.h.bf16 %v3779
          %v3919 = vunpack.c.l.bf16 %v3780
          %v3920 = vunpack.c.h.bf16 %v3780
          %v3921 = vunpack.c.l.bf16 %v3781
          %v3922 = vunpack.c.h.bf16 %v3781
          %v3923 = vunpack.c.l.bf16 %v3782
          %v3924 = vunpack.c.h.bf16 %v3782
          %v3925 = vunpack.c.l.bf16 %v3783
          %v3926 = vunpack.c.h.bf16 %v3783
          %v3927 = vunpack.c.l.bf16 %v3784
          %v3928 = vunpack.c.h.bf16 %v3784
          %v3929 = vunpack.c.l.bf16 %v3785
          %v3930 = vunpack.c.h.bf16 %v3785
          %v3931 = vunpack.c.l.bf16 %v3786
          %v3932 = vunpack.c.h.bf16 %v3786
          %v3933 = vunpack.c.l.bf16 %v3787
          %v3934 = vunpack.c.h.bf16 %v3787
          %v3935 = vunpack.c.l.bf16 %v3788
          %v3936 = vunpack.c.h.bf16 %v3788
          %v3937 = vunpack.c.l.bf16 %v3789
          %v3938 = vunpack.c.h.bf16 %v3789
          %v3939 = vunpack.c.l.bf16 %v3790
          %v3940 = vunpack.c.h.bf16 %v3790
          %v3941 = vunpack.c.l.bf16 %v3791
          %v3942 = vunpack.c.h.bf16 %v3791
          %v3943 = vunpack.c.l.bf16 %v3792
          %v3944 = vunpack.c.h.bf16 %v3792
          %v3945 = vunpack.c.l.bf16 %v3793
          %v3946 = vunpack.c.h.bf16 %v3793
          %v3947 = vunpack.c.l.bf16 %v3794
          %v3948 = vunpack.c.h.bf16 %v3794
          %v3949 = vunpack.c.l.bf16 %v3795
          %v3950 = vunpack.c.h.bf16 %v3795
          %v3951 = vunpack.c.l.bf16 %v3796
          %v3952 = vunpack.c.h.bf16 %v3796
          %v3953 = vunpack.c.l.bf16 %v3797
          %v3954 = vunpack.c.h.bf16 %v3797
          %v3955 = vunpack.c.l.bf16 %v3798
          %v3956 = vunpack.c.h.bf16 %v3798
          %v3957 = vunpack.c.l.bf16 %v3799
          %v3958 = vunpack.c.h.bf16 %v3799
          %v3959 = vunpack.c.l.bf16 %v3800
          %v3960 = vunpack.c.h.bf16 %v3800
          %v3961 = vunpack.c.l.bf16 %v3801
          %v3962 = vunpack.c.h.bf16 %v3801
          %v3963 = vunpack.c.l.bf16 %v3802
          %v3964 = vunpack.c.h.bf16 %v3802
          %v3965 = vunpack.c.l.bf16 %v3803
          %v3966 = vunpack.c.h.bf16 %v3803
          %v3967 = vunpack.c.l.bf16 %v3804
          %v3968 = vunpack.c.h.bf16 %v3804
          %v3969 = vunpack.c.l.bf16 %v3805
          %v3970 = vunpack.c.h.bf16 %v3805
          %v3971 = vunpack.c.l.bf16 %v3806
          %v3972 = vunpack.c.h.bf16 %v3806
          %v3973 = vunpack.c.l.bf16 %v3807
          %v3974 = vunpack.c.h.bf16 %v3807
          %v3975 = vunpack.c.l.bf16 %v3808
          %v3976 = vunpack.c.h.bf16 %v3808
          %v3977 = vunpack.c.l.bf16 %v3809
          %v3978 = vunpack.c.h.bf16 %v3809
          %v3979 = vunpack.c.l.bf16 %v3810
          %v3980 = vunpack.c.h.bf16 %v3810
          %v3981 = vunpack.c.l.bf16 %v3811
          %v3982 = vunpack.c.h.bf16 %v3811
          %v3983 = vunpack.c.l.bf16 %v3812
          %v3984 = vunpack.c.h.bf16 %v3812
          %v3985 = vunpack.c.l.bf16 %v3813
          %v3986 = vunpack.c.h.bf16 %v3813
          %v3987 = vunpack.c.l.bf16 %v3814
          %v3988 = vunpack.c.h.bf16 %v3814
          %v3989 = vunpack.c.l.bf16 %v3815
          %v3990 = vunpack.c.h.bf16 %v3815
          %v3991 = vunpack.c.l.bf16 %v3816
          %v3992 = vunpack.c.h.bf16 %v3816
          %v3993 = vunpack.c.l.bf16 %v3817
          %v3994 = vunpack.c.h.bf16 %v3817
          %v3995 = vunpack.c.l.bf16 %v3818
          %v3996 = vunpack.c.h.bf16 %v3818
          %v3997 = vunpack.c.l.bf16 %v3819
          %v3998 = vunpack.c.h.bf16 %v3819
          %v3999 = vunpack.c.l.bf16 %v3820
          %v4000 = vunpack.c.h.bf16 %v3820
          %v4001 = vunpack.c.l.bf16 %v3821
          %v4002 = vunpack.c.h.bf16 %v3821
          %v4003 = vunpack.c.l.bf16 %v3822
          %v4004 = vunpack.c.h.bf16 %v3822
          %v4005 = vunpack.c.l.bf16 %v3823
          %v4006 = vunpack.c.h.bf16 %v3823
          %v4007 = vunpack.c.l.bf16 %v3824
          %v4008 = vunpack.c.h.bf16 %v3824
          %v4009 = vunpack.c.l.bf16 %v3825
          %v4010 = vunpack.c.h.bf16 %v3825
          %v4011 = vunpack.c.l.bf16 %v3826
          %v4012 = vunpack.c.h.bf16 %v3826
          %v4013 = vunpack.c.l.bf16 %v3827
          %v4014 = vunpack.c.h.bf16 %v3827
          %v4015 = vunpack.c.l.bf16 %v3828
          %v4016 = vunpack.c.h.bf16 %v3828
          %v4017 = vunpack.c.l.bf16 %v3829
          %v4018 = vunpack.c.h.bf16 %v3829
          %v4019 = vunpack.c.l.bf16 %v3830
          %v4020 = vunpack.c.h.bf16 %v3830
          %v4021 = vunpack.c.l.bf16 %v3831
          %v4022 = vunpack.c.h.bf16 %v3831
          %v4023 = vunpack.c.l.bf16 %v3832
          %v4024 = vunpack.c.h.bf16 %v3832
          %v4025 = vunpack.c.l.bf16 %v3833
          %v4026 = vunpack.c.h.bf16 %v3833
          %v4027 = vunpack.c.l.bf16 %v3834
          %v4028 = vunpack.c.h.bf16 %v3834
          %v4029 = vunpack.c.l.bf16 %v3835
          %v4030 = vunpack.c.h.bf16 %v3835
          %v4031 = vunpack.c.l.bf16 %v3836
          %v4032 = vunpack.c.h.bf16 %v3836
          %v4033 = vunpack.c.l.bf16 %v3837
          %v4034 = vunpack.c.h.bf16 %v3837
          %v4035 = vunpack.c.l.bf16 %v3838
          %v4036 = vunpack.c.h.bf16 %v3838
          %v4037 = vunpack.c.l.bf16 %v3839
          %v4038 = vunpack.c.h.bf16 %v3839
          %v4039 = vunpack.c.l.bf16 %v3840
          %v4040 = vunpack.c.h.bf16 %v3840
          %v4041 = vunpack.c.l.bf16 %v3841
          %v4042 = vunpack.c.h.bf16 %v3841
          %v4043 = vunpack.c.l.bf16 %v3842
          %v4044 = vunpack.c.h.bf16 %v3842
          %v4045 = vunpack.c.l.bf16 %v3843
          %v4046 = vunpack.c.h.bf16 %v3843
          %v4047 = vunpack.c.l.bf16 %v3844
          %v4048 = vunpack.c.h.bf16 %v3844
          %v4049 = vunpack.c.l.bf16 %v3845
          %v4050 = vunpack.c.h.bf16 %v3845
          %v4051 = vunpack.c.l.bf16 %v3846
          %v4052 = vunpack.c.h.bf16 %v3846
          %v4053 = vunpack.c.l.bf16 %v3847
          %v4054 = vunpack.c.h.bf16 %v3847
          %v4055 = vunpack.c.l.bf16 %v3848
          %v4056 = vunpack.c.h.bf16 %v3848
          %v4057 = vunpack.c.l.bf16 %v3849
          %v4058 = vunpack.c.h.bf16 %v3849
          %v4059 = vunpack.c.l.bf16 %v3850
          %v4060 = vunpack.c.h.bf16 %v3850
          %v4061 = vunpack.c.l.bf16 %v3851
          %v4062 = vunpack.c.h.bf16 %v3851
          %v4063 = vunpack.c.l.bf16 %v3852
          %v4064 = vunpack.c.h.bf16 %v3852
          %v4065 = vunpack.c.l.bf16 %v3853
          %v4066 = vunpack.c.h.bf16 %v3853
          %v4067 = vunpack.c.l.bf16 %v3854
          %v4068 = vunpack.c.h.bf16 %v3854
          %v4069 = vunpack.c.l.bf16 %v3855
          %v4070 = vunpack.c.h.bf16 %v3855
          %v4071 = vunpack.c.l.bf16 %v3856
          %v4072 = vunpack.c.h.bf16 %v3856
          %v4073 = vunpack.c.l.bf16 %v3857
          %v4074 = vunpack.c.h.bf16 %v3857
          %v4075 = vunpack.c.l.bf16 %v3858
          %v4076 = vunpack.c.h.bf16 %v3858
          %v4077 = vunpack.c.l.bf16 %v3859
          %v4078 = vunpack.c.h.bf16 %v3859
          %v4079 = vunpack.c.l.bf16 %v3860
          %v4080 = vunpack.c.h.bf16 %v3860
          %v4081 = vunpack.c.l.bf16 %v3861
          %v4082 = vunpack.c.h.bf16 %v3861
          %v4083 = vunpack.c.l.bf16 %v3862
          %v4084 = vunpack.c.h.bf16 %v3862
          %v4085 = vunpack.c.l.bf16 %v3863
          %v4086 = vunpack.c.h.bf16 %v3863
          %v4087 = vunpack.c.l.bf16 %v3864
          %v4088 = vunpack.c.h.bf16 %v3864
          %v4089 = vunpack.c.l.bf16 %v3865
          %v4090 = vunpack.c.h.bf16 %v3865
          %v4091 = vunpack.c.l.bf16 %v3866
          %v4092 = vunpack.c.h.bf16 %v3866
          %v4093 = vunpack.c.l.bf16 %v3867
          %v4094 = vunpack.c.h.bf16 %v3867
          %v4095 = vunpack.c.l.bf16 %v3868
          %v4096 = vunpack.c.h.bf16 %v3868
          %v4097 = vunpack.c.l.bf16 %v3869
          %v4098 = vunpack.c.h.bf16 %v3869
          %v4099 = vunpack.c.l.bf16 %v3870
          %v4100 = vunpack.c.h.bf16 %v3870
          %v4101 = vunpack.c.l.bf16 %v3871
          %v4102 = vunpack.c.h.bf16 %v3871
          %v4103 = vunpack.c.l.bf16 %v3872
          %v4104 = vunpack.c.h.bf16 %v3872
          %v4105 = vunpack.c.l.bf16 %v3873
          %v4106 = vunpack.c.h.bf16 %v3873
          %v4107 = vunpack.c.l.bf16 %v3874
          %v4108 = vunpack.c.h.bf16 %v3874
          %v4109 = vunpack.c.l.bf16 %v3875
          %v4110 = vunpack.c.h.bf16 %v3875
          %v4111 = vunpack.c.l.bf16 %v3876
          %v4112 = vunpack.c.h.bf16 %v3876
          %v4113 = vunpack.c.l.bf16 %v3877
          %v4114 = vunpack.c.h.bf16 %v3877
          %v4115 = vunpack.c.l.bf16 %v3878
          %v4116 = vunpack.c.h.bf16 %v3878
          %v4117 = vunpack.c.l.bf16 %v3879
          %v4118 = vunpack.c.h.bf16 %v3879
          %v4119 = vunpack.c.l.bf16 %v3880
          %v4120 = vunpack.c.h.bf16 %v3880
          %v4121 = vunpack.c.l.bf16 %v3881
          %v4122 = vunpack.c.h.bf16 %v3881
          %v4123 = vunpack.c.l.bf16 %v3882
          %v4124 = vunpack.c.h.bf16 %v3882
          %v4125 = vunpack.c.l.bf16 %v3883
          %v4126 = vunpack.c.h.bf16 %v3883
          %v4127 = vunpack.c.l.bf16 %v3884
          %v4128 = vunpack.c.h.bf16 %v3884
          %v4129 = vunpack.c.l.bf16 %v3885
          %v4130 = vunpack.c.h.bf16 %v3885
          %v4131 = vunpack.c.l.bf16 %v3886
          %v4132 = vunpack.c.h.bf16 %v3886
          %v4133 = vunpack.c.l.bf16 %v3887
          %v4134 = vunpack.c.h.bf16 %v3887
          %v4135 = vunpack.c.l.bf16 %v3888
          %v4136 = vunpack.c.h.bf16 %v3888
          %v4137 = vunpack.c.l.bf16 %v3889
          %v4138 = vunpack.c.h.bf16 %v3889
          %v4139 = vunpack.c.l.bf16 %v3890
          %v4140 = vunpack.c.h.bf16 %v3890
          %v4141 = vunpack.c.l.bf16 %v3891
          %v4142 = vunpack.c.h.bf16 %v3891
          %v4143 = vunpack.c.l.bf16 %v3892
          %v4144 = vunpack.c.h.bf16 %v3892
          %v4145 = vunpack.c.l.bf16 %v3893
          %v4146 = vunpack.c.h.bf16 %v3893
          %v4147 = vunpack.c.l.bf16 %v3894
          %v4148 = vunpack.c.h.bf16 %v3894
          %v4149 = vunpack.c.l.bf16 %v3895
          %v4150 = vunpack.c.h.bf16 %v3895
          %v4151 = vunpack.c.l.bf16 %v3896
          %v4152 = vunpack.c.h.bf16 %v3896
          %v4153 = vld [vmem:[#allocation14] sm:$0xf]
          %v4155 = vlaneseq
          %v4156 = vshrl.u32 %v4155, 7
          %v4157 = vsub.s32 0, %v4156
          %v4158 = vrot.slane %v4153, %v4157
          %v4159 = vlaneseq
          %v4160 = vshrl.u32 %v4159, 7
          %v4161 = vsub.s32 1, %v4160
          %v4162 = vrot.slane %v4153, %v4161
          %v4163 = vlaneseq
          %v4164 = vshrl.u32 %v4163, 7
          %v4165 = vsub.s32 2, %v4164
          %v4166 = vrot.slane %v4153, %v4165
          %v4167 = vlaneseq
          %v4168 = vshrl.u32 %v4167, 7
          %v4169 = vsub.s32 3, %v4168
          %v4170 = vrot.slane %v4153, %v4169
          %4175 = vmatprep.subr.mxu0 %v3898
          %4176 = vmatpush1.msra.mxu0 %v3897
          %4177 = vmatprep.subr.mxu0 %v3902
          %4178 = vmatpush1.msra.mxu0 %v3901
          %4179 = vmatprep.subr.mxu0 %v3906
          %4180 = vmatpush1.msra.mxu0 %v3905
          %4181 = vmatprep.subr.mxu0 %v3910
          %4182 = vmatpush1.msra.mxu0 %v3909
          %4183 = vmatprep.subr.mxu0 %v3914
          %4184 = vmatpush1.msra.mxu0 %v3913
          %4185 = vmatprep.subr.mxu0 %v3918
          %4186 = vmatpush1.msra.mxu0 %v3917
          %4187 = vmatprep.subr.mxu0 %v3922
          %4188 = vmatpush1.msra.mxu0 %v3921
          %4189 = vmatprep.subr.mxu0 %v3926
          %4190 = vmatpush1.msra.mxu0 %v3925
          %4191 = vmatprep.subr.mxu0 %v3930
          %4192 = vmatpush1.msra.mxu0 %v3929
          %4193 = vmatprep.subr.mxu0 %v3934
          %4194 = vmatpush1.msra.mxu0 %v3933
          %4195 = vmatprep.subr.mxu0 %v3938
          %4196 = vmatpush1.msra.mxu0 %v3937
          %4197 = vmatprep.subr.mxu0 %v3942
          %4198 = vmatpush1.msra.mxu0 %v3941
          %4199 = vmatprep.subr.mxu0 %v3946
          %4200 = vmatpush1.msra.mxu0 %v3945
          %4201 = vmatprep.subr.mxu0 %v3950
          %4202 = vmatpush1.msra.mxu0 %v3949
          %4203 = vmatprep.subr.mxu0 %v3954
          %4204 = vmatpush1.msra.mxu0 %v3953
          %4205 = vmatprep.subr.mxu0 %v3958
          %4206 = vmatpush1.msra.mxu0 %v3957
          %4207 = vmatprep.subr.mxu0 %v3962
          %4208 = vmatpush1.msra.mxu0 %v3961
          %4209 = vmatprep.subr.mxu0 %v3966
          %4210 = vmatpush1.msra.mxu0 %v3965
          %4211 = vmatprep.subr.mxu0 %v3970
          %4212 = vmatpush1.msra.mxu0 %v3969
          %4213 = vmatprep.subr.mxu0 %v3974
          %4214 = vmatpush1.msra.mxu0 %v3973
          %4215 = vmatprep.subr.mxu0 %v3978
          %4216 = vmatpush1.msra.mxu0 %v3977
          %4217 = vmatprep.subr.mxu0 %v3982
          %4218 = vmatpush1.msra.mxu0 %v3981
          %4219 = vmatprep.subr.mxu0 %v3986
          %4220 = vmatpush1.msra.mxu0 %v3985
          %4221 = vmatprep.subr.mxu0 %v3990
          %4222 = vmatpush1.msra.mxu0 %v3989
          %4223 = vmatprep.subr.mxu0 %v3994
          %4224 = vmatpush1.msra.mxu0 %v3993
          %4225 = vmatprep.subr.mxu0 %v3998
          %4226 = vmatpush1.msra.mxu0 %v3997
          %4227 = vmatprep.subr.mxu0 %v4002
          %4228 = vmatpush1.msra.mxu0 %v4001
          %4229 = vmatprep.subr.mxu0 %v4006
          %4230 = vmatpush1.msra.mxu0 %v4005
          %4231 = vmatprep.subr.mxu0 %v4010
          %4232 = vmatpush1.msra.mxu0 %v4009
          %4233 = vmatprep.subr.mxu0 %v4014
          %4234 = vmatpush1.msra.mxu0 %v4013
          %4235 = vmatprep.subr.mxu0 %v4018
          %4236 = vmatpush1.msra.mxu0 %v4017
          %4237 = vmatprep.subr.mxu0 %v4022
          %4238 = vmatpush1.msra.mxu0 %v4021
          %4239 = vmatprep.mubr.f32.mxu0 %v3766
          %4240 = vmatmul.mubr.f32.gmra.mrb[0].mxu0 %v3765
          %v4241 = vpop.f32.mrb[0].mxu0
          %v4242 = vadd.f32 %v4158, %v4241
          %v4243 = vpop.f32.mrb[0].mxu0
          %v4244 = vadd.f32 %v4162, %v4243
          %4245 = vdwg.mxu0
          %4246 = vmatprep.subr.mxu0 %v4026
          %4247 = vmatpush1.msra.mxu0 %v4025
          %4248 = vmatprep.subr.mxu0 %v4030
          %4249 = vmatpush1.msra.mxu0 %v4029
          %4250 = vmatprep.subr.mxu0 %v4034
          %4251 = vmatpush1.msra.mxu0 %v4033
          %4252 = vmatprep.subr.mxu0 %v4038
          %4253 = vmatpush1.msra.mxu0 %v4037
          %4254 = vmatprep.subr.mxu0 %v4042
          %4255 = vmatpush1.msra.mxu0 %v4041
          %4256 = vmatprep.subr.mxu0 %v4046
          %4257 = vmatpush1.msra.mxu0 %v4045
          %4258 = vmatprep.subr.mxu0 %v4050
          %4259 = vmatpush1.msra.mxu0 %v4049
          %4260 = vmatprep.subr.mxu0 %v4054
          %4261 = vmatpush1.msra.mxu0 %v4053
          %4262 = vmatprep.subr.mxu0 %v4058
          %4263 = vmatpush1.msra.mxu0 %v4057
          %4264 = vmatprep.subr.mxu0 %v4062
          %4265 = vmatpush1.msra.mxu0 %v4061
          %4266 = vmatprep.subr.mxu0 %v4066
          %4267 = vmatpush1.msra.mxu0 %v4065
          %4268 = vmatprep.subr.mxu0 %v4070
          %4269 = vmatpush1.msra.mxu0 %v4069
          %4270 = vmatprep.subr.mxu0 %v4074
          %4271 = vmatpush1.msra.mxu0 %v4073
          %4272 = vmatprep.subr.mxu0 %v4078
          %4273 = vmatpush1.msra.mxu0 %v4077
          %4274 = vmatprep.subr.mxu0 %v4082
          %4275 = vmatpush1.msra.mxu0 %v4081
          %4276 = vmatprep.subr.mxu0 %v4086
          %4277 = vmatpush1.msra.mxu0 %v4085
          %4278 = vmatprep.subr.mxu0 %v4090
          %4279 = vmatpush1.msra.mxu0 %v4089
          %4280 = vmatprep.subr.mxu0 %v4094
          %4281 = vmatpush1.msra.mxu0 %v4093
          %4282 = vmatprep.subr.mxu0 %v4098
          %4283 = vmatpush1.msra.mxu0 %v4097
          %4284 = vmatprep.subr.mxu0 %v4102
          %4285 = vmatpush1.msra.mxu0 %v4101
          %4286 = vmatprep.subr.mxu0 %v4106
          %4287 = vmatpush1.msra.mxu0 %v4105
          %4288 = vmatprep.subr.mxu0 %v4110
          %4289 = vmatpush1.msra.mxu0 %v4109
          %4290 = vmatprep.subr.mxu0 %v4114
          %4291 = vmatpush1.msra.mxu0 %v4113
          %4292 = vmatprep.subr.mxu0 %v4118
          %4293 = vmatpush1.msra.mxu0 %v4117
          %4294 = vmatprep.subr.mxu0 %v4122
          %4295 = vmatpush1.msra.mxu0 %v4121
          %4296 = vmatprep.subr.mxu0 %v4126
          %4297 = vmatpush1.msra.mxu0 %v4125
          %4298 = vmatprep.subr.mxu0 %v4130
          %4299 = vmatpush1.msra.mxu0 %v4129
          %4300 = vmatprep.subr.mxu0 %v4134
          %4301 = vmatpush1.msra.mxu0 %v4133
          %4302 = vmatprep.subr.mxu0 %v4138
          %4303 = vmatpush1.msra.mxu0 %v4137
          %4304 = vmatprep.subr.mxu0 %v4142
          %4305 = vmatpush1.msra.mxu0 %v4141
          %4306 = vmatprep.subr.mxu0 %v4146
          %4307 = vmatpush1.msra.mxu0 %v4145
          %4308 = vmatprep.subr.mxu0 %v4150
          %4309 = vmatpush1.msra.mxu0 %v4149
          %4310 = vmatprep.mubr.f32.mxu0 %v3768
          %4311 = vmatmul.mubr.f32.gmra.mrb[0].mxu0 %v3767
          %v4312 = vpop.f32.mrb[0].mxu0
          %v4313 = vadd.f32 %v4242, %v4312
          %v4314 = vpop.f32.mrb[0].mxu0
          %v4315 = vadd.f32 %v4244, %v4314
          %4316 = vdwg.mxu0
          %4317 = vmatprep.subr.mxu0 %v3900
          %4318 = vmatpush1.msra.mxu0 %v3899
          %4319 = vmatprep.subr.mxu0 %v3904
          %4320 = vmatpush1.msra.mxu0 %v3903
          %4321 = vmatprep.subr.mxu0 %v3908
          %4322 = vmatpush1.msra.mxu0 %v3907
          %4323 = vmatprep.subr.mxu0 %v3912
          %4324 = vmatpush1.msra.mxu0 %v3911
          %4325 = vmatprep.subr.mxu0 %v3916
          %4326 = vmatpush1.msra.mxu0 %v3915
          %4327 = vmatprep.subr.mxu0 %v3920
          %4328 = vmatpush1.msra.mxu0 %v3919
          %4329 = vmatprep.subr.mxu0 %v3924
          %4330 = vmatpush1.msra.mxu0 %v3923
          %4331 = vmatprep.subr.mxu0 %v3928
          %4332 = vmatpush1.msra.mxu0 %v3927
          %4333 = vmatprep.subr.mxu0 %v3932
          %4334 = vmatpush1.msra.mxu0 %v3931
          %4335 = vmatprep.subr.mxu0 %v3936
          %4336 = vmatpush1.msra.mxu0 %v3935
          %4337 = vmatprep.subr.mxu0 %v3940
          %4338 = vmatpush1.msra.mxu0 %v3939
          %4339 = vmatprep.subr.mxu0 %v3944
          %4340 = vmatpush1.msra.mxu0 %v3943
          %4341 = vmatprep.subr.mxu0 %v3948
          %4342 = vmatpush1.msra.mxu0 %v3947
          %4343 = vmatprep.subr.mxu0 %v3952
          %4344 = vmatpush1.msra.mxu0 %v3951
          %4345 = vmatprep.subr.mxu0 %v3956
          %4346 = vmatpush1.msra.mxu0 %v3955
          %4347 = vmatprep.subr.mxu0 %v3960
          %4348 = vmatpush1.msra.mxu0 %v3959
          %4349 = vmatprep.subr.mxu0 %v3964
          %4350 = vmatpush1.msra.mxu0 %v3963
          %4351 = vmatprep.subr.mxu0 %v3968
          %4352 = vmatpush1.msra.mxu0 %v3967
          %4353 = vmatprep.subr.mxu0 %v3972
          %4354 = vmatpush1.msra.mxu0 %v3971
          %4355 = vmatprep.subr.mxu0 %v3976
          %4356 = vmatpush1.msra.mxu0 %v3975
          %4357 = vmatprep.subr.mxu0 %v3980
          %4358 = vmatpush1.msra.mxu0 %v3979
          %4359 = vmatprep.subr.mxu0 %v3984
          %4360 = vmatpush1.msra.mxu0 %v3983
          %4361 = vmatprep.subr.mxu0 %v3988
          %4362 = vmatpush1.msra.mxu0 %v3987
          %4363 = vmatprep.subr.mxu0 %v3992
          %4364 = vmatpush1.msra.mxu0 %v3991
          %4365 = vmatprep.subr.mxu0 %v3996
          %4366 = vmatpush1.msra.mxu0 %v3995
          %4367 = vmatprep.subr.mxu0 %v4000
          %4368 = vmatpush1.msra.mxu0 %v3999
          %4369 = vmatprep.subr.mxu0 %v4004
          %4370 = vmatpush1.msra.mxu0 %v4003
          %4371 = vmatprep.subr.mxu0 %v4008
          %4372 = vmatpush1.msra.mxu0 %v4007
          %4373 = vmatprep.subr.mxu0 %v4012
          %4374 = vmatpush1.msra.mxu0 %v4011
          %4375 = vmatprep.subr.mxu0 %v4016
          %4376 = vmatpush1.msra.mxu0 %v4015
          %4377 = vmatprep.subr.mxu0 %v4020
          %4378 = vmatpush1.msra.mxu0 %v4019
          %4379 = vmatprep.subr.mxu0 %v4024
          %4380 = vmatpush1.msra.mxu0 %v4023
          %4381 = vmatprep.mubr.f32.mxu0 %v3766
          %4382 = vmatmul.mubr.f32.gmra.mrb[0].mxu0 %v3765
          %v4383 = vpop.f32.mrb[0].mxu0
          %v4384 = vadd.f32 %v4166, %v4383
          %v4385 = vpop.f32.mrb[0].mxu0
          %v4386 = vadd.f32 %v4170, %v4385
          %4387 = vdwg.mxu0
          %4388 = vmatprep.subr.mxu0 %v4028
          %4389 = vmatpush1.msra.mxu0 %v4027
          %4390 = vmatprep.subr.mxu0 %v4032
          %4391 = vmatpush1.msra.mxu0 %v4031
          %4392 = vmatprep.subr.mxu0 %v4036
          %4393 = vmatpush1.msra.mxu0 %v4035
          %4394 = vmatprep.subr.mxu0 %v4040
          %4395 = vmatpush1.msra.mxu0 %v4039
          %4396 = vmatprep.subr.mxu0 %v4044
          %4397 = vmatpush1.msra.mxu0 %v4043
          %4398 = vmatprep.subr.mxu0 %v4048
          %4399 = vmatpush1.msra.mxu0 %v4047
          %4400 = vmatprep.subr.mxu0 %v4052
          %4401 = vmatpush1.msra.mxu0 %v4051
          %4402 = vmatprep.subr.mxu0 %v4056
          %4403 = vmatpush1.msra.mxu0 %v4055
          %4404 = vmatprep.subr.mxu0 %v4060
          %4405 = vmatpush1.msra.mxu0 %v4059
          %4406 = vmatprep.subr.mxu0 %v4064
          %4407 = vmatpush1.msra.mxu0 %v4063
          %4408 = vmatprep.subr.mxu0 %v4068
          %4409 = vmatpush1.msra.mxu0 %v4067
          %4410 = vmatprep.subr.mxu0 %v4072
          %4411 = vmatpush1.msra.mxu0 %v4071
          %4412 = vmatprep.subr.mxu0 %v4076
          %4413 = vmatpush1.msra.mxu0 %v4075
          %4414 = vmatprep.subr.mxu0 %v4080
          %4415 = vmatpush1.msra.mxu0 %v4079
          %4416 = vmatprep.subr.mxu0 %v4084
          %4417 = vmatpush1.msra.mxu0 %v4083
          %4418 = vmatprep.subr.mxu0 %v4088
          %4419 = vmatpush1.msra.mxu0 %v4087
          %4420 = vmatprep.subr.mxu0 %v4092
          %4421 = vmatpush1.msra.mxu0 %v4091
          %4422 = vmatprep.subr.mxu0 %v4096
          %4423 = vmatpush1.msra.mxu0 %v4095
          %4424 = vmatprep.subr.mxu0 %v4100
          %4425 = vmatpush1.msra.mxu0 %v4099
          %4426 = vmatprep.subr.mxu0 %v4104
          %4427 = vmatpush1.msra.mxu0 %v4103
          %4428 = vmatprep.subr.mxu0 %v4108
          %4429 = vmatpush1.msra.mxu0 %v4107
          %4430 = vmatprep.subr.mxu0 %v4112
          %4431 = vmatpush1.msra.mxu0 %v4111
          %4432 = vmatprep.subr.mxu0 %v4116
          %4433 = vmatpush1.msra.mxu0 %v4115
          %4434 = vmatprep.subr.mxu0 %v4120
          %4435 = vmatpush1.msra.mxu0 %v4119
          %4436 = vmatprep.subr.mxu0 %v4124
          %4437 = vmatpush1.msra.mxu0 %v4123
          %4438 = vmatprep.subr.mxu0 %v4128
          %4439 = vmatpush1.msra.mxu0 %v4127
          %4440 = vmatprep.subr.mxu0 %v4132
          %4441 = vmatpush1.msra.mxu0 %v4131
          %4442 = vmatprep.subr.mxu0 %v4136
          %4443 = vmatpush1.msra.mxu0 %v4135
          %4444 = vmatprep.subr.mxu0 %v4140
          %4445 = vmatpush1.msra.mxu0 %v4139
          %4446 = vmatprep.subr.mxu0 %v4144
          %4447 = vmatpush1.msra.mxu0 %v4143
          %4448 = vmatprep.subr.mxu0 %v4148
          %4449 = vmatpush1.msra.mxu0 %v4147
          %4450 = vmatprep.subr.mxu0 %v4152
          %4451 = vmatpush1.msra.mxu0 %v4151
          %4452 = vmatprep.mubr.f32.mxu0 %v3768
          %4453 = vmatmul.mubr.f32.gmra.mrb[0].mxu0 %v3767
          %v4454 = vpop.f32.mrb[0].mxu0
          %v4455 = vadd.f32 %v4384, %v4454
          %v4456 = vpop.f32.mrb[0].mxu0
          %v4457 = vadd.f32 %v4386, %v4456
          %4458 = vdwg.mxu0
          %v4459 = vmax.f32 %v4313, 0.0
          %v4460 = vmax.f32 %v4315, 0.0
          %v4461 = vmax.f32 %v4455, 0.0
          %v4462 = vmax.f32 %v4457, 0.0
          %v4463 = vld [vmem:[#allocation16] sm:$0xff]
          %v4464 = vld [vmem:[#allocation16 + $0x8] sm:$0xff]
          %v4465 = vld [vmem:[#allocation16 + $0x10] sm:$0xff]
          %v4466 = vld [vmem:[#allocation16 + $0x18] sm:$0xff]
          %v4467 = vld [vmem:[#allocation16 + $0x20] sm:$0xff]
          %v4468 = vld [vmem:[#allocation16 + $0x28] sm:$0xff]
          %v4469 = vld [vmem:[#allocation16 + $0x30] sm:$0xff]
          %v4470 = vld [vmem:[#allocation16 + $0x38] sm:$0xff]
          %v4471 = vld [vmem:[#allocation16 + $0x40] sm:$0xff]
          %v4472 = vld [vmem:[#allocation16 + $0x48] sm:$0xff]
          %v4473 = vld [vmem:[#allocation16 + $0x50] sm:$0xff]
          %v4474 = vld [vmem:[#allocation16 + $0x58] sm:$0xff]
          %v4475 = vld [vmem:[#allocation16 + $0x60] sm:$0xff]
          %v4476 = vld [vmem:[#allocation16 + $0x68] sm:$0xff]
          %v4477 = vld [vmem:[#allocation16 + $0x70] sm:$0xff]
          %v4478 = vld [vmem:[#allocation16 + $0x78] sm:$0xff]
          %v4479 = vld [vmem:[#allocation16 + $0x80] sm:$0xff]
          %v4480 = vld [vmem:[#allocation16 + $0x88] sm:$0xff]
          %v4481 = vld [vmem:[#allocation16 + $0x90] sm:$0xff]
          %v4482 = vld [vmem:[#allocation16 + $0x98] sm:$0xff]
          %v4483 = vld [vmem:[#allocation16 + $0xa0] sm:$0xff]
          %v4484 = vld [vmem:[#allocation16 + $0xa8] sm:$0xff]
          %v4485 = vld [vmem:[#allocation16 + $0xb0] sm:$0xff]
          %v4486 = vld [vmem:[#allocation16 + $0xb8] sm:$0xff]
          %v4487 = vld [vmem:[#allocation16 + $0xc0] sm:$0xff]
          %v4488 = vld [vmem:[#allocation16 + $0xc8] sm:$0xff]
          %v4489 = vld [vmem:[#allocation16 + $0xd0] sm:$0xff]
          %v4490 = vld [vmem:[#allocation16 + $0xd8] sm:$0xff]
          %v4491 = vld [vmem:[#allocation16 + $0xe0] sm:$0xff]
          %v4492 = vld [vmem:[#allocation16 + $0xe8] sm:$0xff]
          %v4493 = vld [vmem:[#allocation16 + $0xf0] sm:$0xff]
          %v4494 = vld [vmem:[#allocation16 + $0xf8] sm:$0xff]
          %v4495 = vld [vmem:[#allocation16 + $0x100] sm:$0xff]
          %v4496 = vld [vmem:[#allocation16 + $0x108] sm:$0xff]
          %v4497 = vld [vmem:[#allocation16 + $0x110] sm:$0xff]
          %v4498 = vld [vmem:[#allocation16 + $0x118] sm:$0xff]
          %v4499 = vld [vmem:[#allocation16 + $0x120] sm:$0xff]
          %v4500 = vld [vmem:[#allocation16 + $0x128] sm:$0xff]
          %v4501 = vld [vmem:[#allocation16 + $0x130] sm:$0xff]
          %v4502 = vld [vmem:[#allocation16 + $0x138] sm:$0xff]
          %v4503 = vld [vmem:[#allocation16 + $0x140] sm:$0xff]
          %v4504 = vld [vmem:[#allocation16 + $0x148] sm:$0xff]
          %v4505 = vld [vmem:[#allocation16 + $0x150] sm:$0xff]
          %v4506 = vld [vmem:[#allocation16 + $0x158] sm:$0xff]
          %v4507 = vld [vmem:[#allocation16 + $0x160] sm:$0xff]
          %v4508 = vld [vmem:[#allocation16 + $0x168] sm:$0xff]
          %v4509 = vld [vmem:[#allocation16 + $0x170] sm:$0xff]
          %v4510 = vld [vmem:[#allocation16 + $0x178] sm:$0xff]
          %v4511 = vld [vmem:[#allocation16 + $0x180] sm:$0xff]
          %v4512 = vld [vmem:[#allocation16 + $0x188] sm:$0xff]
          %v4513 = vld [vmem:[#allocation16 + $0x190] sm:$0xff]
          %v4514 = vld [vmem:[#allocation16 + $0x198] sm:$0xff]
          %v4515 = vld [vmem:[#allocation16 + $0x1a0] sm:$0xff]
          %v4516 = vld [vmem:[#allocation16 + $0x1a8] sm:$0xff]
          %v4517 = vld [vmem:[#allocation16 + $0x1b0] sm:$0xff]
          %v4518 = vld [vmem:[#allocation16 + $0x1b8] sm:$0xff]
          %v4519 = vld [vmem:[#allocation16 + $0x1c0] sm:$0xff]
          %v4520 = vld [vmem:[#allocation16 + $0x1c8] sm:$0xff]
          %v4521 = vld [vmem:[#allocation16 + $0x1d0] sm:$0xff]
          %v4522 = vld [vmem:[#allocation16 + $0x1d8] sm:$0xff]
          %v4523 = vld [vmem:[#allocation16 + $0x1e0] sm:$0xff]
          %v4524 = vld [vmem:[#allocation16 + $0x1e8] sm:$0xff]
          %v4525 = vld [vmem:[#allocation16 + $0x1f0] sm:$0xff]
          %v4526 = vld [vmem:[#allocation16 + $0x1f8] sm:$0xff]
          %v4527 = vld [vmem:[#allocation16 + $0x200] sm:$0xff]
          %v4528 = vld [vmem:[#allocation16 + $0x208] sm:$0xff]
          %v4529 = vld [vmem:[#allocation16 + $0x210] sm:$0xff]
          %v4530 = vld [vmem:[#allocation16 + $0x218] sm:$0xff]
          %v4531 = vld [vmem:[#allocation16 + $0x220] sm:$0xff]
          %v4532 = vld [vmem:[#allocation16 + $0x228] sm:$0xff]
          %v4533 = vld [vmem:[#allocation16 + $0x230] sm:$0xff]
          %v4534 = vld [vmem:[#allocation16 + $0x238] sm:$0xff]
          %v4535 = vld [vmem:[#allocation16 + $0x240] sm:$0xff]
          %v4536 = vld [vmem:[#allocation16 + $0x248] sm:$0xff]
          %v4537 = vld [vmem:[#allocation16 + $0x250] sm:$0xff]
          %v4538 = vld [vmem:[#allocation16 + $0x258] sm:$0xff]
          %v4539 = vld [vmem:[#allocation16 + $0x260] sm:$0xff]
          %v4540 = vld [vmem:[#allocation16 + $0x268] sm:$0xff]
          %v4541 = vld [vmem:[#allocation16 + $0x270] sm:$0xff]
          %v4542 = vld [vmem:[#allocation16 + $0x278] sm:$0xff]
          %v4543 = vld [vmem:[#allocation16 + $0x280] sm:$0xff]
          %v4544 = vld [vmem:[#allocation16 + $0x288] sm:$0xff]
          %v4545 = vld [vmem:[#allocation16 + $0x290] sm:$0xff]
          %v4546 = vld [vmem:[#allocation16 + $0x298] sm:$0xff]
          %v4547 = vld [vmem:[#allocation16 + $0x2a0] sm:$0xff]
          %v4548 = vld [vmem:[#allocation16 + $0x2a8] sm:$0xff]
          %v4549 = vld [vmem:[#allocation16 + $0x2b0] sm:$0xff]
          %v4550 = vld [vmem:[#allocation16 + $0x2b8] sm:$0xff]
          %v4551 = vld [vmem:[#allocation16 + $0x2c0] sm:$0xff]
          %v4552 = vld [vmem:[#allocation16 + $0x2c8] sm:$0xff]
          %v4553 = vld [vmem:[#allocation16 + $0x2d0] sm:$0xff]
          %v4554 = vld [vmem:[#allocation16 + $0x2d8] sm:$0xff]
          %v4555 = vld [vmem:[#allocation16 + $0x2e0] sm:$0xff]
          %v4556 = vld [vmem:[#allocation16 + $0x2e8] sm:$0xff]
          %v4557 = vld [vmem:[#allocation16 + $0x2f0] sm:$0xff]
          %v4558 = vld [vmem:[#allocation16 + $0x2f8] sm:$0xff]
          %v4559 = vld [vmem:[#allocation16 + $0x300] sm:$0xff]
          %v4560 = vld [vmem:[#allocation16 + $0x308] sm:$0xff]
          %v4561 = vld [vmem:[#allocation16 + $0x310] sm:$0xff]
          %v4562 = vld [vmem:[#allocation16 + $0x318] sm:$0xff]
          %v4563 = vld [vmem:[#allocation16 + $0x320] sm:$0xff]
          %v4564 = vld [vmem:[#allocation16 + $0x328] sm:$0xff]
          %v4565 = vld [vmem:[#allocation16 + $0x330] sm:$0xff]
          %v4566 = vld [vmem:[#allocation16 + $0x338] sm:$0xff]
          %v4567 = vld [vmem:[#allocation16 + $0x340] sm:$0xff]
          %v4568 = vld [vmem:[#allocation16 + $0x348] sm:$0xff]
          %v4569 = vld [vmem:[#allocation16 + $0x350] sm:$0xff]
          %v4570 = vld [vmem:[#allocation16 + $0x358] sm:$0xff]
          %v4571 = vld [vmem:[#allocation16 + $0x360] sm:$0xff]
          %v4572 = vld [vmem:[#allocation16 + $0x368] sm:$0xff]
          %v4573 = vld [vmem:[#allocation16 + $0x370] sm:$0xff]
          %v4574 = vld [vmem:[#allocation16 + $0x378] sm:$0xff]
          %v4575 = vld [vmem:[#allocation16 + $0x380] sm:$0xff]
          %v4576 = vld [vmem:[#allocation16 + $0x388] sm:$0xff]
          %v4577 = vld [vmem:[#allocation16 + $0x390] sm:$0xff]
          %v4578 = vld [vmem:[#allocation16 + $0x398] sm:$0xff]
          %v4579 = vld [vmem:[#allocation16 + $0x3a0] sm:$0xff]
          %v4580 = vld [vmem:[#allocation16 + $0x3a8] sm:$0xff]
          %v4581 = vld [vmem:[#allocation16 + $0x3b0] sm:$0xff]
          %v4582 = vld [vmem:[#allocation16 + $0x3b8] sm:$0xff]
          %v4583 = vld [vmem:[#allocation16 + $0x3c0] sm:$0xff]
          %v4584 = vld [vmem:[#allocation16 + $0x3c8] sm:$0xff]
          %v4585 = vld [vmem:[#allocation16 + $0x3d0] sm:$0xff]
          %v4586 = vld [vmem:[#allocation16 + $0x3d8] sm:$0xff]
          %v4587 = vld [vmem:[#allocation16 + $0x3e0] sm:$0xff]
          %v4588 = vld [vmem:[#allocation16 + $0x3e8] sm:$0xff]
          %v4589 = vld [vmem:[#allocation16 + $0x3f0] sm:$0xff]
          %v4590 = vld [vmem:[#allocation16 + $0x3f8] sm:$0xff]
          %v4591 = vunpack.c.l.bf16 %v4463
          %v4592 = vunpack.c.h.bf16 %v4463
          %v4593 = vunpack.c.l.bf16 %v4464
          %v4594 = vunpack.c.h.bf16 %v4464
          %v4595 = vunpack.c.l.bf16 %v4465
          %v4596 = vunpack.c.h.bf16 %v4465
          %v4597 = vunpack.c.l.bf16 %v4466
          %v4598 = vunpack.c.h.bf16 %v4466
          %v4599 = vunpack.c.l.bf16 %v4467
          %v4600 = vunpack.c.h.bf16 %v4467
          %v4601 = vunpack.c.l.bf16 %v4468
          %v4602 = vunpack.c.h.bf16 %v4468
          %v4603 = vunpack.c.l.bf16 %v4469
          %v4604 = vunpack.c.h.bf16 %v4469
          %v4605 = vunpack.c.l.bf16 %v4470
          %v4606 = vunpack.c.h.bf16 %v4470
          %v4607 = vunpack.c.l.bf16 %v4471
          %v4608 = vunpack.c.h.bf16 %v4471
          %v4609 = vunpack.c.l.bf16 %v4472
          %v4610 = vunpack.c.h.bf16 %v4472
          %v4611 = vunpack.c.l.bf16 %v4473
          %v4612 = vunpack.c.h.bf16 %v4473
          %v4613 = vunpack.c.l.bf16 %v4474
          %v4614 = vunpack.c.h.bf16 %v4474
          %v4615 = vunpack.c.l.bf16 %v4475
          %v4616 = vunpack.c.h.bf16 %v4475
          %v4617 = vunpack.c.l.bf16 %v4476
          %v4618 = vunpack.c.h.bf16 %v4476
          %v4619 = vunpack.c.l.bf16 %v4477
          %v4620 = vunpack.c.h.bf16 %v4477
          %v4621 = vunpack.c.l.bf16 %v4478
          %v4622 = vunpack.c.h.bf16 %v4478
          %v4623 = vunpack.c.l.bf16 %v4479
          %v4624 = vunpack.c.h.bf16 %v4479
          %v4625 = vunpack.c.l.bf16 %v4480
          %v4626 = vunpack.c.h.bf16 %v4480
          %v4627 = vunpack.c.l.bf16 %v4481
          %v4628 = vunpack.c.h.bf16 %v4481
          %v4629 = vunpack.c.l.bf16 %v4482
          %v4630 = vunpack.c.h.bf16 %v4482
          %v4631 = vunpack.c.l.bf16 %v4483
          %v4632 = vunpack.c.h.bf16 %v4483
          %v4633 = vunpack.c.l.bf16 %v4484
          %v4634 = vunpack.c.h.bf16 %v4484
          %v4635 = vunpack.c.l.bf16 %v4485
          %v4636 = vunpack.c.h.bf16 %v4485
          %v4637 = vunpack.c.l.bf16 %v4486
          %v4638 = vunpack.c.h.bf16 %v4486
          %v4639 = vunpack.c.l.bf16 %v4487
          %v4640 = vunpack.c.h.bf16 %v4487
          %v4641 = vunpack.c.l.bf16 %v4488
          %v4642 = vunpack.c.h.bf16 %v4488
          %v4643 = vunpack.c.l.bf16 %v4489
          %v4644 = vunpack.c.h.bf16 %v4489
          %v4645 = vunpack.c.l.bf16 %v4490
          %v4646 = vunpack.c.h.bf16 %v4490
          %v4647 = vunpack.c.l.bf16 %v4491
          %v4648 = vunpack.c.h.bf16 %v4491
          %v4649 = vunpack.c.l.bf16 %v4492
          %v4650 = vunpack.c.h.bf16 %v4492
          %v4651 = vunpack.c.l.bf16 %v4493
          %v4652 = vunpack.c.h.bf16 %v4493
          %v4653 = vunpack.c.l.bf16 %v4494
          %v4654 = vunpack.c.h.bf16 %v4494
          %v4655 = vunpack.c.l.bf16 %v4495
          %v4656 = vunpack.c.h.bf16 %v4495
          %v4657 = vunpack.c.l.bf16 %v4496
          %v4658 = vunpack.c.h.bf16 %v4496
          %v4659 = vunpack.c.l.bf16 %v4497
          %v4660 = vunpack.c.h.bf16 %v4497
          %v4661 = vunpack.c.l.bf16 %v4498
          %v4662 = vunpack.c.h.bf16 %v4498
          %v4663 = vunpack.c.l.bf16 %v4499
          %v4664 = vunpack.c.h.bf16 %v4499
          %v4665 = vunpack.c.l.bf16 %v4500
          %v4666 = vunpack.c.h.bf16 %v4500
          %v4667 = vunpack.c.l.bf16 %v4501
          %v4668 = vunpack.c.h.bf16 %v4501
          %v4669 = vunpack.c.l.bf16 %v4502
          %v4670 = vunpack.c.h.bf16 %v4502
          %v4671 = vunpack.c.l.bf16 %v4503
          %v4672 = vunpack.c.h.bf16 %v4503
          %v4673 = vunpack.c.l.bf16 %v4504
          %v4674 = vunpack.c.h.bf16 %v4504
          %v4675 = vunpack.c.l.bf16 %v4505
          %v4676 = vunpack.c.h.bf16 %v4505
          %v4677 = vunpack.c.l.bf16 %v4506
          %v4678 = vunpack.c.h.bf16 %v4506
          %v4679 = vunpack.c.l.bf16 %v4507
          %v4680 = vunpack.c.h.bf16 %v4507
          %v4681 = vunpack.c.l.bf16 %v4508
          %v4682 = vunpack.c.h.bf16 %v4508
          %v4683 = vunpack.c.l.bf16 %v4509
          %v4684 = vunpack.c.h.bf16 %v4509
          %v4685 = vunpack.c.l.bf16 %v4510
          %v4686 = vunpack.c.h.bf16 %v4510
          %v4687 = vunpack.c.l.bf16 %v4511
          %v4688 = vunpack.c.h.bf16 %v4511
          %v4689 = vunpack.c.l.bf16 %v4512
          %v4690 = vunpack.c.h.bf16 %v4512
          %v4691 = vunpack.c.l.bf16 %v4513
          %v4692 = vunpack.c.h.bf16 %v4513
          %v4693 = vunpack.c.l.bf16 %v4514
          %v4694 = vunpack.c.h.bf16 %v4514
          %v4695 = vunpack.c.l.bf16 %v4515
          %v4696 = vunpack.c.h.bf16 %v4515
          %v4697 = vunpack.c.l.bf16 %v4516
          %v4698 = vunpack.c.h.bf16 %v4516
          %v4699 = vunpack.c.l.bf16 %v4517
          %v4700 = vunpack.c.h.bf16 %v4517
          %v4701 = vunpack.c.l.bf16 %v4518
          %v4702 = vunpack.c.h.bf16 %v4518
          %v4703 = vunpack.c.l.bf16 %v4519
          %v4704 = vunpack.c.h.bf16 %v4519
          %v4705 = vunpack.c.l.bf16 %v4520
          %v4706 = vunpack.c.h.bf16 %v4520
          %v4707 = vunpack.c.l.bf16 %v4521
          %v4708 = vunpack.c.h.bf16 %v4521
          %v4709 = vunpack.c.l.bf16 %v4522
          %v4710 = vunpack.c.h.bf16 %v4522
          %v4711 = vunpack.c.l.bf16 %v4523
          %v4712 = vunpack.c.h.bf16 %v4523
          %v4713 = vunpack.c.l.bf16 %v4524
          %v4714 = vunpack.c.h.bf16 %v4524
          %v4715 = vunpack.c.l.bf16 %v4525
          %v4716 = vunpack.c.h.bf16 %v4525
          %v4717 = vunpack.c.l.bf16 %v4526
          %v4718 = vunpack.c.h.bf16 %v4526
          %v4719 = vunpack.c.l.bf16 %v4527
          %v4720 = vunpack.c.h.bf16 %v4527
          %v4721 = vunpack.c.l.bf16 %v4528
          %v4722 = vunpack.c.h.bf16 %v4528
          %v4723 = vunpack.c.l.bf16 %v4529
          %v4724 = vunpack.c.h.bf16 %v4529
          %v4725 = vunpack.c.l.bf16 %v4530
          %v4726 = vunpack.c.h.bf16 %v4530
          %v4727 = vunpack.c.l.bf16 %v4531
          %v4728 = vunpack.c.h.bf16 %v4531
          %v4729 = vunpack.c.l.bf16 %v4532
          %v4730 = vunpack.c.h.bf16 %v4532
          %v4731 = vunpack.c.l.bf16 %v4533
          %v4732 = vunpack.c.h.bf16 %v4533
          %v4733 = vunpack.c.l.bf16 %v4534
          %v4734 = vunpack.c.h.bf16 %v4534
          %v4735 = vunpack.c.l.bf16 %v4535
          %v4736 = vunpack.c.h.bf16 %v4535
          %v4737 = vunpack.c.l.bf16 %v4536
          %v4738 = vunpack.c.h.bf16 %v4536
          %v4739 = vunpack.c.l.bf16 %v4537
          %v4740 = vunpack.c.h.bf16 %v4537
          %v4741 = vunpack.c.l.bf16 %v4538
          %v4742 = vunpack.c.h.bf16 %v4538
          %v4743 = vunpack.c.l.bf16 %v4539
          %v4744 = vunpack.c.h.bf16 %v4539
          %v4745 = vunpack.c.l.bf16 %v4540
          %v4746 = vunpack.c.h.bf16 %v4540
          %v4747 = vunpack.c.l.bf16 %v4541
          %v4748 = vunpack.c.h.bf16 %v4541
          %v4749 = vunpack.c.l.bf16 %v4542
          %v4750 = vunpack.c.h.bf16 %v4542
          %v4751 = vunpack.c.l.bf16 %v4543
          %v4752 = vunpack.c.h.bf16 %v4543
          %v4753 = vunpack.c.l.bf16 %v4544
          %v4754 = vunpack.c.h.bf16 %v4544
          %v4755 = vunpack.c.l.bf16 %v4545
          %v4756 = vunpack.c.h.bf16 %v4545
          %v4757 = vunpack.c.l.bf16 %v4546
          %v4758 = vunpack.c.h.bf16 %v4546
          %v4759 = vunpack.c.l.bf16 %v4547
          %v4760 = vunpack.c.h.bf16 %v4547
          %v4761 = vunpack.c.l.bf16 %v4548
          %v4762 = vunpack.c.h.bf16 %v4548
          %v4763 = vunpack.c.l.bf16 %v4549
          %v4764 = vunpack.c.h.bf16 %v4549
          %v4765 = vunpack.c.l.bf16 %v4550
          %v4766 = vunpack.c.h.bf16 %v4550
          %v4767 = vunpack.c.l.bf16 %v4551
          %v4768 = vunpack.c.h.bf16 %v4551
          %v4769 = vunpack.c.l.bf16 %v4552
          %v4770 = vunpack.c.h.bf16 %v4552
          %v4771 = vunpack.c.l.bf16 %v4553
          %v4772 = vunpack.c.h.bf16 %v4553
          %v4773 = vunpack.c.l.bf16 %v4554
          %v4774 = vunpack.c.h.bf16 %v4554
          %v4775 = vunpack.c.l.bf16 %v4555
          %v4776 = vunpack.c.h.bf16 %v4555
          %v4777 = vunpack.c.l.bf16 %v4556
          %v4778 = vunpack.c.h.bf16 %v4556
          %v4779 = vunpack.c.l.bf16 %v4557
          %v4780 = vunpack.c.h.bf16 %v4557
          %v4781 = vunpack.c.l.bf16 %v4558
          %v4782 = vunpack.c.h.bf16 %v4558
          %v4783 = vunpack.c.l.bf16 %v4559
          %v4784 = vunpack.c.h.bf16 %v4559
          %v4785 = vunpack.c.l.bf16 %v4560
          %v4786 = vunpack.c.h.bf16 %v4560
          %v4787 = vunpack.c.l.bf16 %v4561
          %v4788 = vunpack.c.h.bf16 %v4561
          %v4789 = vunpack.c.l.bf16 %v4562
          %v4790 = vunpack.c.h.bf16 %v4562
          %v4791 = vunpack.c.l.bf16 %v4563
          %v4792 = vunpack.c.h.bf16 %v4563
          %v4793 = vunpack.c.l.bf16 %v4564
          %v4794 = vunpack.c.h.bf16 %v4564
          %v4795 = vunpack.c.l.bf16 %v4565
          %v4796 = vunpack.c.h.bf16 %v4565
          %v4797 = vunpack.c.l.bf16 %v4566
          %v4798 = vunpack.c.h.bf16 %v4566
          %v4799 = vunpack.c.l.bf16 %v4567
          %v4800 = vunpack.c.h.bf16 %v4567
          %v4801 = vunpack.c.l.bf16 %v4568
          %v4802 = vunpack.c.h.bf16 %v4568
          %v4803 = vunpack.c.l.bf16 %v4569
          %v4804 = vunpack.c.h.bf16 %v4569
          %v4805 = vunpack.c.l.bf16 %v4570
          %v4806 = vunpack.c.h.bf16 %v4570
          %v4807 = vunpack.c.l.bf16 %v4571
          %v4808 = vunpack.c.h.bf16 %v4571
          %v4809 = vunpack.c.l.bf16 %v4572
          %v4810 = vunpack.c.h.bf16 %v4572
          %v4811 = vunpack.c.l.bf16 %v4573
          %v4812 = vunpack.c.h.bf16 %v4573
          %v4813 = vunpack.c.l.bf16 %v4574
          %v4814 = vunpack.c.h.bf16 %v4574
          %v4815 = vunpack.c.l.bf16 %v4575
          %v4816 = vunpack.c.h.bf16 %v4575
          %v4817 = vunpack.c.l.bf16 %v4576
          %v4818 = vunpack.c.h.bf16 %v4576
          %v4819 = vunpack.c.l.bf16 %v4577
          %v4820 = vunpack.c.h.bf16 %v4577
          %v4821 = vunpack.c.l.bf16 %v4578
          %v4822 = vunpack.c.h.bf16 %v4578
          %v4823 = vunpack.c.l.bf16 %v4579
          %v4824 = vunpack.c.h.bf16 %v4579
          %v4825 = vunpack.c.l.bf16 %v4580
          %v4826 = vunpack.c.h.bf16 %v4580
          %v4827 = vunpack.c.l.bf16 %v4581
          %v4828 = vunpack.c.h.bf16 %v4581
          %v4829 = vunpack.c.l.bf16 %v4582
          %v4830 = vunpack.c.h.bf16 %v4582
          %v4831 = vunpack.c.l.bf16 %v4583
          %v4832 = vunpack.c.h.bf16 %v4583
          %v4833 = vunpack.c.l.bf16 %v4584
          %v4834 = vunpack.c.h.bf16 %v4584
          %v4835 = vunpack.c.l.bf16 %v4585
          %v4836 = vunpack.c.h.bf16 %v4585
          %v4837 = vunpack.c.l.bf16 %v4586
          %v4838 = vunpack.c.h.bf16 %v4586
          %v4839 = vunpack.c.l.bf16 %v4587
          %v4840 = vunpack.c.h.bf16 %v4587
          %v4841 = vunpack.c.l.bf16 %v4588
          %v4842 = vunpack.c.h.bf16 %v4588
          %v4843 = vunpack.c.l.bf16 %v4589
          %v4844 = vunpack.c.h.bf16 %v4589
          %v4845 = vunpack.c.l.bf16 %v4590
          %v4846 = vunpack.c.h.bf16 %v4590
          %v4847 = vld [vmem:[#allocation17] sm:$0xf]
          %v4849 = vlaneseq
          %v4850 = vshrl.u32 %v4849, 7
          %v4851 = vsub.s32 0, %v4850
          %v4852 = vrot.slane %v4847, %v4851
          %v4853 = vlaneseq
          %v4854 = vshrl.u32 %v4853, 7
          %v4855 = vsub.s32 1, %v4854
          %v4856 = vrot.slane %v4847, %v4855
          %v4857 = vlaneseq
          %v4858 = vshrl.u32 %v4857, 7
          %v4859 = vsub.s32 2, %v4858
          %v4860 = vrot.slane %v4847, %v4859
          %v4861 = vlaneseq
          %v4862 = vshrl.u32 %v4861, 7
          %v4863 = vsub.s32 3, %v4862
          %v4864 = vrot.slane %v4847, %v4863
          %4869 = vmatprep.subr.mxu0 %v4592
          %4870 = vmatpush1.msra.mxu0 %v4591
          %4871 = vmatprep.subr.mxu0 %v4596
          %4872 = vmatpush1.msra.mxu0 %v4595
          %4873 = vmatprep.subr.mxu0 %v4600
          %4874 = vmatpush1.msra.mxu0 %v4599
          %4875 = vmatprep.subr.mxu0 %v4604
          %4876 = vmatpush1.msra.mxu0 %v4603
          %4877 = vmatprep.subr.mxu0 %v4608
          %4878 = vmatpush1.msra.mxu0 %v4607
          %4879 = vmatprep.subr.mxu0 %v4612
          %4880 = vmatpush1.msra.mxu0 %v4611
          %4881 = vmatprep.subr.mxu0 %v4616
          %4882 = vmatpush1.msra.mxu0 %v4615
          %4883 = vmatprep.subr.mxu0 %v4620
          %4884 = vmatpush1.msra.mxu0 %v4619
          %4885 = vmatprep.subr.mxu0 %v4624
          %4886 = vmatpush1.msra.mxu0 %v4623
          %4887 = vmatprep.subr.mxu0 %v4628
          %4888 = vmatpush1.msra.mxu0 %v4627
          %4889 = vmatprep.subr.mxu0 %v4632
          %4890 = vmatpush1.msra.mxu0 %v4631
          %4891 = vmatprep.subr.mxu0 %v4636
          %4892 = vmatpush1.msra.mxu0 %v4635
          %4893 = vmatprep.subr.mxu0 %v4640
          %4894 = vmatpush1.msra.mxu0 %v4639
          %4895 = vmatprep.subr.mxu0 %v4644
          %4896 = vmatpush1.msra.mxu0 %v4643
          %4897 = vmatprep.subr.mxu0 %v4648
          %4898 = vmatpush1.msra.mxu0 %v4647
          %4899 = vmatprep.subr.mxu0 %v4652
          %4900 = vmatpush1.msra.mxu0 %v4651
          %4901 = vmatprep.subr.mxu0 %v4656
          %4902 = vmatpush1.msra.mxu0 %v4655
          %4903 = vmatprep.subr.mxu0 %v4660
          %4904 = vmatpush1.msra.mxu0 %v4659
          %4905 = vmatprep.subr.mxu0 %v4664
          %4906 = vmatpush1.msra.mxu0 %v4663
          %4907 = vmatprep.subr.mxu0 %v4668
          %4908 = vmatpush1.msra.mxu0 %v4667
          %4909 = vmatprep.subr.mxu0 %v4672
          %4910 = vmatpush1.msra.mxu0 %v4671
          %4911 = vmatprep.subr.mxu0 %v4676
          %4912 = vmatpush1.msra.mxu0 %v4675
          %4913 = vmatprep.subr.mxu0 %v4680
          %4914 = vmatpush1.msra.mxu0 %v4679
          %4915 = vmatprep.subr.mxu0 %v4684
          %4916 = vmatpush1.msra.mxu0 %v4683
          %4917 = vmatprep.subr.mxu0 %v4688
          %4918 = vmatpush1.msra.mxu0 %v4687
          %4919 = vmatprep.subr.mxu0 %v4692
          %4920 = vmatpush1.msra.mxu0 %v4691
          %4921 = vmatprep.subr.mxu0 %v4696
          %4922 = vmatpush1.msra.mxu0 %v4695
          %4923 = vmatprep.subr.mxu0 %v4700
          %4924 = vmatpush1.msra.mxu0 %v4699
          %4925 = vmatprep.subr.mxu0 %v4704
          %4926 = vmatpush1.msra.mxu0 %v4703
          %4927 = vmatprep.subr.mxu0 %v4708
          %4928 = vmatpush1.msra.mxu0 %v4707
          %4929 = vmatprep.subr.mxu0 %v4712
          %4930 = vmatpush1.msra.mxu0 %v4711
          %4931 = vmatprep.subr.mxu0 %v4716
          %4932 = vmatpush1.msra.mxu0 %v4715
          %4933 = vmatprep.mubr.f32.mxu0 %v4460
          %4934 = vmatmul.mubr.f32.gmra.mrb[0].mxu0 %v4459
          %v4935 = vpop.f32.mrb[0].mxu0
          %v4936 = vadd.f32 %v4852, %v4935
          %v4937 = vpop.f32.mrb[0].mxu0
          %v4938 = vadd.f32 %v4856, %v4937
          %4939 = vdwg.mxu0
          %4940 = vmatprep.subr.mxu0 %v4720
          %4941 = vmatpush1.msra.mxu0 %v4719
          %4942 = vmatprep.subr.mxu0 %v4724
          %4943 = vmatpush1.msra.mxu0 %v4723
          %4944 = vmatprep.subr.mxu0 %v4728
          %4945 = vmatpush1.msra.mxu0 %v4727
          %4946 = vmatprep.subr.mxu0 %v4732
          %4947 = vmatpush1.msra.mxu0 %v4731
          %4948 = vmatprep.subr.mxu0 %v4736
          %4949 = vmatpush1.msra.mxu0 %v4735
          %4950 = vmatprep.subr.mxu0 %v4740
          %4951 = vmatpush1.msra.mxu0 %v4739
          %4952 = vmatprep.subr.mxu0 %v4744
          %4953 = vmatpush1.msra.mxu0 %v4743
          %4954 = vmatprep.subr.mxu0 %v4748
          %4955 = vmatpush1.msra.mxu0 %v4747
          %4956 = vmatprep.subr.mxu0 %v4752
          %4957 = vmatpush1.msra.mxu0 %v4751
          %4958 = vmatprep.subr.mxu0 %v4756
          %4959 = vmatpush1.msra.mxu0 %v4755
          %4960 = vmatprep.subr.mxu0 %v4760
          %4961 = vmatpush1.msra.mxu0 %v4759
          %4962 = vmatprep.subr.mxu0 %v4764
          %4963 = vmatpush1.msra.mxu0 %v4763
          %4964 = vmatprep.subr.mxu0 %v4768
          %4965 = vmatpush1.msra.mxu0 %v4767
          %4966 = vmatprep.subr.mxu0 %v4772
          %4967 = vmatpush1.msra.mxu0 %v4771
          %4968 = vmatprep.subr.mxu0 %v4776
          %4969 = vmatpush1.msra.mxu0 %v4775
          %4970 = vmatprep.subr.mxu0 %v4780
          %4971 = vmatpush1.msra.mxu0 %v4779
          %4972 = vmatprep.subr.mxu0 %v4784
          %4973 = vmatpush1.msra.mxu0 %v4783
          %4974 = vmatprep.subr.mxu0 %v4788
          %4975 = vmatpush1.msra.mxu0 %v4787
          %4976 = vmatprep.subr.mxu0 %v4792
          %4977 = vmatpush1.msra.mxu0 %v4791
          %4978 = vmatprep.subr.mxu0 %v4796
          %4979 = vmatpush1.msra.mxu0 %v4795
          %4980 = vmatprep.subr.mxu0 %v4800
          %4981 = vmatpush1.msra.mxu0 %v4799
          %4982 = vmatprep.subr.mxu0 %v4804
          %4983 = vmatpush1.msra.mxu0 %v4803
          %4984 = vmatprep.subr.mxu0 %v4808
          %4985 = vmatpush1.msra.mxu0 %v4807
          %4986 = vmatprep.subr.mxu0 %v4812
          %4987 = vmatpush1.msra.mxu0 %v4811
          %4988 = vmatprep.subr.mxu0 %v4816
          %4989 = vmatpush1.msra.mxu0 %v4815
          %4990 = vmatprep.subr.mxu0 %v4820
          %4991 = vmatpush1.msra.mxu0 %v4819
          %4992 = vmatprep.subr.mxu0 %v4824
          %4993 = vmatpush1.msra.mxu0 %v4823
          %4994 = vmatprep.subr.mxu0 %v4828
          %4995 = vmatpush1.msra.mxu0 %v4827
          %4996 = vmatprep.subr.mxu0 %v4832
          %4997 = vmatpush1.msra.mxu0 %v4831
          %4998 = vmatprep.subr.mxu0 %v4836
          %4999 = vmatpush1.msra.mxu0 %v4835
          %5000 = vmatprep.subr.mxu0 %v4840
          %5001 = vmatpush1.msra.mxu0 %v4839
          %5002 = vmatprep.subr.mxu0 %v4844
          %5003 = vmatpush1.msra.mxu0 %v4843
          %5004 = vmatprep.mubr.f32.mxu0 %v4462
          %5005 = vmatmul.mubr.f32.gmra.mrb[0].mxu0 %v4461
          %v5006 = vpop.f32.mrb[0].mxu0
          %v5007 = vadd.f32 %v4936, %v5006
          %v5008 = vpop.f32.mrb[0].mxu0
          %v5009 = vadd.f32 %v4938, %v5008
          %5010 = vdwg.mxu0
          %5011 = vmatprep.subr.mxu0 %v4594
          %5012 = vmatpush1.msra.mxu0 %v4593
          %5013 = vmatprep.subr.mxu0 %v4598
          %5014 = vmatpush1.msra.mxu0 %v4597
          %5015 = vmatprep.subr.mxu0 %v4602
          %5016 = vmatpush1.msra.mxu0 %v4601
          %5017 = vmatprep.subr.mxu0 %v4606
          %5018 = vmatpush1.msra.mxu0 %v4605
          %5019 = vmatprep.subr.mxu0 %v4610
          %5020 = vmatpush1.msra.mxu0 %v4609
          %5021 = vmatprep.subr.mxu0 %v4614
          %5022 = vmatpush1.msra.mxu0 %v4613
          %5023 = vmatprep.subr.mxu0 %v4618
          %5024 = vmatpush1.msra.mxu0 %v4617
          %5025 = vmatprep.subr.mxu0 %v4622
          %5026 = vmatpush1.msra.mxu0 %v4621
          %5027 = vmatprep.subr.mxu0 %v4626
          %5028 = vmatpush1.msra.mxu0 %v4625
          %5029 = vmatprep.subr.mxu0 %v4630
          %5030 = vmatpush1.msra.mxu0 %v4629
          %5031 = vmatprep.subr.mxu0 %v4634
          %5032 = vmatpush1.msra.mxu0 %v4633
          %5033 = vmatprep.subr.mxu0 %v4638
          %5034 = vmatpush1.msra.mxu0 %v4637
          %5035 = vmatprep.subr.mxu0 %v4642
          %5036 = vmatpush1.msra.mxu0 %v4641
          %5037 = vmatprep.subr.mxu0 %v4646
          %5038 = vmatpush1.msra.mxu0 %v4645
          %5039 = vmatprep.subr.mxu0 %v4650
          %5040 = vmatpush1.msra.mxu0 %v4649
          %5041 = vmatprep.subr.mxu0 %v4654
          %5042 = vmatpush1.msra.mxu0 %v4653
          %5043 = vmatprep.subr.mxu0 %v4658
          %5044 = vmatpush1.msra.mxu0 %v4657
          %5045 = vmatprep.subr.mxu0 %v4662
          %5046 = vmatpush1.msra.mxu0 %v4661
          %5047 = vmatprep.subr.mxu0 %v4666
          %5048 = vmatpush1.msra.mxu0 %v4665
          %5049 = vmatprep.subr.mxu0 %v4670
          %5050 = vmatpush1.msra.mxu0 %v4669
          %5051 = vmatprep.subr.mxu0 %v4674
          %5052 = vmatpush1.msra.mxu0 %v4673
          %5053 = vmatprep.subr.mxu0 %v4678
          %5054 = vmatpush1.msra.mxu0 %v4677
          %5055 = vmatprep.subr.mxu0 %v4682
          %5056 = vmatpush1.msra.mxu0 %v4681
          %5057 = vmatprep.subr.mxu0 %v4686
          %5058 = vmatpush1.msra.mxu0 %v4685
          %5059 = vmatprep.subr.mxu0 %v4690
          %5060 = vmatpush1.msra.mxu0 %v4689
          %5061 = vmatprep.subr.mxu0 %v4694
          %5062 = vmatpush1.msra.mxu0 %v4693
          %5063 = vmatprep.subr.mxu0 %v4698
          %5064 = vmatpush1.msra.mxu0 %v4697
          %5065 = vmatprep.subr.mxu0 %v4702
          %5066 = vmatpush1.msra.mxu0 %v4701
          %5067 = vmatprep.subr.mxu0 %v4706
          %5068 = vmatpush1.msra.mxu0 %v4705
          %5069 = vmatprep.subr.mxu0 %v4710
          %5070 = vmatpush1.msra.mxu0 %v4709
          %5071 = vmatprep.subr.mxu0 %v4714
          %5072 = vmatpush1.msra.mxu0 %v4713
          %5073 = vmatprep.subr.mxu0 %v4718
          %5074 = vmatpush1.msra.mxu0 %v4717
          %5075 = vmatprep.mubr.f32.mxu0 %v4460
          %5076 = vmatmul.mubr.f32.gmra.mrb[0].mxu0 %v4459
          %v5077 = vpop.f32.mrb[0].mxu0
          %v5078 = vadd.f32 %v4860, %v5077
          %v5079 = vpop.f32.mrb[0].mxu0
          %v5080 = vadd.f32 %v4864, %v5079
          %5081 = vdwg.mxu0
          %5082 = vmatprep.subr.mxu0 %v4722
          %5083 = vmatpush1.msra.mxu0 %v4721
          %5084 = vmatprep.subr.mxu0 %v4726
          %5085 = vmatpush1.msra.mxu0 %v4725
          %5086 = vmatprep.subr.mxu0 %v4730
          %5087 = vmatpush1.msra.mxu0 %v4729
          %5088 = vmatprep.subr.mxu0 %v4734
          %5089 = vmatpush1.msra.mxu0 %v4733
          %5090 = vmatprep.subr.mxu0 %v4738
          %5091 = vmatpush1.msra.mxu0 %v4737
          %5092 = vmatprep.subr.mxu0 %v4742
          %5093 = vmatpush1.msra.mxu0 %v4741
          %5094 = vmatprep.subr.mxu0 %v4746
          %5095 = vmatpush1.msra.mxu0 %v4745
          %5096 = vmatprep.subr.mxu0 %v4750
          %5097 = vmatpush1.msra.mxu0 %v4749
          %5098 = vmatprep.subr.mxu0 %v4754
          %5099 = vmatpush1.msra.mxu0 %v4753
          %5100 = vmatprep.subr.mxu0 %v4758
          %5101 = vmatpush1.msra.mxu0 %v4757
          %5102 = vmatprep.subr.mxu0 %v4762
          %5103 = vmatpush1.msra.mxu0 %v4761
          %5104 = vmatprep.subr.mxu0 %v4766
          %5105 = vmatpush1.msra.mxu0 %v4765
          %5106 = vmatprep.subr.mxu0 %v4770
          %5107 = vmatpush1.msra.mxu0 %v4769
          %5108 = vmatprep.subr.mxu0 %v4774
          %5109 = vmatpush1.msra.mxu0 %v4773
          %5110 = vmatprep.subr.mxu0 %v4778
          %5111 = vmatpush1.msra.mxu0 %v4777
          %5112 = vmatprep.subr.mxu0 %v4782
          %5113 = vmatpush1.msra.mxu0 %v4781
          %5114 = vmatprep.subr.mxu0 %v4786
          %5115 = vmatpush1.msra.mxu0 %v4785
          %5116 = vmatprep.subr.mxu0 %v4790
          %5117 = vmatpush1.msra.mxu0 %v4789
          %5118 = vmatprep.subr.mxu0 %v4794
          %5119 = vmatpush1.msra.mxu0 %v4793
          %5120 = vmatprep.subr.mxu0 %v4798
          %5121 = vmatpush1.msra.mxu0 %v4797
          %5122 = vmatprep.subr.mxu0 %v4802
          %5123 = vmatpush1.msra.mxu0 %v4801
          %5124 = vmatprep.subr.mxu0 %v4806
          %5125 = vmatpush1.msra.mxu0 %v4805
          %5126 = vmatprep.subr.mxu0 %v4810
          %5127 = vmatpush1.msra.mxu0 %v4809
          %5128 = vmatprep.subr.mxu0 %v4814
          %5129 = vmatpush1.msra.mxu0 %v4813
          %5130 = vmatprep.subr.mxu0 %v4818
          %5131 = vmatpush1.msra.mxu0 %v4817
          %5132 = vmatprep.subr.mxu0 %v4822
          %5133 = vmatpush1.msra.mxu0 %v4821
          %5134 = vmatprep.subr.mxu0 %v4826
          %5135 = vmatpush1.msra.mxu0 %v4825
          %5136 = vmatprep.subr.mxu0 %v4830
          %5137 = vmatpush1.msra.mxu0 %v4829
          %5138 = vmatprep.subr.mxu0 %v4834
          %5139 = vmatpush1.msra.mxu0 %v4833
          %5140 = vmatprep.subr.mxu0 %v4838
          %5141 = vmatpush1.msra.mxu0 %v4837
          %5142 = vmatprep.subr.mxu0 %v4842
          %5143 = vmatpush1.msra.mxu0 %v4841
          %5144 = vmatprep.subr.mxu0 %v4846
          %5145 = vmatpush1.msra.mxu0 %v4845
          %5146 = vmatprep.mubr.f32.mxu0 %v4462
          %5147 = vmatmul.mubr.f32.gmra.mrb[0].mxu0 %v4461
          %v5148 = vpop.f32.mrb[0].mxu0
          %v5149 = vadd.f32 %v5078, %v5148
          %v5150 = vpop.f32.mrb[0].mxu0
          %v5151 = vadd.f32 %v5080, %v5150
          %5152 = vdwg.mxu0
          %v5153 = vmax.f32 %v5007, 0.0
          %v5154 = vmax.f32 %v5009, 0.0
          %v5155 = vmax.f32 %v5149, 0.0
          %v5156 = vmax.f32 %v5151, 0.0
          %v5157 = vld [vmem:[#allocation19] sm:$0xff]
          %v5158 = vld [vmem:[#allocation19 + $0x8] sm:$0xff]
          %v5159 = vld [vmem:[#allocation19 + $0x10] sm:$0xff]
          %v5160 = vld [vmem:[#allocation19 + $0x18] sm:$0xff]
          %v5161 = vld [vmem:[#allocation19 + $0x20] sm:$0xff]
          %v5162 = vld [vmem:[#allocation19 + $0x28] sm:$0xff]
          %v5163 = vld [vmem:[#allocation19 + $0x30] sm:$0xff]
          %v5164 = vld [vmem:[#allocation19 + $0x38] sm:$0xff]
          %v5165 = vld [vmem:[#allocation19 + $0x40] sm:$0xff]
          %v5166 = vld [vmem:[#allocation19 + $0x48] sm:$0xff]
          %v5167 = vld [vmem:[#allocation19 + $0x50] sm:$0xff]
          %v5168 = vld [vmem:[#allocation19 + $0x58] sm:$0xff]
          %v5169 = vld [vmem:[#allocation19 + $0x60] sm:$0xff]
          %v5170 = vld [vmem:[#allocation19 + $0x68] sm:$0xff]
          %v5171 = vld [vmem:[#allocation19 + $0x70] sm:$0xff]
          %v5172 = vld [vmem:[#allocation19 + $0x78] sm:$0xff]
          %v5173 = vld [vmem:[#allocation19 + $0x80] sm:$0xff]
          %v5174 = vld [vmem:[#allocation19 + $0x88] sm:$0xff]
          %v5175 = vld [vmem:[#allocation19 + $0x90] sm:$0xff]
          %v5176 = vld [vmem:[#allocation19 + $0x98] sm:$0xff]
          %v5177 = vld [vmem:[#allocation19 + $0xa0] sm:$0xff]
          %v5178 = vld [vmem:[#allocation19 + $0xa8] sm:$0xff]
          %v5179 = vld [vmem:[#allocation19 + $0xb0] sm:$0xff]
          %v5180 = vld [vmem:[#allocation19 + $0xb8] sm:$0xff]
          %v5181 = vld [vmem:[#allocation19 + $0xc0] sm:$0xff]
          %v5182 = vld [vmem:[#allocation19 + $0xc8] sm:$0xff]
          %v5183 = vld [vmem:[#allocation19 + $0xd0] sm:$0xff]
          %v5184 = vld [vmem:[#allocation19 + $0xd8] sm:$0xff]
          %v5185 = vld [vmem:[#allocation19 + $0xe0] sm:$0xff]
          %v5186 = vld [vmem:[#allocation19 + $0xe8] sm:$0xff]
          %v5187 = vld [vmem:[#allocation19 + $0xf0] sm:$0xff]
          %v5188 = vld [vmem:[#allocation19 + $0xf8] sm:$0xff]
          %v5189 = vld [vmem:[#allocation19 + $0x100] sm:$0xff]
          %v5190 = vld [vmem:[#allocation19 + $0x108] sm:$0xff]
          %v5191 = vld [vmem:[#allocation19 + $0x110] sm:$0xff]
          %v5192 = vld [vmem:[#allocation19 + $0x118] sm:$0xff]
          %v5193 = vld [vmem:[#allocation19 + $0x120] sm:$0xff]
          %v5194 = vld [vmem:[#allocation19 + $0x128] sm:$0xff]
          %v5195 = vld [vmem:[#allocation19 + $0x130] sm:$0xff]
          %v5196 = vld [vmem:[#allocation19 + $0x138] sm:$0xff]
          %v5197 = vld [vmem:[#allocation19 + $0x140] sm:$0xff]
          %v5198 = vld [vmem:[#allocation19 + $0x148] sm:$0xff]
          %v5199 = vld [vmem:[#allocation19 + $0x150] sm:$0xff]
          %v5200 = vld [vmem:[#allocation19 + $0x158] sm:$0xff]
          %v5201 = vld [vmem:[#allocation19 + $0x160] sm:$0xff]
          %v5202 = vld [vmem:[#allocation19 + $0x168] sm:$0xff]
          %v5203 = vld [vmem:[#allocation19 + $0x170] sm:$0xff]
          %v5204 = vld [vmem:[#allocation19 + $0x178] sm:$0xff]
          %v5205 = vld [vmem:[#allocation19 + $0x180] sm:$0xff]
          %v5206 = vld [vmem:[#allocation19 + $0x188] sm:$0xff]
          %v5207 = vld [vmem:[#allocation19 + $0x190] sm:$0xff]
          %v5208 = vld [vmem:[#allocation19 + $0x198] sm:$0xff]
          %v5209 = vld [vmem:[#allocation19 + $0x1a0] sm:$0xff]
          %v5210 = vld [vmem:[#allocation19 + $0x1a8] sm:$0xff]
          %v5211 = vld [vmem:[#allocation19 + $0x1b0] sm:$0xff]
          %v5212 = vld [vmem:[#allocation19 + $0x1b8] sm:$0xff]
          %v5213 = vld [vmem:[#allocation19 + $0x1c0] sm:$0xff]
          %v5214 = vld [vmem:[#allocation19 + $0x1c8] sm:$0xff]
          %v5215 = vld [vmem:[#allocation19 + $0x1d0] sm:$0xff]
          %v5216 = vld [vmem:[#allocation19 + $0x1d8] sm:$0xff]
          %v5217 = vld [vmem:[#allocation19 + $0x1e0] sm:$0xff]
          %v5218 = vld [vmem:[#allocation19 + $0x1e8] sm:$0xff]
          %v5219 = vld [vmem:[#allocation19 + $0x1f0] sm:$0xff]
          %v5220 = vld [vmem:[#allocation19 + $0x1f8] sm:$0xff]
          %v5221 = vld [vmem:[#allocation19 + $0x200] sm:$0xff]
          %v5222 = vld [vmem:[#allocation19 + $0x208] sm:$0xff]
          %v5223 = vld [vmem:[#allocation19 + $0x210] sm:$0xff]
          %v5224 = vld [vmem:[#allocation19 + $0x218] sm:$0xff]
          %v5225 = vld [vmem:[#allocation19 + $0x220] sm:$0xff]
          %v5226 = vld [vmem:[#allocation19 + $0x228] sm:$0xff]
          %v5227 = vld [vmem:[#allocation19 + $0x230] sm:$0xff]
          %v5228 = vld [vmem:[#allocation19 + $0x238] sm:$0xff]
          %v5229 = vld [vmem:[#allocation19 + $0x240] sm:$0xff]
          %v5230 = vld [vmem:[#allocation19 + $0x248] sm:$0xff]
          %v5231 = vld [vmem:[#allocation19 + $0x250] sm:$0xff]
          %v5232 = vld [vmem:[#allocation19 + $0x258] sm:$0xff]
          %v5233 = vld [vmem:[#allocation19 + $0x260] sm:$0xff]
          %v5234 = vld [vmem:[#allocation19 + $0x268] sm:$0xff]
          %v5235 = vld [vmem:[#allocation19 + $0x270] sm:$0xff]
          %v5236 = vld [vmem:[#allocation19 + $0x278] sm:$0xff]
          %v5237 = vld [vmem:[#allocation19 + $0x280] sm:$0xff]
          %v5238 = vld [vmem:[#allocation19 + $0x288] sm:$0xff]
          %v5239 = vld [vmem:[#allocation19 + $0x290] sm:$0xff]
          %v5240 = vld [vmem:[#allocation19 + $0x298] sm:$0xff]
          %v5241 = vld [vmem:[#allocation19 + $0x2a0] sm:$0xff]
          %v5242 = vld [vmem:[#allocation19 + $0x2a8] sm:$0xff]
          %v5243 = vld [vmem:[#allocation19 + $0x2b0] sm:$0xff]
          %v5244 = vld [vmem:[#allocation19 + $0x2b8] sm:$0xff]
          %v5245 = vld [vmem:[#allocation19 + $0x2c0] sm:$0xff]
          %v5246 = vld [vmem:[#allocation19 + $0x2c8] sm:$0xff]
          %v5247 = vld [vmem:[#allocation19 + $0x2d0] sm:$0xff]
          %v5248 = vld [vmem:[#allocation19 + $0x2d8] sm:$0xff]
          %v5249 = vld [vmem:[#allocation19 + $0x2e0] sm:$0xff]
          %v5250 = vld [vmem:[#allocation19 + $0x2e8] sm:$0xff]
          %v5251 = vld [vmem:[#allocation19 + $0x2f0] sm:$0xff]
          %v5252 = vld [vmem:[#allocation19 + $0x2f8] sm:$0xff]
          %v5253 = vld [vmem:[#allocation19 + $0x300] sm:$0xff]
          %v5254 = vld [vmem:[#allocation19 + $0x308] sm:$0xff]
          %v5255 = vld [vmem:[#allocation19 + $0x310] sm:$0xff]
          %v5256 = vld [vmem:[#allocation19 + $0x318] sm:$0xff]
          %v5257 = vld [vmem:[#allocation19 + $0x320] sm:$0xff]
          %v5258 = vld [vmem:[#allocation19 + $0x328] sm:$0xff]
          %v5259 = vld [vmem:[#allocation19 + $0x330] sm:$0xff]
          %v5260 = vld [vmem:[#allocation19 + $0x338] sm:$0xff]
          %v5261 = vld [vmem:[#allocation19 + $0x340] sm:$0xff]
          %v5262 = vld [vmem:[#allocation19 + $0x348] sm:$0xff]
          %v5263 = vld [vmem:[#allocation19 + $0x350] sm:$0xff]
          %v5264 = vld [vmem:[#allocation19 + $0x358] sm:$0xff]
          %v5265 = vld [vmem:[#allocation19 + $0x360] sm:$0xff]
          %v5266 = vld [vmem:[#allocation19 + $0x368] sm:$0xff]
          %v5267 = vld [vmem:[#allocation19 + $0x370] sm:$0xff]
          %v5268 = vld [vmem:[#allocation19 + $0x378] sm:$0xff]
          %v5269 = vld [vmem:[#allocation19 + $0x380] sm:$0xff]
          %v5270 = vld [vmem:[#allocation19 + $0x388] sm:$0xff]
          %v5271 = vld [vmem:[#allocation19 + $0x390] sm:$0xff]
          %v5272 = vld [vmem:[#allocation19 + $0x398] sm:$0xff]
          %v5273 = vld [vmem:[#allocation19 + $0x3a0] sm:$0xff]
          %v5274 = vld [vmem:[#allocation19 + $0x3a8] sm:$0xff]
          %v5275 = vld [vmem:[#allocation19 + $0x3b0] sm:$0xff]
          %v5276 = vld [vmem:[#allocation19 + $0x3b8] sm:$0xff]
          %v5277 = vld [vmem:[#allocation19 + $0x3c0] sm:$0xff]
          %v5278 = vld [vmem:[#allocation19 + $0x3c8] sm:$0xff]
          %v5279 = vld [vmem:[#allocation19 + $0x3d0] sm:$0xff]
          %v5280 = vld [vmem:[#allocation19 + $0x3d8] sm:$0xff]
          %v5281 = vld [vmem:[#allocation19 + $0x3e0] sm:$0xff]
          %v5282 = vld [vmem:[#allocation19 + $0x3e8] sm:$0xff]
          %v5283 = vld [vmem:[#allocation19 + $0x3f0] sm:$0xff]
          %v5284 = vld [vmem:[#allocation19 + $0x3f8] sm:$0xff]
          %v5285 = vunpack.c.l.bf16 %v5157
          %v5286 = vunpack.c.h.bf16 %v5157
          %v5287 = vunpack.c.l.bf16 %v5158
          %v5288 = vunpack.c.h.bf16 %v5158
          %v5289 = vunpack.c.l.bf16 %v5159
          %v5290 = vunpack.c.h.bf16 %v5159
          %v5291 = vunpack.c.l.bf16 %v5160
          %v5292 = vunpack.c.h.bf16 %v5160
          %v5293 = vunpack.c.l.bf16 %v5161
          %v5294 = vunpack.c.h.bf16 %v5161
          %v5295 = vunpack.c.l.bf16 %v5162
          %v5296 = vunpack.c.h.bf16 %v5162
          %v5297 = vunpack.c.l.bf16 %v5163
          %v5298 = vunpack.c.h.bf16 %v5163
          %v5299 = vunpack.c.l.bf16 %v5164
          %v5300 = vunpack.c.h.bf16 %v5164
          %v5301 = vunpack.c.l.bf16 %v5165
          %v5302 = vunpack.c.h.bf16 %v5165
          %v5303 = vunpack.c.l.bf16 %v5166
          %v5304 = vunpack.c.h.bf16 %v5166
          %v5305 = vunpack.c.l.bf16 %v5167
          %v5306 = vunpack.c.h.bf16 %v5167
          %v5307 = vunpack.c.l.bf16 %v5168
          %v5308 = vunpack.c.h.bf16 %v5168
          %v5309 = vunpack.c.l.bf16 %v5169
          %v5310 = vunpack.c.h.bf16 %v5169
          %v5311 = vunpack.c.l.bf16 %v5170
          %v5312 = vunpack.c.h.bf16 %v5170
          %v5313 = vunpack.c.l.bf16 %v5171
          %v5314 = vunpack.c.h.bf16 %v5171
          %v5315 = vunpack.c.l.bf16 %v5172
          %v5316 = vunpack.c.h.bf16 %v5172
          %v5317 = vunpack.c.l.bf16 %v5173
          %v5318 = vunpack.c.h.bf16 %v5173
          %v5319 = vunpack.c.l.bf16 %v5174
          %v5320 = vunpack.c.h.bf16 %v5174
          %v5321 = vunpack.c.l.bf16 %v5175
          %v5322 = vunpack.c.h.bf16 %v5175
          %v5323 = vunpack.c.l.bf16 %v5176
          %v5324 = vunpack.c.h.bf16 %v5176
          %v5325 = vunpack.c.l.bf16 %v5177
          %v5326 = vunpack.c.h.bf16 %v5177
          %v5327 = vunpack.c.l.bf16 %v5178
          %v5328 = vunpack.c.h.bf16 %v5178
          %v5329 = vunpack.c.l.bf16 %v5179
          %v5330 = vunpack.c.h.bf16 %v5179
          %v5331 = vunpack.c.l.bf16 %v5180
          %v5332 = vunpack.c.h.bf16 %v5180
          %v5333 = vunpack.c.l.bf16 %v5181
          %v5334 = vunpack.c.h.bf16 %v5181
          %v5335 = vunpack.c.l.bf16 %v5182
          %v5336 = vunpack.c.h.bf16 %v5182
          %v5337 = vunpack.c.l.bf16 %v5183
          %v5338 = vunpack.c.h.bf16 %v5183
          %v5339 = vunpack.c.l.bf16 %v5184
          %v5340 = vunpack.c.h.bf16 %v5184
          %v5341 = vunpack.c.l.bf16 %v5185
          %v5342 = vunpack.c.h.bf16 %v5185
          %v5343 = vunpack.c.l.bf16 %v5186
          %v5344 = vunpack.c.h.bf16 %v5186
          %v5345 = vunpack.c.l.bf16 %v5187
          %v5346 = vunpack.c.h.bf16 %v5187
          %v5347 = vunpack.c.l.bf16 %v5188
          %v5348 = vunpack.c.h.bf16 %v5188
          %v5349 = vunpack.c.l.bf16 %v5189
          %v5350 = vunpack.c.h.bf16 %v5189
          %v5351 = vunpack.c.l.bf16 %v5190
          %v5352 = vunpack.c.h.bf16 %v5190
          %v5353 = vunpack.c.l.bf16 %v5191
          %v5354 = vunpack.c.h.bf16 %v5191
          %v5355 = vunpack.c.l.bf16 %v5192
          %v5356 = vunpack.c.h.bf16 %v5192
          %v5357 = vunpack.c.l.bf16 %v5193
          %v5358 = vunpack.c.h.bf16 %v5193
          %v5359 = vunpack.c.l.bf16 %v5194
          %v5360 = vunpack.c.h.bf16 %v5194
          %v5361 = vunpack.c.l.bf16 %v5195
          %v5362 = vunpack.c.h.bf16 %v5195
          %v5363 = vunpack.c.l.bf16 %v5196
          %v5364 = vunpack.c.h.bf16 %v5196
          %v5365 = vunpack.c.l.bf16 %v5197
          %v5366 = vunpack.c.h.bf16 %v5197
          %v5367 = vunpack.c.l.bf16 %v5198
          %v5368 = vunpack.c.h.bf16 %v5198
          %v5369 = vunpack.c.l.bf16 %v5199
          %v5370 = vunpack.c.h.bf16 %v5199
          %v5371 = vunpack.c.l.bf16 %v5200
          %v5372 = vunpack.c.h.bf16 %v5200
          %v5373 = vunpack.c.l.bf16 %v5201
          %v5374 = vunpack.c.h.bf16 %v5201
          %v5375 = vunpack.c.l.bf16 %v5202
          %v5376 = vunpack.c.h.bf16 %v5202
          %v5377 = vunpack.c.l.bf16 %v5203
          %v5378 = vunpack.c.h.bf16 %v5203
          %v5379 = vunpack.c.l.bf16 %v5204
          %v5380 = vunpack.c.h.bf16 %v5204
          %v5381 = vunpack.c.l.bf16 %v5205
          %v5382 = vunpack.c.h.bf16 %v5205
          %v5383 = vunpack.c.l.bf16 %v5206
          %v5384 = vunpack.c.h.bf16 %v5206
          %v5385 = vunpack.c.l.bf16 %v5207
          %v5386 = vunpack.c.h.bf16 %v5207
          %v5387 = vunpack.c.l.bf16 %v5208
          %v5388 = vunpack.c.h.bf16 %v5208
          %v5389 = vunpack.c.l.bf16 %v5209
          %v5390 = vunpack.c.h.bf16 %v5209
          %v5391 = vunpack.c.l.bf16 %v5210
          %v5392 = vunpack.c.h.bf16 %v5210
          %v5393 = vunpack.c.l.bf16 %v5211
          %v5394 = vunpack.c.h.bf16 %v5211
          %v5395 = vunpack.c.l.bf16 %v5212
          %v5396 = vunpack.c.h.bf16 %v5212
          %v5397 = vunpack.c.l.bf16 %v5213
          %v5398 = vunpack.c.h.bf16 %v5213
          %v5399 = vunpack.c.l.bf16 %v5214
          %v5400 = vunpack.c.h.bf16 %v5214
          %v5401 = vunpack.c.l.bf16 %v5215
          %v5402 = vunpack.c.h.bf16 %v5215
          %v5403 = vunpack.c.l.bf16 %v5216
          %v5404 = vunpack.c.h.bf16 %v5216
          %v5405 = vunpack.c.l.bf16 %v5217
          %v5406 = vunpack.c.h.bf16 %v5217
          %v5407 = vunpack.c.l.bf16 %v5218
          %v5408 = vunpack.c.h.bf16 %v5218
          %v5409 = vunpack.c.l.bf16 %v5219
          %v5410 = vunpack.c.h.bf16 %v5219
          %v5411 = vunpack.c.l.bf16 %v5220
          %v5412 = vunpack.c.h.bf16 %v5220
          %v5413 = vunpack.c.l.bf16 %v5221
          %v5414 = vunpack.c.h.bf16 %v5221
          %v5415 = vunpack.c.l.bf16 %v5222
          %v5416 = vunpack.c.h.bf16 %v5222
          %v5417 = vunpack.c.l.bf16 %v5223
          %v5418 = vunpack.c.h.bf16 %v5223
          %v5419 = vunpack.c.l.bf16 %v5224
          %v5420 = vunpack.c.h.bf16 %v5224
          %v5421 = vunpack.c.l.bf16 %v5225
          %v5422 = vunpack.c.h.bf16 %v5225
          %v5423 = vunpack.c.l.bf16 %v5226
          %v5424 = vunpack.c.h.bf16 %v5226
          %v5425 = vunpack.c.l.bf16 %v5227
          %v5426 = vunpack.c.h.bf16 %v5227
          %v5427 = vunpack.c.l.bf16 %v5228
          %v5428 = vunpack.c.h.bf16 %v5228
          %v5429 = vunpack.c.l.bf16 %v5229
          %v5430 = vunpack.c.h.bf16 %v5229
          %v5431 = vunpack.c.l.bf16 %v5230
          %v5432 = vunpack.c.h.bf16 %v5230
          %v5433 = vunpack.c.l.bf16 %v5231
          %v5434 = vunpack.c.h.bf16 %v5231
          %v5435 = vunpack.c.l.bf16 %v5232
          %v5436 = vunpack.c.h.bf16 %v5232
          %v5437 = vunpack.c.l.bf16 %v5233
          %v5438 = vunpack.c.h.bf16 %v5233
          %v5439 = vunpack.c.l.bf16 %v5234
          %v5440 = vunpack.c.h.bf16 %v5234
          %v5441 = vunpack.c.l.bf16 %v5235
          %v5442 = vunpack.c.h.bf16 %v5235
          %v5443 = vunpack.c.l.bf16 %v5236
          %v5444 = vunpack.c.h.bf16 %v5236
          %v5445 = vunpack.c.l.bf16 %v5237
          %v5446 = vunpack.c.h.bf16 %v5237
          %v5447 = vunpack.c.l.bf16 %v5238
          %v5448 = vunpack.c.h.bf16 %v5238
          %v5449 = vunpack.c.l.bf16 %v5239
          %v5450 = vunpack.c.h.bf16 %v5239
          %v5451 = vunpack.c.l.bf16 %v5240
          %v5452 = vunpack.c.h.bf16 %v5240
          %v5453 = vunpack.c.l.bf16 %v5241
          %v5454 = vunpack.c.h.bf16 %v5241
          %v5455 = vunpack.c.l.bf16 %v5242
          %v5456 = vunpack.c.h.bf16 %v5242
          %v5457 = vunpack.c.l.bf16 %v5243
          %v5458 = vunpack.c.h.bf16 %v5243
          %v5459 = vunpack.c.l.bf16 %v5244
          %v5460 = vunpack.c.h.bf16 %v5244
          %v5461 = vunpack.c.l.bf16 %v5245
          %v5462 = vunpack.c.h.bf16 %v5245
          %v5463 = vunpack.c.l.bf16 %v5246
          %v5464 = vunpack.c.h.bf16 %v5246
          %v5465 = vunpack.c.l.bf16 %v5247
          %v5466 = vunpack.c.h.bf16 %v5247
          %v5467 = vunpack.c.l.bf16 %v5248
          %v5468 = vunpack.c.h.bf16 %v5248
          %v5469 = vunpack.c.l.bf16 %v5249
          %v5470 = vunpack.c.h.bf16 %v5249
          %v5471 = vunpack.c.l.bf16 %v5250
          %v5472 = vunpack.c.h.bf16 %v5250
          %v5473 = vunpack.c.l.bf16 %v5251
          %v5474 = vunpack.c.h.bf16 %v5251
          %v5475 = vunpack.c.l.bf16 %v5252
          %v5476 = vunpack.c.h.bf16 %v5252
          %v5477 = vunpack.c.l.bf16 %v5253
          %v5478 = vunpack.c.h.bf16 %v5253
          %v5479 = vunpack.c.l.bf16 %v5254
          %v5480 = vunpack.c.h.bf16 %v5254
          %v5481 = vunpack.c.l.bf16 %v5255
          %v5482 = vunpack.c.h.bf16 %v5255
          %v5483 = vunpack.c.l.bf16 %v5256
          %v5484 = vunpack.c.h.bf16 %v5256
          %v5485 = vunpack.c.l.bf16 %v5257
          %v5486 = vunpack.c.h.bf16 %v5257
          %v5487 = vunpack.c.l.bf16 %v5258
          %v5488 = vunpack.c.h.bf16 %v5258
          %v5489 = vunpack.c.l.bf16 %v5259
          %v5490 = vunpack.c.h.bf16 %v5259
          %v5491 = vunpack.c.l.bf16 %v5260
          %v5492 = vunpack.c.h.bf16 %v5260
          %v5493 = vunpack.c.l.bf16 %v5261
          %v5494 = vunpack.c.h.bf16 %v5261
          %v5495 = vunpack.c.l.bf16 %v5262
          %v5496 = vunpack.c.h.bf16 %v5262
          %v5497 = vunpack.c.l.bf16 %v5263
          %v5498 = vunpack.c.h.bf16 %v5263
          %v5499 = vunpack.c.l.bf16 %v5264
          %v5500 = vunpack.c.h.bf16 %v5264
          %v5501 = vunpack.c.l.bf16 %v5265
          %v5502 = vunpack.c.h.bf16 %v5265
          %v5503 = vunpack.c.l.bf16 %v5266
          %v5504 = vunpack.c.h.bf16 %v5266
          %v5505 = vunpack.c.l.bf16 %v5267
          %v5506 = vunpack.c.h.bf16 %v5267
          %v5507 = vunpack.c.l.bf16 %v5268
          %v5508 = vunpack.c.h.bf16 %v5268
          %v5509 = vunpack.c.l.bf16 %v5269
          %v5510 = vunpack.c.h.bf16 %v5269
          %v5511 = vunpack.c.l.bf16 %v5270
          %v5512 = vunpack.c.h.bf16 %v5270
          %v5513 = vunpack.c.l.bf16 %v5271
          %v5514 = vunpack.c.h.bf16 %v5271
          %v5515 = vunpack.c.l.bf16 %v5272
          %v5516 = vunpack.c.h.bf16 %v5272
          %v5517 = vunpack.c.l.bf16 %v5273
          %v5518 = vunpack.c.h.bf16 %v5273
          %v5519 = vunpack.c.l.bf16 %v5274
          %v5520 = vunpack.c.h.bf16 %v5274
          %v5521 = vunpack.c.l.bf16 %v5275
          %v5522 = vunpack.c.h.bf16 %v5275
          %v5523 = vunpack.c.l.bf16 %v5276
          %v5524 = vunpack.c.h.bf16 %v5276
          %v5525 = vunpack.c.l.bf16 %v5277
          %v5526 = vunpack.c.h.bf16 %v5277
          %v5527 = vunpack.c.l.bf16 %v5278
          %v5528 = vunpack.c.h.bf16 %v5278
          %v5529 = vunpack.c.l.bf16 %v5279
          %v5530 = vunpack.c.h.bf16 %v5279
          %v5531 = vunpack.c.l.bf16 %v5280
          %v5532 = vunpack.c.h.bf16 %v5280
          %v5533 = vunpack.c.l.bf16 %v5281
          %v5534 = vunpack.c.h.bf16 %v5281
          %v5535 = vunpack.c.l.bf16 %v5282
          %v5536 = vunpack.c.h.bf16 %v5282
          %v5537 = vunpack.c.l.bf16 %v5283
          %v5538 = vunpack.c.h.bf16 %v5283
          %v5539 = vunpack.c.l.bf16 %v5284
          %v5540 = vunpack.c.h.bf16 %v5284
          %v5541 = vld [vmem:[#allocation20] sm:$0xf]
          %v5543 = vlaneseq
          %v5544 = vshrl.u32 %v5543, 7
          %v5545 = vsub.s32 0, %v5544
          %v5546 = vrot.slane %v5541, %v5545
          %v5547 = vlaneseq
          %v5548 = vshrl.u32 %v5547, 7
          %v5549 = vsub.s32 1, %v5548
          %v5550 = vrot.slane %v5541, %v5549
          %v5551 = vlaneseq
          %v5552 = vshrl.u32 %v5551, 7
          %v5553 = vsub.s32 2, %v5552
          %v5554 = vrot.slane %v5541, %v5553
          %v5555 = vlaneseq
          %v5556 = vshrl.u32 %v5555, 7
          %v5557 = vsub.s32 3, %v5556
          %v5558 = vrot.slane %v5541, %v5557
          %5563 = vmatprep.subr.mxu0 %v5286
          %5564 = vmatpush1.msra.mxu0 %v5285
          %5565 = vmatprep.subr.mxu0 %v5290
          %5566 = vmatpush1.msra.mxu0 %v5289
          %5567 = vmatprep.subr.mxu0 %v5294
          %5568 = vmatpush1.msra.mxu0 %v5293
          %5569 = vmatprep.subr.mxu0 %v5298
          %5570 = vmatpush1.msra.mxu0 %v5297
          %5571 = vmatprep.subr.mxu0 %v5302
          %5572 = vmatpush1.msra.mxu0 %v5301
          %5573 = vmatprep.subr.mxu0 %v5306
          %5574 = vmatpush1.msra.mxu0 %v5305
          %5575 = vmatprep.subr.mxu0 %v5310
          %5576 = vmatpush1.msra.mxu0 %v5309
          %5577 = vmatprep.subr.mxu0 %v5314
          %5578 = vmatpush1.msra.mxu0 %v5313
          %5579 = vmatprep.subr.mxu0 %v5318
          %5580 = vmatpush1.msra.mxu0 %v5317
          %5581 = vmatprep.subr.mxu0 %v5322
          %5582 = vmatpush1.msra.mxu0 %v5321
          %5583 = vmatprep.subr.mxu0 %v5326
          %5584 = vmatpush1.msra.mxu0 %v5325
          %5585 = vmatprep.subr.mxu0 %v5330
          %5586 = vmatpush1.msra.mxu0 %v5329
          %5587 = vmatprep.subr.mxu0 %v5334
          %5588 = vmatpush1.msra.mxu0 %v5333
          %5589 = vmatprep.subr.mxu0 %v5338
          %5590 = vmatpush1.msra.mxu0 %v5337
          %5591 = vmatprep.subr.mxu0 %v5342
          %5592 = vmatpush1.msra.mxu0 %v5341
          %5593 = vmatprep.subr.mxu0 %v5346
          %5594 = vmatpush1.msra.mxu0 %v5345
          %5595 = vmatprep.subr.mxu0 %v5350
          %5596 = vmatpush1.msra.mxu0 %v5349
          %5597 = vmatprep.subr.mxu0 %v5354
          %5598 = vmatpush1.msra.mxu0 %v5353
          %5599 = vmatprep.subr.mxu0 %v5358
          %5600 = vmatpush1.msra.mxu0 %v5357
          %5601 = vmatprep.subr.mxu0 %v5362
          %5602 = vmatpush1.msra.mxu0 %v5361
          %5603 = vmatprep.subr.mxu0 %v5366
          %5604 = vmatpush1.msra.mxu0 %v5365
          %5605 = vmatprep.subr.mxu0 %v5370
          %5606 = vmatpush1.msra.mxu0 %v5369
          %5607 = vmatprep.subr.mxu0 %v5374
          %5608 = vmatpush1.msra.mxu0 %v5373
          %5609 = vmatprep.subr.mxu0 %v5378
          %5610 = vmatpush1.msra.mxu0 %v5377
          %5611 = vmatprep.subr.mxu0 %v5382
          %5612 = vmatpush1.msra.mxu0 %v5381
          %5613 = vmatprep.subr.mxu0 %v5386
          %5614 = vmatpush1.msra.mxu0 %v5385
          %5615 = vmatprep.subr.mxu0 %v5390
          %5616 = vmatpush1.msra.mxu0 %v5389
          %5617 = vmatprep.subr.mxu0 %v5394
          %5618 = vmatpush1.msra.mxu0 %v5393
          %5619 = vmatprep.subr.mxu0 %v5398
          %5620 = vmatpush1.msra.mxu0 %v5397
          %5621 = vmatprep.subr.mxu0 %v5402
          %5622 = vmatpush1.msra.mxu0 %v5401
          %5623 = vmatprep.subr.mxu0 %v5406
          %5624 = vmatpush1.msra.mxu0 %v5405
          %5625 = vmatprep.subr.mxu0 %v5410
          %5626 = vmatpush1.msra.mxu0 %v5409
          %5627 = vmatprep.mubr.f32.mxu0 %v5154
          %5628 = vmatmul.mubr.f32.gmra.mrb[0].mxu0 %v5153
          %v5629 = vpop.f32.mrb[0].mxu0
          %v5630 = vadd.f32 %v5546, %v5629
          %v5631 = vpop.f32.mrb[0].mxu0
          %v5632 = vadd.f32 %v5550, %v5631
          %5633 = vdwg.mxu0
          %5634 = vmatprep.subr.mxu0 %v5414
          %5635 = vmatpush1.msra.mxu0 %v5413
          %5636 = vmatprep.subr.mxu0 %v5418
          %5637 = vmatpush1.msra.mxu0 %v5417
          %5638 = vmatprep.subr.mxu0 %v5422
          %5639 = vmatpush1.msra.mxu0 %v5421
          %5640 = vmatprep.subr.mxu0 %v5426
          %5641 = vmatpush1.msra.mxu0 %v5425
          %5642 = vmatprep.subr.mxu0 %v5430
          %5643 = vmatpush1.msra.mxu0 %v5429
          %5644 = vmatprep.subr.mxu0 %v5434
          %5645 = vmatpush1.msra.mxu0 %v5433
          %5646 = vmatprep.subr.mxu0 %v5438
          %5647 = vmatpush1.msra.mxu0 %v5437
          %5648 = vmatprep.subr.mxu0 %v5442
          %5649 = vmatpush1.msra.mxu0 %v5441
          %5650 = vmatprep.subr.mxu0 %v5446
          %5651 = vmatpush1.msra.mxu0 %v5445
          %5652 = vmatprep.subr.mxu0 %v5450
          %5653 = vmatpush1.msra.mxu0 %v5449
          %5654 = vmatprep.subr.mxu0 %v5454
          %5655 = vmatpush1.msra.mxu0 %v5453
          %5656 = vmatprep.subr.mxu0 %v5458
          %5657 = vmatpush1.msra.mxu0 %v5457
          %5658 = vmatprep.subr.mxu0 %v5462
          %5659 = vmatpush1.msra.mxu0 %v5461
          %5660 = vmatprep.subr.mxu0 %v5466
          %5661 = vmatpush1.msra.mxu0 %v5465
          %5662 = vmatprep.subr.mxu0 %v5470
          %5663 = vmatpush1.msra.mxu0 %v5469
          %5664 = vmatprep.subr.mxu0 %v5474
          %5665 = vmatpush1.msra.mxu0 %v5473
          %5666 = vmatprep.subr.mxu0 %v5478
          %5667 = vmatpush1.msra.mxu0 %v5477
          %5668 = vmatprep.subr.mxu0 %v5482
          %5669 = vmatpush1.msra.mxu0 %v5481
          %5670 = vmatprep.subr.mxu0 %v5486
          %5671 = vmatpush1.msra.mxu0 %v5485
          %5672 = vmatprep.subr.mxu0 %v5490
          %5673 = vmatpush1.msra.mxu0 %v5489
          %5674 = vmatprep.subr.mxu0 %v5494
          %5675 = vmatpush1.msra.mxu0 %v5493
          %5676 = vmatprep.subr.mxu0 %v5498
          %5677 = vmatpush1.msra.mxu0 %v5497
          %5678 = vmatprep.subr.mxu0 %v5502
          %5679 = vmatpush1.msra.mxu0 %v5501
          %5680 = vmatprep.subr.mxu0 %v5506
          %5681 = vmatpush1.msra.mxu0 %v5505
          %5682 = vmatprep.subr.mxu0 %v5510
          %5683 = vmatpush1.msra.mxu0 %v5509
          %5684 = vmatprep.subr.mxu0 %v5514
          %5685 = vmatpush1.msra.mxu0 %v5513
          %5686 = vmatprep.subr.mxu0 %v5518
          %5687 = vmatpush1.msra.mxu0 %v5517
          %5688 = vmatprep.subr.mxu0 %v5522
          %5689 = vmatpush1.msra.mxu0 %v5521
          %5690 = vmatprep.subr.mxu0 %v5526
          %5691 = vmatpush1.msra.mxu0 %v5525
          %5692 = vmatprep.subr.mxu0 %v5530
          %5693 = vmatpush1.msra.mxu0 %v5529
          %5694 = vmatprep.subr.mxu0 %v5534
          %5695 = vmatpush1.msra.mxu0 %v5533
          %5696 = vmatprep.subr.mxu0 %v5538
          %5697 = vmatpush1.msra.mxu0 %v5537
          %5698 = vmatprep.mubr.f32.mxu0 %v5156
          %5699 = vmatmul.mubr.f32.gmra.mrb[0].mxu0 %v5155
          %v5700 = vpop.f32.mrb[0].mxu0
          %v5701 = vadd.f32 %v5630, %v5700
          %v5702 = vpop.f32.mrb[0].mxu0
          %v5703 = vadd.f32 %v5632, %v5702
          %5704 = vdwg.mxu0
          %5705 = vmatprep.subr.mxu0 %v5288
          %5706 = vmatpush1.msra.mxu0 %v5287
          %5707 = vmatprep.subr.mxu0 %v5292
          %5708 = vmatpush1.msra.mxu0 %v5291
          %5709 = vmatprep.subr.mxu0 %v5296
          %5710 = vmatpush1.msra.mxu0 %v5295
          %5711 = vmatprep.subr.mxu0 %v5300
          %5712 = vmatpush1.msra.mxu0 %v5299
          %5713 = vmatprep.subr.mxu0 %v5304
          %5714 = vmatpush1.msra.mxu0 %v5303
          %5715 = vmatprep.subr.mxu0 %v5308
          %5716 = vmatpush1.msra.mxu0 %v5307
          %5717 = vmatprep.subr.mxu0 %v5312
          %5718 = vmatpush1.msra.mxu0 %v5311
          %5719 = vmatprep.subr.mxu0 %v5316
          %5720 = vmatpush1.msra.mxu0 %v5315
          %5721 = vmatprep.subr.mxu0 %v5320
          %5722 = vmatpush1.msra.mxu0 %v5319
          %5723 = vmatprep.subr.mxu0 %v5324
          %5724 = vmatpush1.msra.mxu0 %v5323
          %5725 = vmatprep.subr.mxu0 %v5328
          %5726 = vmatpush1.msra.mxu0 %v5327
          %5727 = vmatprep.subr.mxu0 %v5332
          %5728 = vmatpush1.msra.mxu0 %v5331
          %5729 = vmatprep.subr.mxu0 %v5336
          %5730 = vmatpush1.msra.mxu0 %v5335
          %5731 = vmatprep.subr.mxu0 %v5340
          %5732 = vmatpush1.msra.mxu0 %v5339
          %5733 = vmatprep.subr.mxu0 %v5344
          %5734 = vmatpush1.msra.mxu0 %v5343
          %5735 = vmatprep.subr.mxu0 %v5348
          %5736 = vmatpush1.msra.mxu0 %v5347
          %5737 = vmatprep.subr.mxu0 %v5352
          %5738 = vmatpush1.msra.mxu0 %v5351
          %5739 = vmatprep.subr.mxu0 %v5356
          %5740 = vmatpush1.msra.mxu0 %v5355
          %5741 = vmatprep.subr.mxu0 %v5360
          %5742 = vmatpush1.msra.mxu0 %v5359
          %5743 = vmatprep.subr.mxu0 %v5364
          %5744 = vmatpush1.msra.mxu0 %v5363
          %5745 = vmatprep.subr.mxu0 %v5368
          %5746 = vmatpush1.msra.mxu0 %v5367
          %5747 = vmatprep.subr.mxu0 %v5372
          %5748 = vmatpush1.msra.mxu0 %v5371
          %5749 = vmatprep.subr.mxu0 %v5376
          %5750 = vmatpush1.msra.mxu0 %v5375
          %5751 = vmatprep.subr.mxu0 %v5380
          %5752 = vmatpush1.msra.mxu0 %v5379
          %5753 = vmatprep.subr.mxu0 %v5384
          %5754 = vmatpush1.msra.mxu0 %v5383
          %5755 = vmatprep.subr.mxu0 %v5388
          %5756 = vmatpush1.msra.mxu0 %v5387
          %5757 = vmatprep.subr.mxu0 %v5392
          %5758 = vmatpush1.msra.mxu0 %v5391
          %5759 = vmatprep.subr.mxu0 %v5396
          %5760 = vmatpush1.msra.mxu0 %v5395
          %5761 = vmatprep.subr.mxu0 %v5400
          %5762 = vmatpush1.msra.mxu0 %v5399
          %5763 = vmatprep.subr.mxu0 %v5404
          %5764 = vmatpush1.msra.mxu0 %v5403
          %5765 = vmatprep.subr.mxu0 %v5408
          %5766 = vmatpush1.msra.mxu0 %v5407
          %5767 = vmatprep.subr.mxu0 %v5412
          %5768 = vmatpush1.msra.mxu0 %v5411
          %5769 = vmatprep.mubr.f32.mxu0 %v5154
          %5770 = vmatmul.mubr.f32.gmra.mrb[0].mxu0 %v5153
          %v5771 = vpop.f32.mrb[0].mxu0
          %v5772 = vadd.f32 %v5554, %v5771
          %v5773 = vpop.f32.mrb[0].mxu0
          %v5774 = vadd.f32 %v5558, %v5773
          %5775 = vdwg.mxu0
          %5776 = vmatprep.subr.mxu0 %v5416
          %5777 = vmatpush1.msra.mxu0 %v5415
          %5778 = vmatprep.subr.mxu0 %v5420
          %5779 = vmatpush1.msra.mxu0 %v5419
          %5780 = vmatprep.subr.mxu0 %v5424
          %5781 = vmatpush1.msra.mxu0 %v5423
          %5782 = vmatprep.subr.mxu0 %v5428
          %5783 = vmatpush1.msra.mxu0 %v5427
          %5784 = vmatprep.subr.mxu0 %v5432
          %5785 = vmatpush1.msra.mxu0 %v5431
          %5786 = vmatprep.subr.mxu0 %v5436
          %5787 = vmatpush1.msra.mxu0 %v5435
          %5788 = vmatprep.subr.mxu0 %v5440
          %5789 = vmatpush1.msra.mxu0 %v5439
          %5790 = vmatprep.subr.mxu0 %v5444
          %5791 = vmatpush1.msra.mxu0 %v5443
          %5792 = vmatprep.subr.mxu0 %v5448
          %5793 = vmatpush1.msra.mxu0 %v5447
          %5794 = vmatprep.subr.mxu0 %v5452
          %5795 = vmatpush1.msra.mxu0 %v5451
          %5796 = vmatprep.subr.mxu0 %v5456
          %5797 = vmatpush1.msra.mxu0 %v5455
          %5798 = vmatprep.subr.mxu0 %v5460
          %5799 = vmatpush1.msra.mxu0 %v5459
          %5800 = vmatprep.subr.mxu0 %v5464
          %5801 = vmatpush1.msra.mxu0 %v5463
          %5802 = vmatprep.subr.mxu0 %v5468
          %5803 = vmatpush1.msra.mxu0 %v5467
          %5804 = vmatprep.subr.mxu0 %v5472
          %5805 = vmatpush1.msra.mxu0 %v5471
          %5806 = vmatprep.subr.mxu0 %v5476
          %5807 = vmatpush1.msra.mxu0 %v5475
          %5808 = vmatprep.subr.mxu0 %v5480
          %5809 = vmatpush1.msra.mxu0 %v5479
          %5810 = vmatprep.subr.mxu0 %v5484
          %5811 = vmatpush1.msra.mxu0 %v5483
          %5812 = vmatprep.subr.mxu0 %v5488
          %5813 = vmatpush1.msra.mxu0 %v5487
          %5814 = vmatprep.subr.mxu0 %v5492
          %5815 = vmatpush1.msra.mxu0 %v5491
          %5816 = vmatprep.subr.mxu0 %v5496
          %5817 = vmatpush1.msra.mxu0 %v5495
          %5818 = vmatprep.subr.mxu0 %v5500
          %5819 = vmatpush1.msra.mxu0 %v5499
          %5820 = vmatprep.subr.mxu0 %v5504
          %5821 = vmatpush1.msra.mxu0 %v5503
          %5822 = vmatprep.subr.mxu0 %v5508
          %5823 = vmatpush1.msra.mxu0 %v5507
          %5824 = vmatprep.subr.mxu0 %v5512
          %5825 = vmatpush1.msra.mxu0 %v5511
          %5826 = vmatprep.subr.mxu0 %v5516
          %5827 = vmatpush1.msra.mxu0 %v5515
          %5828 = vmatprep.subr.mxu0 %v5520
          %5829 = vmatpush1.msra.mxu0 %v5519
          %5830 = vmatprep.subr.mxu0 %v5524
          %5831 = vmatpush1.msra.mxu0 %v5523
          %5832 = vmatprep.subr.mxu0 %v5528
          %5833 = vmatpush1.msra.mxu0 %v5527
          %5834 = vmatprep.subr.mxu0 %v5532
          %5835 = vmatpush1.msra.mxu0 %v5531
          %5836 = vmatprep.subr.mxu0 %v5536
          %5837 = vmatpush1.msra.mxu0 %v5535
          %5838 = vmatprep.subr.mxu0 %v5540
          %5839 = vmatpush1.msra.mxu0 %v5539
          %5840 = vmatprep.mubr.f32.mxu0 %v5156
          %5841 = vmatmul.mubr.f32.gmra.mrb[0].mxu0 %v5155
          %v5842 = vpop.f32.mrb[0].mxu0
          %v5843 = vadd.f32 %v5772, %v5842
          %v5844 = vpop.f32.mrb[0].mxu0
          %v5845 = vadd.f32 %v5774, %v5844
          %5846 = vdwg.mxu0
          %v5847 = vmax.f32 %v5701, 0.0
          %v5848 = vmax.f32 %v5703, 0.0
          %v5849 = vmax.f32 %v5843, 0.0
          %v5850 = vmax.f32 %v5845, 0.0
          %5851 = vst [vmem:[#allocation2] sm:$0xff] %v5847
          %5852 = vst [vmem:[#allocation2 + $0x8] sm:$0xff] %v5848
          %5853 = vst [vmem:[#allocation2 + $0x10] sm:$0xff] %v5849
          %5854 = vst [vmem:[#allocation2 + $0x18] sm:$0xff] %v5850
        $region164: #{farmer_predict.1} parent=95 // pred_fallthru
          _
        %v5855 = vld [vmem:[#allocation2] sm:$0xff]
        %v5856 = vld [vmem:[#allocation2 + $0x8] sm:$0xff]
        %v5857 = vld [vmem:[#allocation2 + $0x10] sm:$0xff]
        %v5858 = vld [vmem:[#allocation2 + $0x18] sm:$0xff]
        %v5859 = vld [vmem:[%s846] sm:$0xff]
        %v5860 = vld [vmem:[%s846 + $0x8] sm:$0xff]
        %v5861 = vld [vmem:[%s846 + $0x10] sm:$0xff]
        %v5862 = vld [vmem:[%s846 + $0x18] sm:$0xf]
        %v5863 = vld [vmem:[%s846 + $0x1c] sm:$0xff]
        %v5864 = vld [vmem:[%s846 + $0x24] sm:$0xff]
        %v5865 = vld [vmem:[%s846 + $0x2c] sm:$0xff]
        %v5866 = vld [vmem:[%s846 + $0x34] sm:$0xf]
        %v5867 = vld [vmem:[%s846 + $0x38] sm:$0xff]
        %v5868 = vld [vmem:[%s846 + $0x40] sm:$0xff]
        %v5869 = vld [vmem:[%s846 + $0x48] sm:$0xff]
        %v5870 = vld [vmem:[%s846 + $0x50] sm:$0xf]
        %v5871 = vld [vmem:[%s846 + $0x54] sm:$0xff]
        %v5872 = vld [vmem:[%s846 + $0x5c] sm:$0xff]
        %v5873 = vld [vmem:[%s846 + $0x64] sm:$0xff]
        %v5874 = vld [vmem:[%s846 + $0x6c] sm:$0xf]
        %v5875 = vld [vmem:[%s846 + $0x70] sm:$0xff]
        %v5876 = vld [vmem:[%s846 + $0x78] sm:$0xff]
        %v5877 = vld [vmem:[%s846 + $0x80] sm:$0xff]
        %v5878 = vld [vmem:[%s846 + $0x88] sm:$0xf]
        %v5879 = vld [vmem:[%s846 + $0x8c] sm:$0xff]
        %v5880 = vld [vmem:[%s846 + $0x94] sm:$0xff]
        %v5881 = vld [vmem:[%s846 + $0x9c] sm:$0xff]
        %v5882 = vld [vmem:[%s846 + $0xa4] sm:$0xf]
        %v5883 = vld [vmem:[%s846 + $0xa8] sm:$0xff]
        %v5884 = vld [vmem:[%s846 + $0xb0] sm:$0xff]
        %v5885 = vld [vmem:[%s846 + $0xb8] sm:$0xff]
        %v5886 = vld [vmem:[%s846 + $0xc0] sm:$0xf]
        %v5887 = vld [vmem:[%s846 + $0xc4] sm:$0xff]
        %v5888 = vld [vmem:[%s846 + $0xcc] sm:$0xff]
        %v5889 = vld [vmem:[%s846 + $0xd4] sm:$0xff]
        %v5890 = vld [vmem:[%s846 + $0xdc] sm:$0xf]
        %v5891 = vld [vmem:[%s846 + $0xe0] sm:$0xff]
        %v5892 = vld [vmem:[%s846 + $0xe8] sm:$0xff]
        %v5893 = vld [vmem:[%s846 + $0xf0] sm:$0xff]
        %v5894 = vld [vmem:[%s846 + $0xf8] sm:$0xf]
        %v5895 = vld [vmem:[%s846 + $0xfc] sm:$0xff]
        %v5896 = vld [vmem:[%s846 + $0x104] sm:$0xff]
        %v5897 = vld [vmem:[%s846 + $0x10c] sm:$0xff]
        %v5898 = vld [vmem:[%s846 + $0x114] sm:$0xf]
        %v5899 = vld [vmem:[%s846 + $0x118] sm:$0xff]
        %v5900 = vld [vmem:[%s846 + $0x120] sm:$0xff]
        %v5901 = vld [vmem:[%s846 + $0x128] sm:$0xff]
        %v5902 = vld [vmem:[%s846 + $0x130] sm:$0xf]
        %v5903 = vld [vmem:[%s846 + $0x134] sm:$0xff]
        %v5904 = vld [vmem:[%s846 + $0x13c] sm:$0xff]
        %v5905 = vld [vmem:[%s846 + $0x144] sm:$0xff]
        %v5906 = vld [vmem:[%s846 + $0x14c] sm:$0xf]
        %v5907 = vld [vmem:[%s846 + $0x150] sm:$0xff]
        %v5908 = vld [vmem:[%s846 + $0x158] sm:$0xff]
        %v5909 = vld [vmem:[%s846 + $0x160] sm:$0xff]
        %v5910 = vld [vmem:[%s846 + $0x168] sm:$0xf]
        %v5911 = vld [vmem:[%s846 + $0x16c] sm:$0xff]
        %v5912 = vld [vmem:[%s846 + $0x174] sm:$0xff]
        %v5913 = vld [vmem:[%s846 + $0x17c] sm:$0xff]
        %v5914 = vld [vmem:[%s846 + $0x184] sm:$0xf]
        %v5915 = vld [vmem:[%s846 + $0x188] sm:$0xff]
        %v5916 = vld [vmem:[%s846 + $0x190] sm:$0xff]
        %v5917 = vld [vmem:[%s846 + $0x198] sm:$0xff]
        %v5918 = vld [vmem:[%s846 + $0x1a0] sm:$0xf]
        %v5919 = vld [vmem:[%s846 + $0x1a4] sm:$0xff]
        %v5920 = vld [vmem:[%s846 + $0x1ac] sm:$0xff]
        %v5921 = vld [vmem:[%s846 + $0x1b4] sm:$0xff]
        %v5922 = vld [vmem:[%s846 + $0x1bc] sm:$0xf]
        %v5923 = vld [vmem:[%s846 + $0x1c0] sm:$0xff]
        %v5924 = vld [vmem:[%s846 + $0x1c8] sm:$0xff]
        %v5925 = vld [vmem:[%s846 + $0x1d0] sm:$0xff]
        %v5926 = vld [vmem:[%s846 + $0x1d8] sm:$0xf]
        %v5927 = vld [vmem:[%s846 + $0x1dc] sm:$0xff]
        %v5928 = vld [vmem:[%s846 + $0x1e4] sm:$0xff]
        %v5929 = vld [vmem:[%s846 + $0x1ec] sm:$0xff]
        %v5930 = vld [vmem:[%s846 + $0x1f4] sm:$0xf]
        %v5931 = vld [vmem:[%s846 + $0x1f8] sm:$0xff]
        %v5932 = vld [vmem:[%s846 + $0x200] sm:$0xff]
        %v5933 = vld [vmem:[%s846 + $0x208] sm:$0xff]
        %v5934 = vld [vmem:[%s846 + $0x210] sm:$0xf]
        %v5935 = vld [vmem:[%s846 + $0x214] sm:$0xff]
        %v5936 = vld [vmem:[%s846 + $0x21c] sm:$0xff]
        %v5937 = vld [vmem:[%s846 + $0x224] sm:$0xff]
        %v5938 = vld [vmem:[%s846 + $0x22c] sm:$0xf]
        %v5939 = vld [vmem:[%s846 + $0x230] sm:$0xff]
        %v5940 = vld [vmem:[%s846 + $0x238] sm:$0xff]
        %v5941 = vld [vmem:[%s846 + $0x240] sm:$0xff]
        %v5942 = vld [vmem:[%s846 + $0x248] sm:$0xf]
        %v5943 = vld [vmem:[%s846 + $0x24c] sm:$0xff]
        %v5944 = vld [vmem:[%s846 + $0x254] sm:$0xff]
        %v5945 = vld [vmem:[%s846 + $0x25c] sm:$0xff]
        %v5946 = vld [vmem:[%s846 + $0x264] sm:$0xf]
        %v5947 = vld [vmem:[%s846 + $0x268] sm:$0xff]
        %v5948 = vld [vmem:[%s846 + $0x270] sm:$0xff]
        %v5949 = vld [vmem:[%s846 + $0x278] sm:$0xff]
        %v5950 = vld [vmem:[%s846 + $0x280] sm:$0xf]
        %v5951 = vld [vmem:[%s846 + $0x284] sm:$0xff]
        %v5952 = vld [vmem:[%s846 + $0x28c] sm:$0xff]
        %v5953 = vld [vmem:[%s846 + $0x294] sm:$0xff]
        %v5954 = vld [vmem:[%s846 + $0x29c] sm:$0xf]
        %v5955 = vld [vmem:[%s846 + $0x2a0] sm:$0xff]
        %v5956 = vld [vmem:[%s846 + $0x2a8] sm:$0xff]
        %v5957 = vld [vmem:[%s846 + $0x2b0] sm:$0xff]
        %v5958 = vld [vmem:[%s846 + $0x2b8] sm:$0xf]
        %v5959 = vld [vmem:[%s846 + $0x2bc] sm:$0xff]
        %v5960 = vld [vmem:[%s846 + $0x2c4] sm:$0xff]
        %v5961 = vld [vmem:[%s846 + $0x2cc] sm:$0xff]
        %v5962 = vld [vmem:[%s846 + $0x2d4] sm:$0xf]
        %v5963 = vld [vmem:[%s846 + $0x2d8] sm:$0xff]
        %v5964 = vld [vmem:[%s846 + $0x2e0] sm:$0xff]
        %v5965 = vld [vmem:[%s846 + $0x2e8] sm:$0xff]
        %v5966 = vld [vmem:[%s846 + $0x2f0] sm:$0xf]
        %v5967 = vld [vmem:[%s846 + $0x2f4] sm:$0xff]
        %v5968 = vld [vmem:[%s846 + $0x2fc] sm:$0xff]
        %v5969 = vld [vmem:[%s846 + $0x304] sm:$0xff]
        %v5970 = vld [vmem:[%s846 + $0x30c] sm:$0xf]
        %v5971 = vld [vmem:[%s846 + $0x310] sm:$0xff]
        %v5972 = vld [vmem:[%s846 + $0x318] sm:$0xff]
        %v5973 = vld [vmem:[%s846 + $0x320] sm:$0xff]
        %v5974 = vld [vmem:[%s846 + $0x328] sm:$0xf]
        %v5975 = vld [vmem:[%s846 + $0x32c] sm:$0xff]
        %v5976 = vld [vmem:[%s846 + $0x334] sm:$0xff]
        %v5977 = vld [vmem:[%s846 + $0x33c] sm:$0xff]
        %v5978 = vld [vmem:[%s846 + $0x344] sm:$0xf]
        %v5979 = vld [vmem:[%s846 + $0x348] sm:$0xff]
        %v5980 = vld [vmem:[%s846 + $0x350] sm:$0xff]
        %v5981 = vld [vmem:[%s846 + $0x358] sm:$0xff]
        %v5982 = vld [vmem:[%s846 + $0x360] sm:$0xf]
        %v5983 = vld [vmem:[%s846 + $0x364] sm:$0xff]
        %v5984 = vld [vmem:[%s846 + $0x36c] sm:$0xff]
        %v5985 = vld [vmem:[%s846 + $0x374] sm:$0xff]
        %v5986 = vld [vmem:[%s846 + $0x37c] sm:$0xf]
        %v5987 = vld [vmem:[%s846 + $0x380] sm:$0xff]
        %v5988 = vld [vmem:[%s846 + $0x388] sm:$0xff]
        %v5989 = vld [vmem:[%s846 + $0x390] sm:$0xff]
        %v5990 = vld [vmem:[%s846 + $0x398] sm:$0xf]
        %v5991 = vld [vmem:[%s846 + $0x39c] sm:$0xff]
        %v5992 = vld [vmem:[%s846 + $0x3a4] sm:$0xff]
        %v5993 = vld [vmem:[%s846 + $0x3ac] sm:$0xff]
        %v5994 = vld [vmem:[%s846 + $0x3b4] sm:$0xf]
        %v5995 = vld [vmem:[%s846 + $0x3b8] sm:$0xff]
        %v5996 = vld [vmem:[%s846 + $0x3c0] sm:$0xff]
        %v5997 = vld [vmem:[%s846 + $0x3c8] sm:$0xff]
        %v5998 = vld [vmem:[%s846 + $0x3d0] sm:$0xf]
        %v5999 = vld [vmem:[%s846 + $0x3d4] sm:$0xff]
        %v6000 = vld [vmem:[%s846 + $0x3dc] sm:$0xff]
        %v6001 = vld [vmem:[%s846 + $0x3e4] sm:$0xff]
        %v6002 = vld [vmem:[%s846 + $0x3ec] sm:$0xf]
        %v6003 = vld [vmem:[%s846 + $0x3f0] sm:$0xff]
        %v6004 = vld [vmem:[%s846 + $0x3f8] sm:$0xff]
        %v6005 = vld [vmem:[%s846 + $0x400] sm:$0xff]
        %v6006 = vld [vmem:[%s846 + $0x408] sm:$0xf]
        %v6007 = vld [vmem:[%s846 + $0x40c] sm:$0xff]
        %v6008 = vld [vmem:[%s846 + $0x414] sm:$0xff]
        %v6009 = vld [vmem:[%s846 + $0x41c] sm:$0xff]
        %v6010 = vld [vmem:[%s846 + $0x424] sm:$0xf]
        %v6011 = vld [vmem:[%s846 + $0x428] sm:$0xff]
        %v6012 = vld [vmem:[%s846 + $0x430] sm:$0xff]
        %v6013 = vld [vmem:[%s846 + $0x438] sm:$0xff]
        %v6014 = vld [vmem:[%s846 + $0x440] sm:$0xf]
        %v6015 = vld [vmem:[%s846 + $0x444] sm:$0xff]
        %v6016 = vld [vmem:[%s846 + $0x44c] sm:$0xff]
        %v6017 = vld [vmem:[%s846 + $0x454] sm:$0xff]
        %v6018 = vld [vmem:[%s846 + $0x45c] sm:$0xf]
        %v6019 = vld [vmem:[%s846 + $0x460] sm:$0xff]
        %v6020 = vld [vmem:[%s846 + $0x468] sm:$0xff]
        %v6021 = vld [vmem:[%s846 + $0x470] sm:$0xff]
        %v6022 = vld [vmem:[%s846 + $0x478] sm:$0xf]
        %v6023 = vld [vmem:[%s846 + $0x47c] sm:$0xff]
        %v6024 = vld [vmem:[%s846 + $0x484] sm:$0xff]
        %v6025 = vld [vmem:[%s846 + $0x48c] sm:$0xff]
        %v6026 = vld [vmem:[%s846 + $0x494] sm:$0xf]
        %v6027 = vld [vmem:[%s846 + $0x498] sm:$0xff]
        %v6028 = vld [vmem:[%s846 + $0x4a0] sm:$0xff]
        %v6029 = vld [vmem:[%s846 + $0x4a8] sm:$0xff]
        %v6030 = vld [vmem:[%s846 + $0x4b0] sm:$0xf]
        %v6031 = vld [vmem:[%s846 + $0x4b4] sm:$0xff]
        %v6032 = vld [vmem:[%s846 + $0x4bc] sm:$0xff]
        %v6033 = vld [vmem:[%s846 + $0x4c4] sm:$0xff]
        %v6034 = vld [vmem:[%s846 + $0x4cc] sm:$0xf]
        %v6035 = vld [vmem:[%s846 + $0x4d0] sm:$0xff]
        %v6036 = vld [vmem:[%s846 + $0x4d8] sm:$0xff]
        %v6037 = vld [vmem:[%s846 + $0x4e0] sm:$0xff]
        %v6038 = vld [vmem:[%s846 + $0x4e8] sm:$0xf]
        %v6039 = vld [vmem:[%s846 + $0x4ec] sm:$0xff]
        %v6040 = vld [vmem:[%s846 + $0x4f4] sm:$0xff]
        %v6041 = vld [vmem:[%s846 + $0x4fc] sm:$0xff]
        %v6042 = vld [vmem:[%s846 + $0x504] sm:$0xf]
        %v6043 = vld [vmem:[%s846 + $0x508] sm:$0xff]
        %v6044 = vld [vmem:[%s846 + $0x510] sm:$0xff]
        %v6045 = vld [vmem:[%s846 + $0x518] sm:$0xff]
        %v6046 = vld [vmem:[%s846 + $0x520] sm:$0xf]
        %v6047 = vld [vmem:[%s846 + $0x524] sm:$0xff]
        %v6048 = vld [vmem:[%s846 + $0x52c] sm:$0xff]
        %v6049 = vld [vmem:[%s846 + $0x534] sm:$0xff]
        %v6050 = vld [vmem:[%s846 + $0x53c] sm:$0xf]
        %v6051 = vld [vmem:[%s846 + $0x540] sm:$0xff]
        %v6052 = vld [vmem:[%s846 + $0x548] sm:$0xff]
        %v6053 = vld [vmem:[%s846 + $0x550] sm:$0xff]
        %v6054 = vld [vmem:[%s846 + $0x558] sm:$0xf]
        %v6055 = vld [vmem:[%s846 + $0x55c] sm:$0xff]
        %v6056 = vld [vmem:[%s846 + $0x564] sm:$0xff]
        %v6057 = vld [vmem:[%s846 + $0x56c] sm:$0xff]
        %v6058 = vld [vmem:[%s846 + $0x574] sm:$0xf]
        %v6059 = vld [vmem:[%s846 + $0x578] sm:$0xff]
        %v6060 = vld [vmem:[%s846 + $0x580] sm:$0xff]
        %v6061 = vld [vmem:[%s846 + $0x588] sm:$0xff]
        %v6062 = vld [vmem:[%s846 + $0x590] sm:$0xf]
        %v6063 = vld [vmem:[%s846 + $0x594] sm:$0xff]
        %v6064 = vld [vmem:[%s846 + $0x59c] sm:$0xff]
        %v6065 = vld [vmem:[%s846 + $0x5a4] sm:$0xff]
        %v6066 = vld [vmem:[%s846 + $0x5ac] sm:$0xf]
        %v6067 = vld [vmem:[%s846 + $0x5b0] sm:$0xff]
        %v6068 = vld [vmem:[%s846 + $0x5b8] sm:$0xff]
        %v6069 = vld [vmem:[%s846 + $0x5c0] sm:$0xff]
        %v6070 = vld [vmem:[%s846 + $0x5c8] sm:$0xf]
        %v6071 = vld [vmem:[%s846 + $0x5cc] sm:$0xff]
        %v6072 = vld [vmem:[%s846 + $0x5d4] sm:$0xff]
        %v6073 = vld [vmem:[%s846 + $0x5dc] sm:$0xff]
        %v6074 = vld [vmem:[%s846 + $0x5e4] sm:$0xf]
        %v6075 = vld [vmem:[%s846 + $0x5e8] sm:$0xff]
        %v6076 = vld [vmem:[%s846 + $0x5f0] sm:$0xff]
        %v6077 = vld [vmem:[%s846 + $0x5f8] sm:$0xff]
        %v6078 = vld [vmem:[%s846 + $0x600] sm:$0xf]
        %v6079 = vld [vmem:[%s846 + $0x604] sm:$0xff]
        %v6080 = vld [vmem:[%s846 + $0x60c] sm:$0xff]
        %v6081 = vld [vmem:[%s846 + $0x614] sm:$0xff]
        %v6082 = vld [vmem:[%s846 + $0x61c] sm:$0xf]
        %v6083 = vld [vmem:[%s846 + $0x620] sm:$0xff]
        %v6084 = vld [vmem:[%s846 + $0x628] sm:$0xff]
        %v6085 = vld [vmem:[%s846 + $0x630] sm:$0xff]
        %v6086 = vld [vmem:[%s846 + $0x638] sm:$0xf]
        %v6087 = vld [vmem:[%s846 + $0x63c] sm:$0xff]
        %v6088 = vld [vmem:[%s846 + $0x644] sm:$0xff]
        %v6089 = vld [vmem:[%s846 + $0x64c] sm:$0xff]
        %v6090 = vld [vmem:[%s846 + $0x654] sm:$0xf]
        %v6091 = vld [vmem:[%s846 + $0x658] sm:$0xff]
        %v6092 = vld [vmem:[%s846 + $0x660] sm:$0xff]
        %v6093 = vld [vmem:[%s846 + $0x668] sm:$0xff]
        %v6094 = vld [vmem:[%s846 + $0x670] sm:$0xf]
        %v6095 = vld [vmem:[%s846 + $0x674] sm:$0xff]
        %v6096 = vld [vmem:[%s846 + $0x67c] sm:$0xff]
        %v6097 = vld [vmem:[%s846 + $0x684] sm:$0xff]
        %v6098 = vld [vmem:[%s846 + $0x68c] sm:$0xf]
        %v6099 = vld [vmem:[%s846 + $0x690] sm:$0xff]
        %v6100 = vld [vmem:[%s846 + $0x698] sm:$0xff]
        %v6101 = vld [vmem:[%s846 + $0x6a0] sm:$0xff]
        %v6102 = vld [vmem:[%s846 + $0x6a8] sm:$0xf]
        %v6103 = vld [vmem:[%s846 + $0x6ac] sm:$0xff]
        %v6104 = vld [vmem:[%s846 + $0x6b4] sm:$0xff]
        %v6105 = vld [vmem:[%s846 + $0x6bc] sm:$0xff]
        %v6106 = vld [vmem:[%s846 + $0x6c4] sm:$0xf]
        %v6107 = vld [vmem:[%s846 + $0x6c8] sm:$0xff]
        %v6108 = vld [vmem:[%s846 + $0x6d0] sm:$0xff]
        %v6109 = vld [vmem:[%s846 + $0x6d8] sm:$0xff]
        %v6110 = vld [vmem:[%s846 + $0x6e0] sm:$0xf]
        %v6111 = vld [vmem:[%s846 + $0x6e4] sm:$0xff]
        %v6112 = vld [vmem:[%s846 + $0x6ec] sm:$0xff]
        %v6113 = vld [vmem:[%s846 + $0x6f4] sm:$0xff]
        %v6114 = vld [vmem:[%s846 + $0x6fc] sm:$0xf]
        %v6115 = vunpack.c.l.bf16 %v5859
        %v6116 = vunpack.c.h.bf16 %v5859
        %v6117 = vunpack.c.l.bf16 %v5860
        %v6118 = vunpack.c.h.bf16 %v5860
        %v6119 = vunpack.c.l.bf16 %v5861
        %v6120 = vunpack.c.h.bf16 %v5861
        %v6121 = vunpack.c.l.bf16 %v5862
        %v6122 = vunpack.c.l.bf16 %v5863
        %v6123 = vunpack.c.h.bf16 %v5863
        %v6124 = vunpack.c.l.bf16 %v5864
        %v6125 = vunpack.c.h.bf16 %v5864
        %v6126 = vunpack.c.l.bf16 %v5865
        %v6127 = vunpack.c.h.bf16 %v5865
        %v6128 = vunpack.c.l.bf16 %v5866
        %v6129 = vunpack.c.l.bf16 %v5867
        %v6130 = vunpack.c.h.bf16 %v5867
        %v6131 = vunpack.c.l.bf16 %v5868
        %v6132 = vunpack.c.h.bf16 %v5868
        %v6133 = vunpack.c.l.bf16 %v5869
        %v6134 = vunpack.c.h.bf16 %v5869
        %v6135 = vunpack.c.l.bf16 %v5870
        %v6136 = vunpack.c.l.bf16 %v5871
        %v6137 = vunpack.c.h.bf16 %v5871
        %v6138 = vunpack.c.l.bf16 %v5872
        %v6139 = vunpack.c.h.bf16 %v5872
        %v6140 = vunpack.c.l.bf16 %v5873
        %v6141 = vunpack.c.h.bf16 %v5873
        %v6142 = vunpack.c.l.bf16 %v5874
        %v6143 = vunpack.c.l.bf16 %v5875
        %v6144 = vunpack.c.h.bf16 %v5875
        %v6145 = vunpack.c.l.bf16 %v5876
        %v6146 = vunpack.c.h.bf16 %v5876
        %v6147 = vunpack.c.l.bf16 %v5877
        %v6148 = vunpack.c.h.bf16 %v5877
        %v6149 = vunpack.c.l.bf16 %v5878
        %v6150 = vunpack.c.l.bf16 %v5879
        %v6151 = vunpack.c.h.bf16 %v5879
        %v6152 = vunpack.c.l.bf16 %v5880
        %v6153 = vunpack.c.h.bf16 %v5880
        %v6154 = vunpack.c.l.bf16 %v5881
        %v6155 = vunpack.c.h.bf16 %v5881
        %v6156 = vunpack.c.l.bf16 %v5882
        %v6157 = vunpack.c.l.bf16 %v5883
        %v6158 = vunpack.c.h.bf16 %v5883
        %v6159 = vunpack.c.l.bf16 %v5884
        %v6160 = vunpack.c.h.bf16 %v5884
        %v6161 = vunpack.c.l.bf16 %v5885
        %v6162 = vunpack.c.h.bf16 %v5885
        %v6163 = vunpack.c.l.bf16 %v5886
        %v6164 = vunpack.c.l.bf16 %v5887
        %v6165 = vunpack.c.h.bf16 %v5887
        %v6166 = vunpack.c.l.bf16 %v5888
        %v6167 = vunpack.c.h.bf16 %v5888
        %v6168 = vunpack.c.l.bf16 %v5889
        %v6169 = vunpack.c.h.bf16 %v5889
        %v6170 = vunpack.c.l.bf16 %v5890
        %v6171 = vunpack.c.l.bf16 %v5891
        %v6172 = vunpack.c.h.bf16 %v5891
        %v6173 = vunpack.c.l.bf16 %v5892
        %v6174 = vunpack.c.h.bf16 %v5892
        %v6175 = vunpack.c.l.bf16 %v5893
        %v6176 = vunpack.c.h.bf16 %v5893
        %v6177 = vunpack.c.l.bf16 %v5894
        %v6178 = vunpack.c.l.bf16 %v5895
        %v6179 = vunpack.c.h.bf16 %v5895
        %v6180 = vunpack.c.l.bf16 %v5896
        %v6181 = vunpack.c.h.bf16 %v5896
        %v6182 = vunpack.c.l.bf16 %v5897
        %v6183 = vunpack.c.h.bf16 %v5897
        %v6184 = vunpack.c.l.bf16 %v5898
        %v6185 = vunpack.c.l.bf16 %v5899
        %v6186 = vunpack.c.h.bf16 %v5899
        %v6187 = vunpack.c.l.bf16 %v5900
        %v6188 = vunpack.c.h.bf16 %v5900
        %v6189 = vunpack.c.l.bf16 %v5901
        %v6190 = vunpack.c.h.bf16 %v5901
        %v6191 = vunpack.c.l.bf16 %v5902
        %v6192 = vunpack.c.l.bf16 %v5903
        %v6193 = vunpack.c.h.bf16 %v5903
        %v6194 = vunpack.c.l.bf16 %v5904
        %v6195 = vunpack.c.h.bf16 %v5904
        %v6196 = vunpack.c.l.bf16 %v5905
        %v6197 = vunpack.c.h.bf16 %v5905
        %v6198 = vunpack.c.l.bf16 %v5906
        %v6199 = vunpack.c.l.bf16 %v5907
        %v6200 = vunpack.c.h.bf16 %v5907
        %v6201 = vunpack.c.l.bf16 %v5908
        %v6202 = vunpack.c.h.bf16 %v5908
        %v6203 = vunpack.c.l.bf16 %v5909
        %v6204 = vunpack.c.h.bf16 %v5909
        %v6205 = vunpack.c.l.bf16 %v5910
        %v6206 = vunpack.c.l.bf16 %v5911
        %v6207 = vunpack.c.h.bf16 %v5911
        %v6208 = vunpack.c.l.bf16 %v5912
        %v6209 = vunpack.c.h.bf16 %v5912
        %v6210 = vunpack.c.l.bf16 %v5913
        %v6211 = vunpack.c.h.bf16 %v5913
        %v6212 = vunpack.c.l.bf16 %v5914
        %v6213 = vunpack.c.l.bf16 %v5915
        %v6214 = vunpack.c.h.bf16 %v5915
        %v6215 = vunpack.c.l.bf16 %v5916
        %v6216 = vunpack.c.h.bf16 %v5916
        %v6217 = vunpack.c.l.bf16 %v5917
        %v6218 = vunpack.c.h.bf16 %v5917
        %v6219 = vunpack.c.l.bf16 %v5918
        %v6220 = vunpack.c.l.bf16 %v5919
        %v6221 = vunpack.c.h.bf16 %v5919
        %v6222 = vunpack.c.l.bf16 %v5920
        %v6223 = vunpack.c.h.bf16 %v5920
        %v6224 = vunpack.c.l.bf16 %v5921
        %v6225 = vunpack.c.h.bf16 %v5921
        %v6226 = vunpack.c.l.bf16 %v5922
        %v6227 = vunpack.c.l.bf16 %v5923
        %v6228 = vunpack.c.h.bf16 %v5923
        %v6229 = vunpack.c.l.bf16 %v5924
        %v6230 = vunpack.c.h.bf16 %v5924
        %v6231 = vunpack.c.l.bf16 %v5925
        %v6232 = vunpack.c.h.bf16 %v5925
        %v6233 = vunpack.c.l.bf16 %v5926
        %v6234 = vunpack.c.l.bf16 %v5927
        %v6235 = vunpack.c.h.bf16 %v5927
        %v6236 = vunpack.c.l.bf16 %v5928
        %v6237 = vunpack.c.h.bf16 %v5928
        %v6238 = vunpack.c.l.bf16 %v5929
        %v6239 = vunpack.c.h.bf16 %v5929
        %v6240 = vunpack.c.l.bf16 %v5930
        %v6241 = vunpack.c.l.bf16 %v5931
        %v6242 = vunpack.c.h.bf16 %v5931
        %v6243 = vunpack.c.l.bf16 %v5932
        %v6244 = vunpack.c.h.bf16 %v5932
        %v6245 = vunpack.c.l.bf16 %v5933
        %v6246 = vunpack.c.h.bf16 %v5933
        %v6247 = vunpack.c.l.bf16 %v5934
        %v6248 = vunpack.c.l.bf16 %v5935
        %v6249 = vunpack.c.h.bf16 %v5935
        %v6250 = vunpack.c.l.bf16 %v5936
        %v6251 = vunpack.c.h.bf16 %v5936
        %v6252 = vunpack.c.l.bf16 %v5937
        %v6253 = vunpack.c.h.bf16 %v5937
        %v6254 = vunpack.c.l.bf16 %v5938
        %v6255 = vunpack.c.l.bf16 %v5939
        %v6256 = vunpack.c.h.bf16 %v5939
        %v6257 = vunpack.c.l.bf16 %v5940
        %v6258 = vunpack.c.h.bf16 %v5940
        %v6259 = vunpack.c.l.bf16 %v5941
        %v6260 = vunpack.c.h.bf16 %v5941
        %v6261 = vunpack.c.l.bf16 %v5942
        %v6262 = vunpack.c.l.bf16 %v5943
        %v6263 = vunpack.c.h.bf16 %v5943
        %v6264 = vunpack.c.l.bf16 %v5944
        %v6265 = vunpack.c.h.bf16 %v5944
        %v6266 = vunpack.c.l.bf16 %v5945
        %v6267 = vunpack.c.h.bf16 %v5945
        %v6268 = vunpack.c.l.bf16 %v5946
        %v6269 = vunpack.c.l.bf16 %v5947
        %v6270 = vunpack.c.h.bf16 %v5947
        %v6271 = vunpack.c.l.bf16 %v5948
        %v6272 = vunpack.c.h.bf16 %v5948
        %v6273 = vunpack.c.l.bf16 %v5949
        %v6274 = vunpack.c.h.bf16 %v5949
        %v6275 = vunpack.c.l.bf16 %v5950
        %v6276 = vunpack.c.l.bf16 %v5951
        %v6277 = vunpack.c.h.bf16 %v5951
        %v6278 = vunpack.c.l.bf16 %v5952
        %v6279 = vunpack.c.h.bf16 %v5952
        %v6280 = vunpack.c.l.bf16 %v5953
        %v6281 = vunpack.c.h.bf16 %v5953
        %v6282 = vunpack.c.l.bf16 %v5954
        %v6283 = vunpack.c.l.bf16 %v5955
        %v6284 = vunpack.c.h.bf16 %v5955
        %v6285 = vunpack.c.l.bf16 %v5956
        %v6286 = vunpack.c.h.bf16 %v5956
        %v6287 = vunpack.c.l.bf16 %v5957
        %v6288 = vunpack.c.h.bf16 %v5957
        %v6289 = vunpack.c.l.bf16 %v5958
        %v6290 = vunpack.c.l.bf16 %v5959
        %v6291 = vunpack.c.h.bf16 %v5959
        %v6292 = vunpack.c.l.bf16 %v5960
        %v6293 = vunpack.c.h.bf16 %v5960
        %v6294 = vunpack.c.l.bf16 %v5961
        %v6295 = vunpack.c.h.bf16 %v5961
        %v6296 = vunpack.c.l.bf16 %v5962
        %v6297 = vunpack.c.l.bf16 %v5963
        %v6298 = vunpack.c.h.bf16 %v5963
        %v6299 = vunpack.c.l.bf16 %v5964
        %v6300 = vunpack.c.h.bf16 %v5964
        %v6301 = vunpack.c.l.bf16 %v5965
        %v6302 = vunpack.c.h.bf16 %v5965
        %v6303 = vunpack.c.l.bf16 %v5966
        %v6304 = vunpack.c.l.bf16 %v5967
        %v6305 = vunpack.c.h.bf16 %v5967
        %v6306 = vunpack.c.l.bf16 %v5968
        %v6307 = vunpack.c.h.bf16 %v5968
        %v6308 = vunpack.c.l.bf16 %v5969
        %v6309 = vunpack.c.h.bf16 %v5969
        %v6310 = vunpack.c.l.bf16 %v5970
        %v6311 = vunpack.c.l.bf16 %v5971
        %v6312 = vunpack.c.h.bf16 %v5971
        %v6313 = vunpack.c.l.bf16 %v5972
        %v6314 = vunpack.c.h.bf16 %v5972
        %v6315 = vunpack.c.l.bf16 %v5973
        %v6316 = vunpack.c.h.bf16 %v5973
        %v6317 = vunpack.c.l.bf16 %v5974
        %v6318 = vunpack.c.l.bf16 %v5975
        %v6319 = vunpack.c.h.bf16 %v5975
        %v6320 = vunpack.c.l.bf16 %v5976
        %v6321 = vunpack.c.h.bf16 %v5976
        %v6322 = vunpack.c.l.bf16 %v5977
        %v6323 = vunpack.c.h.bf16 %v5977
        %v6324 = vunpack.c.l.bf16 %v5978
        %v6325 = vunpack.c.l.bf16 %v5979
        %v6326 = vunpack.c.h.bf16 %v5979
        %v6327 = vunpack.c.l.bf16 %v5980
        %v6328 = vunpack.c.h.bf16 %v5980
        %v6329 = vunpack.c.l.bf16 %v5981
        %v6330 = vunpack.c.h.bf16 %v5981
        %v6331 = vunpack.c.l.bf16 %v5982
        %v6332 = vunpack.c.l.bf16 %v5983
        %v6333 = vunpack.c.h.bf16 %v5983
        %v6334 = vunpack.c.l.bf16 %v5984
        %v6335 = vunpack.c.h.bf16 %v5984
        %v6336 = vunpack.c.l.bf16 %v5985
        %v6337 = vunpack.c.h.bf16 %v5985
        %v6338 = vunpack.c.l.bf16 %v5986
        %v6339 = vunpack.c.l.bf16 %v5987
        %v6340 = vunpack.c.h.bf16 %v5987
        %v6341 = vunpack.c.l.bf16 %v5988
        %v6342 = vunpack.c.h.bf16 %v5988
        %v6343 = vunpack.c.l.bf16 %v5989
        %v6344 = vunpack.c.h.bf16 %v5989
        %v6345 = vunpack.c.l.bf16 %v5990
        %v6346 = vunpack.c.l.bf16 %v5991
        %v6347 = vunpack.c.h.bf16 %v5991
        %v6348 = vunpack.c.l.bf16 %v5992
        %v6349 = vunpack.c.h.bf16 %v5992
        %v6350 = vunpack.c.l.bf16 %v5993
        %v6351 = vunpack.c.h.bf16 %v5993
        %v6352 = vunpack.c.l.bf16 %v5994
        %v6353 = vunpack.c.l.bf16 %v5995
        %v6354 = vunpack.c.h.bf16 %v5995
        %v6355 = vunpack.c.l.bf16 %v5996
        %v6356 = vunpack.c.h.bf16 %v5996
        %v6357 = vunpack.c.l.bf16 %v5997
        %v6358 = vunpack.c.h.bf16 %v5997
        %v6359 = vunpack.c.l.bf16 %v5998
        %v6360 = vunpack.c.l.bf16 %v5999
        %v6361 = vunpack.c.h.bf16 %v5999
        %v6362 = vunpack.c.l.bf16 %v6000
        %v6363 = vunpack.c.h.bf16 %v6000
        %v6364 = vunpack.c.l.bf16 %v6001
        %v6365 = vunpack.c.h.bf16 %v6001
        %v6366 = vunpack.c.l.bf16 %v6002
        %v6367 = vunpack.c.l.bf16 %v6003
        %v6368 = vunpack.c.h.bf16 %v6003
        %v6369 = vunpack.c.l.bf16 %v6004
        %v6370 = vunpack.c.h.bf16 %v6004
        %v6371 = vunpack.c.l.bf16 %v6005
        %v6372 = vunpack.c.h.bf16 %v6005
        %v6373 = vunpack.c.l.bf16 %v6006
        %v6374 = vunpack.c.l.bf16 %v6007
        %v6375 = vunpack.c.h.bf16 %v6007
        %v6376 = vunpack.c.l.bf16 %v6008
        %v6377 = vunpack.c.h.bf16 %v6008
        %v6378 = vunpack.c.l.bf16 %v6009
        %v6379 = vunpack.c.h.bf16 %v6009
        %v6380 = vunpack.c.l.bf16 %v6010
        %v6381 = vunpack.c.l.bf16 %v6011
        %v6382 = vunpack.c.h.bf16 %v6011
        %v6383 = vunpack.c.l.bf16 %v6012
        %v6384 = vunpack.c.h.bf16 %v6012
        %v6385 = vunpack.c.l.bf16 %v6013
        %v6386 = vunpack.c.h.bf16 %v6013
        %v6387 = vunpack.c.l.bf16 %v6014
        %v6388 = vunpack.c.l.bf16 %v6015
        %v6389 = vunpack.c.h.bf16 %v6015
        %v6390 = vunpack.c.l.bf16 %v6016
        %v6391 = vunpack.c.h.bf16 %v6016
        %v6392 = vunpack.c.l.bf16 %v6017
        %v6393 = vunpack.c.h.bf16 %v6017
        %v6394 = vunpack.c.l.bf16 %v6018
        %v6395 = vunpack.c.l.bf16 %v6019
        %v6396 = vunpack.c.h.bf16 %v6019
        %v6397 = vunpack.c.l.bf16 %v6020
        %v6398 = vunpack.c.h.bf16 %v6020
        %v6399 = vunpack.c.l.bf16 %v6021
        %v6400 = vunpack.c.h.bf16 %v6021
        %v6401 = vunpack.c.l.bf16 %v6022
        %v6402 = vunpack.c.l.bf16 %v6023
        %v6403 = vunpack.c.h.bf16 %v6023
        %v6404 = vunpack.c.l.bf16 %v6024
        %v6405 = vunpack.c.h.bf16 %v6024
        %v6406 = vunpack.c.l.bf16 %v6025
        %v6407 = vunpack.c.h.bf16 %v6025
        %v6408 = vunpack.c.l.bf16 %v6026
        %v6409 = vunpack.c.l.bf16 %v6027
        %v6410 = vunpack.c.h.bf16 %v6027
        %v6411 = vunpack.c.l.bf16 %v6028
        %v6412 = vunpack.c.h.bf16 %v6028
        %v6413 = vunpack.c.l.bf16 %v6029
        %v6414 = vunpack.c.h.bf16 %v6029
        %v6415 = vunpack.c.l.bf16 %v6030
        %v6416 = vunpack.c.l.bf16 %v6031
        %v6417 = vunpack.c.h.bf16 %v6031
        %v6418 = vunpack.c.l.bf16 %v6032
        %v6419 = vunpack.c.h.bf16 %v6032
        %v6420 = vunpack.c.l.bf16 %v6033
        %v6421 = vunpack.c.h.bf16 %v6033
        %v6422 = vunpack.c.l.bf16 %v6034
        %v6423 = vunpack.c.l.bf16 %v6035
        %v6424 = vunpack.c.h.bf16 %v6035
        %v6425 = vunpack.c.l.bf16 %v6036
        %v6426 = vunpack.c.h.bf16 %v6036
        %v6427 = vunpack.c.l.bf16 %v6037
        %v6428 = vunpack.c.h.bf16 %v6037
        %v6429 = vunpack.c.l.bf16 %v6038
        %v6430 = vunpack.c.l.bf16 %v6039
        %v6431 = vunpack.c.h.bf16 %v6039
        %v6432 = vunpack.c.l.bf16 %v6040
        %v6433 = vunpack.c.h.bf16 %v6040
        %v6434 = vunpack.c.l.bf16 %v6041
        %v6435 = vunpack.c.h.bf16 %v6041
        %v6436 = vunpack.c.l.bf16 %v6042
        %v6437 = vunpack.c.l.bf16 %v6043
        %v6438 = vunpack.c.h.bf16 %v6043
        %v6439 = vunpack.c.l.bf16 %v6044
        %v6440 = vunpack.c.h.bf16 %v6044
        %v6441 = vunpack.c.l.bf16 %v6045
        %v6442 = vunpack.c.h.bf16 %v6045
        %v6443 = vunpack.c.l.bf16 %v6046
        %v6444 = vunpack.c.l.bf16 %v6047
        %v6445 = vunpack.c.h.bf16 %v6047
        %v6446 = vunpack.c.l.bf16 %v6048
        %v6447 = vunpack.c.h.bf16 %v6048
        %v6448 = vunpack.c.l.bf16 %v6049
        %v6449 = vunpack.c.h.bf16 %v6049
        %v6450 = vunpack.c.l.bf16 %v6050
        %v6451 = vunpack.c.l.bf16 %v6051
        %v6452 = vunpack.c.h.bf16 %v6051
        %v6453 = vunpack.c.l.bf16 %v6052
        %v6454 = vunpack.c.h.bf16 %v6052
        %v6455 = vunpack.c.l.bf16 %v6053
        %v6456 = vunpack.c.h.bf16 %v6053
        %v6457 = vunpack.c.l.bf16 %v6054
        %v6458 = vunpack.c.l.bf16 %v6055
        %v6459 = vunpack.c.h.bf16 %v6055
        %v6460 = vunpack.c.l.bf16 %v6056
        %v6461 = vunpack.c.h.bf16 %v6056
        %v6462 = vunpack.c.l.bf16 %v6057
        %v6463 = vunpack.c.h.bf16 %v6057
        %v6464 = vunpack.c.l.bf16 %v6058
        %v6465 = vunpack.c.l.bf16 %v6059
        %v6466 = vunpack.c.h.bf16 %v6059
        %v6467 = vunpack.c.l.bf16 %v6060
        %v6468 = vunpack.c.h.bf16 %v6060
        %v6469 = vunpack.c.l.bf16 %v6061
        %v6470 = vunpack.c.h.bf16 %v6061
        %v6471 = vunpack.c.l.bf16 %v6062
        %v6472 = vunpack.c.l.bf16 %v6063
        %v6473 = vunpack.c.h.bf16 %v6063
        %v6474 = vunpack.c.l.bf16 %v6064
        %v6475 = vunpack.c.h.bf16 %v6064
        %v6476 = vunpack.c.l.bf16 %v6065
        %v6477 = vunpack.c.h.bf16 %v6065
        %v6478 = vunpack.c.l.bf16 %v6066
        %v6479 = vunpack.c.l.bf16 %v6067
        %v6480 = vunpack.c.h.bf16 %v6067
        %v6481 = vunpack.c.l.bf16 %v6068
        %v6482 = vunpack.c.h.bf16 %v6068
        %v6483 = vunpack.c.l.bf16 %v6069
        %v6484 = vunpack.c.h.bf16 %v6069
        %v6485 = vunpack.c.l.bf16 %v6070
        %v6486 = vunpack.c.l.bf16 %v6071
        %v6487 = vunpack.c.h.bf16 %v6071
        %v6488 = vunpack.c.l.bf16 %v6072
        %v6489 = vunpack.c.h.bf16 %v6072
        %v6490 = vunpack.c.l.bf16 %v6073
        %v6491 = vunpack.c.h.bf16 %v6073
        %v6492 = vunpack.c.l.bf16 %v6074
        %v6493 = vunpack.c.l.bf16 %v6075
        %v6494 = vunpack.c.h.bf16 %v6075
        %v6495 = vunpack.c.l.bf16 %v6076
        %v6496 = vunpack.c.h.bf16 %v6076
        %v6497 = vunpack.c.l.bf16 %v6077
        %v6498 = vunpack.c.h.bf16 %v6077
        %v6499 = vunpack.c.l.bf16 %v6078
        %v6500 = vunpack.c.l.bf16 %v6079
        %v6501 = vunpack.c.h.bf16 %v6079
        %v6502 = vunpack.c.l.bf16 %v6080
        %v6503 = vunpack.c.h.bf16 %v6080
        %v6504 = vunpack.c.l.bf16 %v6081
        %v6505 = vunpack.c.h.bf16 %v6081
        %v6506 = vunpack.c.l.bf16 %v6082
        %v6507 = vunpack.c.l.bf16 %v6083
        %v6508 = vunpack.c.h.bf16 %v6083
        %v6509 = vunpack.c.l.bf16 %v6084
        %v6510 = vunpack.c.h.bf16 %v6084
        %v6511 = vunpack.c.l.bf16 %v6085
        %v6512 = vunpack.c.h.bf16 %v6085
        %v6513 = vunpack.c.l.bf16 %v6086
        %v6514 = vunpack.c.l.bf16 %v6087
        %v6515 = vunpack.c.h.bf16 %v6087
        %v6516 = vunpack.c.l.bf16 %v6088
        %v6517 = vunpack.c.h.bf16 %v6088
        %v6518 = vunpack.c.l.bf16 %v6089
        %v6519 = vunpack.c.h.bf16 %v6089
        %v6520 = vunpack.c.l.bf16 %v6090
        %v6521 = vunpack.c.l.bf16 %v6091
        %v6522 = vunpack.c.h.bf16 %v6091
        %v6523 = vunpack.c.l.bf16 %v6092
        %v6524 = vunpack.c.h.bf16 %v6092
        %v6525 = vunpack.c.l.bf16 %v6093
        %v6526 = vunpack.c.h.bf16 %v6093
        %v6527 = vunpack.c.l.bf16 %v6094
        %v6528 = vunpack.c.l.bf16 %v6095
        %v6529 = vunpack.c.h.bf16 %v6095
        %v6530 = vunpack.c.l.bf16 %v6096
        %v6531 = vunpack.c.h.bf16 %v6096
        %v6532 = vunpack.c.l.bf16 %v6097
        %v6533 = vunpack.c.h.bf16 %v6097
        %v6534 = vunpack.c.l.bf16 %v6098
        %v6535 = vunpack.c.l.bf16 %v6099
        %v6536 = vunpack.c.h.bf16 %v6099
        %v6537 = vunpack.c.l.bf16 %v6100
        %v6538 = vunpack.c.h.bf16 %v6100
        %v6539 = vunpack.c.l.bf16 %v6101
        %v6540 = vunpack.c.h.bf16 %v6101
        %v6541 = vunpack.c.l.bf16 %v6102
        %v6542 = vunpack.c.l.bf16 %v6103
        %v6543 = vunpack.c.h.bf16 %v6103
        %v6544 = vunpack.c.l.bf16 %v6104
        %v6545 = vunpack.c.h.bf16 %v6104
        %v6546 = vunpack.c.l.bf16 %v6105
        %v6547 = vunpack.c.h.bf16 %v6105
        %v6548 = vunpack.c.l.bf16 %v6106
        %v6549 = vunpack.c.l.bf16 %v6107
        %v6550 = vunpack.c.h.bf16 %v6107
        %v6551 = vunpack.c.l.bf16 %v6108
        %v6552 = vunpack.c.h.bf16 %v6108
        %v6553 = vunpack.c.l.bf16 %v6109
        %v6554 = vunpack.c.h.bf16 %v6109
        %v6555 = vunpack.c.l.bf16 %v6110
        %v6556 = vunpack.c.l.bf16 %v6111
        %v6557 = vunpack.c.h.bf16 %v6111
        %v6558 = vunpack.c.l.bf16 %v6112
        %v6559 = vunpack.c.h.bf16 %v6112
        %v6560 = vunpack.c.l.bf16 %v6113
        %v6561 = vunpack.c.h.bf16 %v6113
        %v6562 = vunpack.c.l.bf16 %v6114
        %v6563 = vld [vmem:[%s855] sm:$0xff]
        %v6565 = vlaneseq
        %v6566 = vshrl.u32 %v6565, 7
        %v6567 = vsub.s32 0, %v6566
        %v6568 = vrot.slane %v6563, %v6567
        %v6569 = vlaneseq
        %v6570 = vshrl.u32 %v6569, 7
        %v6571 = vsub.s32 1, %v6570
        %v6572 = vrot.slane %v6563, %v6571
        %v6573 = vlaneseq
        %v6574 = vshrl.u32 %v6573, 7
        %v6575 = vsub.s32 2, %v6574
        %v6576 = vrot.slane %v6563, %v6575
        %v6577 = vlaneseq
        %v6578 = vshrl.u32 %v6577, 7
        %v6579 = vsub.s32 3, %v6578
        %v6580 = vrot.slane %v6563, %v6579
        %v6581 = vlaneseq
        %v6582 = vshrl.u32 %v6581, 7
        %v6583 = vsub.s32 4, %v6582
        %v6584 = vrot.slane %v6563, %v6583
        %v6585 = vlaneseq
        %v6586 = vshrl.u32 %v6585, 7
        %v6587 = vsub.s32 5, %v6586
        %v6588 = vrot.slane %v6563, %v6587
        %v6589 = vlaneseq
        %v6590 = vshrl.u32 %v6589, 7
        %v6591 = vsub.s32 6, %v6590
        %v6592 = vrot.slane %v6563, %v6591
        %6600 = vmatprep.subr.mxu0 %v6116
        %6601 = vmatpush1.msra.mxu0 %v6115
        %6602 = vmatprep.subr.mxu0 %v6123
        %6603 = vmatpush1.msra.mxu0 %v6122
        %6604 = vmatprep.subr.mxu0 %v6130
        %6605 = vmatpush1.msra.mxu0 %v6129
        %6606 = vmatprep.subr.mxu0 %v6137
        %6607 = vmatpush1.msra.mxu0 %v6136
        %6608 = vmatprep.subr.mxu0 %v6144
        %6609 = vmatpush1.msra.mxu0 %v6143
        %6610 = vmatprep.subr.mxu0 %v6151
        %6611 = vmatpush1.msra.mxu0 %v6150
        %6612 = vmatprep.subr.mxu0 %v6158
        %6613 = vmatpush1.msra.mxu0 %v6157
        %6614 = vmatprep.subr.mxu0 %v6165
        %6615 = vmatpush1.msra.mxu0 %v6164
        %6616 = vmatprep.subr.mxu0 %v6172
        %6617 = vmatpush1.msra.mxu0 %v6171
        %6618 = vmatprep.subr.mxu0 %v6179
        %6619 = vmatpush1.msra.mxu0 %v6178
        %6620 = vmatprep.subr.mxu0 %v6186
        %6621 = vmatpush1.msra.mxu0 %v6185
        %6622 = vmatprep.subr.mxu0 %v6193
        %6623 = vmatpush1.msra.mxu0 %v6192
        %6624 = vmatprep.subr.mxu0 %v6200
        %6625 = vmatpush1.msra.mxu0 %v6199
        %6626 = vmatprep.subr.mxu0 %v6207
        %6627 = vmatpush1.msra.mxu0 %v6206
        %6628 = vmatprep.subr.mxu0 %v6214
        %6629 = vmatpush1.msra.mxu0 %v6213
        %6630 = vmatprep.subr.mxu0 %v6221
        %6631 = vmatpush1.msra.mxu0 %v6220
        %6632 = vmatprep.subr.mxu0 %v6228
        %6633 = vmatpush1.msra.mxu0 %v6227
        %6634 = vmatprep.subr.mxu0 %v6235
        %6635 = vmatpush1.msra.mxu0 %v6234
        %6636 = vmatprep.subr.mxu0 %v6242
        %6637 = vmatpush1.msra.mxu0 %v6241
        %6638 = vmatprep.subr.mxu0 %v6249
        %6639 = vmatpush1.msra.mxu0 %v6248
        %6640 = vmatprep.subr.mxu0 %v6256
        %6641 = vmatpush1.msra.mxu0 %v6255
        %6642 = vmatprep.subr.mxu0 %v6263
        %6643 = vmatpush1.msra.mxu0 %v6262
        %6644 = vmatprep.subr.mxu0 %v6270
        %6645 = vmatpush1.msra.mxu0 %v6269
        %6646 = vmatprep.subr.mxu0 %v6277
        %6647 = vmatpush1.msra.mxu0 %v6276
        %6648 = vmatprep.subr.mxu0 %v6284
        %6649 = vmatpush1.msra.mxu0 %v6283
        %6650 = vmatprep.subr.mxu0 %v6291
        %6651 = vmatpush1.msra.mxu0 %v6290
        %6652 = vmatprep.subr.mxu0 %v6298
        %6653 = vmatpush1.msra.mxu0 %v6297
        %6654 = vmatprep.subr.mxu0 %v6305
        %6655 = vmatpush1.msra.mxu0 %v6304
        %6656 = vmatprep.subr.mxu0 %v6312
        %6657 = vmatpush1.msra.mxu0 %v6311
        %6658 = vmatprep.subr.mxu0 %v6319
        %6659 = vmatpush1.msra.mxu0 %v6318
        %6660 = vmatprep.subr.mxu0 %v6326
        %6661 = vmatpush1.msra.mxu0 %v6325
        %6662 = vmatprep.subr.mxu0 %v6333
        %6663 = vmatpush1.msra.mxu0 %v6332
        %6664 = vmatprep.mubr.f32.mxu0 %v5856
        %6665 = vmatmul.mubr.f32.gmra.mrb[0].mxu0 %v5855
        %v6666 = vpop.f32.mrb[0].mxu0
        %v6667 = vadd.f32 %v6568, %v6666
        %v6668 = vpop.f32.mrb[0].mxu0
        %v6669 = vadd.f32 %v6572, %v6668
        %6670 = vdwg.mxu0
        %6671 = vmatprep.subr.mxu0 %v6340
        %6672 = vmatpush1.msra.mxu0 %v6339
        %6673 = vmatprep.subr.mxu0 %v6347
        %6674 = vmatpush1.msra.mxu0 %v6346
        %6675 = vmatprep.subr.mxu0 %v6354
        %6676 = vmatpush1.msra.mxu0 %v6353
        %6677 = vmatprep.subr.mxu0 %v6361
        %6678 = vmatpush1.msra.mxu0 %v6360
        %6679 = vmatprep.subr.mxu0 %v6368
        %6680 = vmatpush1.msra.mxu0 %v6367
        %6681 = vmatprep.subr.mxu0 %v6375
        %6682 = vmatpush1.msra.mxu0 %v6374
        %6683 = vmatprep.subr.mxu0 %v6382
        %6684 = vmatpush1.msra.mxu0 %v6381
        %6685 = vmatprep.subr.mxu0 %v6389
        %6686 = vmatpush1.msra.mxu0 %v6388
        %6687 = vmatprep.subr.mxu0 %v6396
        %6688 = vmatpush1.msra.mxu0 %v6395
        %6689 = vmatprep.subr.mxu0 %v6403
        %6690 = vmatpush1.msra.mxu0 %v6402
        %6691 = vmatprep.subr.mxu0 %v6410
        %6692 = vmatpush1.msra.mxu0 %v6409
        %6693 = vmatprep.subr.mxu0 %v6417
        %6694 = vmatpush1.msra.mxu0 %v6416
        %6695 = vmatprep.subr.mxu0 %v6424
        %6696 = vmatpush1.msra.mxu0 %v6423
        %6697 = vmatprep.subr.mxu0 %v6431
        %6698 = vmatpush1.msra.mxu0 %v6430
        %6699 = vmatprep.subr.mxu0 %v6438
        %6700 = vmatpush1.msra.mxu0 %v6437
        %6701 = vmatprep.subr.mxu0 %v6445
        %6702 = vmatpush1.msra.mxu0 %v6444
        %6703 = vmatprep.subr.mxu0 %v6452
        %6704 = vmatpush1.msra.mxu0 %v6451
        %6705 = vmatprep.subr.mxu0 %v6459
        %6706 = vmatpush1.msra.mxu0 %v6458
        %6707 = vmatprep.subr.mxu0 %v6466
        %6708 = vmatpush1.msra.mxu0 %v6465
        %6709 = vmatprep.subr.mxu0 %v6473
        %6710 = vmatpush1.msra.mxu0 %v6472
        %6711 = vmatprep.subr.mxu0 %v6480
        %6712 = vmatpush1.msra.mxu0 %v6479
        %6713 = vmatprep.subr.mxu0 %v6487
        %6714 = vmatpush1.msra.mxu0 %v6486
        %6715 = vmatprep.subr.mxu0 %v6494
        %6716 = vmatpush1.msra.mxu0 %v6493
        %6717 = vmatprep.subr.mxu0 %v6501
        %6718 = vmatpush1.msra.mxu0 %v6500
        %6719 = vmatprep.subr.mxu0 %v6508
        %6720 = vmatpush1.msra.mxu0 %v6507
        %6721 = vmatprep.subr.mxu0 %v6515
        %6722 = vmatpush1.msra.mxu0 %v6514
        %6723 = vmatprep.subr.mxu0 %v6522
        %6724 = vmatpush1.msra.mxu0 %v6521
        %6725 = vmatprep.subr.mxu0 %v6529
        %6726 = vmatpush1.msra.mxu0 %v6528
        %6727 = vmatprep.subr.mxu0 %v6536
        %6728 = vmatpush1.msra.mxu0 %v6535
        %6729 = vmatprep.subr.mxu0 %v6543
        %6730 = vmatpush1.msra.mxu0 %v6542
        %6731 = vmatprep.subr.mxu0 %v6550
        %6732 = vmatpush1.msra.mxu0 %v6549
        %6733 = vmatprep.subr.mxu0 %v6557
        %6734 = vmatpush1.msra.mxu0 %v6556
        %6735 = vmatprep.mubr.f32.mxu0 %v5858
        %6736 = vmatmul.mubr.f32.gmra.mrb[0].mxu0 %v5857
        %v6737 = vpop.f32.mrb[0].mxu0
        %v6738 = vadd.f32 %v6667, %v6737
        %v6739 = vpop.f32.mrb[0].mxu0
        %v6740 = vadd.f32 %v6669, %v6739
        %6741 = vdwg.mxu0
        %6742 = vmatprep.subr.mxu0 %v6118
        %6743 = vmatpush1.msra.mxu0 %v6117
        %6744 = vmatprep.subr.mxu0 %v6125
        %6745 = vmatpush1.msra.mxu0 %v6124
        %6746 = vmatprep.subr.mxu0 %v6132
        %6747 = vmatpush1.msra.mxu0 %v6131
        %6748 = vmatprep.subr.mxu0 %v6139
        %6749 = vmatpush1.msra.mxu0 %v6138
        %6750 = vmatprep.subr.mxu0 %v6146
        %6751 = vmatpush1.msra.mxu0 %v6145
        %6752 = vmatprep.subr.mxu0 %v6153
        %6753 = vmatpush1.msra.mxu0 %v6152
        %6754 = vmatprep.subr.mxu0 %v6160
        %6755 = vmatpush1.msra.mxu0 %v6159
        %6756 = vmatprep.subr.mxu0 %v6167
        %6757 = vmatpush1.msra.mxu0 %v6166
        %6758 = vmatprep.subr.mxu0 %v6174
        %6759 = vmatpush1.msra.mxu0 %v6173
        %6760 = vmatprep.subr.mxu0 %v6181
        %6761 = vmatpush1.msra.mxu0 %v6180
        %6762 = vmatprep.subr.mxu0 %v6188
        %6763 = vmatpush1.msra.mxu0 %v6187
        %6764 = vmatprep.subr.mxu0 %v6195
        %6765 = vmatpush1.msra.mxu0 %v6194
        %6766 = vmatprep.subr.mxu0 %v6202
        %6767 = vmatpush1.msra.mxu0 %v6201
        %6768 = vmatprep.subr.mxu0 %v6209
        %6769 = vmatpush1.msra.mxu0 %v6208
        %6770 = vmatprep.subr.mxu0 %v6216
        %6771 = vmatpush1.msra.mxu0 %v6215
        %6772 = vmatprep.subr.mxu0 %v6223
        %6773 = vmatpush1.msra.mxu0 %v6222
        %6774 = vmatprep.subr.mxu0 %v6230
        %6775 = vmatpush1.msra.mxu0 %v6229
        %6776 = vmatprep.subr.mxu0 %v6237
        %6777 = vmatpush1.msra.mxu0 %v6236
        %6778 = vmatprep.subr.mxu0 %v6244
        %6779 = vmatpush1.msra.mxu0 %v6243
        %6780 = vmatprep.subr.mxu0 %v6251
        %6781 = vmatpush1.msra.mxu0 %v6250
        %6782 = vmatprep.subr.mxu0 %v6258
        %6783 = vmatpush1.msra.mxu0 %v6257
        %6784 = vmatprep.subr.mxu0 %v6265
        %6785 = vmatpush1.msra.mxu0 %v6264
        %6786 = vmatprep.subr.mxu0 %v6272
        %6787 = vmatpush1.msra.mxu0 %v6271
        %6788 = vmatprep.subr.mxu0 %v6279
        %6789 = vmatpush1.msra.mxu0 %v6278
        %6790 = vmatprep.subr.mxu0 %v6286
        %6791 = vmatpush1.msra.mxu0 %v6285
        %6792 = vmatprep.subr.mxu0 %v6293
        %6793 = vmatpush1.msra.mxu0 %v6292
        %6794 = vmatprep.subr.mxu0 %v6300
        %6795 = vmatpush1.msra.mxu0 %v6299
        %6796 = vmatprep.subr.mxu0 %v6307
        %6797 = vmatpush1.msra.mxu0 %v6306
        %6798 = vmatprep.subr.mxu0 %v6314
        %6799 = vmatpush1.msra.mxu0 %v6313
        %6800 = vmatprep.subr.mxu0 %v6321
        %6801 = vmatpush1.msra.mxu0 %v6320
        %6802 = vmatprep.subr.mxu0 %v6328
        %6803 = vmatpush1.msra.mxu0 %v6327
        %6804 = vmatprep.subr.mxu0 %v6335
        %6805 = vmatpush1.msra.mxu0 %v6334
        %6806 = vmatprep.mubr.f32.mxu0 %v5856
        %6807 = vmatmul.mubr.f32.gmra.mrb[0].mxu0 %v5855
        %v6808 = vpop.f32.mrb[0].mxu0
        %v6809 = vadd.f32 %v6576, %v6808
        %v6810 = vpop.f32.mrb[0].mxu0
        %v6811 = vadd.f32 %v6580, %v6810
        %6812 = vdwg.mxu0
        %6813 = vmatprep.subr.mxu0 %v6342
        %6814 = vmatpush1.msra.mxu0 %v6341
        %6815 = vmatprep.subr.mxu0 %v6349
        %6816 = vmatpush1.msra.mxu0 %v6348
        %6817 = vmatprep.subr.mxu0 %v6356
        %6818 = vmatpush1.msra.mxu0 %v6355
        %6819 = vmatprep.subr.mxu0 %v6363
        %6820 = vmatpush1.msra.mxu0 %v6362
        %6821 = vmatprep.subr.mxu0 %v6370
        %6822 = vmatpush1.msra.mxu0 %v6369
        %6823 = vmatprep.subr.mxu0 %v6377
        %6824 = vmatpush1.msra.mxu0 %v6376
        %6825 = vmatprep.subr.mxu0 %v6384
        %6826 = vmatpush1.msra.mxu0 %v6383
        %6827 = vmatprep.subr.mxu0 %v6391
        %6828 = vmatpush1.msra.mxu0 %v6390
        %6829 = vmatprep.subr.mxu0 %v6398
        %6830 = vmatpush1.msra.mxu0 %v6397
        %6831 = vmatprep.subr.mxu0 %v6405
        %6832 = vmatpush1.msra.mxu0 %v6404
        %6833 = vmatprep.subr.mxu0 %v6412
        %6834 = vmatpush1.msra.mxu0 %v6411
        %6835 = vmatprep.subr.mxu0 %v6419
        %6836 = vmatpush1.msra.mxu0 %v6418
        %6837 = vmatprep.subr.mxu0 %v6426
        %6838 = vmatpush1.msra.mxu0 %v6425
        %6839 = vmatprep.subr.mxu0 %v6433
        %6840 = vmatpush1.msra.mxu0 %v6432
        %6841 = vmatprep.subr.mxu0 %v6440
        %6842 = vmatpush1.msra.mxu0 %v6439
        %6843 = vmatprep.subr.mxu0 %v6447
        %6844 = vmatpush1.msra.mxu0 %v6446
        %6845 = vmatprep.subr.mxu0 %v6454
        %6846 = vmatpush1.msra.mxu0 %v6453
        %6847 = vmatprep.subr.mxu0 %v6461
        %6848 = vmatpush1.msra.mxu0 %v6460
        %6849 = vmatprep.subr.mxu0 %v6468
        %6850 = vmatpush1.msra.mxu0 %v6467
        %6851 = vmatprep.subr.mxu0 %v6475
        %6852 = vmatpush1.msra.mxu0 %v6474
        %6853 = vmatprep.subr.mxu0 %v6482
        %6854 = vmatpush1.msra.mxu0 %v6481
        %6855 = vmatprep.subr.mxu0 %v6489
        %6856 = vmatpush1.msra.mxu0 %v6488
        %6857 = vmatprep.subr.mxu0 %v6496
        %6858 = vmatpush1.msra.mxu0 %v6495
        %6859 = vmatprep.subr.mxu0 %v6503
        %6860 = vmatpush1.msra.mxu0 %v6502
        %6861 = vmatprep.subr.mxu0 %v6510
        %6862 = vmatpush1.msra.mxu0 %v6509
        %6863 = vmatprep.subr.mxu0 %v6517
        %6864 = vmatpush1.msra.mxu0 %v6516
        %6865 = vmatprep.subr.mxu0 %v6524
        %6866 = vmatpush1.msra.mxu0 %v6523
        %6867 = vmatprep.subr.mxu0 %v6531
        %6868 = vmatpush1.msra.mxu0 %v6530
        %6869 = vmatprep.subr.mxu0 %v6538
        %6870 = vmatpush1.msra.mxu0 %v6537
        %6871 = vmatprep.subr.mxu0 %v6545
        %6872 = vmatpush1.msra.mxu0 %v6544
        %6873 = vmatprep.subr.mxu0 %v6552
        %6874 = vmatpush1.msra.mxu0 %v6551
        %6875 = vmatprep.subr.mxu0 %v6559
        %6876 = vmatpush1.msra.mxu0 %v6558
        %6877 = vmatprep.mubr.f32.mxu0 %v5858
        %6878 = vmatmul.mubr.f32.gmra.mrb[0].mxu0 %v5857
        %v6879 = vpop.f32.mrb[0].mxu0
        %v6880 = vadd.f32 %v6809, %v6879
        %v6881 = vpop.f32.mrb[0].mxu0
        %v6882 = vadd.f32 %v6811, %v6881
        %6883 = vdwg.mxu0
        %6884 = vmatprep.subr.mxu0 %v6120
        %6885 = vmatpush1.msra.mxu0 %v6119
        %6886 = vmatprep.subr.mxu0 %v6127
        %6887 = vmatpush1.msra.mxu0 %v6126
        %6888 = vmatprep.subr.mxu0 %v6134
        %6889 = vmatpush1.msra.mxu0 %v6133
        %6890 = vmatprep.subr.mxu0 %v6141
        %6891 = vmatpush1.msra.mxu0 %v6140
        %6892 = vmatprep.subr.mxu0 %v6148
        %6893 = vmatpush1.msra.mxu0 %v6147
        %6894 = vmatprep.subr.mxu0 %v6155
        %6895 = vmatpush1.msra.mxu0 %v6154
        %6896 = vmatprep.subr.mxu0 %v6162
        %6897 = vmatpush1.msra.mxu0 %v6161
        %6898 = vmatprep.subr.mxu0 %v6169
        %6899 = vmatpush1.msra.mxu0 %v6168
        %6900 = vmatprep.subr.mxu0 %v6176
        %6901 = vmatpush1.msra.mxu0 %v6175
        %6902 = vmatprep.subr.mxu0 %v6183
        %6903 = vmatpush1.msra.mxu0 %v6182
        %6904 = vmatprep.subr.mxu0 %v6190
        %6905 = vmatpush1.msra.mxu0 %v6189
        %6906 = vmatprep.subr.mxu0 %v6197
        %6907 = vmatpush1.msra.mxu0 %v6196
        %6908 = vmatprep.subr.mxu0 %v6204
        %6909 = vmatpush1.msra.mxu0 %v6203
        %6910 = vmatprep.subr.mxu0 %v6211
        %6911 = vmatpush1.msra.mxu0 %v6210
        %6912 = vmatprep.subr.mxu0 %v6218
        %6913 = vmatpush1.msra.mxu0 %v6217
        %6914 = vmatprep.subr.mxu0 %v6225
        %6915 = vmatpush1.msra.mxu0 %v6224
        %6916 = vmatprep.subr.mxu0 %v6232
        %6917 = vmatpush1.msra.mxu0 %v6231
        %6918 = vmatprep.subr.mxu0 %v6239
        %6919 = vmatpush1.msra.mxu0 %v6238
        %6920 = vmatprep.subr.mxu0 %v6246
        %6921 = vmatpush1.msra.mxu0 %v6245
        %6922 = vmatprep.subr.mxu0 %v6253
        %6923 = vmatpush1.msra.mxu0 %v6252
        %6924 = vmatprep.subr.mxu0 %v6260
        %6925 = vmatpush1.msra.mxu0 %v6259
        %6926 = vmatprep.subr.mxu0 %v6267
        %6927 = vmatpush1.msra.mxu0 %v6266
        %6928 = vmatprep.subr.mxu0 %v6274
        %6929 = vmatpush1.msra.mxu0 %v6273
        %6930 = vmatprep.subr.mxu0 %v6281
        %6931 = vmatpush1.msra.mxu0 %v6280
        %6932 = vmatprep.subr.mxu0 %v6288
        %6933 = vmatpush1.msra.mxu0 %v6287
        %6934 = vmatprep.subr.mxu0 %v6295
        %6935 = vmatpush1.msra.mxu0 %v6294
        %6936 = vmatprep.subr.mxu0 %v6302
        %6937 = vmatpush1.msra.mxu0 %v6301
        %6938 = vmatprep.subr.mxu0 %v6309
        %6939 = vmatpush1.msra.mxu0 %v6308
        %6940 = vmatprep.subr.mxu0 %v6316
        %6941 = vmatpush1.msra.mxu0 %v6315
        %6942 = vmatprep.subr.mxu0 %v6323
        %6943 = vmatpush1.msra.mxu0 %v6322
        %6944 = vmatprep.subr.mxu0 %v6330
        %6945 = vmatpush1.msra.mxu0 %v6329
        %6946 = vmatprep.subr.mxu0 %v6337
        %6947 = vmatpush1.msra.mxu0 %v6336
        %6948 = vmatprep.mubr.f32.mxu0 %v5856
        %6949 = vmatmul.mubr.f32.gmra.mrb[0].mxu0 %v5855
        %v6950 = vpop.f32.mrb[0].mxu0
        %v6951 = vadd.f32 %v6584, %v6950
        %v6952 = vpop.f32.mrb[0].mxu0
        %v6953 = vadd.f32 %v6588, %v6952
        %6954 = vdwg.mxu0
        %6955 = vmatprep.subr.mxu0 %v6344
        %6956 = vmatpush1.msra.mxu0 %v6343
        %6957 = vmatprep.subr.mxu0 %v6351
        %6958 = vmatpush1.msra.mxu0 %v6350
        %6959 = vmatprep.subr.mxu0 %v6358
        %6960 = vmatpush1.msra.mxu0 %v6357
        %6961 = vmatprep.subr.mxu0 %v6365
        %6962 = vmatpush1.msra.mxu0 %v6364
        %6963 = vmatprep.subr.mxu0 %v6372
        %6964 = vmatpush1.msra.mxu0 %v6371
        %6965 = vmatprep.subr.mxu0 %v6379
        %6966 = vmatpush1.msra.mxu0 %v6378
        %6967 = vmatprep.subr.mxu0 %v6386
        %6968 = vmatpush1.msra.mxu0 %v6385
        %6969 = vmatprep.subr.mxu0 %v6393
        %6970 = vmatpush1.msra.mxu0 %v6392
        %6971 = vmatprep.subr.mxu0 %v6400
        %6972 = vmatpush1.msra.mxu0 %v6399
        %6973 = vmatprep.subr.mxu0 %v6407
        %6974 = vmatpush1.msra.mxu0 %v6406
        %6975 = vmatprep.subr.mxu0 %v6414
        %6976 = vmatpush1.msra.mxu0 %v6413
        %6977 = vmatprep.subr.mxu0 %v6421
        %6978 = vmatpush1.msra.mxu0 %v6420
        %6979 = vmatprep.subr.mxu0 %v6428
        %6980 = vmatpush1.msra.mxu0 %v6427
        %6981 = vmatprep.subr.mxu0 %v6435
        %6982 = vmatpush1.msra.mxu0 %v6434
        %6983 = vmatprep.subr.mxu0 %v6442
        %6984 = vmatpush1.msra.mxu0 %v6441
        %6985 = vmatprep.subr.mxu0 %v6449
        %6986 = vmatpush1.msra.mxu0 %v6448
        %6987 = vmatprep.subr.mxu0 %v6456
        %6988 = vmatpush1.msra.mxu0 %v6455
        %6989 = vmatprep.subr.mxu0 %v6463
        %6990 = vmatpush1.msra.mxu0 %v6462
        %6991 = vmatprep.subr.mxu0 %v6470
        %6992 = vmatpush1.msra.mxu0 %v6469
        %6993 = vmatprep.subr.mxu0 %v6477
        %6994 = vmatpush1.msra.mxu0 %v6476
        %6995 = vmatprep.subr.mxu0 %v6484
        %6996 = vmatpush1.msra.mxu0 %v6483
        %6997 = vmatprep.subr.mxu0 %v6491
        %6998 = vmatpush1.msra.mxu0 %v6490
        %6999 = vmatprep.subr.mxu0 %v6498
        %7000 = vmatpush1.msra.mxu0 %v6497
        %7001 = vmatprep.subr.mxu0 %v6505
        %7002 = vmatpush1.msra.mxu0 %v6504
        %7003 = vmatprep.subr.mxu0 %v6512
        %7004 = vmatpush1.msra.mxu0 %v6511
        %7005 = vmatprep.subr.mxu0 %v6519
        %7006 = vmatpush1.msra.mxu0 %v6518
        %7007 = vmatprep.subr.mxu0 %v6526
        %7008 = vmatpush1.msra.mxu0 %v6525
        %7009 = vmatprep.subr.mxu0 %v6533
        %7010 = vmatpush1.msra.mxu0 %v6532
        %7011 = vmatprep.subr.mxu0 %v6540
        %7012 = vmatpush1.msra.mxu0 %v6539
        %7013 = vmatprep.subr.mxu0 %v6547
        %7014 = vmatpush1.msra.mxu0 %v6546
        %7015 = vmatprep.subr.mxu0 %v6554
        %7016 = vmatpush1.msra.mxu0 %v6553
        %7017 = vmatprep.subr.mxu0 %v6561
        %7018 = vmatpush1.msra.mxu0 %v6560
        %7019 = vmatprep.mubr.f32.mxu0 %v5858
        %7020 = vmatmul.mubr.f32.gmra.mrb[0].mxu0 %v5857
        %v7021 = vpop.f32.mrb[0].mxu0
        %v7022 = vadd.f32 %v6951, %v7021
        %v7023 = vpop.f32.mrb[0].mxu0
        %v7024 = vadd.f32 %v6953, %v7023
        %7025 = vdwg.mxu0
        %7026 = vmatprep.subr.mxu0 0.0
        %7027 = vmatpush1.msra.mxu0 %v6121
        %7028 = vmatprep.subr.mxu0 0.0
        %7029 = vmatpush1.msra.mxu0 %v6128
        %7030 = vmatprep.subr.mxu0 0.0
        %7031 = vmatpush1.msra.mxu0 %v6135
        %7032 = vmatprep.subr.mxu0 0.0
        %7033 = vmatpush1.msra.mxu0 %v6142
        %7034 = vmatprep.subr.mxu0 0.0
        %7035 = vmatpush1.msra.mxu0 %v6149
        %7036 = vmatprep.subr.mxu0 0.0
        %7037 = vmatpush1.msra.mxu0 %v6156
        %7038 = vmatprep.subr.mxu0 0.0
        %7039 = vmatpush1.msra.mxu0 %v6163
        %7040 = vmatprep.subr.mxu0 0.0
        %7041 = vmatpush1.msra.mxu0 %v6170
        %7042 = vmatprep.subr.mxu0 0.0
        %7043 = vmatpush1.msra.mxu0 %v6177
        %7044 = vmatprep.subr.mxu0 0.0
        %7045 = vmatpush1.msra.mxu0 %v6184
        %7046 = vmatprep.subr.mxu0 0.0
        %7047 = vmatpush1.msra.mxu0 %v6191
        %7048 = vmatprep.subr.mxu0 0.0
        %7049 = vmatpush1.msra.mxu0 %v6198
        %7050 = vmatprep.subr.mxu0 0.0
        %7051 = vmatpush1.msra.mxu0 %v6205
        %7052 = vmatprep.subr.mxu0 0.0
        %7053 = vmatpush1.msra.mxu0 %v6212
        %7054 = vmatprep.subr.mxu0 0.0
        %7055 = vmatpush1.msra.mxu0 %v6219
        %7056 = vmatprep.subr.mxu0 0.0
        %7057 = vmatpush1.msra.mxu0 %v6226
        %7058 = vmatprep.subr.mxu0 0.0
        %7059 = vmatpush1.msra.mxu0 %v6233
        %7060 = vmatprep.subr.mxu0 0.0
        %7061 = vmatpush1.msra.mxu0 %v6240
        %7062 = vmatprep.subr.mxu0 0.0
        %7063 = vmatpush1.msra.mxu0 %v6247
        %7064 = vmatprep.subr.mxu0 0.0
        %7065 = vmatpush1.msra.mxu0 %v6254
        %7066 = vmatprep.subr.mxu0 0.0
        %7067 = vmatpush1.msra.mxu0 %v6261
        %7068 = vmatprep.subr.mxu0 0.0
        %7069 = vmatpush1.msra.mxu0 %v6268
        %7070 = vmatprep.subr.mxu0 0.0
        %7071 = vmatpush1.msra.mxu0 %v6275
        %7072 = vmatprep.subr.mxu0 0.0
        %7073 = vmatpush1.msra.mxu0 %v6282
        %7074 = vmatprep.subr.mxu0 0.0
        %7075 = vmatpush1.msra.mxu0 %v6289
        %7076 = vmatprep.subr.mxu0 0.0
        %7077 = vmatpush1.msra.mxu0 %v6296
        %7078 = vmatprep.subr.mxu0 0.0
        %7079 = vmatpush1.msra.mxu0 %v6303
        %7080 = vmatprep.subr.mxu0 0.0
        %7081 = vmatpush1.msra.mxu0 %v6310
        %7082 = vmatprep.subr.mxu0 0.0
        %7083 = vmatpush1.msra.mxu0 %v6317
        %7084 = vmatprep.subr.mxu0 0.0
        %7085 = vmatpush1.msra.mxu0 %v6324
        %7086 = vmatprep.subr.mxu0 0.0
        %7087 = vmatpush1.msra.mxu0 %v6331
        %7088 = vmatprep.subr.mxu0 0.0
        %7089 = vmatpush1.msra.mxu0 %v6338
        %7090 = vmatprep.mubr.f32.mxu0 %v5856
        %7091 = vmatmul.mubr.f32.gmra.mrb[0].mxu0 %v5855
        %v7092 = vpop.f32.mrb[0].mxu0
        %v7093 = vadd.f32 %v6592, %v7092
        %v7094 = vpop.f32.mrb[0].mxu0
        %7095 = vdwg.mxu0
        %7096 = vmatprep.subr.mxu0 0.0
        %7097 = vmatpush1.msra.mxu0 %v6345
        %7098 = vmatprep.subr.mxu0 0.0
        %7099 = vmatpush1.msra.mxu0 %v6352
        %7100 = vmatprep.subr.mxu0 0.0
        %7101 = vmatpush1.msra.mxu0 %v6359
        %7102 = vmatprep.subr.mxu0 0.0
        %7103 = vmatpush1.msra.mxu0 %v6366
        %7104 = vmatprep.subr.mxu0 0.0
        %7105 = vmatpush1.msra.mxu0 %v6373
        %7106 = vmatprep.subr.mxu0 0.0
        %7107 = vmatpush1.msra.mxu0 %v6380
        %7108 = vmatprep.subr.mxu0 0.0
        %7109 = vmatpush1.msra.mxu0 %v6387
        %7110 = vmatprep.subr.mxu0 0.0
        %7111 = vmatpush1.msra.mxu0 %v6394
        %7112 = vmatprep.subr.mxu0 0.0
        %7113 = vmatpush1.msra.mxu0 %v6401
        %7114 = vmatprep.subr.mxu0 0.0
        %7115 = vmatpush1.msra.mxu0 %v6408
        %7116 = vmatprep.subr.mxu0 0.0
        %7117 = vmatpush1.msra.mxu0 %v6415
        %7118 = vmatprep.subr.mxu0 0.0
        %7119 = vmatpush1.msra.mxu0 %v6422
        %7120 = vmatprep.subr.mxu0 0.0
        %7121 = vmatpush1.msra.mxu0 %v6429
        %7122 = vmatprep.subr.mxu0 0.0
        %7123 = vmatpush1.msra.mxu0 %v6436
        %7124 = vmatprep.subr.mxu0 0.0
        %7125 = vmatpush1.msra.mxu0 %v6443
        %7126 = vmatprep.subr.mxu0 0.0
        %7127 = vmatpush1.msra.mxu0 %v6450
        %7128 = vmatprep.subr.mxu0 0.0
        %7129 = vmatpush1.msra.mxu0 %v6457
        %7130 = vmatprep.subr.mxu0 0.0
        %7131 = vmatpush1.msra.mxu0 %v6464
        %7132 = vmatprep.subr.mxu0 0.0
        %7133 = vmatpush1.msra.mxu0 %v6471
        %7134 = vmatprep.subr.mxu0 0.0
        %7135 = vmatpush1.msra.mxu0 %v6478
        %7136 = vmatprep.subr.mxu0 0.0
        %7137 = vmatpush1.msra.mxu0 %v6485
        %7138 = vmatprep.subr.mxu0 0.0
        %7139 = vmatpush1.msra.mxu0 %v6492
        %7140 = vmatprep.subr.mxu0 0.0
        %7141 = vmatpush1.msra.mxu0 %v6499
        %7142 = vmatprep.subr.mxu0 0.0
        %7143 = vmatpush1.msra.mxu0 %v6506
        %7144 = vmatprep.subr.mxu0 0.0
        %7145 = vmatpush1.msra.mxu0 %v6513
        %7146 = vmatprep.subr.mxu0 0.0
        %7147 = vmatpush1.msra.mxu0 %v6520
        %7148 = vmatprep.subr.mxu0 0.0
        %7149 = vmatpush1.msra.mxu0 %v6527
        %7150 = vmatprep.subr.mxu0 0.0
        %7151 = vmatpush1.msra.mxu0 %v6534
        %7152 = vmatprep.subr.mxu0 0.0
        %7153 = vmatpush1.msra.mxu0 %v6541
        %7154 = vmatprep.subr.mxu0 0.0
        %7155 = vmatpush1.msra.mxu0 %v6548
        %7156 = vmatprep.subr.mxu0 0.0
        %7157 = vmatpush1.msra.mxu0 %v6555
        %7158 = vmatprep.subr.mxu0 0.0
        %7159 = vmatpush1.msra.mxu0 %v6562
        %7160 = vmatprep.mubr.f32.mxu0 %v5858
        %7161 = vmatmul.mubr.f32.gmra.mrb[0].mxu0 %v5857
        %v7162 = vpop.f32.mrb[0].mxu0
        %v7163 = vadd.f32 %v7093, %v7162
        %v7164 = vpop.f32.mrb[0].mxu0
        %7165 = vdwg.mxu0
        %v7166 = vmax.f32 %v6738, 0.0
        %v7167 = vmax.f32 %v6740, 0.0
        %v7168 = vmax.f32 %v6880, 0.0
        %v7169 = vmax.f32 %v6882, 0.0
        %v7170 = vmax.f32 %v7022, 0.0
        %v7171 = vmax.f32 %v7024, 0.0
        %v7172 = vmax.f32 %v7163, 0.0
        %v7173 = vld [vmem:[%s864] sm:$0xf]
        %v7174 = vld [vmem:[%s864 + $0x4] sm:$0xf]
        %v7175 = vld [vmem:[%s864 + $0x8] sm:$0xf]
        %v7176 = vld [vmem:[%s864 + $0xc] sm:$0xf]
        %v7177 = vld [vmem:[%s864 + $0x10] sm:$0xf]
        %v7178 = vld [vmem:[%s864 + $0x14] sm:$0xf]
        %v7179 = vld [vmem:[%s864 + $0x18] sm:$0xf]
        %v7180 = vld [vmem:[%s864 + $0x1c] sm:$0xf]
        %v7181 = vld [vmem:[%s864 + $0x20] sm:$0xf]
        %v7182 = vld [vmem:[%s864 + $0x24] sm:$0xf]
        %v7183 = vld [vmem:[%s864 + $0x28] sm:$0xf]
        %v7184 = vld [vmem:[%s864 + $0x2c] sm:$0xf]
        %v7185 = vld [vmem:[%s864 + $0x30] sm:$0xf]
        %v7186 = vld [vmem:[%s864 + $0x34] sm:$0xf]
        %v7187 = vld [vmem:[%s864 + $0x38] sm:$0xf]
        %v7188 = vld [vmem:[%s864 + $0x3c] sm:$0xf]
        %v7189 = vld [vmem:[%s864 + $0x40] sm:$0xf]
        %v7190 = vld [vmem:[%s864 + $0x44] sm:$0xf]
        %v7191 = vld [vmem:[%s864 + $0x48] sm:$0xf]
        %v7192 = vld [vmem:[%s864 + $0x4c] sm:$0xf]
        %v7193 = vld [vmem:[%s864 + $0x50] sm:$0xf]
        %v7194 = vld [vmem:[%s864 + $0x54] sm:$0xf]
        %v7195 = vld [vmem:[%s864 + $0x58] sm:$0xf]
        %v7196 = vld [vmem:[%s864 + $0x5c] sm:$0xf]
        %v7197 = vld [vmem:[%s864 + $0x60] sm:$0xf]
        %v7198 = vld [vmem:[%s864 + $0x64] sm:$0xf]
        %v7199 = vld [vmem:[%s864 + $0x68] sm:$0xf]
        %v7200 = vld [vmem:[%s864 + $0x6c] sm:$0xf]
        %v7201 = vld [vmem:[%s864 + $0x70] sm:$0xf]
        %v7202 = vld [vmem:[%s864 + $0x74] sm:$0xf]
        %v7203 = vld [vmem:[%s864 + $0x78] sm:$0xf]
        %v7204 = vld [vmem:[%s864 + $0x7c] sm:$0xf]
        %v7205 = vld [vmem:[%s864 + $0x80] sm:$0xf]
        %v7206 = vld [vmem:[%s864 + $0x84] sm:$0xf]
        %v7207 = vld [vmem:[%s864 + $0x88] sm:$0xf]
        %v7208 = vld [vmem:[%s864 + $0x8c] sm:$0xf]
        %v7209 = vld [vmem:[%s864 + $0x90] sm:$0xf]
        %v7210 = vld [vmem:[%s864 + $0x94] sm:$0xf]
        %v7211 = vld [vmem:[%s864 + $0x98] sm:$0xf]
        %v7212 = vld [vmem:[%s864 + $0x9c] sm:$0xf]
        %v7213 = vld [vmem:[%s864 + $0xa0] sm:$0xf]
        %v7214 = vld [vmem:[%s864 + $0xa4] sm:$0xf]
        %v7215 = vld [vmem:[%s864 + $0xa8] sm:$0xf]
        %v7216 = vld [vmem:[%s864 + $0xac] sm:$0xf]
        %v7217 = vld [vmem:[%s864 + $0xb0] sm:$0xf]
        %v7218 = vld [vmem:[%s864 + $0xb4] sm:$0xf]
        %v7219 = vld [vmem:[%s864 + $0xb8] sm:$0xf]
        %v7220 = vld [vmem:[%s864 + $0xbc] sm:$0xf]
        %v7221 = vld [vmem:[%s864 + $0xc0] sm:$0xf]
        %v7222 = vld [vmem:[%s864 + $0xc4] sm:$0xf]
        %v7223 = vld [vmem:[%s864 + $0xc8] sm:$0xf]
        %v7224 = vld [vmem:[%s864 + $0xcc] sm:$0xf]
        %v7225 = vld [vmem:[%s864 + $0xd0] sm:$0xf]
        %v7226 = vld [vmem:[%s864 + $0xd4] sm:$0xf]
        %v7227 = vld [vmem:[%s864 + $0xd8] sm:$0xf]
        %v7228 = vld [vmem:[%s864 + $0xdc] sm:$0xf]
        %v7229 = vld [vmem:[%s864 + $0xe0] sm:$0xf]
        %v7230 = vld [vmem:[%s864 + $0xe4] sm:$0xf]
        %v7231 = vld [vmem:[%s864 + $0xe8] sm:$0xf]
        %v7232 = vld [vmem:[%s864 + $0xec] sm:$0xf]
        %v7233 = vld [vmem:[%s864 + $0xf0] sm:$0xf]
        %v7234 = vld [vmem:[%s864 + $0xf4] sm:$0xf]
        %v7235 = vld [vmem:[%s864 + $0xf8] sm:$0xf]
        %v7236 = vld [vmem:[%s864 + $0xfc] sm:$0xf]
        %v7237 = vld [vmem:[%s864 + $0x100] sm:$0xf]
        %v7238 = vld [vmem:[%s864 + $0x104] sm:$0xf]
        %v7239 = vld [vmem:[%s864 + $0x108] sm:$0xf]
        %v7240 = vld [vmem:[%s864 + $0x10c] sm:$0xf]
        %v7241 = vld [vmem:[%s864 + $0x110] sm:$0xf]
        %v7242 = vld [vmem:[%s864 + $0x114] sm:$0xf]
        %v7243 = vld [vmem:[%s864 + $0x118] sm:$0xf]
        %v7244 = vld [vmem:[%s864 + $0x11c] sm:$0xf]
        %v7245 = vld [vmem:[%s864 + $0x120] sm:$0xf]
        %v7246 = vld [vmem:[%s864 + $0x124] sm:$0xf]
        %v7247 = vld [vmem:[%s864 + $0x128] sm:$0xf]
        %v7248 = vld [vmem:[%s864 + $0x12c] sm:$0xf]
        %v7249 = vld [vmem:[%s864 + $0x130] sm:$0xf]
        %v7250 = vld [vmem:[%s864 + $0x134] sm:$0xf]
        %v7251 = vld [vmem:[%s864 + $0x138] sm:$0xf]
        %v7252 = vld [vmem:[%s864 + $0x13c] sm:$0xf]
        %v7253 = vld [vmem:[%s864 + $0x140] sm:$0xf]
        %v7254 = vld [vmem:[%s864 + $0x144] sm:$0xf]
        %v7255 = vld [vmem:[%s864 + $0x148] sm:$0xf]
        %v7256 = vld [vmem:[%s864 + $0x14c] sm:$0xf]
        %v7257 = vld [vmem:[%s864 + $0x150] sm:$0xf]
        %v7258 = vld [vmem:[%s864 + $0x154] sm:$0xf]
        %v7259 = vld [vmem:[%s864 + $0x158] sm:$0xf]
        %v7260 = vld [vmem:[%s864 + $0x15c] sm:$0xf]
        %v7261 = vld [vmem:[%s864 + $0x160] sm:$0xf]
        %v7262 = vld [vmem:[%s864 + $0x164] sm:$0xf]
        %v7263 = vld [vmem:[%s864 + $0x168] sm:$0xf]
        %v7264 = vld [vmem:[%s864 + $0x16c] sm:$0xf]
        %v7265 = vld [vmem:[%s864 + $0x170] sm:$0xf]
        %v7266 = vld [vmem:[%s864 + $0x174] sm:$0xf]
        %v7267 = vld [vmem:[%s864 + $0x178] sm:$0xf]
        %v7268 = vld [vmem:[%s864 + $0x17c] sm:$0xf]
        %v7269 = vld [vmem:[%s864 + $0x180] sm:$0xf]
        %v7270 = vld [vmem:[%s864 + $0x184] sm:$0xf]
        %v7271 = vld [vmem:[%s864 + $0x188] sm:$0xf]
        %v7272 = vld [vmem:[%s864 + $0x18c] sm:$0xf]
        %v7273 = vld [vmem:[%s864 + $0x190] sm:$0xf]
        %v7274 = vld [vmem:[%s864 + $0x194] sm:$0xf]
        %v7275 = vld [vmem:[%s864 + $0x198] sm:$0xf]
        %v7276 = vld [vmem:[%s864 + $0x19c] sm:$0xf]
        %v7277 = vld [vmem:[%s864 + $0x1a0] sm:$0xf]
        %v7278 = vld [vmem:[%s864 + $0x1a4] sm:$0xf]
        %v7279 = vld [vmem:[%s864 + $0x1a8] sm:$0xf]
        %v7280 = vld [vmem:[%s864 + $0x1ac] sm:$0xf]
        %v7281 = vld [vmem:[%s864 + $0x1b0] sm:$0xf]
        %v7282 = vld [vmem:[%s864 + $0x1b4] sm:$0xf]
        %v7283 = vld [vmem:[%s864 + $0x1b8] sm:$0xf]
        %v7284 = vld [vmem:[%s864 + $0x1bc] sm:$0xf]
        %v7285 = vunpack.c.l.bf16 %v7173
        %v7286 = vunpack.c.l.bf16 %v7174
        %v7287 = vunpack.c.l.bf16 %v7175
        %v7288 = vunpack.c.l.bf16 %v7176
        %v7289 = vunpack.c.l.bf16 %v7177
        %v7290 = vunpack.c.l.bf16 %v7178
        %v7291 = vunpack.c.l.bf16 %v7179
        %v7292 = vunpack.c.l.bf16 %v7180
        %v7293 = vunpack.c.l.bf16 %v7181
        %v7294 = vunpack.c.l.bf16 %v7182
        %v7295 = vunpack.c.l.bf16 %v7183
        %v7296 = vunpack.c.l.bf16 %v7184
        %v7297 = vunpack.c.l.bf16 %v7185
        %v7298 = vunpack.c.l.bf16 %v7186
        %v7299 = vunpack.c.l.bf16 %v7187
        %v7300 = vunpack.c.l.bf16 %v7188
        %v7301 = vunpack.c.l.bf16 %v7189
        %v7302 = vunpack.c.l.bf16 %v7190
        %v7303 = vunpack.c.l.bf16 %v7191
        %v7304 = vunpack.c.l.bf16 %v7192
        %v7305 = vunpack.c.l.bf16 %v7193
        %v7306 = vunpack.c.l.bf16 %v7194
        %v7307 = vunpack.c.l.bf16 %v7195
        %v7308 = vunpack.c.l.bf16 %v7196
        %v7309 = vunpack.c.l.bf16 %v7197
        %v7310 = vunpack.c.l.bf16 %v7198
        %v7311 = vunpack.c.l.bf16 %v7199
        %v7312 = vunpack.c.l.bf16 %v7200
        %v7313 = vunpack.c.l.bf16 %v7201
        %v7314 = vunpack.c.l.bf16 %v7202
        %v7315 = vunpack.c.l.bf16 %v7203
        %v7316 = vunpack.c.l.bf16 %v7204
        %v7317 = vunpack.c.l.bf16 %v7205
        %v7318 = vunpack.c.l.bf16 %v7206
        %v7319 = vunpack.c.l.bf16 %v7207
        %v7320 = vunpack.c.l.bf16 %v7208
        %v7321 = vunpack.c.l.bf16 %v7209
        %v7322 = vunpack.c.l.bf16 %v7210
        %v7323 = vunpack.c.l.bf16 %v7211
        %v7324 = vunpack.c.l.bf16 %v7212
        %v7325 = vunpack.c.l.bf16 %v7213
        %v7326 = vunpack.c.l.bf16 %v7214
        %v7327 = vunpack.c.l.bf16 %v7215
        %v7328 = vunpack.c.l.bf16 %v7216
        %v7329 = vunpack.c.l.bf16 %v7217
        %v7330 = vunpack.c.l.bf16 %v7218
        %v7331 = vunpack.c.l.bf16 %v7219
        %v7332 = vunpack.c.l.bf16 %v7220
        %v7333 = vunpack.c.l.bf16 %v7221
        %v7334 = vunpack.c.l.bf16 %v7222
        %v7335 = vunpack.c.l.bf16 %v7223
        %v7336 = vunpack.c.l.bf16 %v7224
        %v7337 = vunpack.c.l.bf16 %v7225
        %v7338 = vunpack.c.l.bf16 %v7226
        %v7339 = vunpack.c.l.bf16 %v7227
        %v7340 = vunpack.c.l.bf16 %v7228
        %v7341 = vunpack.c.l.bf16 %v7229
        %v7342 = vunpack.c.l.bf16 %v7230
        %v7343 = vunpack.c.l.bf16 %v7231
        %v7344 = vunpack.c.l.bf16 %v7232
        %v7345 = vunpack.c.l.bf16 %v7233
        %v7346 = vunpack.c.l.bf16 %v7234
        %v7347 = vunpack.c.l.bf16 %v7235
        %v7348 = vunpack.c.l.bf16 %v7236
        %v7349 = vunpack.c.l.bf16 %v7237
        %v7350 = vunpack.c.l.bf16 %v7238
        %v7351 = vunpack.c.l.bf16 %v7239
        %v7352 = vunpack.c.l.bf16 %v7240
        %v7353 = vunpack.c.l.bf16 %v7241
        %v7354 = vunpack.c.l.bf16 %v7242
        %v7355 = vunpack.c.l.bf16 %v7243
        %v7356 = vunpack.c.l.bf16 %v7244
        %v7357 = vunpack.c.l.bf16 %v7245
        %v7358 = vunpack.c.l.bf16 %v7246
        %v7359 = vunpack.c.l.bf16 %v7247
        %v7360 = vunpack.c.l.bf16 %v7248
        %v7361 = vunpack.c.l.bf16 %v7249
        %v7362 = vunpack.c.l.bf16 %v7250
        %v7363 = vunpack.c.l.bf16 %v7251
        %v7364 = vunpack.c.l.bf16 %v7252
        %v7365 = vunpack.c.l.bf16 %v7253
        %v7366 = vunpack.c.l.bf16 %v7254
        %v7367 = vunpack.c.l.bf16 %v7255
        %v7368 = vunpack.c.l.bf16 %v7256
        %v7369 = vunpack.c.l.bf16 %v7257
        %v7370 = vunpack.c.l.bf16 %v7258
        %v7371 = vunpack.c.l.bf16 %v7259
        %v7372 = vunpack.c.l.bf16 %v7260
        %v7373 = vunpack.c.l.bf16 %v7261
        %v7374 = vunpack.c.l.bf16 %v7262
        %v7375 = vunpack.c.l.bf16 %v7263
        %v7376 = vunpack.c.l.bf16 %v7264
        %v7377 = vunpack.c.l.bf16 %v7265
        %v7378 = vunpack.c.l.bf16 %v7266
        %v7379 = vunpack.c.l.bf16 %v7267
        %v7380 = vunpack.c.l.bf16 %v7268
        %v7381 = vunpack.c.l.bf16 %v7269
        %v7382 = vunpack.c.l.bf16 %v7270
        %v7383 = vunpack.c.l.bf16 %v7271
        %v7384 = vunpack.c.l.bf16 %v7272
        %v7385 = vunpack.c.l.bf16 %v7273
        %v7386 = vunpack.c.l.bf16 %v7274
        %v7387 = vunpack.c.l.bf16 %v7275
        %v7388 = vunpack.c.l.bf16 %v7276
        %v7389 = vunpack.c.l.bf16 %v7277
        %v7390 = vunpack.c.l.bf16 %v7278
        %v7391 = vunpack.c.l.bf16 %v7279
        %v7392 = vunpack.c.l.bf16 %v7280
        %v7393 = vunpack.c.l.bf16 %v7281
        %v7394 = vunpack.c.l.bf16 %v7282
        %v7395 = vunpack.c.l.bf16 %v7283
        %v7396 = vunpack.c.l.bf16 %v7284
        %7397 = vmatprep.subr.mxu0 0.0
        %7398 = vmatpush1.msra.mxu0 %v7285
        %7399 = vmatprep.subr.mxu0 0.0
        %7400 = vmatpush1.msra.mxu0 %v7286
        %7401 = vmatprep.subr.mxu0 0.0
        %7402 = vmatpush1.msra.mxu0 %v7287
        %7403 = vmatprep.subr.mxu0 0.0
        %7404 = vmatpush1.msra.mxu0 %v7288
        %7405 = vmatprep.subr.mxu0 0.0
        %7406 = vmatpush1.msra.mxu0 %v7289
        %7407 = vmatprep.subr.mxu0 0.0
        %7408 = vmatpush1.msra.mxu0 %v7290
        %7409 = vmatprep.subr.mxu0 0.0
        %7410 = vmatpush1.msra.mxu0 %v7291
        %7411 = vmatprep.subr.mxu0 0.0
        %7412 = vmatpush1.msra.mxu0 %v7292
        %7413 = vmatprep.subr.mxu0 0.0
        %7414 = vmatpush1.msra.mxu0 %v7293
        %7415 = vmatprep.subr.mxu0 0.0
        %7416 = vmatpush1.msra.mxu0 %v7294
        %7417 = vmatprep.subr.mxu0 0.0
        %7418 = vmatpush1.msra.mxu0 %v7295
        %7419 = vmatprep.subr.mxu0 0.0
        %7420 = vmatpush1.msra.mxu0 %v7296
        %7421 = vmatprep.subr.mxu0 0.0
        %7422 = vmatpush1.msra.mxu0 %v7297
        %7423 = vmatprep.subr.mxu0 0.0
        %7424 = vmatpush1.msra.mxu0 %v7298
        %7425 = vmatprep.subr.mxu0 0.0
        %7426 = vmatpush1.msra.mxu0 %v7299
        %7427 = vmatprep.subr.mxu0 0.0
        %7428 = vmatpush1.msra.mxu0 %v7300
        %7429 = vmatprep.subr.mxu0 0.0
        %7430 = vmatpush1.msra.mxu0 %v7301
        %7431 = vmatprep.subr.mxu0 0.0
        %7432 = vmatpush1.msra.mxu0 %v7302
        %7433 = vmatprep.subr.mxu0 0.0
        %7434 = vmatpush1.msra.mxu0 %v7303
        %7435 = vmatprep.subr.mxu0 0.0
        %7436 = vmatpush1.msra.mxu0 %v7304
        %7437 = vmatprep.subr.mxu0 0.0
        %7438 = vmatpush1.msra.mxu0 %v7305
        %7439 = vmatprep.subr.mxu0 0.0
        %7440 = vmatpush1.msra.mxu0 %v7306
        %7441 = vmatprep.subr.mxu0 0.0
        %7442 = vmatpush1.msra.mxu0 %v7307
        %7443 = vmatprep.subr.mxu0 0.0
        %7444 = vmatpush1.msra.mxu0 %v7308
        %7445 = vmatprep.subr.mxu0 0.0
        %7446 = vmatpush1.msra.mxu0 %v7309
        %7447 = vmatprep.subr.mxu0 0.0
        %7448 = vmatpush1.msra.mxu0 %v7310
        %7449 = vmatprep.subr.mxu0 0.0
        %7450 = vmatpush1.msra.mxu0 %v7311
        %7451 = vmatprep.subr.mxu0 0.0
        %7452 = vmatpush1.msra.mxu0 %v7312
        %7453 = vmatprep.subr.mxu0 0.0
        %7454 = vmatpush1.msra.mxu0 %v7313
        %7455 = vmatprep.subr.mxu0 0.0
        %7456 = vmatpush1.msra.mxu0 %v7314
        %7457 = vmatprep.subr.mxu0 0.0
        %7458 = vmatpush1.msra.mxu0 %v7315
        %7459 = vmatprep.subr.mxu0 0.0
        %7460 = vmatpush1.msra.mxu0 %v7316
        %7461 = vmatprep.mubr.f32.mxu0 %v7167
        %7462 = vmatmul.mubr.f32.gmra.mrb[0].mxu0 %v7166
        %v7463 = vpop.f32.mrb[0].mxu0
        %v7464 = vadd.f32 0.0, %v7463
        %v7465 = vpop.f32.mrb[0].mxu0
        %7466 = vdwg.mxu0
        %7467 = vmatprep.subr.mxu0 0.0
        %7468 = vmatpush1.msra.mxu0 %v7317
        %7469 = vmatprep.subr.mxu0 0.0
        %7470 = vmatpush1.msra.mxu0 %v7318
        %7471 = vmatprep.subr.mxu0 0.0
        %7472 = vmatpush1.msra.mxu0 %v7319
        %7473 = vmatprep.subr.mxu0 0.0
        %7474 = vmatpush1.msra.mxu0 %v7320
        %7475 = vmatprep.subr.mxu0 0.0
        %7476 = vmatpush1.msra.mxu0 %v7321
        %7477 = vmatprep.subr.mxu0 0.0
        %7478 = vmatpush1.msra.mxu0 %v7322
        %7479 = vmatprep.subr.mxu0 0.0
        %7480 = vmatpush1.msra.mxu0 %v7323
        %7481 = vmatprep.subr.mxu0 0.0
        %7482 = vmatpush1.msra.mxu0 %v7324
        %7483 = vmatprep.subr.mxu0 0.0
        %7484 = vmatpush1.msra.mxu0 %v7325
        %7485 = vmatprep.subr.mxu0 0.0
        %7486 = vmatpush1.msra.mxu0 %v7326
        %7487 = vmatprep.subr.mxu0 0.0
        %7488 = vmatpush1.msra.mxu0 %v7327
        %7489 = vmatprep.subr.mxu0 0.0
        %7490 = vmatpush1.msra.mxu0 %v7328
        %7491 = vmatprep.subr.mxu0 0.0
        %7492 = vmatpush1.msra.mxu0 %v7329
        %7493 = vmatprep.subr.mxu0 0.0
        %7494 = vmatpush1.msra.mxu0 %v7330
        %7495 = vmatprep.subr.mxu0 0.0
        %7496 = vmatpush1.msra.mxu0 %v7331
        %7497 = vmatprep.subr.mxu0 0.0
        %7498 = vmatpush1.msra.mxu0 %v7332
        %7499 = vmatprep.subr.mxu0 0.0
        %7500 = vmatpush1.msra.mxu0 %v7333
        %7501 = vmatprep.subr.mxu0 0.0
        %7502 = vmatpush1.msra.mxu0 %v7334
        %7503 = vmatprep.subr.mxu0 0.0
        %7504 = vmatpush1.msra.mxu0 %v7335
        %7505 = vmatprep.subr.mxu0 0.0
        %7506 = vmatpush1.msra.mxu0 %v7336
        %7507 = vmatprep.subr.mxu0 0.0
        %7508 = vmatpush1.msra.mxu0 %v7337
        %7509 = vmatprep.subr.mxu0 0.0
        %7510 = vmatpush1.msra.mxu0 %v7338
        %7511 = vmatprep.subr.mxu0 0.0
        %7512 = vmatpush1.msra.mxu0 %v7339
        %7513 = vmatprep.subr.mxu0 0.0
        %7514 = vmatpush1.msra.mxu0 %v7340
        %7515 = vmatprep.subr.mxu0 0.0
        %7516 = vmatpush1.msra.mxu0 %v7341
        %7517 = vmatprep.subr.mxu0 0.0
        %7518 = vmatpush1.msra.mxu0 %v7342
        %7519 = vmatprep.subr.mxu0 0.0
        %7520 = vmatpush1.msra.mxu0 %v7343
        %7521 = vmatprep.subr.mxu0 0.0
        %7522 = vmatpush1.msra.mxu0 %v7344
        %7523 = vmatprep.subr.mxu0 0.0
        %7524 = vmatpush1.msra.mxu0 %v7345
        %7525 = vmatprep.subr.mxu0 0.0
        %7526 = vmatpush1.msra.mxu0 %v7346
        %7527 = vmatprep.subr.mxu0 0.0
        %7528 = vmatpush1.msra.mxu0 %v7347
        %7529 = vmatprep.subr.mxu0 0.0
        %7530 = vmatpush1.msra.mxu0 %v7348
        %7531 = vmatprep.mubr.f32.mxu0 %v7169
        %7532 = vmatmul.mubr.f32.gmra.mrb[0].mxu0 %v7168
        %v7533 = vpop.f32.mrb[0].mxu0
        %v7534 = vadd.f32 %v7464, %v7533
        %v7535 = vpop.f32.mrb[0].mxu0
        %7536 = vdwg.mxu0
        %7537 = vmatprep.subr.mxu0 0.0
        %7538 = vmatpush1.msra.mxu0 %v7349
        %7539 = vmatprep.subr.mxu0 0.0
        %7540 = vmatpush1.msra.mxu0 %v7350
        %7541 = vmatprep.subr.mxu0 0.0
        %7542 = vmatpush1.msra.mxu0 %v7351
        %7543 = vmatprep.subr.mxu0 0.0
        %7544 = vmatpush1.msra.mxu0 %v7352
        %7545 = vmatprep.subr.mxu0 0.0
        %7546 = vmatpush1.msra.mxu0 %v7353
        %7547 = vmatprep.subr.mxu0 0.0
        %7548 = vmatpush1.msra.mxu0 %v7354
        %7549 = vmatprep.subr.mxu0 0.0
        %7550 = vmatpush1.msra.mxu0 %v7355
        %7551 = vmatprep.subr.mxu0 0.0
        %7552 = vmatpush1.msra.mxu0 %v7356
        %7553 = vmatprep.subr.mxu0 0.0
        %7554 = vmatpush1.msra.mxu0 %v7357
        %7555 = vmatprep.subr.mxu0 0.0
        %7556 = vmatpush1.msra.mxu0 %v7358
        %7557 = vmatprep.subr.mxu0 0.0
        %7558 = vmatpush1.msra.mxu0 %v7359
        %7559 = vmatprep.subr.mxu0 0.0
        %7560 = vmatpush1.msra.mxu0 %v7360
        %7561 = vmatprep.subr.mxu0 0.0
        %7562 = vmatpush1.msra.mxu0 %v7361
        %7563 = vmatprep.subr.mxu0 0.0
        %7564 = vmatpush1.msra.mxu0 %v7362
        %7565 = vmatprep.subr.mxu0 0.0
        %7566 = vmatpush1.msra.mxu0 %v7363
        %7567 = vmatprep.subr.mxu0 0.0
        %7568 = vmatpush1.msra.mxu0 %v7364
        %7569 = vmatprep.subr.mxu0 0.0
        %7570 = vmatpush1.msra.mxu0 %v7365
        %7571 = vmatprep.subr.mxu0 0.0
        %7572 = vmatpush1.msra.mxu0 %v7366
        %7573 = vmatprep.subr.mxu0 0.0
        %7574 = vmatpush1.msra.mxu0 %v7367
        %7575 = vmatprep.subr.mxu0 0.0
        %7576 = vmatpush1.msra.mxu0 %v7368
        %7577 = vmatprep.subr.mxu0 0.0
        %7578 = vmatpush1.msra.mxu0 %v7369
        %7579 = vmatprep.subr.mxu0 0.0
        %7580 = vmatpush1.msra.mxu0 %v7370
        %7581 = vmatprep.subr.mxu0 0.0
        %7582 = vmatpush1.msra.mxu0 %v7371
        %7583 = vmatprep.subr.mxu0 0.0
        %7584 = vmatpush1.msra.mxu0 %v7372
        %7585 = vmatprep.subr.mxu0 0.0
        %7586 = vmatpush1.msra.mxu0 %v7373
        %7587 = vmatprep.subr.mxu0 0.0
        %7588 = vmatpush1.msra.mxu0 %v7374
        %7589 = vmatprep.subr.mxu0 0.0
        %7590 = vmatpush1.msra.mxu0 %v7375
        %7591 = vmatprep.subr.mxu0 0.0
        %7592 = vmatpush1.msra.mxu0 %v7376
        %7593 = vmatprep.subr.mxu0 0.0
        %7594 = vmatpush1.msra.mxu0 %v7377
        %7595 = vmatprep.subr.mxu0 0.0
        %7596 = vmatpush1.msra.mxu0 %v7378
        %7597 = vmatprep.subr.mxu0 0.0
        %7598 = vmatpush1.msra.mxu0 %v7379
        %7599 = vmatprep.subr.mxu0 0.0
        %7600 = vmatpush1.msra.mxu0 %v7380
        %7601 = vmatprep.mubr.f32.mxu0 %v7171
        %7602 = vmatmul.mubr.f32.gmra.mrb[0].mxu0 %v7170
        %v7603 = vpop.f32.mrb[0].mxu0
        %v7604 = vadd.f32 %v7534, %v7603
        %v7605 = vpop.f32.mrb[0].mxu0
        %7606 = vdwg.mxu0
        %7607 = vmatprep.subr.mxu0 0.0
        %7608 = vmatpush1.msra.mxu0 %v7381
        %7609 = vmatprep.subr.mxu0 0.0
        %7610 = vmatpush1.msra.mxu0 %v7382
        %7611 = vmatprep.subr.mxu0 0.0
        %7612 = vmatpush1.msra.mxu0 %v7383
        %7613 = vmatprep.subr.mxu0 0.0
        %7614 = vmatpush1.msra.mxu0 %v7384
        %7615 = vmatprep.subr.mxu0 0.0
        %7616 = vmatpush1.msra.mxu0 %v7385
        %7617 = vmatprep.subr.mxu0 0.0
        %7618 = vmatpush1.msra.mxu0 %v7386
        %7619 = vmatprep.subr.mxu0 0.0
        %7620 = vmatpush1.msra.mxu0 %v7387
        %7621 = vmatprep.subr.mxu0 0.0
        %7622 = vmatpush1.msra.mxu0 %v7388
        %7623 = vmatprep.subr.mxu0 0.0
        %7624 = vmatpush1.msra.mxu0 %v7389
        %7625 = vmatprep.subr.mxu0 0.0
        %7626 = vmatpush1.msra.mxu0 %v7390
        %7627 = vmatprep.subr.mxu0 0.0
        %7628 = vmatpush1.msra.mxu0 %v7391
        %7629 = vmatprep.subr.mxu0 0.0
        %7630 = vmatpush1.msra.mxu0 %v7392
        %7631 = vmatprep.subr.mxu0 0.0
        %7632 = vmatpush1.msra.mxu0 %v7393
        %7633 = vmatprep.subr.mxu0 0.0
        %7634 = vmatpush1.msra.mxu0 %v7394
        %7635 = vmatprep.subr.mxu0 0.0
        %7636 = vmatpush1.msra.mxu0 %v7395
        %7637 = vmatprep.subr.mxu0 0.0
        %7638 = vmatpush1.msra.mxu0 %v7396
        %7639 = vmatprep.subr.mxu0 0.0
        %7640 = vmatpush1.msra.mxu0 0.0
        %7641 = vmatprep.subr.mxu0 0.0
        %7642 = vmatpush1.msra.mxu0 0.0
        %7643 = vmatprep.subr.mxu0 0.0
        %7644 = vmatpush1.msra.mxu0 0.0
        %7645 = vmatprep.subr.mxu0 0.0
        %7646 = vmatpush1.msra.mxu0 0.0
        %7647 = vmatprep.subr.mxu0 0.0
        %7648 = vmatpush1.msra.mxu0 0.0
        %7649 = vmatprep.subr.mxu0 0.0
        %7650 = vmatpush1.msra.mxu0 0.0
        %7651 = vmatprep.subr.mxu0 0.0
        %7652 = vmatpush1.msra.mxu0 0.0
        %7653 = vmatprep.subr.mxu0 0.0
        %7654 = vmatpush1.msra.mxu0 0.0
        %7655 = vmatprep.subr.mxu0 0.0
        %7656 = vmatpush1.msra.mxu0 0.0
        %7657 = vmatprep.subr.mxu0 0.0
        %7658 = vmatpush1.msra.mxu0 0.0
        %7659 = vmatprep.subr.mxu0 0.0
        %7660 = vmatpush1.msra.mxu0 0.0
        %7661 = vmatprep.subr.mxu0 0.0
        %7662 = vmatpush1.msra.mxu0 0.0
        %7663 = vmatprep.subr.mxu0 0.0
        %7664 = vmatpush1.msra.mxu0 0.0
        %7665 = vmatprep.subr.mxu0 0.0
        %7666 = vmatpush1.msra.mxu0 0.0
        %7667 = vmatprep.subr.mxu0 0.0
        %7668 = vmatpush1.msra.mxu0 0.0
        %7669 = vmatprep.subr.mxu0 0.0
        %7670 = vmatpush1.msra.mxu0 0.0
        %7671 = vmatprep.mubr.f32.mxu0 0.0
        %7672 = vmatmul.mubr.f32.gmra.mrb[0].mxu0 %v7172
        %v7673 = vpop.f32.mrb[0].mxu0
        %v7674 = vadd.f32 %v7604, %v7673
        %v7675 = vpop.f32.mrb[0].mxu0
        %7676 = vdwg.mxu0
        // Predicated region
        $region165: #{farmer_predict.1} parent=95 // pred_check
          %p7677 = pneg %p977
        $region166: #{farmer_predict.1} parent=95 // pred_check_branch
          %7679 = sbr.rel (%p7677) target = $region168
        $region167: #{farmer_predict.1} parent=95 // pred_region
          %7680 = vst [vmem:[%s972] sm:$0xff] %v7674
        $region168: #{farmer_predict.1} parent=95 // pred_fallthru
          _
        %p7681 = scmp.gt.s32.totalorder %s44, 0
        // Predicated region
        $region169: #{farmer_predict.1} parent=95 // pred_check
          %p7682 = pneg %p7681
        $region170: #{farmer_predict.1} parent=95 // pred_check_branch
          %7684 = sbr.rel (%p7682) target = $region172
        $region171: #{farmer_predict.1} parent=95 // pred_region
          %v7685 = vld [vmem:[%s972] sm:$0xff]
          %v7686 = vadd.f32 %v7685, %v7674
          %7687 = vst [vmem:[%s972] sm:$0xff] %v7686
        $region172: #{farmer_predict.1} parent=95 // pred_fallthru
          _
        %p7688 = scmp.eq.s32.totalorder %s44, 3
        // Predicated region
        $region173: #{farmer_predict.1} parent=95 // pred_check
          %p7689 = pneg %p7688
        $region174: #{farmer_predict.1} parent=95 // pred_check_branch
          %7691 = sbr.rel (%p7689) target = $region176
        $region175: #{farmer_predict.1} parent=95 // pred_region
          %v7692 = vld [vmem:[%s965] sm:$0xff]
          %v7693 = vld [vmem:[%s972] sm:$0xff]
          %v7694 = vld [vmem:[#allocation25] sm:$0x1]
          %v7696 = vlaneseq
          %v7697 = vshrl.u32 %v7696, 7
          %v7698 = vsub.s32 0, %v7697
          %v7699 = vrot.slane %v7694, %v7698
          %v7701 = vadd.f32 %v7693, %v7699
          %v7702 = vsub.f32 1.0, %v7692
          %v7703 = vmul.f32 %v7702, 10000000.0
          %v7704 = vsub.f32 %v7701, %v7703
          %7705 = vst [vmem:[%s972] sm:$0xff] %v7704
          %v7706 = vlaneseq
          %v7707 = vshrl.u32 %v7706, 7
          %v7708 = vadd.s32 %v7707, 8
          %v7709 = vadd.s32 %v7707, 16
          %v7710 = vadd.s32 %v7707, 24
          %v7711 = vadd.s32 %v7707, 32
          %v7712 = vadd.s32 %v7707, 40
          %v7713 = vadd.s32 %v7707, 48
          %v7714 = vadd.s32 %v7707, 56
          %v7715 = vadd.s32 %v7707, 64
          %v7716 = vadd.s32 %v7707, 72
          %v7717 = vadd.s32 %v7707, 80
          %v7718 = vadd.s32 %v7707, 88
          %v7719 = vadd.s32 %v7707, 96
          %v7720 = vadd.s32 %v7707, 104
          %v7721 = vadd.s32 %v7707, 112
          %v7722 = vadd.s32 %v7707, 120
          %v7723 = vlaneseq
          %v7724 = vand.u32 %v7723, 127
          %v7725 = vmul.u32 %v7724, 5
          %vm7726 = vcmp.ge.s32.totalorder %v7707, %v7725
          %vm7727 = vcmp.ge.s32.totalorder %v7708, %v7725
          %vm7728 = vcmp.ge.s32.totalorder %v7709, %v7725
          %vm7729 = vcmp.ge.s32.totalorder %v7710, %v7725
          %vm7730 = vcmp.ge.s32.totalorder %v7711, %v7725
          %vm7731 = vcmp.ge.s32.totalorder %v7712, %v7725
          %vm7732 = vcmp.ge.s32.totalorder %v7713, %v7725
          %vm7733 = vcmp.ge.s32.totalorder %v7714, %v7725
          %vm7734 = vcmp.ge.s32.totalorder %v7715, %v7725
          %vm7735 = vcmp.ge.s32.totalorder %v7716, %v7725
          %vm7736 = vcmp.ge.s32.totalorder %v7717, %v7725
          %vm7737 = vcmp.ge.s32.totalorder %v7718, %v7725
          %vm7738 = vcmp.ge.s32.totalorder %v7719, %v7725
          %vm7739 = vcmp.ge.s32.totalorder %v7720, %v7725
          %vm7740 = vcmp.ge.s32.totalorder %v7721, %v7725
          %vm7741 = vcmp.ge.s32.totalorder %v7722, %v7725
          %v7742 = vadd.s32 %v7725, 5
          %vm7743 = vcmp.lt.s32.totalorder %v7707, %v7742
          %vm7744 = vcmp.lt.s32.totalorder %v7708, %v7742
          %vm7745 = vcmp.lt.s32.totalorder %v7709, %v7742
          %vm7746 = vcmp.lt.s32.totalorder %v7710, %v7742
          %vm7747 = vcmp.lt.s32.totalorder %v7711, %v7742
          %vm7748 = vcmp.lt.s32.totalorder %v7712, %v7742
          %vm7749 = vcmp.lt.s32.totalorder %v7713, %v7742
          %vm7750 = vcmp.lt.s32.totalorder %v7714, %v7742
          %vm7751 = vcmp.lt.s32.totalorder %v7715, %v7742
          %vm7752 = vcmp.lt.s32.totalorder %v7716, %v7742
          %vm7753 = vcmp.lt.s32.totalorder %v7717, %v7742
          %vm7754 = vcmp.lt.s32.totalorder %v7718, %v7742
          %vm7755 = vcmp.lt.s32.totalorder %v7719, %v7742
          %vm7756 = vcmp.lt.s32.totalorder %v7720, %v7742
          %vm7757 = vcmp.lt.s32.totalorder %v7721, %v7742
          %vm7758 = vcmp.lt.s32.totalorder %v7722, %v7742
          %vm7759 = vmand %vm7726, %vm7743
          %vm7760 = vmand %vm7727, %vm7744
          %vm7761 = vmand %vm7728, %vm7745
          %vm7762 = vmand %vm7729, %vm7746
          %vm7763 = vmand %vm7730, %vm7747
          %vm7764 = vmand %vm7731, %vm7748
          %vm7765 = vmand %vm7732, %vm7749
          %vm7766 = vmand %vm7733, %vm7750
          %vm7767 = vmand %vm7734, %vm7751
          %vm7768 = vmand %vm7735, %vm7752
          %vm7769 = vmand %vm7736, %vm7753
          %vm7770 = vmand %vm7737, %vm7754
          %vm7771 = vmand %vm7738, %vm7755
          %vm7772 = vmand %vm7739, %vm7756
          %vm7773 = vmand %vm7740, %vm7757
          %vm7774 = vmand %vm7741, %vm7758
          %v7775 = vsel %vm7759, 1.0, 0.0
          %v7776 = vsel %vm7760, 1.0, 0.0
          %v7777 = vsel %vm7761, 1.0, 0.0
          %v7778 = vsel %vm7762, 1.0, 0.0
          %v7779 = vsel %vm7763, 1.0, 0.0
          %v7780 = vsel %vm7764, 1.0, 0.0
          %v7781 = vsel %vm7765, 1.0, 0.0
          %v7782 = vsel %vm7766, 1.0, 0.0
          %v7783 = vsel %vm7767, 1.0, 0.0
          %v7784 = vsel %vm7768, 1.0, 0.0
          %v7785 = vsel %vm7769, 1.0, 0.0
          %v7786 = vsel %vm7770, 1.0, 0.0
          %v7787 = vsel %vm7771, 1.0, 0.0
          %v7788 = vsel %vm7772, 1.0, 0.0
          %v7789 = vsel %vm7773, 1.0, 0.0
          %v7790 = vsel %vm7774, 1.0, 0.0
          %v7791 = vmul.u32 %v7707, 5
          %v7792 = vmul.u32 %v7708, 5
          %v7793 = vmul.u32 %v7709, 5
          %v7794 = vmul.u32 %v7710, 5
          %vm7795 = vcmp.ge.s32.totalorder %v7724, %v7791
          %vm7796 = vcmp.ge.s32.totalorder %v7724, %v7792
          %vm7797 = vcmp.ge.s32.totalorder %v7724, %v7793
          %vm7798 = vcmp.ge.s32.totalorder %v7724, %v7794
          %v7799 = vadd.s32 %v7791, 5
          %v7800 = vadd.s32 %v7792, 5
          %v7801 = vadd.s32 %v7793, 5
          %v7802 = vadd.s32 %v7794, 5
          %vm7803 = vcmp.lt.s32.totalorder %v7724, %v7799
          %vm7804 = vcmp.lt.s32.totalorder %v7724, %v7800
          %vm7805 = vcmp.lt.s32.totalorder %v7724, %v7801
          %vm7806 = vcmp.lt.s32.totalorder %v7724, %v7802
          %vm7807 = vmand %vm7795, %vm7803
          %vm7808 = vmand %vm7796, %vm7804
          %vm7809 = vmand %vm7797, %vm7805
          %vm7810 = vmand %vm7798, %vm7806
          %v7811 = vsel %vm7807, 1.0, 0.0
          %v7812 = vsel %vm7808, 1.0, 0.0
          %v7813 = vsel %vm7809, 1.0, 0.0
          %v7814 = vsel %vm7810, 1.0, 0.0
          %7815 = vmatprep.subr.mxu0 0.0
          %7816 = vmatpush1.msra.mxu0 %v7775
          %7817 = vmatprep.subr.mxu0 0.0
          %7818 = vmatpush1.msra.mxu0 %v7776
          %7819 = vmatprep.subr.mxu0 0.0
          %7820 = vmatpush1.msra.mxu0 %v7777
          %7821 = vmatprep.subr.mxu0 0.0
          %7822 = vmatpush1.msra.mxu0 %v7778
          %7823 = vmatprep.subr.mxu0 0.0
          %7824 = vmatpush1.msra.mxu0 %v7779
          %7825 = vmatprep.subr.mxu0 0.0
          %7826 = vmatpush1.msra.mxu0 %v7780
          %7827 = vmatprep.subr.mxu0 0.0
          %7828 = vmatpush1.msra.mxu0 %v7781
          %7829 = vmatprep.subr.mxu0 0.0
          %7830 = vmatpush1.msra.mxu0 %v7782
          %7831 = vmatprep.subr.mxu0 0.0
          %7832 = vmatpush1.msra.mxu0 %v7783
          %7833 = vmatprep.subr.mxu0 0.0
          %7834 = vmatpush1.msra.mxu0 %v7784
          %7835 = vmatprep.subr.mxu0 0.0
          %7836 = vmatpush1.msra.mxu0 %v7785
          %7837 = vmatprep.subr.mxu0 0.0
          %7838 = vmatpush1.msra.mxu0 %v7786
          %7839 = vmatprep.subr.mxu0 0.0
          %7840 = vmatpush1.msra.mxu0 %v7787
          %7841 = vmatprep.subr.mxu0 0.0
          %7842 = vmatpush1.msra.mxu0 %v7788
          %7843 = vmatprep.subr.mxu0 0.0
          %7844 = vmatpush1.msra.mxu0 %v7789
          %7845 = vmatprep.subr.mxu0 0.0
          %7846 = vmatpush1.msra.mxu0 %v7790
          %7847 = vmatprep.subr.mxu0 0.0
          %7848 = vmatpush1.msra.mxu0 0.0
          %7849 = vmatprep.subr.mxu0 0.0
          %7850 = vmatpush1.msra.mxu0 0.0
          %7851 = vmatprep.subr.mxu0 0.0
          %7852 = vmatpush1.msra.mxu0 0.0
          %7853 = vmatprep.subr.mxu0 0.0
          %7854 = vmatpush1.msra.mxu0 0.0
          %7855 = vmatprep.subr.mxu0 0.0
          %7856 = vmatpush1.msra.mxu0 0.0
          %7857 = vmatprep.subr.mxu0 0.0
          %7858 = vmatpush1.msra.mxu0 0.0
          %7859 = vmatprep.subr.mxu0 0.0
          %7860 = vmatpush1.msra.mxu0 0.0
          %7861 = vmatprep.subr.mxu0 0.0
          %7862 = vmatpush1.msra.mxu0 0.0
          %7863 = vmatprep.subr.mxu0 0.0
          %7864 = vmatpush1.msra.mxu0 0.0
          %7865 = vmatprep.subr.mxu0 0.0
          %7866 = vmatpush1.msra.mxu0 0.0
          %7867 = vmatprep.subr.mxu0 0.0
          %7868 = vmatpush1.msra.mxu0 0.0
          %7869 = vmatprep.subr.mxu0 0.0
          %7870 = vmatpush1.msra.mxu0 0.0
          %7871 = vmatprep.subr.mxu0 0.0
          %7872 = vmatpush1.msra.mxu0 0.0
          %7873 = vmatprep.subr.mxu0 0.0
          %7874 = vmatpush1.msra.mxu0 0.0
          %7875 = vmatprep.subr.mxu0 0.0
          %7876 = vmatpush1.msra.mxu0 0.0
          %7877 = vmatprep.subr.mxu0 0.0
          %7878 = vmatpush1.msra.mxu0 0.0
          %7879 = vmatprep.mubr.f32.mxu0 0.0
          %7880 = vmatmul.mubr.f32.gmra.mrb[0].mxu0 %v7692
          %v7881 = vpop.f32.mrb[0].mxu0
          %v7882 = vadd.f32 0.0, %v7881
          %v7883 = vpop.f32.mrb[0].mxu0
          %7884 = vdwg.mxu0
          %vm7885 = vcmp.lt.f32.partialorder %v7882, 0.5
          %v7886 = vsel %vm7885, 1.0, 0.0
          %vm7887 = vcmask 261120
          %v7889 = vsel %vm7887, %v7886, 0
          %7891 = vmatprep.subr.mxu0 0.0
          %7892 = vmatpush1.msra.mxu0 %v7811
          %7893 = vmatprep.subr.mxu0 0.0
          %7894 = vmatpush1.msra.mxu0 %v7812
          %7895 = vmatprep.subr.mxu0 0.0
          %7896 = vmatpush1.msra.mxu0 %v7813
          %7897 = vmatprep.subr.mxu0 0.0
          %7898 = vmatpush1.msra.mxu0 %v7814
          %7899 = vmatprep.subr.mxu0 0.0
          %7900 = vmatpush1.msra.mxu0 0.0
          %7901 = vmatprep.subr.mxu0 0.0
          %7902 = vmatpush1.msra.mxu0 0.0
          %7903 = vmatprep.subr.mxu0 0.0
          %7904 = vmatpush1.msra.mxu0 0.0
          %7905 = vmatprep.subr.mxu0 0.0
          %7906 = vmatpush1.msra.mxu0 0.0
          %7907 = vmatprep.subr.mxu0 0.0
          %7908 = vmatpush1.msra.mxu0 0.0
          %7909 = vmatprep.subr.mxu0 0.0
          %7910 = vmatpush1.msra.mxu0 0.0
          %7911 = vmatprep.subr.mxu0 0.0
          %7912 = vmatpush1.msra.mxu0 0.0
          %7913 = vmatprep.subr.mxu0 0.0
          %7914 = vmatpush1.msra.mxu0 0.0
          %7915 = vmatprep.subr.mxu0 0.0
          %7916 = vmatpush1.msra.mxu0 0.0
          %7917 = vmatprep.subr.mxu0 0.0
          %7918 = vmatpush1.msra.mxu0 0.0
          %7919 = vmatprep.subr.mxu0 0.0
          %7920 = vmatpush1.msra.mxu0 0.0
          %7921 = vmatprep.subr.mxu0 0.0
          %7922 = vmatpush1.msra.mxu0 0.0
          %7923 = vmatprep.subr.mxu0 0.0
          %7924 = vmatpush1.msra.mxu0 0.0
          %7925 = vmatprep.subr.mxu0 0.0
          %7926 = vmatpush1.msra.mxu0 0.0
          %7927 = vmatprep.subr.mxu0 0.0
          %7928 = vmatpush1.msra.mxu0 0.0
          %7929 = vmatprep.subr.mxu0 0.0
          %7930 = vmatpush1.msra.mxu0 0.0
          %7931 = vmatprep.subr.mxu0 0.0
          %7932 = vmatpush1.msra.mxu0 0.0
          %7933 = vmatprep.subr.mxu0 0.0
          %7934 = vmatpush1.msra.mxu0 0.0
          %7935 = vmatprep.subr.mxu0 0.0
          %7936 = vmatpush1.msra.mxu0 0.0
          %7937 = vmatprep.subr.mxu0 0.0
          %7938 = vmatpush1.msra.mxu0 0.0
          %7939 = vmatprep.subr.mxu0 0.0
          %7940 = vmatpush1.msra.mxu0 0.0
          %7941 = vmatprep.subr.mxu0 0.0
          %7942 = vmatpush1.msra.mxu0 0.0
          %7943 = vmatprep.subr.mxu0 0.0
          %7944 = vmatpush1.msra.mxu0 0.0
          %7945 = vmatprep.subr.mxu0 0.0
          %7946 = vmatpush1.msra.mxu0 0.0
          %7947 = vmatprep.subr.mxu0 0.0
          %7948 = vmatpush1.msra.mxu0 0.0
          %7949 = vmatprep.subr.mxu0 0.0
          %7950 = vmatpush1.msra.mxu0 0.0
          %7951 = vmatprep.subr.mxu0 0.0
          %7952 = vmatpush1.msra.mxu0 0.0
          %7953 = vmatprep.subr.mxu0 0.0
          %7954 = vmatpush1.msra.mxu0 0.0
          %7955 = vmatprep.mubr.f32.mxu0 0.0
          %7956 = vmatmul.mubr.f32.gmra.mrb[0].mxu0 %v7889
          %v7957 = vpop.f32.mrb[0].mxu0
          %v7958 = vadd.f32 0.0, %v7957
          %v7959 = vpop.f32.mrb[0].mxu0
          %7960 = vdwg.mxu0
          %v7961 = vmul.f32 %v7958, 10000000.0
          %v7962 = vadd.f32 %v7704, %v7961
          %7963 = vmax.xlane.f32.xlu0 %v7962
          %v7964 = vpop.xlane.xlu0 %7963
          %v7965 = vsub.f32 %v7962, %v7964
          %v7966 = vmul.f32 %v7965, 1.442695
          %v7967 = vpow.pop %v7966
          %7968 = vmatprep.subr.mxu0 0.0
          %7969 = vmatpush1.msra.mxu0 %v7775
          %7970 = vmatprep.subr.mxu0 0.0
          %7971 = vmatpush1.msra.mxu0 %v7776
          %7972 = vmatprep.subr.mxu0 0.0
          %7973 = vmatpush1.msra.mxu0 %v7777
          %7974 = vmatprep.subr.mxu0 0.0
          %7975 = vmatpush1.msra.mxu0 %v7778
          %7976 = vmatprep.subr.mxu0 0.0
          %7977 = vmatpush1.msra.mxu0 %v7779
          %7978 = vmatprep.subr.mxu0 0.0
          %7979 = vmatpush1.msra.mxu0 %v7780
          %7980 = vmatprep.subr.mxu0 0.0
          %7981 = vmatpush1.msra.mxu0 %v7781
          %7982 = vmatprep.subr.mxu0 0.0
          %7983 = vmatpush1.msra.mxu0 %v7782
          %7984 = vmatprep.subr.mxu0 0.0
          %7985 = vmatpush1.msra.mxu0 %v7783
          %7986 = vmatprep.subr.mxu0 0.0
          %7987 = vmatpush1.msra.mxu0 %v7784
          %7988 = vmatprep.subr.mxu0 0.0
          %7989 = vmatpush1.msra.mxu0 %v7785
          %7990 = vmatprep.subr.mxu0 0.0
          %7991 = vmatpush1.msra.mxu0 %v7786
          %7992 = vmatprep.subr.mxu0 0.0
          %7993 = vmatpush1.msra.mxu0 %v7787
          %7994 = vmatprep.subr.mxu0 0.0
          %7995 = vmatpush1.msra.mxu0 %v7788
          %7996 = vmatprep.subr.mxu0 0.0
          %7997 = vmatpush1.msra.mxu0 %v7789
          %7998 = vmatprep.subr.mxu0 0.0
          %7999 = vmatpush1.msra.mxu0 %v7790
          %8000 = vmatprep.subr.mxu0 0.0
          %8001 = vmatpush1.msra.mxu0 0.0
          %8002 = vmatprep.subr.mxu0 0.0
          %8003 = vmatpush1.msra.mxu0 0.0
          %8004 = vmatprep.subr.mxu0 0.0
          %8005 = vmatpush1.msra.mxu0 0.0
          %8006 = vmatprep.subr.mxu0 0.0
          %8007 = vmatpush1.msra.mxu0 0.0
          %8008 = vmatprep.subr.mxu0 0.0
          %8009 = vmatpush1.msra.mxu0 0.0
          %8010 = vmatprep.subr.mxu0 0.0
          %8011 = vmatpush1.msra.mxu0 0.0
          %8012 = vmatprep.subr.mxu0 0.0
          %8013 = vmatpush1.msra.mxu0 0.0
          %8014 = vmatprep.subr.mxu0 0.0
          %8015 = vmatpush1.msra.mxu0 0.0
          %8016 = vmatprep.subr.mxu0 0.0
          %8017 = vmatpush1.msra.mxu0 0.0
          %8018 = vmatprep.subr.mxu0 0.0
          %8019 = vmatpush1.msra.mxu0 0.0
          %8020 = vmatprep.subr.mxu0 0.0
          %8021 = vmatpush1.msra.mxu0 0.0
          %8022 = vmatprep.subr.mxu0 0.0
          %8023 = vmatpush1.msra.mxu0 0.0
          %8024 = vmatprep.subr.mxu0 0.0
          %8025 = vmatpush1.msra.mxu0 0.0
          %8026 = vmatprep.subr.mxu0 0.0
          %8027 = vmatpush1.msra.mxu0 0.0
          %8028 = vmatprep.subr.mxu0 0.0
          %8029 = vmatpush1.msra.mxu0 0.0
          %8030 = vmatprep.subr.mxu0 0.0
          %8031 = vmatpush1.msra.mxu0 0.0
          %8032 = vmatprep.mubr.f32.mxu0 0.0
          %8033 = vmatmul.mubr.f32.gmra.mrb[0].mxu0 %v7967
          %v8034 = vpop.f32.mrb[0].mxu0
          %v8035 = vadd.f32 0.0, %v8034
          %v8036 = vpop.f32.mrb[0].mxu0
          %8037 = vdwg.mxu0
          %v8039 = vsel %vm7887, %v8035, 0
          %8041 = vmatprep.subr.mxu0 0.0
          %8042 = vmatpush1.msra.mxu0 %v7811
          %8043 = vmatprep.subr.mxu0 0.0
          %8044 = vmatpush1.msra.mxu0 %v7812
          %8045 = vmatprep.subr.mxu0 0.0
          %8046 = vmatpush1.msra.mxu0 %v7813
          %8047 = vmatprep.subr.mxu0 0.0
          %8048 = vmatpush1.msra.mxu0 %v7814
          %8049 = vmatprep.subr.mxu0 0.0
          %8050 = vmatpush1.msra.mxu0 0.0
          %8051 = vmatprep.subr.mxu0 0.0
          %8052 = vmatpush1.msra.mxu0 0.0
          %8053 = vmatprep.subr.mxu0 0.0
          %8054 = vmatpush1.msra.mxu0 0.0
          %8055 = vmatprep.subr.mxu0 0.0
          %8056 = vmatpush1.msra.mxu0 0.0
          %8057 = vmatprep.subr.mxu0 0.0
          %8058 = vmatpush1.msra.mxu0 0.0
          %8059 = vmatprep.subr.mxu0 0.0
          %8060 = vmatpush1.msra.mxu0 0.0
          %8061 = vmatprep.subr.mxu0 0.0
          %8062 = vmatpush1.msra.mxu0 0.0
          %8063 = vmatprep.subr.mxu0 0.0
          %8064 = vmatpush1.msra.mxu0 0.0
          %8065 = vmatprep.subr.mxu0 0.0
          %8066 = vmatpush1.msra.mxu0 0.0
          %8067 = vmatprep.subr.mxu0 0.0
          %8068 = vmatpush1.msra.mxu0 0.0
          %8069 = vmatprep.subr.mxu0 0.0
          %8070 = vmatpush1.msra.mxu0 0.0
          %8071 = vmatprep.subr.mxu0 0.0
          %8072 = vmatpush1.msra.mxu0 0.0
          %8073 = vmatprep.subr.mxu0 0.0
          %8074 = vmatpush1.msra.mxu0 0.0
          %8075 = vmatprep.subr.mxu0 0.0
          %8076 = vmatpush1.msra.mxu0 0.0
          %8077 = vmatprep.subr.mxu0 0.0
          %8078 = vmatpush1.msra.mxu0 0.0
          %8079 = vmatprep.subr.mxu0 0.0
          %8080 = vmatpush1.msra.mxu0 0.0
          %8081 = vmatprep.subr.mxu0 0.0
          %8082 = vmatpush1.msra.mxu0 0.0
          %8083 = vmatprep.subr.mxu0 0.0
          %8084 = vmatpush1.msra.mxu0 0.0
          %8085 = vmatprep.subr.mxu0 0.0
          %8086 = vmatpush1.msra.mxu0 0.0
          %8087 = vmatprep.subr.mxu0 0.0
          %8088 = vmatpush1.msra.mxu0 0.0
          %8089 = vmatprep.subr.mxu0 0.0
          %8090 = vmatpush1.msra.mxu0 0.0
          %8091 = vmatprep.subr.mxu0 0.0
          %8092 = vmatpush1.msra.mxu0 0.0
          %8093 = vmatprep.subr.mxu0 0.0
          %8094 = vmatpush1.msra.mxu0 0.0
          %8095 = vmatprep.subr.mxu0 0.0
          %8096 = vmatpush1.msra.mxu0 0.0
          %8097 = vmatprep.subr.mxu0 0.0
          %8098 = vmatpush1.msra.mxu0 0.0
          %8099 = vmatprep.subr.mxu0 0.0
          %8100 = vmatpush1.msra.mxu0 0.0
          %8101 = vmatprep.subr.mxu0 0.0
          %8102 = vmatpush1.msra.mxu0 0.0
          %8103 = vmatprep.subr.mxu0 0.0
          %8104 = vmatpush1.msra.mxu0 0.0
          %8105 = vmatprep.mubr.f32.mxu0 0.0
          %8106 = vmatmul.mubr.f32.gmra.mrb[0].mxu0 %v8039
          %v8107 = vpop.f32.mrb[0].mxu0
          %v8108 = vadd.f32 0.0, %v8107
          %v8109 = vpop.f32.mrb[0].mxu0
          %8110 = vdwg.mxu0
          %v8111 = vrcp.pop %v8108
          %v8112 = vmul.f32 %v7967, %v8111
          %8113 = vst [vmem:[%s976] sm:$0xff] %v8112
        $region176: #{farmer_predict.1} parent=95 // pred_fallthru
          _
        %p8114 = scmp.lt.s32.totalorder %s43, 0
        %s8115 = scalar_select %p8114, %s43, 0
        %s8116 = smul.addr %s8115, 8
        %s8117 = scalar_lea.vmem %s19, %s8116
        %p8118 = scmp.lt.s32.totalorder %s43, 0
        %s8119 = scalar_select %p8118, %s43, 0
        %s8120 = smul.addr %s8119, 8
        %s8121 = scalar_lea.vmem %s20, %s8120
        // Predicated region
        $region177: #{farmer_predict.1} parent=95 // pred_check
          %p8122 = pneg %p498
        $region178: #{farmer_predict.1} parent=95 // pred_check_branch
          %8124 = sbr.rel (%p8122) target = $region180
        $region179: #{farmer_predict.1} parent=95 // pred_region
          _
        $region180: #{farmer_predict.1} parent=95 // pred_fallthru
          _
        // Predicated region
        $region181: #{farmer_predict.1} parent=95 // pred_check
          %p8125 = pneg %p524
        $region182: #{farmer_predict.1} parent=95 // pred_check_branch
          %8127 = sbr.rel (%p8125) target = $region184
        $region183: #{farmer_predict.1} parent=95 // pred_region
          _
        $region184: #{farmer_predict.1} parent=95 // pred_fallthru
          _
        // Predicated region
        $region185: #{farmer_predict.1} parent=95 // pred_check
          %p8128 = pneg %p498
        $region186: #{farmer_predict.1} parent=95 // pred_check_branch
          %8130 = sbr.rel (%p8128) target = $region188
        $region187: #{farmer_predict.1} parent=95 // pred_region
          %p8131 = scmp.lt.s32.totalorder %s43, 0
          %s8132 = scalar_select %p8131, %s43, 0
          %s8133 = smul.addr %s8132, 8
          %s8134 = scalar_lea.vmem %s19, %s8133
        $region188: #{farmer_predict.1} parent=95 // pred_fallthru
          _
        // Predicated region
        $region189: #{farmer_predict.1} parent=95 // pred_check
          %p8135 = pneg %p524
        $region190: #{farmer_predict.1} parent=95 // pred_check_branch
          %8137 = sbr.rel (%p8135) target = $region192
        $region191: #{farmer_predict.1} parent=95 // pred_region
          %p8138 = scmp.lt.s32.totalorder %s43, 0
          %s8139 = scalar_select %p8138, %s43, 0
          %s8140 = smul.addr %s8139, 8
          %s8141 = scalar_lea.vmem %s20, %s8140
        $region192: #{farmer_predict.1} parent=95 // pred_fallthru
          _
      $region96: #{farmer_predict.1} parent=5 // pred_fallthru
        _
      %p8142 = scmp.le.s32.totalorder 2, %s34
      // Predicated region
      $region193: #{farmer_predict.1} parent=5 // pred_check
        %p8143 = pneg %p8142
      $region194: #{farmer_predict.1} parent=5 // pred_check_branch
        %8145 = sbr.rel (%p8143) target = $region196
      $region195: #{farmer_predict.1} parent=5 // pred_region
        %s8146 = ssub.s32 %s34, 2
      $region196: #{farmer_predict.1} parent=5 // pred_fallthru
        _
    $region6: #{farmer_predict.1} parent=1 // loop_footer
      %s38 = sadd.s32 1, %s34
    $region7: #{farmer_predict.1} parent=1 // loop_footer_branch
      %33 = sbr.rel target = $region3
    $region8: #{farmer_predict.1} parent=1 // loop_exit
      _
    %8147 = vsyncpa [#allocation4], 1
    %s8148 = scalar_lea.sflag [#allocation4], 1
    %8149 = vsyncpa %s8148, 1
    %8150 = vsyncpa [#allocation6], 1
    %8151 = vsyncpa [#allocation9], 1
    %8152 = vsyncpa [#allocation12], 1
    %8153 = vsyncpa [#allocation15], 1
    %8154 = vsyncpa [#allocation18], 1
    %8155 = vsyncpa [#allocation21], 1

</llo_original>
